<compile_context>
chip_gen: v7x
topology: tpu7x:2x2x1
jax: 0.10.0
libtpu: 0.0.40
codegen_flags: <defaults>
</compile_context>

<pallas_src>
import functools

import jax
import jax.numpy as jnp
from jax.experimental import pallas as pl
from jax.experimental.pallas import tpu as pltpu


def _hdeepfm_kernel(w_ref, vx_ref, kext_ref, b1_ref, w2_ref, b2_ref,
                    w3_ref, b3_ref, scal_ref, y_ref, reg_ref, *,
                    fd, h1_dim):
    w = w_ref[...]                                   # (TB, F)   f32
    vx = vx_ref[...]                                 # (TB, FD)  bf16
    w0 = scal_ref[0]                                 # scalar (SMEM)
    alpha = scal_ref[1]                              # scalar (SMEM)

    # ---- single fused MXU matmul ------------------------------------------
    # columns: [ K (field mix) | K@W1 (MLP-1 pre-act) | K@kron(1_F, I_D) (s) ]
    out = jnp.dot(vx, kext_ref[...],
                  preferred_element_type=jnp.float32)           # (TB, FD+H1+D)
    v0 = out[:, :fd]                                            # flatten(M @ V)
    h1 = jnp.maximum(out[:, fd:fd + h1_dim] + b1_ref[...], 0.0) # (TB, H1)
    s = out[:, fd + h1_dim:]                                    # sum_f V0_f

    # ---- first-order term: w0 + sum_f w[b, f] ------------------------------
    y = w0 + jnp.sum(w, axis=1, keepdims=True)                  # (TB, 1)

    # ---- second-order term via the FM identity (f32 accumulation) ----------
    sum_sq = jnp.sum(s * s, axis=1, keepdims=True)              # ||sum_f V0_f||^2
    sq_sum = jnp.sum(v0 * v0, axis=1, keepdims=True)            # sum_f ||V0_f||^2
    y = y + 0.5 * (sum_sq - sq_sum)

    # ---- deep part: remaining MLP layers -----------------------------------
    h2 = jnp.dot(h1.astype(jnp.bfloat16), w2_ref[...],
                 preferred_element_type=jnp.float32) + b2_ref[...]
    h2 = jnp.maximum(h2, 0.0)                                   # (TB, H2)
    # (H2 -> 1) projection on the VPU: broadcast-mul + lane reduce.
    deep = jnp.sum(h2 * w3_ref[...], axis=1, keepdims=True) + b3_ref[...]

    y_ref[...] = y + deep

    # ---- regularization: one scalar per grid step (padded rows contribute 0)
    reg_ref[...] = (alpha * jnp.sum(w * w)).reshape(1, 1, 1)


def hdeepfm_forward(x, params, *, batch_tile=2048):
    w_table = params['w_table']          # (n,)
    V_table = params['V_table']          # (order-1, n, D)
    M = params['M']                      # (F, F)
    W1, b1 = params['W1'], params['b1']  # (F*D, H1), (1, H1)
    W2, b2 = params['W2'], params['b2']  # (H1, H2), (1, H2)
    W3, b3 = params['W3'], params['b3']  # (H2, 1),  (1, 1)

    B, F = x.shape
    D = V_table.shape[-1]
    FD = F * D
    H1 = W1.shape[1]
    H2 = W2.shape[1]

    TB = batch_tile
    B_pad = ((B + TB - 1) // TB) * TB
    nb = B_pad // TB

    # Embedding gathers stay as plain-JAX glue (see TODO above); the table is
    # pre-cast to bf16 so the gather moves half the bytes.  Padded rows are
    # zero, so they contribute nothing to reg and are sliced off from y.
    w = w_table[x].astype(jnp.float32)                          # (B, F) f32
    vx = V_table[0].astype(jnp.bfloat16)[x].reshape(B, FD)      # (B, FD) bf16
    if B_pad != B:
        pad = ((0, B_pad - B), (0, 0))
        w = jnp.pad(w, pad)
        vx = jnp.pad(vx, pad)

    # K = kron(M.T, I_D)  =>  Vx_flat @ K == flatten(M @ Vx, 1, 2)
    Mf = M.astype(jnp.float32)
    I_D = jnp.eye(D, dtype=jnp.float32)
    K = jnp.kron(Mf.T, I_D)                                     # (FD, FD)
    KW1 = K @ W1.astype(jnp.float32)                            # (FD, H1)
    Ks = jnp.kron(Mf.sum(axis=0, keepdims=True).T, I_D)         # (FD, D) == K @ kron(1_F, I_D)
    K_ext = jnp.concatenate([K, KW1, Ks], axis=1).astype(jnp.bfloat16)   # (FD, FD+H1+D)
    KW = FD + H1 + D

    W2b = W2.astype(jnp.bfloat16)                               # (H1, H2)
    b1f = b1.astype(jnp.float32)
    b2f = b2.astype(jnp.float32)
    b3f = b3.astype(jnp.float32)
    w3_row = W3.reshape(1, H2).astype(jnp.float32)              # row form for VPU reduce
    scal = jnp.stack([jnp.asarray(params['w0'], jnp.float32).reshape(()),
                      jnp.asarray(params['alpha'], jnp.float32).reshape(())])

    kernel = functools.partial(_hdeepfm_kernel, fd=FD, h1_dim=H1)

    y_col, reg_tiles = pl.pallas_call(
        kernel,
        grid=(nb,),
        in_specs=[
            pl.BlockSpec((TB, F), lambda i: (i, 0)),
            pl.BlockSpec((TB, FD), lambda i: (i, 0)),
            # Constant index_maps: weights are DMA'd once, not per step.
            pl.BlockSpec((FD, KW), lambda i: (0, 0)),
            pl.BlockSpec((1, H1), lambda i: (0, 0)),
            pl.BlockSpec((H1, H2), lambda i: (0, 0)),
            pl.BlockSpec((1, H2), lambda i: (0, 0)),
            pl.BlockSpec((1, H2), lambda i: (0, 0)),
            pl.BlockSpec((1, 1), lambda i: (0, 0)),
            pl.BlockSpec(memory_space=pltpu.MemorySpace.SMEM),
        ],
        out_specs=[
            pl.BlockSpec((TB, 1), lambda i: (i, 0)),
            pl.BlockSpec((1, 1, 1), lambda i: (i, 0, 0)),
        ],
        out_shape=[
            jax.ShapeDtypeStruct((B_pad, 1), jnp.float32),
            jax.ShapeDtypeStruct((nb, 1, 1), jnp.float32),
        ],
        compiler_params=pltpu.CompilerParams(
            dimension_semantics=("parallel",),
            vmem_limit_bytes=32 * 1024 * 1024),
    )(w, vx, K_ext, b1f, W2b, b2f, w3_row, b3f, scal)

    y = y_col[:B, 0]
    reg = jnp.sum(reg_tiles)          # per-tile partials; padded rows are 0
    return y, reg


def hdeepfm_reference(x, params):
    """Pure-JAX f32 reference mirroring the PyTorch forward (order == 2)."""
    w = params['w_table'][x]                               # (B, F)
    Vx = params['V_table'][0][x]                           # (B, F, D)
    V0 = jnp.einsum('fg,bgd->bfd', params['M'], Vx)        # (B, F, D)
    y = params['w0'] + jnp.sum(w, axis=1)                  # (B,)
    F = params['M'].shape[0]
    pair = jnp.einsum('bad,bcd->bac', V0, V0)
    a = jnp.arange(F)[:, None]
    c = jnp.arange(F)[None, :]
    y = y + jnp.sum(jnp.where(a > c, pair, 0.0), axis=(1, 2))
    vflat = V0.reshape(V0.shape[0], -1)
    h = jax.nn.relu(vflat @ params['W1'] + params['b1'])
    h = jax.nn.relu(h @ params['W2'] + params['b2'])
    deep = (h @ params['W3'] + params['b3'])[:, 0]
    reg = params['alpha'] * jnp.sum(w * w)                 # beta-term == 0 (empty V)
    return y + deep, reg


if __name__ == "__main__":
    key = jax.random.PRNGKey(0)
    ks = jax.random.split(key, 12)

    # small shapes consistent with the module
    B, F, n, D = 16, 8, 32, 16          # batch, num_field (M is FxF), vocab, emb dim
    order = 2
    H1, H2 = 32, 16                     # deep_layer = [32, 16]
    alpha = 0.01                        # (beta unused: empty-V trace == 0 at order 2)

    params = {
        'w0':      0.01 * jax.random.normal(ks[0], (), jnp.float32),
        'w_table': 0.1 * jax.random.normal(ks[1], (n,), jnp.float32),
        'V_table': 0.1 * jax.random.normal(ks[2], (order - 1, n, D), jnp.float32),
        'M':       0.3 * jax.random.normal(ks[3], (F, F), jnp.float32),
        'W1':      0.1 * jax.random.normal(ks[4], (F * D, H1), jnp.float32),
        'b1':      0.1 * jax.random.normal(ks[5], (1, H1), jnp.float32),
        'W2':      0.1 * jax.random.normal(ks[6], (H1, H2), jnp.float32),
        'b2':      0.1 * jax.random.normal(ks[7], (1, H2), jnp.float32),
        'W3':      0.1 * jax.random.normal(ks[8], (H2, 1), jnp.float32),
        'b3':      0.1 * jax.random.normal(ks[9], (1, 1), jnp.float32),
        'alpha':   jnp.float32(alpha),
    }
    x = jax.random.randint(ks[10], (B, F), 0, n, dtype=jnp.int32)

    y, reg = hdeepfm_forward(x, params)
    y, reg = jax.block_until_ready((y, reg))

    y_ref, reg_ref = hdeepfm_reference(x, params)
    # bf16-streamed embeddings/weights with f32 accumulation -> loosened y tol.
    assert jnp.allclose(y, y_ref, rtol=2e-2, atol=2e-2), (y, y_ref)
    assert jnp.allclose(reg, reg_ref, rtol=1e-4, atol=1e-4), (reg, reg_ref)

    print("KERNEL_OK")
</pallas_src>

<mosaic_0001>
module attributes {stable_mosaic.version = 11 : i64} {
  func.func @_hdeepfm_kernel(%arg0: i32, %arg1: memref<2048x8xf32, #tpu.memory_space<vmem>>, %arg2: memref<2048x128xbf16, #tpu.memory_space<vmem>>, %arg3: memref<128x176xbf16, #tpu.memory_space<vmem>>, %arg4: memref<1x32xf32, #tpu.memory_space<vmem>>, %arg5: memref<32x16xbf16, #tpu.memory_space<vmem>>, %arg6: memref<1x16xf32, #tpu.memory_space<vmem>>, %arg7: memref<1x16xf32, #tpu.memory_space<vmem>>, %arg8: memref<1x1xf32, #tpu.memory_space<vmem>>, %arg9: memref<2xf32, #tpu.memory_space<smem>>, %arg10: memref<2048x1xf32, #tpu.memory_space<vmem>>, %arg11: memref<1x1x1xf32, #tpu.memory_space<vmem>>) attributes {dimension_semantics = [#tpu.dimension_semantics<parallel>], iteration_bounds = array<i64: 1>, scalar_prefetch = 0 : i64, scratch_operands = 0 : i64, tpu.core_type = #tpu.core_type<tc>, window_params = [{transform_indices = @transform_0, window_bounds = array<i64: 2048, 8>}, {transform_indices = @transform_1, window_bounds = array<i64: 2048, 128>}, {pipeline_mode = #tpu.pipeline_mode<synchronous>, transform_indices = @transform_2, window_bounds = array<i64: 128, 176>}, {pipeline_mode = #tpu.pipeline_mode<synchronous>, transform_indices = @transform_3, window_bounds = array<i64: 1, 32>}, {pipeline_mode = #tpu.pipeline_mode<synchronous>, transform_indices = @transform_4, window_bounds = array<i64: 32, 16>}, {pipeline_mode = #tpu.pipeline_mode<synchronous>, transform_indices = @transform_5, window_bounds = array<i64: 1, 16>}, {pipeline_mode = #tpu.pipeline_mode<synchronous>, transform_indices = @transform_6, window_bounds = array<i64: 1, 16>}, {pipeline_mode = #tpu.pipeline_mode<synchronous>, transform_indices = @transform_7, window_bounds = array<i64: 1, 1>}, {transform_indices = @transform_8, window_bounds = array<i64: 2>}, {transform_indices = @transform_9, window_bounds = array<i64: 2048, 1>}, {transform_indices = @transform_10, window_bounds = array<i64: 1, 1, 1>}]} {
    %c0 = arith.constant 0 : index
    %c0_0 = arith.constant 0 : index
    %0 = vector.load %arg1[%c0, %c0_0] : memref<2048x8xf32, #tpu.memory_space<vmem>>, vector<2048x8xf32>
    %c0_1 = arith.constant 0 : index
    %c0_2 = arith.constant 0 : index
    %1 = vector.load %arg2[%c0_1, %c0_2] : memref<2048x128xbf16, #tpu.memory_space<vmem>>, vector<2048x128xbf16>
    %c0_3 = arith.constant 0 : index
    %2 = memref.load %arg9[%c0_3] : memref<2xf32, #tpu.memory_space<smem>>
    %c1 = arith.constant 1 : index
    %3 = memref.load %arg9[%c1] : memref<2xf32, #tpu.memory_space<smem>>
    %c0_4 = arith.constant 0 : index
    %c0_5 = arith.constant 0 : index
    %4 = vector.load %arg3[%c0_4, %c0_5] : memref<128x176xbf16, #tpu.memory_space<vmem>>, vector<128x176xbf16>
    %cst = arith.constant dense<0.000000e+00> : vector<2048x176xf32>
    %5 = tpu.matmul %1, %4, %cst {dimension_numbers = #tpu.dot_dimension_numbers<[1], [0], [0], [1], [0, 0, 1, 1], [], []>} : vector<2048x128xbf16>, vector<128x176xbf16>, vector<2048x176xf32> -> vector<2048x176xf32>
    %6 = vector.extract_strided_slice %5 {offsets = [0, 0], sizes = [2048, 128], strides = [1, 1]} : vector<2048x176xf32> to vector<2048x128xf32>
    %7 = vector.extract_strided_slice %5 {offsets = [0, 128], sizes = [2048, 32], strides = [1, 1]} : vector<2048x176xf32> to vector<2048x32xf32>
    %c0_6 = arith.constant 0 : index
    %c0_7 = arith.constant 0 : index
    %8 = vector.load %arg4[%c0_6, %c0_7] : memref<1x32xf32, #tpu.memory_space<vmem>>, vector<1x32xf32>
    %9 = vector.broadcast %8 : vector<1x32xf32> to vector<2048x32xf32>
    %10 = arith.addf %7, %9 : vector<2048x32xf32>
    %cst_8 = arith.constant 0.000000e+00 : f32
    %11 = vector.broadcast %cst_8 : f32 to vector<2048x32xf32>
    %12 = arith.maximumf %10, %11 : vector<2048x32xf32>
    %13 = vector.extract_strided_slice %5 {offsets = [0, 160], sizes = [2048, 16], strides = [1, 1]} : vector<2048x176xf32> to vector<2048x16xf32>
    %cst_9 = arith.constant dense<0.000000e+00> : vector<2048xf32>
    %14 = vector.multi_reduction <add>, %0, %cst_9 [1] : vector<2048x8xf32> to vector<2048xf32>
    %15 = vector.shape_cast %14 : vector<2048xf32> to vector<2048x1xf32>
    %16 = vector.broadcast %2 : f32 to vector<2048x1xf32>
    %17 = arith.addf %16, %15 : vector<2048x1xf32>
    %18 = arith.mulf %13, %13 : vector<2048x16xf32>
    %cst_10 = arith.constant dense<0.000000e+00> : vector<2048xf32>
    %19 = vector.multi_reduction <add>, %18, %cst_10 [1] : vector<2048x16xf32> to vector<2048xf32>
    %20 = vector.shape_cast %19 : vector<2048xf32> to vector<2048x1xf32>
    %21 = arith.mulf %6, %6 : vector<2048x128xf32>
    %cst_11 = arith.constant dense<0.000000e+00> : vector<2048xf32>
    %22 = vector.multi_reduction <add>, %21, %cst_11 [1] : vector<2048x128xf32> to vector<2048xf32>
    %23 = vector.shape_cast %22 : vector<2048xf32> to vector<2048x1xf32>
    %24 = arith.subf %20, %23 : vector<2048x1xf32>
    %cst_12 = arith.constant 5.000000e-01 : f32
    %25 = vector.broadcast %cst_12 : f32 to vector<2048x1xf32>
    %26 = arith.mulf %25, %24 : vector<2048x1xf32>
    %27 = arith.addf %17, %26 : vector<2048x1xf32>
    %28 = arith.truncf %12 : vector<2048x32xf32> to vector<2048x32xbf16>
    %c0_13 = arith.constant 0 : index
    %c0_14 = arith.constant 0 : index
    %29 = vector.load %arg5[%c0_13, %c0_14] : memref<32x16xbf16, #tpu.memory_space<vmem>>, vector<32x16xbf16>
    %cst_15 = arith.constant dense<0.000000e+00> : vector<2048x16xf32>
    %30 = tpu.matmul %28, %29, %cst_15 {dimension_numbers = #tpu.dot_dimension_numbers<[1], [0], [0], [1], [0, 0, 1, 1], [], []>} : vector<2048x32xbf16>, vector<32x16xbf16>, vector<2048x16xf32> -> vector<2048x16xf32>
    %c0_16 = arith.constant 0 : index
    %c0_17 = arith.constant 0 : index
    %31 = vector.load %arg6[%c0_16, %c0_17] : memref<1x16xf32, #tpu.memory_space<vmem>>, vector<1x16xf32>
    %32 = vector.broadcast %31 : vector<1x16xf32> to vector<2048x16xf32>
    %33 = arith.addf %30, %32 : vector<2048x16xf32>
    %cst_18 = arith.constant 0.000000e+00 : f32
    %34 = vector.broadcast %cst_18 : f32 to vector<2048x16xf32>
    %35 = arith.maximumf %33, %34 : vector<2048x16xf32>
    %c0_19 = arith.constant 0 : index
    %c0_20 = arith.constant 0 : index
    %36 = vector.load %arg7[%c0_19, %c0_20] : memref<1x16xf32, #tpu.memory_space<vmem>>, vector<1x16xf32>
    %37 = vector.broadcast %36 : vector<1x16xf32> to vector<2048x16xf32>
    %38 = arith.mulf %35, %37 : vector<2048x16xf32>
    %cst_21 = arith.constant dense<0.000000e+00> : vector<2048xf32>
    %39 = vector.multi_reduction <add>, %38, %cst_21 [1] : vector<2048x16xf32> to vector<2048xf32>
    %40 = vector.shape_cast %39 : vector<2048xf32> to vector<2048x1xf32>
    %c0_22 = arith.constant 0 : index
    %c0_23 = arith.constant 0 : index
    %41 = vector.load %arg8[%c0_22, %c0_23] : memref<1x1xf32, #tpu.memory_space<vmem>>, vector<1x1xf32>
    %42 = vector.broadcast %41 : vector<1x1xf32> to vector<2048x1xf32>
    %43 = arith.addf %40, %42 : vector<2048x1xf32>
    %44 = arith.addf %27, %43 : vector<2048x1xf32>
    %c0_24 = arith.constant 0 : index
    %c0_25 = arith.constant 0 : index
    %45 = vector.load %arg10[%c0_24, %c0_25] : memref<2048x1xf32, #tpu.memory_space<vmem>>, vector<2048x1xf32>
    tpu.vector_store %arg10[%c0_24, %c0_25], %44 {strides = array<i32>} : memref<2048x1xf32, #tpu.memory_space<vmem>>, vector<2048x1xf32>,
    %46 = arith.mulf %0, %0 : vector<2048x8xf32>
    %47 = vector.shape_cast %46 : vector<2048x8xf32> to vector<1x2048x8xf32>
    %cst_26 = arith.constant dense<0.000000e+00> : vector<1xf32>
    %48 = vector.multi_reduction <add>, %47, %cst_26 [1, 2] : vector<1x2048x8xf32> to vector<1xf32>
    %49 = vector.shape_cast %48 : vector<1xf32> to vector<1x1x1xf32>
    %50 = vector.extract %49[0, 0, 0] : f32 from vector<1x1x1xf32>
    %51 = arith.mulf %3, %50 : f32
    %52 = vector.broadcast %51 : f32 to vector<1x1x1xf32>
    %c0_27 = arith.constant 0 : index
    %c0_28 = arith.constant 0 : index
    %c0_29 = arith.constant 0 : index
    %53 = vector.load %arg11[%c0_27, %c0_28, %c0_29] : memref<1x1x1xf32, #tpu.memory_space<vmem>>, vector<1x1x1xf32>
    tpu.vector_store %arg11[%c0_27, %c0_28, %c0_29], %52 {strides = array<i32>} : memref<1x1x1xf32, #tpu.memory_space<vmem>>, vector<1x1x1xf32>,
    return
  }
  func.func @transform_0(%arg0: i32) -> (i32, i32) {
    %c0_i32 = arith.constant 0 : i32
    %c0_i32_0 = arith.constant 0 : i32
    return %arg0, %c0_i32 : i32, i32
  }
  func.func @transform_1(%arg0: i32) -> (i32, i32) {
    %c0_i32 = arith.constant 0 : i32
    %c0_i32_0 = arith.constant 0 : i32
    return %arg0, %c0_i32 : i32, i32
  }
  func.func @transform_2(%arg0: i32) -> (i32, i32) {
    %c0_i32 = arith.constant 0 : i32
    %c0_i32_0 = arith.constant 0 : i32
    %c0_i32_1 = arith.constant 0 : i32
    return %c0_i32, %c0_i32_0 : i32, i32
  }
  func.func @transform_3(%arg0: i32) -> (i32, i32) {
    %c0_i32 = arith.constant 0 : i32
    %c0_i32_0 = arith.constant 0 : i32
    %c0_i32_1 = arith.constant 0 : i32
    return %c0_i32, %c0_i32_0 : i32, i32
  }
  func.func @transform_4(%arg0: i32) -> (i32, i32) {
    %c0_i32 = arith.constant 0 : i32
    %c0_i32_0 = arith.constant 0 : i32
    %c0_i32_1 = arith.constant 0 : i32
    return %c0_i32, %c0_i32_0 : i32, i32
  }
  func.func @transform_5(%arg0: i32) -> (i32, i32) {
    %c0_i32 = arith.constant 0 : i32
    %c0_i32_0 = arith.constant 0 : i32
    %c0_i32_1 = arith.constant 0 : i32
    return %c0_i32, %c0_i32_0 : i32, i32
  }
  func.func @transform_6(%arg0: i32) -> (i32, i32) {
    %c0_i32 = arith.constant 0 : i32
    %c0_i32_0 = arith.constant 0 : i32
    %c0_i32_1 = arith.constant 0 : i32
    return %c0_i32, %c0_i32_0 : i32, i32
  }
  func.func @transform_7(%arg0: i32) -> (i32, i32) {
    %c0_i32 = arith.constant 0 : i32
    %c0_i32_0 = arith.constant 0 : i32
    %c0_i32_1 = arith.constant 0 : i32
    return %c0_i32, %c0_i32_0 : i32, i32
  }
  func.func @transform_8(%arg0: i32) -> i32 {
    %c0_i32 = arith.constant 0 : i32
    %c0_i32_0 = arith.constant 0 : i32
    return %c0_i32 : i32
  }
  func.func @transform_9(%arg0: i32) -> (i32, i32) {
    %c0_i32 = arith.constant 0 : i32
    %c0_i32_0 = arith.constant 0 : i32
    return %arg0, %c0_i32 : i32, i32
  }
  func.func @transform_10(%arg0: i32) -> (i32, i32, i32) {
    %c0_i32 = arith.constant 0 : i32
    %c0_i32_0 = arith.constant 0 : i32
    %c0_i32_1 = arith.constant 0 : i32
    return %arg0, %c0_i32, %c0_i32_0 : i32, i32, i32
  }
}

</mosaic_0001>

<llo_original>
// kernel: tpu_custom_call.1
$region0: #{tpu_custom_call.1}
  #allocation0 [shape = 'u32[]', space=smem, size = 0x4, offset = 0x4, fixed_abs, tag = 'smem constant byte address 0x4 - core index']
  #allocation1 [shape = 'u32[144,128]{1,0:T(1,128)}', space=vmem, size = 0x12000, scoped, tag = 'internal scratch']
  #allocation2 [shape = 'f32[1,1]{1,0:T(1,128)S(1)}', space=vmem, size = 0x200, scoped, tag = 'scoped memory for tpu_custom_call.1']
  %s0 = inlined_call_operand.vmem [shape: f32[2048,8], index: 0, kind: input, shape index: {}]
  %s1 = inlined_call_operand.vmem [shape: bf16[2048,128], index: 1, kind: input, shape index: {}]
  %s2 = inlined_call_operand.vmem [shape: bf16[128,176], index: 2, kind: input, shape index: {}]
  %s3 = inlined_call_operand.vmem [shape: f32[1,32], index: 3, kind: input, shape index: {}]
  %s4 = inlined_call_operand.vmem [shape: bf16[32,16], index: 4, kind: input, shape index: {}]
  %s5 = inlined_call_operand.vmem [shape: f32[1,16], index: 5, kind: input, shape index: {}]
  %s6 = inlined_call_operand.vmem [shape: f32[1,16], index: 6, kind: input, shape index: {}]
  %s7 = inlined_call_operand.<no memory space> [shape: f32[1,1], index: 7, kind: input, shape index: {}]
  %s8 = inlined_call_operand.vmem [shape: f32[2], index: 8, kind: input, shape index: {}]
  %s9 = inlined_call_operand.vmem [shape: f32[2048,1], index: 9, kind: output, shape index: {0}]
  %s10 = inlined_call_operand.hbm [shape: f32[1,1,1], index: 10, kind: output, shape index: {1}]
  %11 = xla_tuple %s9, %s10
  %s12 = sld [smem:[#allocation0]]
  $region58: #{tpu_custom_call.1} parent=0
    _
  %s14 = ssub.s32 1, %s12
  %s15 = scalar_select 0, %s14, %s12
  %v16 = vstv %s7
  %17 = vst [vmem:[#allocation2] sm:$0x1] %v16
  $region1: #{tpu_custom_call.1} parent=0
    #allocation3 [shape = 'u8[512]{0}', space=smem, size = 0x200, scoped, tag = 'input window, operand 8, single buffered']
    #allocation4 [shape = 's32[1]{0}', space=sflag, size = 0x4, scoped, tag = 'scoped memory for tpu_custom_call.1']
    #allocation5 [shape = 's32[1]{0}', space=sflag, size = 0x4, scoped, tag = 'scoped memory for tpu_custom_call.1']
    #allocation6 [shape = 'u8[512]{0}', space=vmem, size = 0x400, scoped, tag = 'output window, operand 1, single buffered']
    %18 = vsyncpa [#allocation5], 0
    %19 = vsyncpa [#allocation4], 0
    // Predicated region
    $region2: #{tpu_custom_call.1} parent=1 // pred_check
      _
    $region3: #{tpu_custom_call.1} parent=1 // pred_check_branch
      %21 = sbr.rel (0) target = $region5
    $region4: #{tpu_custom_call.1} parent=1 // pred_region
      _
    $region5: #{tpu_custom_call.1} parent=1 // pred_fallthru
      _
    // Predicated region
    $region6: #{tpu_custom_call.1} parent=1 // pred_check
      _
    $region7: #{tpu_custom_call.1} parent=1 // pred_check_branch
      %23 = sbr.rel (0) target = $region9
    $region8: #{tpu_custom_call.1} parent=1 // pred_region
      _
    $region9: #{tpu_custom_call.1} parent=1 // pred_fallthru
      _
    // Predicated region
    $region10: #{tpu_custom_call.1} parent=1 // pred_check
      _
    $region11: #{tpu_custom_call.1} parent=1 // pred_check_branch
      %25 = sbr.rel (0) target = $region13
    $region12: #{tpu_custom_call.1} parent=1 // pred_region
      _
    $region13: #{tpu_custom_call.1} parent=1 // pred_fallthru
      _
    // Predicated region
    $region14: #{tpu_custom_call.1} parent=1 // pred_check
      _
    $region15: #{tpu_custom_call.1} parent=1 // pred_check_branch
      %27 = sbr.rel (0) target = $region17
    $region16: #{tpu_custom_call.1} parent=1 // pred_region
      _
    $region17: #{tpu_custom_call.1} parent=1 // pred_fallthru
      _
    // Predicated region
    $region18: #{tpu_custom_call.1} parent=1 // pred_check
      _
    $region19: #{tpu_custom_call.1} parent=1 // pred_check_branch
      %29 = sbr.rel (0) target = $region21
    $region20: #{tpu_custom_call.1} parent=1 // pred_region
      _
    $region21: #{tpu_custom_call.1} parent=1 // pred_fallthru
      _
    // Predicated region
    $region22: #{tpu_custom_call.1} parent=1 // pred_check
      _
    $region23: #{tpu_custom_call.1} parent=1 // pred_check_branch
      %31 = sbr.rel (0) target = $region25
    $region24: #{tpu_custom_call.1} parent=1 // pred_region
      _
    $region25: #{tpu_custom_call.1} parent=1 // pred_fallthru
      _
    // Predicated region
    $region26: #{tpu_custom_call.1} parent=1 // pred_check
      _
    $region27: #{tpu_custom_call.1} parent=1 // pred_check_branch
      %33 = sbr.rel (0) target = $region29
    $region28: #{tpu_custom_call.1} parent=1 // pred_region
      _
    $region29: #{tpu_custom_call.1} parent=1 // pred_fallthru
      _
    // Predicated region
    $region30: #{tpu_custom_call.1} parent=1 // pred_check
      _
    $region31: #{tpu_custom_call.1} parent=1 // pred_check_branch
      %35 = sbr.rel (0) target = $region33
    $region32: #{tpu_custom_call.1} parent=1 // pred_region
      _
    $region33: #{tpu_custom_call.1} parent=1 // pred_fallthru
      _
    // Predicated region
    $region34: #{tpu_custom_call.1} parent=1 // pred_check
      _
    $region35: #{tpu_custom_call.1} parent=1 // pred_check_branch
      %37 = sbr.rel (0) target = $region37
    $region36: #{tpu_custom_call.1} parent=1 // pred_region
      %s39 = ssub.s32 16, 16
      %40 = vsyncadd [#allocation5], %s39
      %s42 = sshll.u32 %s8, 4
      %s43 = int_to_ptr.vmem [resolvable:$true] %s42
      %45 = dma.vmem_to_smem %s43, 16, [#allocation3], [#allocation5]
    $region37: #{tpu_custom_call.1} parent=1 // pred_fallthru
      _
    // Predicated region
    $region38: #{tpu_custom_call.1} parent=1 // pred_check
      _
    $region39: #{tpu_custom_call.1} parent=1 // pred_check_branch
      %47 = sbr.rel (0) target = $region41
    $region40: #{tpu_custom_call.1} parent=1 // pred_region
      %48 = dma.done [#allocation5], 16
    $region41: #{tpu_custom_call.1} parent=1 // pred_fallthru
      _
    %49 = sfence
    %v51 = vld [vmem:[%s0] sm:$0xff]
    %v52 = vld [vmem:[%s0 + $0x8] sm:$0xff]
    %v53 = vld [vmem:[%s0 + $0x10] sm:$0xff]
    %v54 = vld [vmem:[%s0 + $0x18] sm:$0xff]
    %v55 = vld [vmem:[%s0 + $0x20] sm:$0xff]
    %v56 = vld [vmem:[%s0 + $0x28] sm:$0xff]
    %v57 = vld [vmem:[%s0 + $0x30] sm:$0xff]
    %v58 = vld [vmem:[%s0 + $0x38] sm:$0xff]
    %v59 = vld [vmem:[%s0 + $0x40] sm:$0xff]
    %v60 = vld [vmem:[%s0 + $0x48] sm:$0xff]
    %v61 = vld [vmem:[%s0 + $0x50] sm:$0xff]
    %v62 = vld [vmem:[%s0 + $0x58] sm:$0xff]
    %v63 = vld [vmem:[%s0 + $0x60] sm:$0xff]
    %v64 = vld [vmem:[%s0 + $0x68] sm:$0xff]
    %v65 = vld [vmem:[%s0 + $0x70] sm:$0xff]
    %v66 = vld [vmem:[%s0 + $0x78] sm:$0xff]
    %v67 = vld [vmem:[%s0 + $0x80] sm:$0xff]
    %v68 = vld [vmem:[%s0 + $0x88] sm:$0xff]
    %v69 = vld [vmem:[%s0 + $0x90] sm:$0xff]
    %v70 = vld [vmem:[%s0 + $0x98] sm:$0xff]
    %v71 = vld [vmem:[%s0 + $0xa0] sm:$0xff]
    %v72 = vld [vmem:[%s0 + $0xa8] sm:$0xff]
    %v73 = vld [vmem:[%s0 + $0xb0] sm:$0xff]
    %v74 = vld [vmem:[%s0 + $0xb8] sm:$0xff]
    %v75 = vld [vmem:[%s0 + $0xc0] sm:$0xff]
    %v76 = vld [vmem:[%s0 + $0xc8] sm:$0xff]
    %v77 = vld [vmem:[%s0 + $0xd0] sm:$0xff]
    %v78 = vld [vmem:[%s0 + $0xd8] sm:$0xff]
    %v79 = vld [vmem:[%s0 + $0xe0] sm:$0xff]
    %v80 = vld [vmem:[%s0 + $0xe8] sm:$0xff]
    %v81 = vld [vmem:[%s0 + $0xf0] sm:$0xff]
    %v82 = vld [vmem:[%s0 + $0xf8] sm:$0xff]
    %v83 = vld [vmem:[%s0 + $0x100] sm:$0xff]
    %v84 = vld [vmem:[%s0 + $0x108] sm:$0xff]
    %v85 = vld [vmem:[%s0 + $0x110] sm:$0xff]
    %v86 = vld [vmem:[%s0 + $0x118] sm:$0xff]
    %v87 = vld [vmem:[%s0 + $0x120] sm:$0xff]
    %v88 = vld [vmem:[%s0 + $0x128] sm:$0xff]
    %v89 = vld [vmem:[%s0 + $0x130] sm:$0xff]
    %v90 = vld [vmem:[%s0 + $0x138] sm:$0xff]
    %v91 = vld [vmem:[%s0 + $0x140] sm:$0xff]
    %v92 = vld [vmem:[%s0 + $0x148] sm:$0xff]
    %v93 = vld [vmem:[%s0 + $0x150] sm:$0xff]
    %v94 = vld [vmem:[%s0 + $0x158] sm:$0xff]
    %v95 = vld [vmem:[%s0 + $0x160] sm:$0xff]
    %v96 = vld [vmem:[%s0 + $0x168] sm:$0xff]
    %v97 = vld [vmem:[%s0 + $0x170] sm:$0xff]
    %v98 = vld [vmem:[%s0 + $0x178] sm:$0xff]
    %v99 = vld [vmem:[%s0 + $0x180] sm:$0xff]
    %v100 = vld [vmem:[%s0 + $0x188] sm:$0xff]
    %v101 = vld [vmem:[%s0 + $0x190] sm:$0xff]
    %v102 = vld [vmem:[%s0 + $0x198] sm:$0xff]
    %v103 = vld [vmem:[%s0 + $0x1a0] sm:$0xff]
    %v104 = vld [vmem:[%s0 + $0x1a8] sm:$0xff]
    %v105 = vld [vmem:[%s0 + $0x1b0] sm:$0xff]
    %v106 = vld [vmem:[%s0 + $0x1b8] sm:$0xff]
    %v107 = vld [vmem:[%s0 + $0x1c0] sm:$0xff]
    %v108 = vld [vmem:[%s0 + $0x1c8] sm:$0xff]
    %v109 = vld [vmem:[%s0 + $0x1d0] sm:$0xff]
    %v110 = vld [vmem:[%s0 + $0x1d8] sm:$0xff]
    %v111 = vld [vmem:[%s0 + $0x1e0] sm:$0xff]
    %v112 = vld [vmem:[%s0 + $0x1e8] sm:$0xff]
    %v113 = vld [vmem:[%s0 + $0x1f0] sm:$0xff]
    %v114 = vld [vmem:[%s0 + $0x1f8] sm:$0xff]
    %v115 = vld [vmem:[%s0 + $0x200] sm:$0xff]
    %v116 = vld [vmem:[%s0 + $0x208] sm:$0xff]
    %v117 = vld [vmem:[%s0 + $0x210] sm:$0xff]
    %v118 = vld [vmem:[%s0 + $0x218] sm:$0xff]
    %v119 = vld [vmem:[%s0 + $0x220] sm:$0xff]
    %v120 = vld [vmem:[%s0 + $0x228] sm:$0xff]
    %v121 = vld [vmem:[%s0 + $0x230] sm:$0xff]
    %v122 = vld [vmem:[%s0 + $0x238] sm:$0xff]
    %v123 = vld [vmem:[%s0 + $0x240] sm:$0xff]
    %v124 = vld [vmem:[%s0 + $0x248] sm:$0xff]
    %v125 = vld [vmem:[%s0 + $0x250] sm:$0xff]
    %v126 = vld [vmem:[%s0 + $0x258] sm:$0xff]
    %v127 = vld [vmem:[%s0 + $0x260] sm:$0xff]
    %v128 = vld [vmem:[%s0 + $0x268] sm:$0xff]
    %v129 = vld [vmem:[%s0 + $0x270] sm:$0xff]
    %v130 = vld [vmem:[%s0 + $0x278] sm:$0xff]
    %v131 = vld [vmem:[%s0 + $0x280] sm:$0xff]
    %v132 = vld [vmem:[%s0 + $0x288] sm:$0xff]
    %v133 = vld [vmem:[%s0 + $0x290] sm:$0xff]
    %v134 = vld [vmem:[%s0 + $0x298] sm:$0xff]
    %v135 = vld [vmem:[%s0 + $0x2a0] sm:$0xff]
    %v136 = vld [vmem:[%s0 + $0x2a8] sm:$0xff]
    %v137 = vld [vmem:[%s0 + $0x2b0] sm:$0xff]
    %v138 = vld [vmem:[%s0 + $0x2b8] sm:$0xff]
    %v139 = vld [vmem:[%s0 + $0x2c0] sm:$0xff]
    %v140 = vld [vmem:[%s0 + $0x2c8] sm:$0xff]
    %v141 = vld [vmem:[%s0 + $0x2d0] sm:$0xff]
    %v142 = vld [vmem:[%s0 + $0x2d8] sm:$0xff]
    %v143 = vld [vmem:[%s0 + $0x2e0] sm:$0xff]
    %v144 = vld [vmem:[%s0 + $0x2e8] sm:$0xff]
    %v145 = vld [vmem:[%s0 + $0x2f0] sm:$0xff]
    %v146 = vld [vmem:[%s0 + $0x2f8] sm:$0xff]
    %v147 = vld [vmem:[%s0 + $0x300] sm:$0xff]
    %v148 = vld [vmem:[%s0 + $0x308] sm:$0xff]
    %v149 = vld [vmem:[%s0 + $0x310] sm:$0xff]
    %v150 = vld [vmem:[%s0 + $0x318] sm:$0xff]
    %v151 = vld [vmem:[%s0 + $0x320] sm:$0xff]
    %v152 = vld [vmem:[%s0 + $0x328] sm:$0xff]
    %v153 = vld [vmem:[%s0 + $0x330] sm:$0xff]
    %v154 = vld [vmem:[%s0 + $0x338] sm:$0xff]
    %v155 = vld [vmem:[%s0 + $0x340] sm:$0xff]
    %v156 = vld [vmem:[%s0 + $0x348] sm:$0xff]
    %v157 = vld [vmem:[%s0 + $0x350] sm:$0xff]
    %v158 = vld [vmem:[%s0 + $0x358] sm:$0xff]
    %v159 = vld [vmem:[%s0 + $0x360] sm:$0xff]
    %v160 = vld [vmem:[%s0 + $0x368] sm:$0xff]
    %v161 = vld [vmem:[%s0 + $0x370] sm:$0xff]
    %v162 = vld [vmem:[%s0 + $0x378] sm:$0xff]
    %v163 = vld [vmem:[%s0 + $0x380] sm:$0xff]
    %v164 = vld [vmem:[%s0 + $0x388] sm:$0xff]
    %v165 = vld [vmem:[%s0 + $0x390] sm:$0xff]
    %v166 = vld [vmem:[%s0 + $0x398] sm:$0xff]
    %v167 = vld [vmem:[%s0 + $0x3a0] sm:$0xff]
    %v168 = vld [vmem:[%s0 + $0x3a8] sm:$0xff]
    %v169 = vld [vmem:[%s0 + $0x3b0] sm:$0xff]
    %v170 = vld [vmem:[%s0 + $0x3b8] sm:$0xff]
    %v171 = vld [vmem:[%s0 + $0x3c0] sm:$0xff]
    %v172 = vld [vmem:[%s0 + $0x3c8] sm:$0xff]
    %v173 = vld [vmem:[%s0 + $0x3d0] sm:$0xff]
    %v174 = vld [vmem:[%s0 + $0x3d8] sm:$0xff]
    %v175 = vld [vmem:[%s0 + $0x3e0] sm:$0xff]
    %v176 = vld [vmem:[%s0 + $0x3e8] sm:$0xff]
    %v177 = vld [vmem:[%s0 + $0x3f0] sm:$0xff]
    %v178 = vld [vmem:[%s0 + $0x3f8] sm:$0xff]
    %v179 = vld [vmem:[%s0 + $0x400] sm:$0xff]
    %v180 = vld [vmem:[%s0 + $0x408] sm:$0xff]
    %v181 = vld [vmem:[%s0 + $0x410] sm:$0xff]
    %v182 = vld [vmem:[%s0 + $0x418] sm:$0xff]
    %v183 = vld [vmem:[%s0 + $0x420] sm:$0xff]
    %v184 = vld [vmem:[%s0 + $0x428] sm:$0xff]
    %v185 = vld [vmem:[%s0 + $0x430] sm:$0xff]
    %v186 = vld [vmem:[%s0 + $0x438] sm:$0xff]
    %v187 = vld [vmem:[%s0 + $0x440] sm:$0xff]
    %v188 = vld [vmem:[%s0 + $0x448] sm:$0xff]
    %v189 = vld [vmem:[%s0 + $0x450] sm:$0xff]
    %v190 = vld [vmem:[%s0 + $0x458] sm:$0xff]
    %v191 = vld [vmem:[%s0 + $0x460] sm:$0xff]
    %v192 = vld [vmem:[%s0 + $0x468] sm:$0xff]
    %v193 = vld [vmem:[%s0 + $0x470] sm:$0xff]
    %v194 = vld [vmem:[%s0 + $0x478] sm:$0xff]
    %v195 = vld [vmem:[%s0 + $0x480] sm:$0xff]
    %v196 = vld [vmem:[%s0 + $0x488] sm:$0xff]
    %v197 = vld [vmem:[%s0 + $0x490] sm:$0xff]
    %v198 = vld [vmem:[%s0 + $0x498] sm:$0xff]
    %v199 = vld [vmem:[%s0 + $0x4a0] sm:$0xff]
    %v200 = vld [vmem:[%s0 + $0x4a8] sm:$0xff]
    %v201 = vld [vmem:[%s0 + $0x4b0] sm:$0xff]
    %v202 = vld [vmem:[%s0 + $0x4b8] sm:$0xff]
    %v203 = vld [vmem:[%s0 + $0x4c0] sm:$0xff]
    %v204 = vld [vmem:[%s0 + $0x4c8] sm:$0xff]
    %v205 = vld [vmem:[%s0 + $0x4d0] sm:$0xff]
    %v206 = vld [vmem:[%s0 + $0x4d8] sm:$0xff]
    %v207 = vld [vmem:[%s0 + $0x4e0] sm:$0xff]
    %v208 = vld [vmem:[%s0 + $0x4e8] sm:$0xff]
    %v209 = vld [vmem:[%s0 + $0x4f0] sm:$0xff]
    %v210 = vld [vmem:[%s0 + $0x4f8] sm:$0xff]
    %v211 = vld [vmem:[%s0 + $0x500] sm:$0xff]
    %v212 = vld [vmem:[%s0 + $0x508] sm:$0xff]
    %v213 = vld [vmem:[%s0 + $0x510] sm:$0xff]
    %v214 = vld [vmem:[%s0 + $0x518] sm:$0xff]
    %v215 = vld [vmem:[%s0 + $0x520] sm:$0xff]
    %v216 = vld [vmem:[%s0 + $0x528] sm:$0xff]
    %v217 = vld [vmem:[%s0 + $0x530] sm:$0xff]
    %v218 = vld [vmem:[%s0 + $0x538] sm:$0xff]
    %v219 = vld [vmem:[%s0 + $0x540] sm:$0xff]
    %v220 = vld [vmem:[%s0 + $0x548] sm:$0xff]
    %v221 = vld [vmem:[%s0 + $0x550] sm:$0xff]
    %v222 = vld [vmem:[%s0 + $0x558] sm:$0xff]
    %v223 = vld [vmem:[%s0 + $0x560] sm:$0xff]
    %v224 = vld [vmem:[%s0 + $0x568] sm:$0xff]
    %v225 = vld [vmem:[%s0 + $0x570] sm:$0xff]
    %v226 = vld [vmem:[%s0 + $0x578] sm:$0xff]
    %v227 = vld [vmem:[%s0 + $0x580] sm:$0xff]
    %v228 = vld [vmem:[%s0 + $0x588] sm:$0xff]
    %v229 = vld [vmem:[%s0 + $0x590] sm:$0xff]
    %v230 = vld [vmem:[%s0 + $0x598] sm:$0xff]
    %v231 = vld [vmem:[%s0 + $0x5a0] sm:$0xff]
    %v232 = vld [vmem:[%s0 + $0x5a8] sm:$0xff]
    %v233 = vld [vmem:[%s0 + $0x5b0] sm:$0xff]
    %v234 = vld [vmem:[%s0 + $0x5b8] sm:$0xff]
    %v235 = vld [vmem:[%s0 + $0x5c0] sm:$0xff]
    %v236 = vld [vmem:[%s0 + $0x5c8] sm:$0xff]
    %v237 = vld [vmem:[%s0 + $0x5d0] sm:$0xff]
    %v238 = vld [vmem:[%s0 + $0x5d8] sm:$0xff]
    %v239 = vld [vmem:[%s0 + $0x5e0] sm:$0xff]
    %v240 = vld [vmem:[%s0 + $0x5e8] sm:$0xff]
    %v241 = vld [vmem:[%s0 + $0x5f0] sm:$0xff]
    %v242 = vld [vmem:[%s0 + $0x5f8] sm:$0xff]
    %v243 = vld [vmem:[%s0 + $0x600] sm:$0xff]
    %v244 = vld [vmem:[%s0 + $0x608] sm:$0xff]
    %v245 = vld [vmem:[%s0 + $0x610] sm:$0xff]
    %v246 = vld [vmem:[%s0 + $0x618] sm:$0xff]
    %v247 = vld [vmem:[%s0 + $0x620] sm:$0xff]
    %v248 = vld [vmem:[%s0 + $0x628] sm:$0xff]
    %v249 = vld [vmem:[%s0 + $0x630] sm:$0xff]
    %v250 = vld [vmem:[%s0 + $0x638] sm:$0xff]
    %v251 = vld [vmem:[%s0 + $0x640] sm:$0xff]
    %v252 = vld [vmem:[%s0 + $0x648] sm:$0xff]
    %v253 = vld [vmem:[%s0 + $0x650] sm:$0xff]
    %v254 = vld [vmem:[%s0 + $0x658] sm:$0xff]
    %v255 = vld [vmem:[%s0 + $0x660] sm:$0xff]
    %v256 = vld [vmem:[%s0 + $0x668] sm:$0xff]
    %v257 = vld [vmem:[%s0 + $0x670] sm:$0xff]
    %v258 = vld [vmem:[%s0 + $0x678] sm:$0xff]
    %v259 = vld [vmem:[%s0 + $0x680] sm:$0xff]
    %v260 = vld [vmem:[%s0 + $0x688] sm:$0xff]
    %v261 = vld [vmem:[%s0 + $0x690] sm:$0xff]
    %v262 = vld [vmem:[%s0 + $0x698] sm:$0xff]
    %v263 = vld [vmem:[%s0 + $0x6a0] sm:$0xff]
    %v264 = vld [vmem:[%s0 + $0x6a8] sm:$0xff]
    %v265 = vld [vmem:[%s0 + $0x6b0] sm:$0xff]
    %v266 = vld [vmem:[%s0 + $0x6b8] sm:$0xff]
    %v267 = vld [vmem:[%s0 + $0x6c0] sm:$0xff]
    %v268 = vld [vmem:[%s0 + $0x6c8] sm:$0xff]
    %v269 = vld [vmem:[%s0 + $0x6d0] sm:$0xff]
    %v270 = vld [vmem:[%s0 + $0x6d8] sm:$0xff]
    %v271 = vld [vmem:[%s0 + $0x6e0] sm:$0xff]
    %v272 = vld [vmem:[%s0 + $0x6e8] sm:$0xff]
    %v273 = vld [vmem:[%s0 + $0x6f0] sm:$0xff]
    %v274 = vld [vmem:[%s0 + $0x6f8] sm:$0xff]
    %v275 = vld [vmem:[%s0 + $0x700] sm:$0xff]
    %v276 = vld [vmem:[%s0 + $0x708] sm:$0xff]
    %v277 = vld [vmem:[%s0 + $0x710] sm:$0xff]
    %v278 = vld [vmem:[%s0 + $0x718] sm:$0xff]
    %v279 = vld [vmem:[%s0 + $0x720] sm:$0xff]
    %v280 = vld [vmem:[%s0 + $0x728] sm:$0xff]
    %v281 = vld [vmem:[%s0 + $0x730] sm:$0xff]
    %v282 = vld [vmem:[%s0 + $0x738] sm:$0xff]
    %v283 = vld [vmem:[%s0 + $0x740] sm:$0xff]
    %v284 = vld [vmem:[%s0 + $0x748] sm:$0xff]
    %v285 = vld [vmem:[%s0 + $0x750] sm:$0xff]
    %v286 = vld [vmem:[%s0 + $0x758] sm:$0xff]
    %v287 = vld [vmem:[%s0 + $0x760] sm:$0xff]
    %v288 = vld [vmem:[%s0 + $0x768] sm:$0xff]
    %v289 = vld [vmem:[%s0 + $0x770] sm:$0xff]
    %v290 = vld [vmem:[%s0 + $0x778] sm:$0xff]
    %v291 = vld [vmem:[%s0 + $0x780] sm:$0xff]
    %v292 = vld [vmem:[%s0 + $0x788] sm:$0xff]
    %v293 = vld [vmem:[%s0 + $0x790] sm:$0xff]
    %v294 = vld [vmem:[%s0 + $0x798] sm:$0xff]
    %v295 = vld [vmem:[%s0 + $0x7a0] sm:$0xff]
    %v296 = vld [vmem:[%s0 + $0x7a8] sm:$0xff]
    %v297 = vld [vmem:[%s0 + $0x7b0] sm:$0xff]
    %v298 = vld [vmem:[%s0 + $0x7b8] sm:$0xff]
    %v299 = vld [vmem:[%s0 + $0x7c0] sm:$0xff]
    %v300 = vld [vmem:[%s0 + $0x7c8] sm:$0xff]
    %v301 = vld [vmem:[%s0 + $0x7d0] sm:$0xff]
    %v302 = vld [vmem:[%s0 + $0x7d8] sm:$0xff]
    %v303 = vld [vmem:[%s0 + $0x7e0] sm:$0xff]
    %v304 = vld [vmem:[%s0 + $0x7e8] sm:$0xff]
    %v305 = vld [vmem:[%s0 + $0x7f0] sm:$0xff]
    %v306 = vld [vmem:[%s0 + $0x7f8] sm:$0xff]
    %v307 = vld [vmem:[%s1] sm:$0xf]
    %v308 = vld [vmem:[%s1 + $0x4] sm:$0xf]
    %v309 = vld [vmem:[%s1 + $0x8] sm:$0xf]
    %v310 = vld [vmem:[%s1 + $0xc] sm:$0xf]
    %v311 = vld [vmem:[%s1 + $0x10] sm:$0xf]
    %v312 = vld [vmem:[%s1 + $0x14] sm:$0xf]
    %v313 = vld [vmem:[%s1 + $0x18] sm:$0xf]
    %v314 = vld [vmem:[%s1 + $0x1c] sm:$0xf]
    %v315 = vld [vmem:[%s1 + $0x20] sm:$0xf]
    %v316 = vld [vmem:[%s1 + $0x24] sm:$0xf]
    %v317 = vld [vmem:[%s1 + $0x28] sm:$0xf]
    %v318 = vld [vmem:[%s1 + $0x2c] sm:$0xf]
    %v319 = vld [vmem:[%s1 + $0x30] sm:$0xf]
    %v320 = vld [vmem:[%s1 + $0x34] sm:$0xf]
    %v321 = vld [vmem:[%s1 + $0x38] sm:$0xf]
    %v322 = vld [vmem:[%s1 + $0x3c] sm:$0xf]
    %v323 = vld [vmem:[%s1 + $0x40] sm:$0xf]
    %v324 = vld [vmem:[%s1 + $0x44] sm:$0xf]
    %v325 = vld [vmem:[%s1 + $0x48] sm:$0xf]
    %v326 = vld [vmem:[%s1 + $0x4c] sm:$0xf]
    %v327 = vld [vmem:[%s1 + $0x50] sm:$0xf]
    %v328 = vld [vmem:[%s1 + $0x54] sm:$0xf]
    %v329 = vld [vmem:[%s1 + $0x58] sm:$0xf]
    %v330 = vld [vmem:[%s1 + $0x5c] sm:$0xf]
    %v331 = vld [vmem:[%s1 + $0x60] sm:$0xf]
    %v332 = vld [vmem:[%s1 + $0x64] sm:$0xf]
    %v333 = vld [vmem:[%s1 + $0x68] sm:$0xf]
    %v334 = vld [vmem:[%s1 + $0x6c] sm:$0xf]
    %v335 = vld [vmem:[%s1 + $0x70] sm:$0xf]
    %v336 = vld [vmem:[%s1 + $0x74] sm:$0xf]
    %v337 = vld [vmem:[%s1 + $0x78] sm:$0xf]
    %v338 = vld [vmem:[%s1 + $0x7c] sm:$0xf]
    %v339 = vld [vmem:[%s1 + $0x80] sm:$0xf]
    %v340 = vld [vmem:[%s1 + $0x84] sm:$0xf]
    %v341 = vld [vmem:[%s1 + $0x88] sm:$0xf]
    %v342 = vld [vmem:[%s1 + $0x8c] sm:$0xf]
    %v343 = vld [vmem:[%s1 + $0x90] sm:$0xf]
    %v344 = vld [vmem:[%s1 + $0x94] sm:$0xf]
    %v345 = vld [vmem:[%s1 + $0x98] sm:$0xf]
    %v346 = vld [vmem:[%s1 + $0x9c] sm:$0xf]
    %v347 = vld [vmem:[%s1 + $0xa0] sm:$0xf]
    %v348 = vld [vmem:[%s1 + $0xa4] sm:$0xf]
    %v349 = vld [vmem:[%s1 + $0xa8] sm:$0xf]
    %v350 = vld [vmem:[%s1 + $0xac] sm:$0xf]
    %v351 = vld [vmem:[%s1 + $0xb0] sm:$0xf]
    %v352 = vld [vmem:[%s1 + $0xb4] sm:$0xf]
    %v353 = vld [vmem:[%s1 + $0xb8] sm:$0xf]
    %v354 = vld [vmem:[%s1 + $0xbc] sm:$0xf]
    %v355 = vld [vmem:[%s1 + $0xc0] sm:$0xf]
    %v356 = vld [vmem:[%s1 + $0xc4] sm:$0xf]
    %v357 = vld [vmem:[%s1 + $0xc8] sm:$0xf]
    %v358 = vld [vmem:[%s1 + $0xcc] sm:$0xf]
    %v359 = vld [vmem:[%s1 + $0xd0] sm:$0xf]
    %v360 = vld [vmem:[%s1 + $0xd4] sm:$0xf]
    %v361 = vld [vmem:[%s1 + $0xd8] sm:$0xf]
    %v362 = vld [vmem:[%s1 + $0xdc] sm:$0xf]
    %v363 = vld [vmem:[%s1 + $0xe0] sm:$0xf]
    %v364 = vld [vmem:[%s1 + $0xe4] sm:$0xf]
    %v365 = vld [vmem:[%s1 + $0xe8] sm:$0xf]
    %v366 = vld [vmem:[%s1 + $0xec] sm:$0xf]
    %v367 = vld [vmem:[%s1 + $0xf0] sm:$0xf]
    %v368 = vld [vmem:[%s1 + $0xf4] sm:$0xf]
    %v369 = vld [vmem:[%s1 + $0xf8] sm:$0xf]
    %v370 = vld [vmem:[%s1 + $0xfc] sm:$0xf]
    %v371 = vld [vmem:[%s1 + $0x100] sm:$0xf]
    %v372 = vld [vmem:[%s1 + $0x104] sm:$0xf]
    %v373 = vld [vmem:[%s1 + $0x108] sm:$0xf]
    %v374 = vld [vmem:[%s1 + $0x10c] sm:$0xf]
    %v375 = vld [vmem:[%s1 + $0x110] sm:$0xf]
    %v376 = vld [vmem:[%s1 + $0x114] sm:$0xf]
    %v377 = vld [vmem:[%s1 + $0x118] sm:$0xf]
    %v378 = vld [vmem:[%s1 + $0x11c] sm:$0xf]
    %v379 = vld [vmem:[%s1 + $0x120] sm:$0xf]
    %v380 = vld [vmem:[%s1 + $0x124] sm:$0xf]
    %v381 = vld [vmem:[%s1 + $0x128] sm:$0xf]
    %v382 = vld [vmem:[%s1 + $0x12c] sm:$0xf]
    %v383 = vld [vmem:[%s1 + $0x130] sm:$0xf]
    %v384 = vld [vmem:[%s1 + $0x134] sm:$0xf]
    %v385 = vld [vmem:[%s1 + $0x138] sm:$0xf]
    %v386 = vld [vmem:[%s1 + $0x13c] sm:$0xf]
    %v387 = vld [vmem:[%s1 + $0x140] sm:$0xf]
    %v388 = vld [vmem:[%s1 + $0x144] sm:$0xf]
    %v389 = vld [vmem:[%s1 + $0x148] sm:$0xf]
    %v390 = vld [vmem:[%s1 + $0x14c] sm:$0xf]
    %v391 = vld [vmem:[%s1 + $0x150] sm:$0xf]
    %v392 = vld [vmem:[%s1 + $0x154] sm:$0xf]
    %v393 = vld [vmem:[%s1 + $0x158] sm:$0xf]
    %v394 = vld [vmem:[%s1 + $0x15c] sm:$0xf]
    %v395 = vld [vmem:[%s1 + $0x160] sm:$0xf]
    %v396 = vld [vmem:[%s1 + $0x164] sm:$0xf]
    %v397 = vld [vmem:[%s1 + $0x168] sm:$0xf]
    %v398 = vld [vmem:[%s1 + $0x16c] sm:$0xf]
    %v399 = vld [vmem:[%s1 + $0x170] sm:$0xf]
    %v400 = vld [vmem:[%s1 + $0x174] sm:$0xf]
    %v401 = vld [vmem:[%s1 + $0x178] sm:$0xf]
    %v402 = vld [vmem:[%s1 + $0x17c] sm:$0xf]
    %v403 = vld [vmem:[%s1 + $0x180] sm:$0xf]
    %v404 = vld [vmem:[%s1 + $0x184] sm:$0xf]
    %v405 = vld [vmem:[%s1 + $0x188] sm:$0xf]
    %v406 = vld [vmem:[%s1 + $0x18c] sm:$0xf]
    %v407 = vld [vmem:[%s1 + $0x190] sm:$0xf]
    %v408 = vld [vmem:[%s1 + $0x194] sm:$0xf]
    %v409 = vld [vmem:[%s1 + $0x198] sm:$0xf]
    %v410 = vld [vmem:[%s1 + $0x19c] sm:$0xf]
    %v411 = vld [vmem:[%s1 + $0x1a0] sm:$0xf]
    %v412 = vld [vmem:[%s1 + $0x1a4] sm:$0xf]
    %v413 = vld [vmem:[%s1 + $0x1a8] sm:$0xf]
    %v414 = vld [vmem:[%s1 + $0x1ac] sm:$0xf]
    %v415 = vld [vmem:[%s1 + $0x1b0] sm:$0xf]
    %v416 = vld [vmem:[%s1 + $0x1b4] sm:$0xf]
    %v417 = vld [vmem:[%s1 + $0x1b8] sm:$0xf]
    %v418 = vld [vmem:[%s1 + $0x1bc] sm:$0xf]
    %v419 = vld [vmem:[%s1 + $0x1c0] sm:$0xf]
    %v420 = vld [vmem:[%s1 + $0x1c4] sm:$0xf]
    %v421 = vld [vmem:[%s1 + $0x1c8] sm:$0xf]
    %v422 = vld [vmem:[%s1 + $0x1cc] sm:$0xf]
    %v423 = vld [vmem:[%s1 + $0x1d0] sm:$0xf]
    %v424 = vld [vmem:[%s1 + $0x1d4] sm:$0xf]
    %v425 = vld [vmem:[%s1 + $0x1d8] sm:$0xf]
    %v426 = vld [vmem:[%s1 + $0x1dc] sm:$0xf]
    %v427 = vld [vmem:[%s1 + $0x1e0] sm:$0xf]
    %v428 = vld [vmem:[%s1 + $0x1e4] sm:$0xf]
    %v429 = vld [vmem:[%s1 + $0x1e8] sm:$0xf]
    %v430 = vld [vmem:[%s1 + $0x1ec] sm:$0xf]
    %v431 = vld [vmem:[%s1 + $0x1f0] sm:$0xf]
    %v432 = vld [vmem:[%s1 + $0x1f4] sm:$0xf]
    %v433 = vld [vmem:[%s1 + $0x1f8] sm:$0xf]
    %v434 = vld [vmem:[%s1 + $0x1fc] sm:$0xf]
    %v435 = vld [vmem:[%s1 + $0x200] sm:$0xf]
    %v436 = vld [vmem:[%s1 + $0x204] sm:$0xf]
    %v437 = vld [vmem:[%s1 + $0x208] sm:$0xf]
    %v438 = vld [vmem:[%s1 + $0x20c] sm:$0xf]
    %v439 = vld [vmem:[%s1 + $0x210] sm:$0xf]
    %v440 = vld [vmem:[%s1 + $0x214] sm:$0xf]
    %v441 = vld [vmem:[%s1 + $0x218] sm:$0xf]
    %v442 = vld [vmem:[%s1 + $0x21c] sm:$0xf]
    %v443 = vld [vmem:[%s1 + $0x220] sm:$0xf]
    %v444 = vld [vmem:[%s1 + $0x224] sm:$0xf]
    %v445 = vld [vmem:[%s1 + $0x228] sm:$0xf]
    %v446 = vld [vmem:[%s1 + $0x22c] sm:$0xf]
    %v447 = vld [vmem:[%s1 + $0x230] sm:$0xf]
    %v448 = vld [vmem:[%s1 + $0x234] sm:$0xf]
    %v449 = vld [vmem:[%s1 + $0x238] sm:$0xf]
    %v450 = vld [vmem:[%s1 + $0x23c] sm:$0xf]
    %v451 = vld [vmem:[%s1 + $0x240] sm:$0xf]
    %v452 = vld [vmem:[%s1 + $0x244] sm:$0xf]
    %v453 = vld [vmem:[%s1 + $0x248] sm:$0xf]
    %v454 = vld [vmem:[%s1 + $0x24c] sm:$0xf]
    %v455 = vld [vmem:[%s1 + $0x250] sm:$0xf]
    %v456 = vld [vmem:[%s1 + $0x254] sm:$0xf]
    %v457 = vld [vmem:[%s1 + $0x258] sm:$0xf]
    %v458 = vld [vmem:[%s1 + $0x25c] sm:$0xf]
    %v459 = vld [vmem:[%s1 + $0x260] sm:$0xf]
    %v460 = vld [vmem:[%s1 + $0x264] sm:$0xf]
    %v461 = vld [vmem:[%s1 + $0x268] sm:$0xf]
    %v462 = vld [vmem:[%s1 + $0x26c] sm:$0xf]
    %v463 = vld [vmem:[%s1 + $0x270] sm:$0xf]
    %v464 = vld [vmem:[%s1 + $0x274] sm:$0xf]
    %v465 = vld [vmem:[%s1 + $0x278] sm:$0xf]
    %v466 = vld [vmem:[%s1 + $0x27c] sm:$0xf]
    %v467 = vld [vmem:[%s1 + $0x280] sm:$0xf]
    %v468 = vld [vmem:[%s1 + $0x284] sm:$0xf]
    %v469 = vld [vmem:[%s1 + $0x288] sm:$0xf]
    %v470 = vld [vmem:[%s1 + $0x28c] sm:$0xf]
    %v471 = vld [vmem:[%s1 + $0x290] sm:$0xf]
    %v472 = vld [vmem:[%s1 + $0x294] sm:$0xf]
    %v473 = vld [vmem:[%s1 + $0x298] sm:$0xf]
    %v474 = vld [vmem:[%s1 + $0x29c] sm:$0xf]
    %v475 = vld [vmem:[%s1 + $0x2a0] sm:$0xf]
    %v476 = vld [vmem:[%s1 + $0x2a4] sm:$0xf]
    %v477 = vld [vmem:[%s1 + $0x2a8] sm:$0xf]
    %v478 = vld [vmem:[%s1 + $0x2ac] sm:$0xf]
    %v479 = vld [vmem:[%s1 + $0x2b0] sm:$0xf]
    %v480 = vld [vmem:[%s1 + $0x2b4] sm:$0xf]
    %v481 = vld [vmem:[%s1 + $0x2b8] sm:$0xf]
    %v482 = vld [vmem:[%s1 + $0x2bc] sm:$0xf]
    %v483 = vld [vmem:[%s1 + $0x2c0] sm:$0xf]
    %v484 = vld [vmem:[%s1 + $0x2c4] sm:$0xf]
    %v485 = vld [vmem:[%s1 + $0x2c8] sm:$0xf]
    %v486 = vld [vmem:[%s1 + $0x2cc] sm:$0xf]
    %v487 = vld [vmem:[%s1 + $0x2d0] sm:$0xf]
    %v488 = vld [vmem:[%s1 + $0x2d4] sm:$0xf]
    %v489 = vld [vmem:[%s1 + $0x2d8] sm:$0xf]
    %v490 = vld [vmem:[%s1 + $0x2dc] sm:$0xf]
    %v491 = vld [vmem:[%s1 + $0x2e0] sm:$0xf]
    %v492 = vld [vmem:[%s1 + $0x2e4] sm:$0xf]
    %v493 = vld [vmem:[%s1 + $0x2e8] sm:$0xf]
    %v494 = vld [vmem:[%s1 + $0x2ec] sm:$0xf]
    %v495 = vld [vmem:[%s1 + $0x2f0] sm:$0xf]
    %v496 = vld [vmem:[%s1 + $0x2f4] sm:$0xf]
    %v497 = vld [vmem:[%s1 + $0x2f8] sm:$0xf]
    %v498 = vld [vmem:[%s1 + $0x2fc] sm:$0xf]
    %v499 = vld [vmem:[%s1 + $0x300] sm:$0xf]
    %v500 = vld [vmem:[%s1 + $0x304] sm:$0xf]
    %v501 = vld [vmem:[%s1 + $0x308] sm:$0xf]
    %v502 = vld [vmem:[%s1 + $0x30c] sm:$0xf]
    %v503 = vld [vmem:[%s1 + $0x310] sm:$0xf]
    %v504 = vld [vmem:[%s1 + $0x314] sm:$0xf]
    %v505 = vld [vmem:[%s1 + $0x318] sm:$0xf]
    %v506 = vld [vmem:[%s1 + $0x31c] sm:$0xf]
    %v507 = vld [vmem:[%s1 + $0x320] sm:$0xf]
    %v508 = vld [vmem:[%s1 + $0x324] sm:$0xf]
    %v509 = vld [vmem:[%s1 + $0x328] sm:$0xf]
    %v510 = vld [vmem:[%s1 + $0x32c] sm:$0xf]
    %v511 = vld [vmem:[%s1 + $0x330] sm:$0xf]
    %v512 = vld [vmem:[%s1 + $0x334] sm:$0xf]
    %v513 = vld [vmem:[%s1 + $0x338] sm:$0xf]
    %v514 = vld [vmem:[%s1 + $0x33c] sm:$0xf]
    %v515 = vld [vmem:[%s1 + $0x340] sm:$0xf]
    %v516 = vld [vmem:[%s1 + $0x344] sm:$0xf]
    %v517 = vld [vmem:[%s1 + $0x348] sm:$0xf]
    %v518 = vld [vmem:[%s1 + $0x34c] sm:$0xf]
    %v519 = vld [vmem:[%s1 + $0x350] sm:$0xf]
    %v520 = vld [vmem:[%s1 + $0x354] sm:$0xf]
    %v521 = vld [vmem:[%s1 + $0x358] sm:$0xf]
    %v522 = vld [vmem:[%s1 + $0x35c] sm:$0xf]
    %v523 = vld [vmem:[%s1 + $0x360] sm:$0xf]
    %v524 = vld [vmem:[%s1 + $0x364] sm:$0xf]
    %v525 = vld [vmem:[%s1 + $0x368] sm:$0xf]
    %v526 = vld [vmem:[%s1 + $0x36c] sm:$0xf]
    %v527 = vld [vmem:[%s1 + $0x370] sm:$0xf]
    %v528 = vld [vmem:[%s1 + $0x374] sm:$0xf]
    %v529 = vld [vmem:[%s1 + $0x378] sm:$0xf]
    %v530 = vld [vmem:[%s1 + $0x37c] sm:$0xf]
    %v531 = vld [vmem:[%s1 + $0x380] sm:$0xf]
    %v532 = vld [vmem:[%s1 + $0x384] sm:$0xf]
    %v533 = vld [vmem:[%s1 + $0x388] sm:$0xf]
    %v534 = vld [vmem:[%s1 + $0x38c] sm:$0xf]
    %v535 = vld [vmem:[%s1 + $0x390] sm:$0xf]
    %v536 = vld [vmem:[%s1 + $0x394] sm:$0xf]
    %v537 = vld [vmem:[%s1 + $0x398] sm:$0xf]
    %v538 = vld [vmem:[%s1 + $0x39c] sm:$0xf]
    %v539 = vld [vmem:[%s1 + $0x3a0] sm:$0xf]
    %v540 = vld [vmem:[%s1 + $0x3a4] sm:$0xf]
    %v541 = vld [vmem:[%s1 + $0x3a8] sm:$0xf]
    %v542 = vld [vmem:[%s1 + $0x3ac] sm:$0xf]
    %v543 = vld [vmem:[%s1 + $0x3b0] sm:$0xf]
    %v544 = vld [vmem:[%s1 + $0x3b4] sm:$0xf]
    %v545 = vld [vmem:[%s1 + $0x3b8] sm:$0xf]
    %v546 = vld [vmem:[%s1 + $0x3bc] sm:$0xf]
    %v547 = vld [vmem:[%s1 + $0x3c0] sm:$0xf]
    %v548 = vld [vmem:[%s1 + $0x3c4] sm:$0xf]
    %v549 = vld [vmem:[%s1 + $0x3c8] sm:$0xf]
    %v550 = vld [vmem:[%s1 + $0x3cc] sm:$0xf]
    %v551 = vld [vmem:[%s1 + $0x3d0] sm:$0xf]
    %v552 = vld [vmem:[%s1 + $0x3d4] sm:$0xf]
    %v553 = vld [vmem:[%s1 + $0x3d8] sm:$0xf]
    %v554 = vld [vmem:[%s1 + $0x3dc] sm:$0xf]
    %v555 = vld [vmem:[%s1 + $0x3e0] sm:$0xf]
    %v556 = vld [vmem:[%s1 + $0x3e4] sm:$0xf]
    %v557 = vld [vmem:[%s1 + $0x3e8] sm:$0xf]
    %v558 = vld [vmem:[%s1 + $0x3ec] sm:$0xf]
    %v559 = vld [vmem:[%s1 + $0x3f0] sm:$0xf]
    %v560 = vld [vmem:[%s1 + $0x3f4] sm:$0xf]
    %v561 = vld [vmem:[%s1 + $0x3f8] sm:$0xf]
    %v562 = vld [vmem:[%s1 + $0x3fc] sm:$0xf]
    %s563 = sld [smem:[#allocation3]]
    %s564 = sld [smem:[#allocation3 + $0x1]]
    %v565 = vld [vmem:[%s2] sm:$0xff]
    %v566 = vld [vmem:[%s2 + $0x8] sm:$0xff]
    %v567 = vld [vmem:[%s2 + $0x10] sm:$0xff]
    %v568 = vld [vmem:[%s2 + $0x18] sm:$0xff]
    %v569 = vld [vmem:[%s2 + $0x20] sm:$0xff]
    %v570 = vld [vmem:[%s2 + $0x28] sm:$0xff]
    %v571 = vld [vmem:[%s2 + $0x30] sm:$0xff]
    %v572 = vld [vmem:[%s2 + $0x38] sm:$0xff]
    %v573 = vld [vmem:[%s2 + $0x40] sm:$0xff]
    %v574 = vld [vmem:[%s2 + $0x48] sm:$0xff]
    %v575 = vld [vmem:[%s2 + $0x50] sm:$0xff]
    %v576 = vld [vmem:[%s2 + $0x58] sm:$0xff]
    %v577 = vld [vmem:[%s2 + $0x60] sm:$0xff]
    %v578 = vld [vmem:[%s2 + $0x68] sm:$0xff]
    %v579 = vld [vmem:[%s2 + $0x70] sm:$0xff]
    %v580 = vld [vmem:[%s2 + $0x78] sm:$0xff]
    %v837 = vunpack.c.l.b16 %v307
    %v838 = vunpack.c.l.b16 %v308
    %v839 = vunpack.c.l.b16 %v309
    %v840 = vunpack.c.l.b16 %v310
    %v841 = vunpack.c.l.b16 %v311
    %v842 = vunpack.c.l.b16 %v312
    %v843 = vunpack.c.l.b16 %v313
    %v844 = vunpack.c.l.b16 %v314
    %v845 = vunpack.c.l.b16 %v315
    %v846 = vunpack.c.l.b16 %v316
    %v847 = vunpack.c.l.b16 %v317
    %v848 = vunpack.c.l.b16 %v318
    %v849 = vunpack.c.l.b16 %v319
    %v850 = vunpack.c.l.b16 %v320
    %v851 = vunpack.c.l.b16 %v321
    %v852 = vunpack.c.l.b16 %v322
    %v853 = vunpack.c.l.b16 %v323
    %v854 = vunpack.c.l.b16 %v324
    %v855 = vunpack.c.l.b16 %v325
    %v856 = vunpack.c.l.b16 %v326
    %v857 = vunpack.c.l.b16 %v327
    %v858 = vunpack.c.l.b16 %v328
    %v859 = vunpack.c.l.b16 %v329
    %v860 = vunpack.c.l.b16 %v330
    %v861 = vunpack.c.l.b16 %v331
    %v862 = vunpack.c.l.b16 %v332
    %v863 = vunpack.c.l.b16 %v333
    %v864 = vunpack.c.l.b16 %v334
    %v865 = vunpack.c.l.b16 %v335
    %v866 = vunpack.c.l.b16 %v336
    %v867 = vunpack.c.l.b16 %v337
    %v868 = vunpack.c.l.b16 %v338
    %v869 = vunpack.c.l.b16 %v339
    %v870 = vunpack.c.l.b16 %v340
    %v871 = vunpack.c.l.b16 %v341
    %v872 = vunpack.c.l.b16 %v342
    %v873 = vunpack.c.l.b16 %v343
    %v874 = vunpack.c.l.b16 %v344
    %v875 = vunpack.c.l.b16 %v345
    %v876 = vunpack.c.l.b16 %v346
    %v877 = vunpack.c.l.b16 %v347
    %v878 = vunpack.c.l.b16 %v348
    %v879 = vunpack.c.l.b16 %v349
    %v880 = vunpack.c.l.b16 %v350
    %v881 = vunpack.c.l.b16 %v351
    %v882 = vunpack.c.l.b16 %v352
    %v883 = vunpack.c.l.b16 %v353
    %v884 = vunpack.c.l.b16 %v354
    %v885 = vunpack.c.l.b16 %v355
    %v886 = vunpack.c.l.b16 %v356
    %v887 = vunpack.c.l.b16 %v357
    %v888 = vunpack.c.l.b16 %v358
    %v889 = vunpack.c.l.b16 %v359
    %v890 = vunpack.c.l.b16 %v360
    %v891 = vunpack.c.l.b16 %v361
    %v892 = vunpack.c.l.b16 %v362
    %v893 = vunpack.c.l.b16 %v363
    %v894 = vunpack.c.l.b16 %v364
    %v895 = vunpack.c.l.b16 %v365
    %v896 = vunpack.c.l.b16 %v366
    %v897 = vunpack.c.l.b16 %v367
    %v898 = vunpack.c.l.b16 %v368
    %v899 = vunpack.c.l.b16 %v369
    %v900 = vunpack.c.l.b16 %v370
    %v901 = vunpack.c.l.b16 %v371
    %v902 = vunpack.c.l.b16 %v372
    %v903 = vunpack.c.l.b16 %v373
    %v904 = vunpack.c.l.b16 %v374
    %v905 = vunpack.c.l.b16 %v375
    %v906 = vunpack.c.l.b16 %v376
    %v907 = vunpack.c.l.b16 %v377
    %v908 = vunpack.c.l.b16 %v378
    %v909 = vunpack.c.l.b16 %v379
    %v910 = vunpack.c.l.b16 %v380
    %v911 = vunpack.c.l.b16 %v381
    %v912 = vunpack.c.l.b16 %v382
    %v913 = vunpack.c.l.b16 %v383
    %v914 = vunpack.c.l.b16 %v384
    %v915 = vunpack.c.l.b16 %v385
    %v916 = vunpack.c.l.b16 %v386
    %v917 = vunpack.c.l.b16 %v387
    %v918 = vunpack.c.l.b16 %v388
    %v919 = vunpack.c.l.b16 %v389
    %v920 = vunpack.c.l.b16 %v390
    %v921 = vunpack.c.l.b16 %v391
    %v922 = vunpack.c.l.b16 %v392
    %v923 = vunpack.c.l.b16 %v393
    %v924 = vunpack.c.l.b16 %v394
    %v925 = vunpack.c.l.b16 %v395
    %v926 = vunpack.c.l.b16 %v396
    %v927 = vunpack.c.l.b16 %v397
    %v928 = vunpack.c.l.b16 %v398
    %v929 = vunpack.c.l.b16 %v399
    %v930 = vunpack.c.l.b16 %v400
    %v931 = vunpack.c.l.b16 %v401
    %v932 = vunpack.c.l.b16 %v402
    %v933 = vunpack.c.l.b16 %v403
    %v934 = vunpack.c.l.b16 %v404
    %v935 = vunpack.c.l.b16 %v405
    %v936 = vunpack.c.l.b16 %v406
    %v937 = vunpack.c.l.b16 %v407
    %v938 = vunpack.c.l.b16 %v408
    %v939 = vunpack.c.l.b16 %v409
    %v940 = vunpack.c.l.b16 %v410
    %v941 = vunpack.c.l.b16 %v411
    %v942 = vunpack.c.l.b16 %v412
    %v943 = vunpack.c.l.b16 %v413
    %v944 = vunpack.c.l.b16 %v414
    %v945 = vunpack.c.l.b16 %v415
    %v946 = vunpack.c.l.b16 %v416
    %v947 = vunpack.c.l.b16 %v417
    %v948 = vunpack.c.l.b16 %v418
    %v949 = vunpack.c.l.b16 %v419
    %v950 = vunpack.c.l.b16 %v420
    %v951 = vunpack.c.l.b16 %v421
    %v952 = vunpack.c.l.b16 %v422
    %v953 = vunpack.c.l.b16 %v423
    %v954 = vunpack.c.l.b16 %v424
    %v955 = vunpack.c.l.b16 %v425
    %v956 = vunpack.c.l.b16 %v426
    %v957 = vunpack.c.l.b16 %v427
    %v958 = vunpack.c.l.b16 %v428
    %v959 = vunpack.c.l.b16 %v429
    %v960 = vunpack.c.l.b16 %v430
    %v961 = vunpack.c.l.b16 %v431
    %v962 = vunpack.c.l.b16 %v432
    %v963 = vunpack.c.l.b16 %v433
    %v964 = vunpack.c.l.b16 %v434
    %v965 = vunpack.c.l.b16 %v435
    %v966 = vunpack.c.l.b16 %v436
    %v967 = vunpack.c.l.b16 %v437
    %v968 = vunpack.c.l.b16 %v438
    %v969 = vunpack.c.l.b16 %v439
    %v970 = vunpack.c.l.b16 %v440
    %v971 = vunpack.c.l.b16 %v441
    %v972 = vunpack.c.l.b16 %v442
    %v973 = vunpack.c.l.b16 %v443
    %v974 = vunpack.c.l.b16 %v444
    %v975 = vunpack.c.l.b16 %v445
    %v976 = vunpack.c.l.b16 %v446
    %v977 = vunpack.c.l.b16 %v447
    %v978 = vunpack.c.l.b16 %v448
    %v979 = vunpack.c.l.b16 %v449
    %v980 = vunpack.c.l.b16 %v450
    %v981 = vunpack.c.l.b16 %v451
    %v982 = vunpack.c.l.b16 %v452
    %v983 = vunpack.c.l.b16 %v453
    %v984 = vunpack.c.l.b16 %v454
    %v985 = vunpack.c.l.b16 %v455
    %v986 = vunpack.c.l.b16 %v456
    %v987 = vunpack.c.l.b16 %v457
    %v988 = vunpack.c.l.b16 %v458
    %v989 = vunpack.c.l.b16 %v459
    %v990 = vunpack.c.l.b16 %v460
    %v991 = vunpack.c.l.b16 %v461
    %v992 = vunpack.c.l.b16 %v462
    %v993 = vunpack.c.l.b16 %v463
    %v994 = vunpack.c.l.b16 %v464
    %v995 = vunpack.c.l.b16 %v465
    %v996 = vunpack.c.l.b16 %v466
    %v997 = vunpack.c.l.b16 %v467
    %v998 = vunpack.c.l.b16 %v468
    %v999 = vunpack.c.l.b16 %v469
    %v1000 = vunpack.c.l.b16 %v470
    %v1001 = vunpack.c.l.b16 %v471
    %v1002 = vunpack.c.l.b16 %v472
    %v1003 = vunpack.c.l.b16 %v473
    %v1004 = vunpack.c.l.b16 %v474
    %v1005 = vunpack.c.l.b16 %v475
    %v1006 = vunpack.c.l.b16 %v476
    %v1007 = vunpack.c.l.b16 %v477
    %v1008 = vunpack.c.l.b16 %v478
    %v1009 = vunpack.c.l.b16 %v479
    %v1010 = vunpack.c.l.b16 %v480
    %v1011 = vunpack.c.l.b16 %v481
    %v1012 = vunpack.c.l.b16 %v482
    %v1013 = vunpack.c.l.b16 %v483
    %v1014 = vunpack.c.l.b16 %v484
    %v1015 = vunpack.c.l.b16 %v485
    %v1016 = vunpack.c.l.b16 %v486
    %v1017 = vunpack.c.l.b16 %v487
    %v1018 = vunpack.c.l.b16 %v488
    %v1019 = vunpack.c.l.b16 %v489
    %v1020 = vunpack.c.l.b16 %v490
    %v1021 = vunpack.c.l.b16 %v491
    %v1022 = vunpack.c.l.b16 %v492
    %v1023 = vunpack.c.l.b16 %v493
    %v1024 = vunpack.c.l.b16 %v494
    %v1025 = vunpack.c.l.b16 %v495
    %v1026 = vunpack.c.l.b16 %v496
    %v1027 = vunpack.c.l.b16 %v497
    %v1028 = vunpack.c.l.b16 %v498
    %v1029 = vunpack.c.l.b16 %v499
    %v1030 = vunpack.c.l.b16 %v500
    %v1031 = vunpack.c.l.b16 %v501
    %v1032 = vunpack.c.l.b16 %v502
    %v1033 = vunpack.c.l.b16 %v503
    %v1034 = vunpack.c.l.b16 %v504
    %v1035 = vunpack.c.l.b16 %v505
    %v1036 = vunpack.c.l.b16 %v506
    %v1037 = vunpack.c.l.b16 %v507
    %v1038 = vunpack.c.l.b16 %v508
    %v1039 = vunpack.c.l.b16 %v509
    %v1040 = vunpack.c.l.b16 %v510
    %v1041 = vunpack.c.l.b16 %v511
    %v1042 = vunpack.c.l.b16 %v512
    %v1043 = vunpack.c.l.b16 %v513
    %v1044 = vunpack.c.l.b16 %v514
    %v1045 = vunpack.c.l.b16 %v515
    %v1046 = vunpack.c.l.b16 %v516
    %v1047 = vunpack.c.l.b16 %v517
    %v1048 = vunpack.c.l.b16 %v518
    %v1049 = vunpack.c.l.b16 %v519
    %v1050 = vunpack.c.l.b16 %v520
    %v1051 = vunpack.c.l.b16 %v521
    %v1052 = vunpack.c.l.b16 %v522
    %v1053 = vunpack.c.l.b16 %v523
    %v1054 = vunpack.c.l.b16 %v524
    %v1055 = vunpack.c.l.b16 %v525
    %v1056 = vunpack.c.l.b16 %v526
    %v1057 = vunpack.c.l.b16 %v527
    %v1058 = vunpack.c.l.b16 %v528
    %v1059 = vunpack.c.l.b16 %v529
    %v1060 = vunpack.c.l.b16 %v530
    %v1061 = vunpack.c.l.b16 %v531
    %v1062 = vunpack.c.l.b16 %v532
    %v1063 = vunpack.c.l.b16 %v533
    %v1064 = vunpack.c.l.b16 %v534
    %v1065 = vunpack.c.l.b16 %v535
    %v1066 = vunpack.c.l.b16 %v536
    %v1067 = vunpack.c.l.b16 %v537
    %v1068 = vunpack.c.l.b16 %v538
    %v1069 = vunpack.c.l.b16 %v539
    %v1070 = vunpack.c.l.b16 %v540
    %v1071 = vunpack.c.l.b16 %v541
    %v1072 = vunpack.c.l.b16 %v542
    %v1073 = vunpack.c.l.b16 %v543
    %v1074 = vunpack.c.l.b16 %v544
    %v1075 = vunpack.c.l.b16 %v545
    %v1076 = vunpack.c.l.b16 %v546
    %v1077 = vunpack.c.l.b16 %v547
    %v1078 = vunpack.c.l.b16 %v548
    %v1079 = vunpack.c.l.b16 %v549
    %v1080 = vunpack.c.l.b16 %v550
    %v1081 = vunpack.c.l.b16 %v551
    %v1082 = vunpack.c.l.b16 %v552
    %v1083 = vunpack.c.l.b16 %v553
    %v1084 = vunpack.c.l.b16 %v554
    %v1085 = vunpack.c.l.b16 %v555
    %v1086 = vunpack.c.l.b16 %v556
    %v1087 = vunpack.c.l.b16 %v557
    %v1088 = vunpack.c.l.b16 %v558
    %v1089 = vunpack.c.l.b16 %v559
    %v1090 = vunpack.c.l.b16 %v560
    %v1091 = vunpack.c.l.b16 %v561
    %v1092 = vunpack.c.l.b16 %v562
    %v1093 = vpack.c.b16 %v838, %v837
    %v1094 = vpack.c.b16 %v840, %v839
    %v1095 = vpack.c.b16 %v842, %v841
    %v1096 = vpack.c.b16 %v844, %v843
    %v1097 = vpack.c.b16 %v846, %v845
    %v1098 = vpack.c.b16 %v848, %v847
    %v1099 = vpack.c.b16 %v850, %v849
    %v1100 = vpack.c.b16 %v852, %v851
    %v1101 = vpack.c.b16 %v854, %v853
    %v1102 = vpack.c.b16 %v856, %v855
    %v1103 = vpack.c.b16 %v858, %v857
    %v1104 = vpack.c.b16 %v860, %v859
    %v1105 = vpack.c.b16 %v862, %v861
    %v1106 = vpack.c.b16 %v864, %v863
    %v1107 = vpack.c.b16 %v866, %v865
    %v1108 = vpack.c.b16 %v868, %v867
    %v1109 = vpack.c.b16 %v870, %v869
    %v1110 = vpack.c.b16 %v872, %v871
    %v1111 = vpack.c.b16 %v874, %v873
    %v1112 = vpack.c.b16 %v876, %v875
    %v1113 = vpack.c.b16 %v878, %v877
    %v1114 = vpack.c.b16 %v880, %v879
    %v1115 = vpack.c.b16 %v882, %v881
    %v1116 = vpack.c.b16 %v884, %v883
    %v1117 = vpack.c.b16 %v886, %v885
    %v1118 = vpack.c.b16 %v888, %v887
    %v1119 = vpack.c.b16 %v890, %v889
    %v1120 = vpack.c.b16 %v892, %v891
    %v1121 = vpack.c.b16 %v894, %v893
    %v1122 = vpack.c.b16 %v896, %v895
    %v1123 = vpack.c.b16 %v898, %v897
    %v1124 = vpack.c.b16 %v900, %v899
    %v1125 = vpack.c.b16 %v902, %v901
    %v1126 = vpack.c.b16 %v904, %v903
    %v1127 = vpack.c.b16 %v906, %v905
    %v1128 = vpack.c.b16 %v908, %v907
    %v1129 = vpack.c.b16 %v910, %v909
    %v1130 = vpack.c.b16 %v912, %v911
    %v1131 = vpack.c.b16 %v914, %v913
    %v1132 = vpack.c.b16 %v916, %v915
    %v1133 = vpack.c.b16 %v918, %v917
    %v1134 = vpack.c.b16 %v920, %v919
    %v1135 = vpack.c.b16 %v922, %v921
    %v1136 = vpack.c.b16 %v924, %v923
    %v1137 = vpack.c.b16 %v926, %v925
    %v1138 = vpack.c.b16 %v928, %v927
    %v1139 = vpack.c.b16 %v930, %v929
    %v1140 = vpack.c.b16 %v932, %v931
    %v1141 = vpack.c.b16 %v934, %v933
    %v1142 = vpack.c.b16 %v936, %v935
    %v1143 = vpack.c.b16 %v938, %v937
    %v1144 = vpack.c.b16 %v940, %v939
    %v1145 = vpack.c.b16 %v942, %v941
    %v1146 = vpack.c.b16 %v944, %v943
    %v1147 = vpack.c.b16 %v946, %v945
    %v1148 = vpack.c.b16 %v948, %v947
    %v1149 = vpack.c.b16 %v950, %v949
    %v1150 = vpack.c.b16 %v952, %v951
    %v1151 = vpack.c.b16 %v954, %v953
    %v1152 = vpack.c.b16 %v956, %v955
    %v1153 = vpack.c.b16 %v958, %v957
    %v1154 = vpack.c.b16 %v960, %v959
    %v1155 = vpack.c.b16 %v962, %v961
    %v1156 = vpack.c.b16 %v964, %v963
    %v1157 = vpack.c.b16 %v966, %v965
    %v1158 = vpack.c.b16 %v968, %v967
    %v1159 = vpack.c.b16 %v970, %v969
    %v1160 = vpack.c.b16 %v972, %v971
    %v1161 = vpack.c.b16 %v974, %v973
    %v1162 = vpack.c.b16 %v976, %v975
    %v1163 = vpack.c.b16 %v978, %v977
    %v1164 = vpack.c.b16 %v980, %v979
    %v1165 = vpack.c.b16 %v982, %v981
    %v1166 = vpack.c.b16 %v984, %v983
    %v1167 = vpack.c.b16 %v986, %v985
    %v1168 = vpack.c.b16 %v988, %v987
    %v1169 = vpack.c.b16 %v990, %v989
    %v1170 = vpack.c.b16 %v992, %v991
    %v1171 = vpack.c.b16 %v994, %v993
    %v1172 = vpack.c.b16 %v996, %v995
    %v1173 = vpack.c.b16 %v998, %v997
    %v1174 = vpack.c.b16 %v1000, %v999
    %v1175 = vpack.c.b16 %v1002, %v1001
    %v1176 = vpack.c.b16 %v1004, %v1003
    %v1177 = vpack.c.b16 %v1006, %v1005
    %v1178 = vpack.c.b16 %v1008, %v1007
    %v1179 = vpack.c.b16 %v1010, %v1009
    %v1180 = vpack.c.b16 %v1012, %v1011
    %v1181 = vpack.c.b16 %v1014, %v1013
    %v1182 = vpack.c.b16 %v1016, %v1015
    %v1183 = vpack.c.b16 %v1018, %v1017
    %v1184 = vpack.c.b16 %v1020, %v1019
    %v1185 = vpack.c.b16 %v1022, %v1021
    %v1186 = vpack.c.b16 %v1024, %v1023
    %v1187 = vpack.c.b16 %v1026, %v1025
    %v1188 = vpack.c.b16 %v1028, %v1027
    %v1189 = vpack.c.b16 %v1030, %v1029
    %v1190 = vpack.c.b16 %v1032, %v1031
    %v1191 = vpack.c.b16 %v1034, %v1033
    %v1192 = vpack.c.b16 %v1036, %v1035
    %v1193 = vpack.c.b16 %v1038, %v1037
    %v1194 = vpack.c.b16 %v1040, %v1039
    %v1195 = vpack.c.b16 %v1042, %v1041
    %v1196 = vpack.c.b16 %v1044, %v1043
    %v1197 = vpack.c.b16 %v1046, %v1045
    %v1198 = vpack.c.b16 %v1048, %v1047
    %v1199 = vpack.c.b16 %v1050, %v1049
    %v1200 = vpack.c.b16 %v1052, %v1051
    %v1201 = vpack.c.b16 %v1054, %v1053
    %v1202 = vpack.c.b16 %v1056, %v1055
    %v1203 = vpack.c.b16 %v1058, %v1057
    %v1204 = vpack.c.b16 %v1060, %v1059
    %v1205 = vpack.c.b16 %v1062, %v1061
    %v1206 = vpack.c.b16 %v1064, %v1063
    %v1207 = vpack.c.b16 %v1066, %v1065
    %v1208 = vpack.c.b16 %v1068, %v1067
    %v1209 = vpack.c.b16 %v1070, %v1069
    %v1210 = vpack.c.b16 %v1072, %v1071
    %v1211 = vpack.c.b16 %v1074, %v1073
    %v1212 = vpack.c.b16 %v1076, %v1075
    %v1213 = vpack.c.b16 %v1078, %v1077
    %v1214 = vpack.c.b16 %v1080, %v1079
    %v1215 = vpack.c.b16 %v1082, %v1081
    %v1216 = vpack.c.b16 %v1084, %v1083
    %v1217 = vpack.c.b16 %v1086, %v1085
    %v1218 = vpack.c.b16 %v1088, %v1087
    %v1219 = vpack.c.b16 %v1090, %v1089
    %v1220 = vpack.c.b16 %v1092, %v1091
    %v1365 = vunpack.c.l.b16 %v565
    %v1366 = vunpack.c.h.b16 %v565
    %v1367 = vunpack.c.l.b16 %v566
    %v1368 = vunpack.c.h.b16 %v566
    %v1369 = vunpack.c.l.b16 %v567
    %v1370 = vunpack.c.h.b16 %v567
    %v1371 = vunpack.c.l.b16 %v568
    %v1372 = vunpack.c.h.b16 %v568
    %v1373 = vunpack.c.l.b16 %v569
    %v1374 = vunpack.c.h.b16 %v569
    %v1375 = vunpack.c.l.b16 %v570
    %v1376 = vunpack.c.h.b16 %v570
    %v1377 = vunpack.c.l.b16 %v571
    %v1378 = vunpack.c.h.b16 %v571
    %v1379 = vunpack.c.l.b16 %v572
    %v1380 = vunpack.c.h.b16 %v572
    %v1381 = vunpack.c.l.b16 %v573
    %v1382 = vunpack.c.h.b16 %v573
    %v1383 = vunpack.c.l.b16 %v574
    %v1384 = vunpack.c.h.b16 %v574
    %v1385 = vunpack.c.l.b16 %v575
    %v1386 = vunpack.c.h.b16 %v575
    %v1387 = vunpack.c.l.b16 %v576
    %v1388 = vunpack.c.h.b16 %v576
    %v1389 = vunpack.c.l.b16 %v577
    %v1390 = vunpack.c.h.b16 %v577
    %v1391 = vunpack.c.l.b16 %v578
    %v1392 = vunpack.c.h.b16 %v578
    %v1393 = vunpack.c.l.b16 %v579
    %v1394 = vunpack.c.h.b16 %v579
    %v1395 = vunpack.c.l.b16 %v580
    %v1396 = vunpack.c.h.b16 %v580
    %v1397 = vpack.c.b16 %v1367, %v1365
    %v1398 = vpack.c.b16 %v1368, %v1366
    %v1399 = vpack.c.b16 %v1371, %v1369
    %v1400 = vpack.c.b16 %v1372, %v1370
    %v1401 = vpack.c.b16 %v1375, %v1373
    %v1402 = vpack.c.b16 %v1376, %v1374
    %v1403 = vpack.c.b16 %v1379, %v1377
    %v1404 = vpack.c.b16 %v1380, %v1378
    %v1405 = vpack.c.b16 %v1383, %v1381
    %v1406 = vpack.c.b16 %v1384, %v1382
    %v1407 = vpack.c.b16 %v1387, %v1385
    %v1408 = vpack.c.b16 %v1388, %v1386
    %v1409 = vpack.c.b16 %v1391, %v1389
    %v1410 = vpack.c.b16 %v1392, %v1390
    %v1411 = vpack.c.b16 %v1395, %v1393
    %v1412 = vpack.c.b16 %v1396, %v1394
    %1429 = vmatprep.subr.bf16.mxu0 %v1398
    %1430 = vmatpush1.bf16.msra.mxu0 %v1397
    %1431 = vmatprep.subr.bf16.mxu0 %v1400
    %1432 = vmatpush1.bf16.msra.mxu0 %v1399
    %1433 = vmatprep.subr.bf16.mxu0 %v1402
    %1434 = vmatpush1.bf16.msra.mxu0 %v1401
    %1435 = vmatprep.subr.bf16.mxu0 %v1404
    %1436 = vmatpush1.bf16.msra.mxu0 %v1403
    %1437 = vmatprep.subr.bf16.mxu0 %v1406
    %1438 = vmatpush1.bf16.msra.mxu0 %v1405
    %1439 = vmatprep.subr.bf16.mxu0 %v1408
    %1440 = vmatpush1.bf16.msra.mxu0 %v1407
    %1441 = vmatprep.subr.bf16.mxu0 %v1410
    %1442 = vmatpush1.bf16.msra.mxu0 %v1409
    %1443 = vmatprep.subr.bf16.mxu0 %v1412
    %1444 = vmatpush1.bf16.msra.mxu0 %v1411
    %1445 = vmatprep.subr.bf16.mxu0 0
    %1446 = vmatpush1.bf16.msra.mxu0 0
    %1447 = vmatprep.subr.bf16.mxu0 0
    %1448 = vmatpush1.bf16.msra.mxu0 0
    %1449 = vmatprep.subr.bf16.mxu0 0
    %1450 = vmatpush1.bf16.msra.mxu0 0
    %1451 = vmatprep.subr.bf16.mxu0 0
    %1452 = vmatpush1.bf16.msra.mxu0 0
    %1453 = vmatprep.subr.bf16.mxu0 0
    %1454 = vmatpush1.bf16.msra.mxu0 0
    %1455 = vmatprep.subr.bf16.mxu0 0
    %1456 = vmatpush1.bf16.msra.mxu0 0
    %1457 = vmatprep.subr.bf16.mxu0 0
    %1458 = vmatpush1.bf16.msra.mxu0 0
    %1459 = vmatprep.subr.bf16.mxu0 0
    %1460 = vmatpush1.bf16.msra.mxu0 0
    %1461 = vmatprep.mubr.bf16.mxu0 0
    %1462 = vmatmul.mubr.bf16.gmra.mrb[0].mxu0 %v1093
    %v1463 = vpop.f32.mrb[0].mxu0
    %v1464 = vadd.f32 0.0, %v1463
    %v1465 = vpop.f32.mrb[0].mxu0
    %v1466 = vadd.f32 0.0, %v1465
    %v1467 = vpop.f32.mrb[0].mxu0
    %v1468 = vadd.f32 0.0, %v1467
    %v1469 = vpop.f32.mrb[0].mxu0
    %v1470 = vadd.f32 0.0, %v1469
    %1471 = vmatprep.mubr.bf16.mxu0 0
    %1472 = vmatmul.mubr.bf16.gmra.mrb[0].mxu0 %v1094
    %v1473 = vpop.f32.mrb[0].mxu0
    %v1474 = vadd.f32 0.0, %v1473
    %v1475 = vpop.f32.mrb[0].mxu0
    %v1476 = vadd.f32 0.0, %v1475
    %v1477 = vpop.f32.mrb[0].mxu0
    %v1478 = vadd.f32 0.0, %v1477
    %v1479 = vpop.f32.mrb[0].mxu0
    %v1480 = vadd.f32 0.0, %v1479
    %1481 = vmatprep.mubr.bf16.mxu0 0
    %1482 = vmatmul.mubr.bf16.gmra.mrb[0].mxu0 %v1095
    %v1483 = vpop.f32.mrb[0].mxu0
    %v1484 = vadd.f32 0.0, %v1483
    %v1485 = vpop.f32.mrb[0].mxu0
    %v1486 = vadd.f32 0.0, %v1485
    %v1487 = vpop.f32.mrb[0].mxu0
    %v1488 = vadd.f32 0.0, %v1487
    %v1489 = vpop.f32.mrb[0].mxu0
    %v1490 = vadd.f32 0.0, %v1489
    %1491 = vmatprep.mubr.bf16.mxu0 0
    %1492 = vmatmul.mubr.bf16.gmra.mrb[0].mxu0 %v1096
    %v1493 = vpop.f32.mrb[0].mxu0
    %v1494 = vadd.f32 0.0, %v1493
    %v1495 = vpop.f32.mrb[0].mxu0
    %v1496 = vadd.f32 0.0, %v1495
    %v1497 = vpop.f32.mrb[0].mxu0
    %v1498 = vadd.f32 0.0, %v1497
    %v1499 = vpop.f32.mrb[0].mxu0
    %v1500 = vadd.f32 0.0, %v1499
    %1501 = vmatprep.mubr.bf16.mxu0 0
    %1502 = vmatmul.mubr.bf16.gmra.mrb[0].mxu0 %v1097
    %v1503 = vpop.f32.mrb[0].mxu0
    %v1504 = vadd.f32 0.0, %v1503
    %v1505 = vpop.f32.mrb[0].mxu0
    %v1506 = vadd.f32 0.0, %v1505
    %v1507 = vpop.f32.mrb[0].mxu0
    %v1508 = vadd.f32 0.0, %v1507
    %v1509 = vpop.f32.mrb[0].mxu0
    %v1510 = vadd.f32 0.0, %v1509
    %1511 = vmatprep.mubr.bf16.mxu0 0
    %1512 = vmatmul.mubr.bf16.gmra.mrb[0].mxu0 %v1098
    %v1513 = vpop.f32.mrb[0].mxu0
    %v1514 = vadd.f32 0.0, %v1513
    %v1515 = vpop.f32.mrb[0].mxu0
    %v1516 = vadd.f32 0.0, %v1515
    %v1517 = vpop.f32.mrb[0].mxu0
    %v1518 = vadd.f32 0.0, %v1517
    %v1519 = vpop.f32.mrb[0].mxu0
    %v1520 = vadd.f32 0.0, %v1519
    %1521 = vmatprep.mubr.bf16.mxu0 0
    %1522 = vmatmul.mubr.bf16.gmra.mrb[0].mxu0 %v1099
    %v1523 = vpop.f32.mrb[0].mxu0
    %v1524 = vadd.f32 0.0, %v1523
    %v1525 = vpop.f32.mrb[0].mxu0
    %v1526 = vadd.f32 0.0, %v1525
    %v1527 = vpop.f32.mrb[0].mxu0
    %v1528 = vadd.f32 0.0, %v1527
    %v1529 = vpop.f32.mrb[0].mxu0
    %v1530 = vadd.f32 0.0, %v1529
    %1531 = vmatprep.mubr.bf16.mxu0 0
    %1532 = vmatmul.mubr.bf16.gmra.mrb[0].mxu0 %v1100
    %v1533 = vpop.f32.mrb[0].mxu0
    %v1534 = vadd.f32 0.0, %v1533
    %v1535 = vpop.f32.mrb[0].mxu0
    %v1536 = vadd.f32 0.0, %v1535
    %v1537 = vpop.f32.mrb[0].mxu0
    %v1538 = vadd.f32 0.0, %v1537
    %v1539 = vpop.f32.mrb[0].mxu0
    %v1540 = vadd.f32 0.0, %v1539
    %1541 = vmatprep.mubr.bf16.mxu0 0
    %1542 = vmatmul.mubr.bf16.gmra.mrb[0].mxu0 %v1101
    %v1543 = vpop.f32.mrb[0].mxu0
    %v1544 = vadd.f32 0.0, %v1543
    %v1545 = vpop.f32.mrb[0].mxu0
    %v1546 = vadd.f32 0.0, %v1545
    %v1547 = vpop.f32.mrb[0].mxu0
    %v1548 = vadd.f32 0.0, %v1547
    %v1549 = vpop.f32.mrb[0].mxu0
    %v1550 = vadd.f32 0.0, %v1549
    %1551 = vmatprep.mubr.bf16.mxu0 0
    %1552 = vmatmul.mubr.bf16.gmra.mrb[0].mxu0 %v1102
    %v1553 = vpop.f32.mrb[0].mxu0
    %v1554 = vadd.f32 0.0, %v1553
    %v1555 = vpop.f32.mrb[0].mxu0
    %v1556 = vadd.f32 0.0, %v1555
    %v1557 = vpop.f32.mrb[0].mxu0
    %v1558 = vadd.f32 0.0, %v1557
    %v1559 = vpop.f32.mrb[0].mxu0
    %v1560 = vadd.f32 0.0, %v1559
    %1561 = vmatprep.mubr.bf16.mxu0 0
    %1562 = vmatmul.mubr.bf16.gmra.mrb[0].mxu0 %v1103
    %v1563 = vpop.f32.mrb[0].mxu0
    %v1564 = vadd.f32 0.0, %v1563
    %v1565 = vpop.f32.mrb[0].mxu0
    %v1566 = vadd.f32 0.0, %v1565
    %v1567 = vpop.f32.mrb[0].mxu0
    %v1568 = vadd.f32 0.0, %v1567
    %v1569 = vpop.f32.mrb[0].mxu0
    %v1570 = vadd.f32 0.0, %v1569
    %1571 = vmatprep.mubr.bf16.mxu0 0
    %1572 = vmatmul.mubr.bf16.gmra.mrb[0].mxu0 %v1104
    %v1573 = vpop.f32.mrb[0].mxu0
    %v1574 = vadd.f32 0.0, %v1573
    %v1575 = vpop.f32.mrb[0].mxu0
    %v1576 = vadd.f32 0.0, %v1575
    %v1577 = vpop.f32.mrb[0].mxu0
    %v1578 = vadd.f32 0.0, %v1577
    %v1579 = vpop.f32.mrb[0].mxu0
    %v1580 = vadd.f32 0.0, %v1579
    %1581 = vmatprep.mubr.bf16.mxu0 0
    %1582 = vmatmul.mubr.bf16.gmra.mrb[0].mxu0 %v1105
    %v1583 = vpop.f32.mrb[0].mxu0
    %v1584 = vadd.f32 0.0, %v1583
    %v1585 = vpop.f32.mrb[0].mxu0
    %v1586 = vadd.f32 0.0, %v1585
    %v1587 = vpop.f32.mrb[0].mxu0
    %v1588 = vadd.f32 0.0, %v1587
    %v1589 = vpop.f32.mrb[0].mxu0
    %v1590 = vadd.f32 0.0, %v1589
    %1591 = vmatprep.mubr.bf16.mxu0 0
    %1592 = vmatmul.mubr.bf16.gmra.mrb[0].mxu0 %v1106
    %v1593 = vpop.f32.mrb[0].mxu0
    %v1594 = vadd.f32 0.0, %v1593
    %v1595 = vpop.f32.mrb[0].mxu0
    %v1596 = vadd.f32 0.0, %v1595
    %v1597 = vpop.f32.mrb[0].mxu0
    %v1598 = vadd.f32 0.0, %v1597
    %v1599 = vpop.f32.mrb[0].mxu0
    %v1600 = vadd.f32 0.0, %v1599
    %1601 = vmatprep.mubr.bf16.mxu0 0
    %1602 = vmatmul.mubr.bf16.gmra.mrb[0].mxu0 %v1107
    %v1603 = vpop.f32.mrb[0].mxu0
    %v1604 = vadd.f32 0.0, %v1603
    %v1605 = vpop.f32.mrb[0].mxu0
    %v1606 = vadd.f32 0.0, %v1605
    %v1607 = vpop.f32.mrb[0].mxu0
    %v1608 = vadd.f32 0.0, %v1607
    %v1609 = vpop.f32.mrb[0].mxu0
    %v1610 = vadd.f32 0.0, %v1609
    %1611 = vmatprep.mubr.bf16.mxu0 0
    %1612 = vmatmul.mubr.bf16.gmra.mrb[0].mxu0 %v1108
    %v1613 = vpop.f32.mrb[0].mxu0
    %v1614 = vadd.f32 0.0, %v1613
    %v1615 = vpop.f32.mrb[0].mxu0
    %v1616 = vadd.f32 0.0, %v1615
    %v1617 = vpop.f32.mrb[0].mxu0
    %v1618 = vadd.f32 0.0, %v1617
    %v1619 = vpop.f32.mrb[0].mxu0
    %v1620 = vadd.f32 0.0, %v1619
    %1621 = vmatprep.mubr.bf16.mxu0 0
    %1622 = vmatmul.mubr.bf16.gmra.mrb[0].mxu0 %v1109
    %v1623 = vpop.f32.mrb[0].mxu0
    %v1624 = vadd.f32 0.0, %v1623
    %v1625 = vpop.f32.mrb[0].mxu0
    %v1626 = vadd.f32 0.0, %v1625
    %v1627 = vpop.f32.mrb[0].mxu0
    %v1628 = vadd.f32 0.0, %v1627
    %v1629 = vpop.f32.mrb[0].mxu0
    %v1630 = vadd.f32 0.0, %v1629
    %1631 = vmatprep.mubr.bf16.mxu0 0
    %1632 = vmatmul.mubr.bf16.gmra.mrb[0].mxu0 %v1110
    %v1633 = vpop.f32.mrb[0].mxu0
    %v1634 = vadd.f32 0.0, %v1633
    %v1635 = vpop.f32.mrb[0].mxu0
    %v1636 = vadd.f32 0.0, %v1635
    %v1637 = vpop.f32.mrb[0].mxu0
    %v1638 = vadd.f32 0.0, %v1637
    %v1639 = vpop.f32.mrb[0].mxu0
    %v1640 = vadd.f32 0.0, %v1639
    %1641 = vmatprep.mubr.bf16.mxu0 0
    %1642 = vmatmul.mubr.bf16.gmra.mrb[0].mxu0 %v1111
    %v1643 = vpop.f32.mrb[0].mxu0
    %v1644 = vadd.f32 0.0, %v1643
    %v1645 = vpop.f32.mrb[0].mxu0
    %v1646 = vadd.f32 0.0, %v1645
    %v1647 = vpop.f32.mrb[0].mxu0
    %v1648 = vadd.f32 0.0, %v1647
    %v1649 = vpop.f32.mrb[0].mxu0
    %v1650 = vadd.f32 0.0, %v1649
    %1651 = vmatprep.mubr.bf16.mxu0 0
    %1652 = vmatmul.mubr.bf16.gmra.mrb[0].mxu0 %v1112
    %v1653 = vpop.f32.mrb[0].mxu0
    %v1654 = vadd.f32 0.0, %v1653
    %v1655 = vpop.f32.mrb[0].mxu0
    %v1656 = vadd.f32 0.0, %v1655
    %v1657 = vpop.f32.mrb[0].mxu0
    %v1658 = vadd.f32 0.0, %v1657
    %v1659 = vpop.f32.mrb[0].mxu0
    %v1660 = vadd.f32 0.0, %v1659
    %1661 = vmatprep.mubr.bf16.mxu0 0
    %1662 = vmatmul.mubr.bf16.gmra.mrb[0].mxu0 %v1113
    %v1663 = vpop.f32.mrb[0].mxu0
    %v1664 = vadd.f32 0.0, %v1663
    %v1665 = vpop.f32.mrb[0].mxu0
    %v1666 = vadd.f32 0.0, %v1665
    %v1667 = vpop.f32.mrb[0].mxu0
    %v1668 = vadd.f32 0.0, %v1667
    %v1669 = vpop.f32.mrb[0].mxu0
    %v1670 = vadd.f32 0.0, %v1669
    %1671 = vmatprep.mubr.bf16.mxu0 0
    %1672 = vmatmul.mubr.bf16.gmra.mrb[0].mxu0 %v1114
    %v1673 = vpop.f32.mrb[0].mxu0
    %v1674 = vadd.f32 0.0, %v1673
    %v1675 = vpop.f32.mrb[0].mxu0
    %v1676 = vadd.f32 0.0, %v1675
    %v1677 = vpop.f32.mrb[0].mxu0
    %v1678 = vadd.f32 0.0, %v1677
    %v1679 = vpop.f32.mrb[0].mxu0
    %v1680 = vadd.f32 0.0, %v1679
    %1681 = vmatprep.mubr.bf16.mxu0 0
    %1682 = vmatmul.mubr.bf16.gmra.mrb[0].mxu0 %v1115
    %v1683 = vpop.f32.mrb[0].mxu0
    %v1684 = vadd.f32 0.0, %v1683
    %v1685 = vpop.f32.mrb[0].mxu0
    %v1686 = vadd.f32 0.0, %v1685
    %v1687 = vpop.f32.mrb[0].mxu0
    %v1688 = vadd.f32 0.0, %v1687
    %v1689 = vpop.f32.mrb[0].mxu0
    %v1690 = vadd.f32 0.0, %v1689
    %1691 = vmatprep.mubr.bf16.mxu0 0
    %1692 = vmatmul.mubr.bf16.gmra.mrb[0].mxu0 %v1116
    %v1693 = vpop.f32.mrb[0].mxu0
    %v1694 = vadd.f32 0.0, %v1693
    %v1695 = vpop.f32.mrb[0].mxu0
    %v1696 = vadd.f32 0.0, %v1695
    %v1697 = vpop.f32.mrb[0].mxu0
    %v1698 = vadd.f32 0.0, %v1697
    %v1699 = vpop.f32.mrb[0].mxu0
    %v1700 = vadd.f32 0.0, %v1699
    %1701 = vmatprep.mubr.bf16.mxu0 0
    %1702 = vmatmul.mubr.bf16.gmra.mrb[0].mxu0 %v1117
    %v1703 = vpop.f32.mrb[0].mxu0
    %v1704 = vadd.f32 0.0, %v1703
    %v1705 = vpop.f32.mrb[0].mxu0
    %v1706 = vadd.f32 0.0, %v1705
    %v1707 = vpop.f32.mrb[0].mxu0
    %v1708 = vadd.f32 0.0, %v1707
    %v1709 = vpop.f32.mrb[0].mxu0
    %v1710 = vadd.f32 0.0, %v1709
    %1711 = vmatprep.mubr.bf16.mxu0 0
    %1712 = vmatmul.mubr.bf16.gmra.mrb[0].mxu0 %v1118
    %v1713 = vpop.f32.mrb[0].mxu0
    %v1714 = vadd.f32 0.0, %v1713
    %v1715 = vpop.f32.mrb[0].mxu0
    %v1716 = vadd.f32 0.0, %v1715
    %v1717 = vpop.f32.mrb[0].mxu0
    %v1718 = vadd.f32 0.0, %v1717
    %v1719 = vpop.f32.mrb[0].mxu0
    %v1720 = vadd.f32 0.0, %v1719
    %1721 = vmatprep.mubr.bf16.mxu0 0
    %1722 = vmatmul.mubr.bf16.gmra.mrb[0].mxu0 %v1119
    %v1723 = vpop.f32.mrb[0].mxu0
    %v1724 = vadd.f32 0.0, %v1723
    %v1725 = vpop.f32.mrb[0].mxu0
    %v1726 = vadd.f32 0.0, %v1725
    %v1727 = vpop.f32.mrb[0].mxu0
    %v1728 = vadd.f32 0.0, %v1727
    %v1729 = vpop.f32.mrb[0].mxu0
    %v1730 = vadd.f32 0.0, %v1729
    %1731 = vmatprep.mubr.bf16.mxu0 0
    %1732 = vmatmul.mubr.bf16.gmra.mrb[0].mxu0 %v1120
    %v1733 = vpop.f32.mrb[0].mxu0
    %v1734 = vadd.f32 0.0, %v1733
    %v1735 = vpop.f32.mrb[0].mxu0
    %v1736 = vadd.f32 0.0, %v1735
    %v1737 = vpop.f32.mrb[0].mxu0
    %v1738 = vadd.f32 0.0, %v1737
    %v1739 = vpop.f32.mrb[0].mxu0
    %v1740 = vadd.f32 0.0, %v1739
    %1741 = vmatprep.mubr.bf16.mxu0 0
    %1742 = vmatmul.mubr.bf16.gmra.mrb[0].mxu0 %v1121
    %v1743 = vpop.f32.mrb[0].mxu0
    %v1744 = vadd.f32 0.0, %v1743
    %v1745 = vpop.f32.mrb[0].mxu0
    %v1746 = vadd.f32 0.0, %v1745
    %v1747 = vpop.f32.mrb[0].mxu0
    %v1748 = vadd.f32 0.0, %v1747
    %v1749 = vpop.f32.mrb[0].mxu0
    %v1750 = vadd.f32 0.0, %v1749
    %1751 = vmatprep.mubr.bf16.mxu0 0
    %1752 = vmatmul.mubr.bf16.gmra.mrb[0].mxu0 %v1122
    %v1753 = vpop.f32.mrb[0].mxu0
    %v1754 = vadd.f32 0.0, %v1753
    %v1755 = vpop.f32.mrb[0].mxu0
    %v1756 = vadd.f32 0.0, %v1755
    %v1757 = vpop.f32.mrb[0].mxu0
    %v1758 = vadd.f32 0.0, %v1757
    %v1759 = vpop.f32.mrb[0].mxu0
    %v1760 = vadd.f32 0.0, %v1759
    %1761 = vmatprep.mubr.bf16.mxu0 0
    %1762 = vmatmul.mubr.bf16.gmra.mrb[0].mxu0 %v1123
    %v1763 = vpop.f32.mrb[0].mxu0
    %v1764 = vadd.f32 0.0, %v1763
    %v1765 = vpop.f32.mrb[0].mxu0
    %v1766 = vadd.f32 0.0, %v1765
    %v1767 = vpop.f32.mrb[0].mxu0
    %v1768 = vadd.f32 0.0, %v1767
    %v1769 = vpop.f32.mrb[0].mxu0
    %v1770 = vadd.f32 0.0, %v1769
    %1771 = vmatprep.mubr.bf16.mxu0 0
    %1772 = vmatmul.mubr.bf16.gmra.mrb[0].mxu0 %v1124
    %v1773 = vpop.f32.mrb[0].mxu0
    %v1774 = vadd.f32 0.0, %v1773
    %v1775 = vpop.f32.mrb[0].mxu0
    %v1776 = vadd.f32 0.0, %v1775
    %v1777 = vpop.f32.mrb[0].mxu0
    %v1778 = vadd.f32 0.0, %v1777
    %v1779 = vpop.f32.mrb[0].mxu0
    %v1780 = vadd.f32 0.0, %v1779
    %1781 = vmatprep.mubr.bf16.mxu0 0
    %1782 = vmatmul.mubr.bf16.gmra.mrb[0].mxu0 %v1125
    %v1783 = vpop.f32.mrb[0].mxu0
    %v1784 = vadd.f32 0.0, %v1783
    %v1785 = vpop.f32.mrb[0].mxu0
    %v1786 = vadd.f32 0.0, %v1785
    %v1787 = vpop.f32.mrb[0].mxu0
    %v1788 = vadd.f32 0.0, %v1787
    %v1789 = vpop.f32.mrb[0].mxu0
    %v1790 = vadd.f32 0.0, %v1789
    %1791 = vmatprep.mubr.bf16.mxu0 0
    %1792 = vmatmul.mubr.bf16.gmra.mrb[0].mxu0 %v1126
    %v1793 = vpop.f32.mrb[0].mxu0
    %v1794 = vadd.f32 0.0, %v1793
    %v1795 = vpop.f32.mrb[0].mxu0
    %v1796 = vadd.f32 0.0, %v1795
    %v1797 = vpop.f32.mrb[0].mxu0
    %v1798 = vadd.f32 0.0, %v1797
    %v1799 = vpop.f32.mrb[0].mxu0
    %v1800 = vadd.f32 0.0, %v1799
    %1801 = vmatprep.mubr.bf16.mxu0 0
    %1802 = vmatmul.mubr.bf16.gmra.mrb[0].mxu0 %v1127
    %v1803 = vpop.f32.mrb[0].mxu0
    %v1804 = vadd.f32 0.0, %v1803
    %v1805 = vpop.f32.mrb[0].mxu0
    %v1806 = vadd.f32 0.0, %v1805
    %v1807 = vpop.f32.mrb[0].mxu0
    %v1808 = vadd.f32 0.0, %v1807
    %v1809 = vpop.f32.mrb[0].mxu0
    %v1810 = vadd.f32 0.0, %v1809
    %1811 = vmatprep.mubr.bf16.mxu0 0
    %1812 = vmatmul.mubr.bf16.gmra.mrb[0].mxu0 %v1128
    %v1813 = vpop.f32.mrb[0].mxu0
    %v1814 = vadd.f32 0.0, %v1813
    %v1815 = vpop.f32.mrb[0].mxu0
    %v1816 = vadd.f32 0.0, %v1815
    %v1817 = vpop.f32.mrb[0].mxu0
    %v1818 = vadd.f32 0.0, %v1817
    %v1819 = vpop.f32.mrb[0].mxu0
    %v1820 = vadd.f32 0.0, %v1819
    %1821 = vmatprep.mubr.bf16.mxu0 0
    %1822 = vmatmul.mubr.bf16.gmra.mrb[0].mxu0 %v1129
    %v1823 = vpop.f32.mrb[0].mxu0
    %v1824 = vadd.f32 0.0, %v1823
    %v1825 = vpop.f32.mrb[0].mxu0
    %v1826 = vadd.f32 0.0, %v1825
    %v1827 = vpop.f32.mrb[0].mxu0
    %v1828 = vadd.f32 0.0, %v1827
    %v1829 = vpop.f32.mrb[0].mxu0
    %v1830 = vadd.f32 0.0, %v1829
    %1831 = vmatprep.mubr.bf16.mxu0 0
    %1832 = vmatmul.mubr.bf16.gmra.mrb[0].mxu0 %v1130
    %v1833 = vpop.f32.mrb[0].mxu0
    %v1834 = vadd.f32 0.0, %v1833
    %v1835 = vpop.f32.mrb[0].mxu0
    %v1836 = vadd.f32 0.0, %v1835
    %v1837 = vpop.f32.mrb[0].mxu0
    %v1838 = vadd.f32 0.0, %v1837
    %v1839 = vpop.f32.mrb[0].mxu0
    %v1840 = vadd.f32 0.0, %v1839
    %1841 = vmatprep.mubr.bf16.mxu0 0
    %1842 = vmatmul.mubr.bf16.gmra.mrb[0].mxu0 %v1131
    %v1843 = vpop.f32.mrb[0].mxu0
    %v1844 = vadd.f32 0.0, %v1843
    %v1845 = vpop.f32.mrb[0].mxu0
    %v1846 = vadd.f32 0.0, %v1845
    %v1847 = vpop.f32.mrb[0].mxu0
    %v1848 = vadd.f32 0.0, %v1847
    %v1849 = vpop.f32.mrb[0].mxu0
    %v1850 = vadd.f32 0.0, %v1849
    %1851 = vmatprep.mubr.bf16.mxu0 0
    %1852 = vmatmul.mubr.bf16.gmra.mrb[0].mxu0 %v1132
    %v1853 = vpop.f32.mrb[0].mxu0
    %v1854 = vadd.f32 0.0, %v1853
    %v1855 = vpop.f32.mrb[0].mxu0
    %v1856 = vadd.f32 0.0, %v1855
    %v1857 = vpop.f32.mrb[0].mxu0
    %v1858 = vadd.f32 0.0, %v1857
    %v1859 = vpop.f32.mrb[0].mxu0
    %v1860 = vadd.f32 0.0, %v1859
    %1861 = vmatprep.mubr.bf16.mxu0 0
    %1862 = vmatmul.mubr.bf16.gmra.mrb[0].mxu0 %v1133
    %v1863 = vpop.f32.mrb[0].mxu0
    %v1864 = vadd.f32 0.0, %v1863
    %v1865 = vpop.f32.mrb[0].mxu0
    %v1866 = vadd.f32 0.0, %v1865
    %v1867 = vpop.f32.mrb[0].mxu0
    %v1868 = vadd.f32 0.0, %v1867
    %v1869 = vpop.f32.mrb[0].mxu0
    %v1870 = vadd.f32 0.0, %v1869
    %1871 = vmatprep.mubr.bf16.mxu0 0
    %1872 = vmatmul.mubr.bf16.gmra.mrb[0].mxu0 %v1134
    %v1873 = vpop.f32.mrb[0].mxu0
    %v1874 = vadd.f32 0.0, %v1873
    %v1875 = vpop.f32.mrb[0].mxu0
    %v1876 = vadd.f32 0.0, %v1875
    %v1877 = vpop.f32.mrb[0].mxu0
    %v1878 = vadd.f32 0.0, %v1877
    %v1879 = vpop.f32.mrb[0].mxu0
    %v1880 = vadd.f32 0.0, %v1879
    %1881 = vmatprep.mubr.bf16.mxu0 0
    %1882 = vmatmul.mubr.bf16.gmra.mrb[0].mxu0 %v1135
    %v1883 = vpop.f32.mrb[0].mxu0
    %v1884 = vadd.f32 0.0, %v1883
    %v1885 = vpop.f32.mrb[0].mxu0
    %v1886 = vadd.f32 0.0, %v1885
    %v1887 = vpop.f32.mrb[0].mxu0
    %v1888 = vadd.f32 0.0, %v1887
    %v1889 = vpop.f32.mrb[0].mxu0
    %v1890 = vadd.f32 0.0, %v1889
    %1891 = vmatprep.mubr.bf16.mxu0 0
    %1892 = vmatmul.mubr.bf16.gmra.mrb[0].mxu0 %v1136
    %v1893 = vpop.f32.mrb[0].mxu0
    %v1894 = vadd.f32 0.0, %v1893
    %v1895 = vpop.f32.mrb[0].mxu0
    %v1896 = vadd.f32 0.0, %v1895
    %v1897 = vpop.f32.mrb[0].mxu0
    %v1898 = vadd.f32 0.0, %v1897
    %v1899 = vpop.f32.mrb[0].mxu0
    %v1900 = vadd.f32 0.0, %v1899
    %1901 = vmatprep.mubr.bf16.mxu0 0
    %1902 = vmatmul.mubr.bf16.gmra.mrb[0].mxu0 %v1137
    %v1903 = vpop.f32.mrb[0].mxu0
    %v1904 = vadd.f32 0.0, %v1903
    %v1905 = vpop.f32.mrb[0].mxu0
    %v1906 = vadd.f32 0.0, %v1905
    %v1907 = vpop.f32.mrb[0].mxu0
    %v1908 = vadd.f32 0.0, %v1907
    %v1909 = vpop.f32.mrb[0].mxu0
    %v1910 = vadd.f32 0.0, %v1909
    %1911 = vmatprep.mubr.bf16.mxu0 0
    %1912 = vmatmul.mubr.bf16.gmra.mrb[0].mxu0 %v1138
    %v1913 = vpop.f32.mrb[0].mxu0
    %v1914 = vadd.f32 0.0, %v1913
    %v1915 = vpop.f32.mrb[0].mxu0
    %v1916 = vadd.f32 0.0, %v1915
    %v1917 = vpop.f32.mrb[0].mxu0
    %v1918 = vadd.f32 0.0, %v1917
    %v1919 = vpop.f32.mrb[0].mxu0
    %v1920 = vadd.f32 0.0, %v1919
    %1921 = vmatprep.mubr.bf16.mxu0 0
    %1922 = vmatmul.mubr.bf16.gmra.mrb[0].mxu0 %v1139
    %v1923 = vpop.f32.mrb[0].mxu0
    %v1924 = vadd.f32 0.0, %v1923
    %v1925 = vpop.f32.mrb[0].mxu0
    %v1926 = vadd.f32 0.0, %v1925
    %v1927 = vpop.f32.mrb[0].mxu0
    %v1928 = vadd.f32 0.0, %v1927
    %v1929 = vpop.f32.mrb[0].mxu0
    %v1930 = vadd.f32 0.0, %v1929
    %1931 = vmatprep.mubr.bf16.mxu0 0
    %1932 = vmatmul.mubr.bf16.gmra.mrb[0].mxu0 %v1140
    %v1933 = vpop.f32.mrb[0].mxu0
    %v1934 = vadd.f32 0.0, %v1933
    %v1935 = vpop.f32.mrb[0].mxu0
    %v1936 = vadd.f32 0.0, %v1935
    %v1937 = vpop.f32.mrb[0].mxu0
    %v1938 = vadd.f32 0.0, %v1937
    %v1939 = vpop.f32.mrb[0].mxu0
    %v1940 = vadd.f32 0.0, %v1939
    %1941 = vmatprep.mubr.bf16.mxu0 0
    %1942 = vmatmul.mubr.bf16.gmra.mrb[0].mxu0 %v1141
    %v1943 = vpop.f32.mrb[0].mxu0
    %v1944 = vadd.f32 0.0, %v1943
    %v1945 = vpop.f32.mrb[0].mxu0
    %v1946 = vadd.f32 0.0, %v1945
    %v1947 = vpop.f32.mrb[0].mxu0
    %v1948 = vadd.f32 0.0, %v1947
    %v1949 = vpop.f32.mrb[0].mxu0
    %v1950 = vadd.f32 0.0, %v1949
    %1951 = vmatprep.mubr.bf16.mxu0 0
    %1952 = vmatmul.mubr.bf16.gmra.mrb[0].mxu0 %v1142
    %v1953 = vpop.f32.mrb[0].mxu0
    %v1954 = vadd.f32 0.0, %v1953
    %v1955 = vpop.f32.mrb[0].mxu0
    %v1956 = vadd.f32 0.0, %v1955
    %v1957 = vpop.f32.mrb[0].mxu0
    %v1958 = vadd.f32 0.0, %v1957
    %v1959 = vpop.f32.mrb[0].mxu0
    %v1960 = vadd.f32 0.0, %v1959
    %1961 = vmatprep.mubr.bf16.mxu0 0
    %1962 = vmatmul.mubr.bf16.gmra.mrb[0].mxu0 %v1143
    %v1963 = vpop.f32.mrb[0].mxu0
    %v1964 = vadd.f32 0.0, %v1963
    %v1965 = vpop.f32.mrb[0].mxu0
    %v1966 = vadd.f32 0.0, %v1965
    %v1967 = vpop.f32.mrb[0].mxu0
    %v1968 = vadd.f32 0.0, %v1967
    %v1969 = vpop.f32.mrb[0].mxu0
    %v1970 = vadd.f32 0.0, %v1969
    %1971 = vmatprep.mubr.bf16.mxu0 0
    %1972 = vmatmul.mubr.bf16.gmra.mrb[0].mxu0 %v1144
    %v1973 = vpop.f32.mrb[0].mxu0
    %v1974 = vadd.f32 0.0, %v1973
    %v1975 = vpop.f32.mrb[0].mxu0
    %v1976 = vadd.f32 0.0, %v1975
    %v1977 = vpop.f32.mrb[0].mxu0
    %v1978 = vadd.f32 0.0, %v1977
    %v1979 = vpop.f32.mrb[0].mxu0
    %v1980 = vadd.f32 0.0, %v1979
    %1981 = vmatprep.mubr.bf16.mxu0 0
    %1982 = vmatmul.mubr.bf16.gmra.mrb[0].mxu0 %v1145
    %v1983 = vpop.f32.mrb[0].mxu0
    %v1984 = vadd.f32 0.0, %v1983
    %v1985 = vpop.f32.mrb[0].mxu0
    %v1986 = vadd.f32 0.0, %v1985
    %v1987 = vpop.f32.mrb[0].mxu0
    %v1988 = vadd.f32 0.0, %v1987
    %v1989 = vpop.f32.mrb[0].mxu0
    %v1990 = vadd.f32 0.0, %v1989
    %1991 = vmatprep.mubr.bf16.mxu0 0
    %1992 = vmatmul.mubr.bf16.gmra.mrb[0].mxu0 %v1146
    %v1993 = vpop.f32.mrb[0].mxu0
    %v1994 = vadd.f32 0.0, %v1993
    %v1995 = vpop.f32.mrb[0].mxu0
    %v1996 = vadd.f32 0.0, %v1995
    %v1997 = vpop.f32.mrb[0].mxu0
    %v1998 = vadd.f32 0.0, %v1997
    %v1999 = vpop.f32.mrb[0].mxu0
    %v2000 = vadd.f32 0.0, %v1999
    %2001 = vmatprep.mubr.bf16.mxu0 0
    %2002 = vmatmul.mubr.bf16.gmra.mrb[0].mxu0 %v1147
    %v2003 = vpop.f32.mrb[0].mxu0
    %v2004 = vadd.f32 0.0, %v2003
    %v2005 = vpop.f32.mrb[0].mxu0
    %v2006 = vadd.f32 0.0, %v2005
    %v2007 = vpop.f32.mrb[0].mxu0
    %v2008 = vadd.f32 0.0, %v2007
    %v2009 = vpop.f32.mrb[0].mxu0
    %v2010 = vadd.f32 0.0, %v2009
    %2011 = vmatprep.mubr.bf16.mxu0 0
    %2012 = vmatmul.mubr.bf16.gmra.mrb[0].mxu0 %v1148
    %v2013 = vpop.f32.mrb[0].mxu0
    %v2014 = vadd.f32 0.0, %v2013
    %v2015 = vpop.f32.mrb[0].mxu0
    %v2016 = vadd.f32 0.0, %v2015
    %v2017 = vpop.f32.mrb[0].mxu0
    %v2018 = vadd.f32 0.0, %v2017
    %v2019 = vpop.f32.mrb[0].mxu0
    %v2020 = vadd.f32 0.0, %v2019
    %2021 = vmatprep.mubr.bf16.mxu0 0
    %2022 = vmatmul.mubr.bf16.gmra.mrb[0].mxu0 %v1149
    %v2023 = vpop.f32.mrb[0].mxu0
    %v2024 = vadd.f32 0.0, %v2023
    %v2025 = vpop.f32.mrb[0].mxu0
    %v2026 = vadd.f32 0.0, %v2025
    %v2027 = vpop.f32.mrb[0].mxu0
    %v2028 = vadd.f32 0.0, %v2027
    %v2029 = vpop.f32.mrb[0].mxu0
    %v2030 = vadd.f32 0.0, %v2029
    %2031 = vmatprep.mubr.bf16.mxu0 0
    %2032 = vmatmul.mubr.bf16.gmra.mrb[0].mxu0 %v1150
    %v2033 = vpop.f32.mrb[0].mxu0
    %v2034 = vadd.f32 0.0, %v2033
    %v2035 = vpop.f32.mrb[0].mxu0
    %v2036 = vadd.f32 0.0, %v2035
    %v2037 = vpop.f32.mrb[0].mxu0
    %v2038 = vadd.f32 0.0, %v2037
    %v2039 = vpop.f32.mrb[0].mxu0
    %v2040 = vadd.f32 0.0, %v2039
    %2041 = vmatprep.mubr.bf16.mxu0 0
    %2042 = vmatmul.mubr.bf16.gmra.mrb[0].mxu0 %v1151
    %v2043 = vpop.f32.mrb[0].mxu0
    %v2044 = vadd.f32 0.0, %v2043
    %v2045 = vpop.f32.mrb[0].mxu0
    %v2046 = vadd.f32 0.0, %v2045
    %v2047 = vpop.f32.mrb[0].mxu0
    %v2048 = vadd.f32 0.0, %v2047
    %v2049 = vpop.f32.mrb[0].mxu0
    %v2050 = vadd.f32 0.0, %v2049
    %2051 = vmatprep.mubr.bf16.mxu0 0
    %2052 = vmatmul.mubr.bf16.gmra.mrb[0].mxu0 %v1152
    %v2053 = vpop.f32.mrb[0].mxu0
    %v2054 = vadd.f32 0.0, %v2053
    %v2055 = vpop.f32.mrb[0].mxu0
    %v2056 = vadd.f32 0.0, %v2055
    %v2057 = vpop.f32.mrb[0].mxu0
    %v2058 = vadd.f32 0.0, %v2057
    %v2059 = vpop.f32.mrb[0].mxu0
    %v2060 = vadd.f32 0.0, %v2059
    %2061 = vmatprep.mubr.bf16.mxu0 0
    %2062 = vmatmul.mubr.bf16.gmra.mrb[0].mxu0 %v1153
    %v2063 = vpop.f32.mrb[0].mxu0
    %v2064 = vadd.f32 0.0, %v2063
    %v2065 = vpop.f32.mrb[0].mxu0
    %v2066 = vadd.f32 0.0, %v2065
    %v2067 = vpop.f32.mrb[0].mxu0
    %v2068 = vadd.f32 0.0, %v2067
    %v2069 = vpop.f32.mrb[0].mxu0
    %v2070 = vadd.f32 0.0, %v2069
    %2071 = vmatprep.mubr.bf16.mxu0 0
    %2072 = vmatmul.mubr.bf16.gmra.mrb[0].mxu0 %v1154
    %v2073 = vpop.f32.mrb[0].mxu0
    %v2074 = vadd.f32 0.0, %v2073
    %v2075 = vpop.f32.mrb[0].mxu0
    %v2076 = vadd.f32 0.0, %v2075
    %v2077 = vpop.f32.mrb[0].mxu0
    %v2078 = vadd.f32 0.0, %v2077
    %v2079 = vpop.f32.mrb[0].mxu0
    %v2080 = vadd.f32 0.0, %v2079
    %2081 = vmatprep.mubr.bf16.mxu0 0
    %2082 = vmatmul.mubr.bf16.gmra.mrb[0].mxu0 %v1155
    %v2083 = vpop.f32.mrb[0].mxu0
    %v2084 = vadd.f32 0.0, %v2083
    %v2085 = vpop.f32.mrb[0].mxu0
    %v2086 = vadd.f32 0.0, %v2085
    %v2087 = vpop.f32.mrb[0].mxu0
    %v2088 = vadd.f32 0.0, %v2087
    %v2089 = vpop.f32.mrb[0].mxu0
    %v2090 = vadd.f32 0.0, %v2089
    %2091 = vmatprep.mubr.bf16.mxu0 0
    %2092 = vmatmul.mubr.bf16.gmra.mrb[0].mxu0 %v1156
    %v2093 = vpop.f32.mrb[0].mxu0
    %v2094 = vadd.f32 0.0, %v2093
    %v2095 = vpop.f32.mrb[0].mxu0
    %v2096 = vadd.f32 0.0, %v2095
    %v2097 = vpop.f32.mrb[0].mxu0
    %v2098 = vadd.f32 0.0, %v2097
    %v2099 = vpop.f32.mrb[0].mxu0
    %v2100 = vadd.f32 0.0, %v2099
    %2101 = vmatprep.mubr.bf16.mxu0 0
    %2102 = vmatmul.mubr.bf16.gmra.mrb[0].mxu0 %v1157
    %v2103 = vpop.f32.mrb[0].mxu0
    %v2104 = vadd.f32 0.0, %v2103
    %v2105 = vpop.f32.mrb[0].mxu0
    %v2106 = vadd.f32 0.0, %v2105
    %v2107 = vpop.f32.mrb[0].mxu0
    %v2108 = vadd.f32 0.0, %v2107
    %v2109 = vpop.f32.mrb[0].mxu0
    %v2110 = vadd.f32 0.0, %v2109
    %2111 = vmatprep.mubr.bf16.mxu0 0
    %2112 = vmatmul.mubr.bf16.gmra.mrb[0].mxu0 %v1158
    %v2113 = vpop.f32.mrb[0].mxu0
    %v2114 = vadd.f32 0.0, %v2113
    %v2115 = vpop.f32.mrb[0].mxu0
    %v2116 = vadd.f32 0.0, %v2115
    %v2117 = vpop.f32.mrb[0].mxu0
    %v2118 = vadd.f32 0.0, %v2117
    %v2119 = vpop.f32.mrb[0].mxu0
    %v2120 = vadd.f32 0.0, %v2119
    %2121 = vmatprep.mubr.bf16.mxu0 0
    %2122 = vmatmul.mubr.bf16.gmra.mrb[0].mxu0 %v1159
    %v2123 = vpop.f32.mrb[0].mxu0
    %v2124 = vadd.f32 0.0, %v2123
    %v2125 = vpop.f32.mrb[0].mxu0
    %v2126 = vadd.f32 0.0, %v2125
    %v2127 = vpop.f32.mrb[0].mxu0
    %v2128 = vadd.f32 0.0, %v2127
    %v2129 = vpop.f32.mrb[0].mxu0
    %v2130 = vadd.f32 0.0, %v2129
    %2131 = vmatprep.mubr.bf16.mxu0 0
    %2132 = vmatmul.mubr.bf16.gmra.mrb[0].mxu0 %v1160
    %v2133 = vpop.f32.mrb[0].mxu0
    %v2134 = vadd.f32 0.0, %v2133
    %v2135 = vpop.f32.mrb[0].mxu0
    %v2136 = vadd.f32 0.0, %v2135
    %v2137 = vpop.f32.mrb[0].mxu0
    %v2138 = vadd.f32 0.0, %v2137
    %v2139 = vpop.f32.mrb[0].mxu0
    %v2140 = vadd.f32 0.0, %v2139
    %2141 = vmatprep.mubr.bf16.mxu0 0
    %2142 = vmatmul.mubr.bf16.gmra.mrb[0].mxu0 %v1161
    %v2143 = vpop.f32.mrb[0].mxu0
    %v2144 = vadd.f32 0.0, %v2143
    %v2145 = vpop.f32.mrb[0].mxu0
    %v2146 = vadd.f32 0.0, %v2145
    %v2147 = vpop.f32.mrb[0].mxu0
    %v2148 = vadd.f32 0.0, %v2147
    %v2149 = vpop.f32.mrb[0].mxu0
    %v2150 = vadd.f32 0.0, %v2149
    %2151 = vmatprep.mubr.bf16.mxu0 0
    %2152 = vmatmul.mubr.bf16.gmra.mrb[0].mxu0 %v1162
    %v2153 = vpop.f32.mrb[0].mxu0
    %v2154 = vadd.f32 0.0, %v2153
    %v2155 = vpop.f32.mrb[0].mxu0
    %v2156 = vadd.f32 0.0, %v2155
    %v2157 = vpop.f32.mrb[0].mxu0
    %v2158 = vadd.f32 0.0, %v2157
    %v2159 = vpop.f32.mrb[0].mxu0
    %v2160 = vadd.f32 0.0, %v2159
    %2161 = vmatprep.mubr.bf16.mxu0 0
    %2162 = vmatmul.mubr.bf16.gmra.mrb[0].mxu0 %v1163
    %v2163 = vpop.f32.mrb[0].mxu0
    %v2164 = vadd.f32 0.0, %v2163
    %v2165 = vpop.f32.mrb[0].mxu0
    %v2166 = vadd.f32 0.0, %v2165
    %v2167 = vpop.f32.mrb[0].mxu0
    %v2168 = vadd.f32 0.0, %v2167
    %v2169 = vpop.f32.mrb[0].mxu0
    %v2170 = vadd.f32 0.0, %v2169
    %2171 = vmatprep.mubr.bf16.mxu0 0
    %2172 = vmatmul.mubr.bf16.gmra.mrb[0].mxu0 %v1164
    %v2173 = vpop.f32.mrb[0].mxu0
    %v2174 = vadd.f32 0.0, %v2173
    %v2175 = vpop.f32.mrb[0].mxu0
    %v2176 = vadd.f32 0.0, %v2175
    %v2177 = vpop.f32.mrb[0].mxu0
    %v2178 = vadd.f32 0.0, %v2177
    %v2179 = vpop.f32.mrb[0].mxu0
    %v2180 = vadd.f32 0.0, %v2179
    %2181 = vmatprep.mubr.bf16.mxu0 0
    %2182 = vmatmul.mubr.bf16.gmra.mrb[0].mxu0 %v1165
    %v2183 = vpop.f32.mrb[0].mxu0
    %v2184 = vadd.f32 0.0, %v2183
    %v2185 = vpop.f32.mrb[0].mxu0
    %v2186 = vadd.f32 0.0, %v2185
    %v2187 = vpop.f32.mrb[0].mxu0
    %v2188 = vadd.f32 0.0, %v2187
    %v2189 = vpop.f32.mrb[0].mxu0
    %v2190 = vadd.f32 0.0, %v2189
    %2191 = vmatprep.mubr.bf16.mxu0 0
    %2192 = vmatmul.mubr.bf16.gmra.mrb[0].mxu0 %v1166
    %v2193 = vpop.f32.mrb[0].mxu0
    %v2194 = vadd.f32 0.0, %v2193
    %v2195 = vpop.f32.mrb[0].mxu0
    %v2196 = vadd.f32 0.0, %v2195
    %v2197 = vpop.f32.mrb[0].mxu0
    %v2198 = vadd.f32 0.0, %v2197
    %v2199 = vpop.f32.mrb[0].mxu0
    %v2200 = vadd.f32 0.0, %v2199
    %2201 = vmatprep.mubr.bf16.mxu0 0
    %2202 = vmatmul.mubr.bf16.gmra.mrb[0].mxu0 %v1167
    %v2203 = vpop.f32.mrb[0].mxu0
    %v2204 = vadd.f32 0.0, %v2203
    %v2205 = vpop.f32.mrb[0].mxu0
    %v2206 = vadd.f32 0.0, %v2205
    %v2207 = vpop.f32.mrb[0].mxu0
    %v2208 = vadd.f32 0.0, %v2207
    %v2209 = vpop.f32.mrb[0].mxu0
    %v2210 = vadd.f32 0.0, %v2209
    %2211 = vmatprep.mubr.bf16.mxu0 0
    %2212 = vmatmul.mubr.bf16.gmra.mrb[0].mxu0 %v1168
    %v2213 = vpop.f32.mrb[0].mxu0
    %v2214 = vadd.f32 0.0, %v2213
    %v2215 = vpop.f32.mrb[0].mxu0
    %v2216 = vadd.f32 0.0, %v2215
    %v2217 = vpop.f32.mrb[0].mxu0
    %v2218 = vadd.f32 0.0, %v2217
    %v2219 = vpop.f32.mrb[0].mxu0
    %v2220 = vadd.f32 0.0, %v2219
    %2221 = vmatprep.mubr.bf16.mxu0 0
    %2222 = vmatmul.mubr.bf16.gmra.mrb[0].mxu0 %v1169
    %v2223 = vpop.f32.mrb[0].mxu0
    %v2224 = vadd.f32 0.0, %v2223
    %v2225 = vpop.f32.mrb[0].mxu0
    %v2226 = vadd.f32 0.0, %v2225
    %v2227 = vpop.f32.mrb[0].mxu0
    %v2228 = vadd.f32 0.0, %v2227
    %v2229 = vpop.f32.mrb[0].mxu0
    %v2230 = vadd.f32 0.0, %v2229
    %2231 = vmatprep.mubr.bf16.mxu0 0
    %2232 = vmatmul.mubr.bf16.gmra.mrb[0].mxu0 %v1170
    %v2233 = vpop.f32.mrb[0].mxu0
    %v2234 = vadd.f32 0.0, %v2233
    %v2235 = vpop.f32.mrb[0].mxu0
    %v2236 = vadd.f32 0.0, %v2235
    %v2237 = vpop.f32.mrb[0].mxu0
    %v2238 = vadd.f32 0.0, %v2237
    %v2239 = vpop.f32.mrb[0].mxu0
    %v2240 = vadd.f32 0.0, %v2239
    %2241 = vmatprep.mubr.bf16.mxu0 0
    %2242 = vmatmul.mubr.bf16.gmra.mrb[0].mxu0 %v1171
    %v2243 = vpop.f32.mrb[0].mxu0
    %v2244 = vadd.f32 0.0, %v2243
    %v2245 = vpop.f32.mrb[0].mxu0
    %v2246 = vadd.f32 0.0, %v2245
    %v2247 = vpop.f32.mrb[0].mxu0
    %v2248 = vadd.f32 0.0, %v2247
    %v2249 = vpop.f32.mrb[0].mxu0
    %v2250 = vadd.f32 0.0, %v2249
    %2251 = vmatprep.mubr.bf16.mxu0 0
    %2252 = vmatmul.mubr.bf16.gmra.mrb[0].mxu0 %v1172
    %v2253 = vpop.f32.mrb[0].mxu0
    %v2254 = vadd.f32 0.0, %v2253
    %v2255 = vpop.f32.mrb[0].mxu0
    %v2256 = vadd.f32 0.0, %v2255
    %v2257 = vpop.f32.mrb[0].mxu0
    %v2258 = vadd.f32 0.0, %v2257
    %v2259 = vpop.f32.mrb[0].mxu0
    %v2260 = vadd.f32 0.0, %v2259
    %2261 = vmatprep.mubr.bf16.mxu0 0
    %2262 = vmatmul.mubr.bf16.gmra.mrb[0].mxu0 %v1173
    %v2263 = vpop.f32.mrb[0].mxu0
    %v2264 = vadd.f32 0.0, %v2263
    %v2265 = vpop.f32.mrb[0].mxu0
    %v2266 = vadd.f32 0.0, %v2265
    %v2267 = vpop.f32.mrb[0].mxu0
    %v2268 = vadd.f32 0.0, %v2267
    %v2269 = vpop.f32.mrb[0].mxu0
    %v2270 = vadd.f32 0.0, %v2269
    %2271 = vmatprep.mubr.bf16.mxu0 0
    %2272 = vmatmul.mubr.bf16.gmra.mrb[0].mxu0 %v1174
    %v2273 = vpop.f32.mrb[0].mxu0
    %v2274 = vadd.f32 0.0, %v2273
    %v2275 = vpop.f32.mrb[0].mxu0
    %v2276 = vadd.f32 0.0, %v2275
    %v2277 = vpop.f32.mrb[0].mxu0
    %v2278 = vadd.f32 0.0, %v2277
    %v2279 = vpop.f32.mrb[0].mxu0
    %v2280 = vadd.f32 0.0, %v2279
    %2281 = vmatprep.mubr.bf16.mxu0 0
    %2282 = vmatmul.mubr.bf16.gmra.mrb[0].mxu0 %v1175
    %v2283 = vpop.f32.mrb[0].mxu0
    %v2284 = vadd.f32 0.0, %v2283
    %v2285 = vpop.f32.mrb[0].mxu0
    %v2286 = vadd.f32 0.0, %v2285
    %v2287 = vpop.f32.mrb[0].mxu0
    %v2288 = vadd.f32 0.0, %v2287
    %v2289 = vpop.f32.mrb[0].mxu0
    %v2290 = vadd.f32 0.0, %v2289
    %2291 = vmatprep.mubr.bf16.mxu0 0
    %2292 = vmatmul.mubr.bf16.gmra.mrb[0].mxu0 %v1176
    %v2293 = vpop.f32.mrb[0].mxu0
    %v2294 = vadd.f32 0.0, %v2293
    %v2295 = vpop.f32.mrb[0].mxu0
    %v2296 = vadd.f32 0.0, %v2295
    %v2297 = vpop.f32.mrb[0].mxu0
    %v2298 = vadd.f32 0.0, %v2297
    %v2299 = vpop.f32.mrb[0].mxu0
    %v2300 = vadd.f32 0.0, %v2299
    %2301 = vmatprep.mubr.bf16.mxu0 0
    %2302 = vmatmul.mubr.bf16.gmra.mrb[0].mxu0 %v1177
    %v2303 = vpop.f32.mrb[0].mxu0
    %v2304 = vadd.f32 0.0, %v2303
    %v2305 = vpop.f32.mrb[0].mxu0
    %v2306 = vadd.f32 0.0, %v2305
    %v2307 = vpop.f32.mrb[0].mxu0
    %v2308 = vadd.f32 0.0, %v2307
    %v2309 = vpop.f32.mrb[0].mxu0
    %v2310 = vadd.f32 0.0, %v2309
    %2311 = vmatprep.mubr.bf16.mxu0 0
    %2312 = vmatmul.mubr.bf16.gmra.mrb[0].mxu0 %v1178
    %v2313 = vpop.f32.mrb[0].mxu0
    %v2314 = vadd.f32 0.0, %v2313
    %v2315 = vpop.f32.mrb[0].mxu0
    %v2316 = vadd.f32 0.0, %v2315
    %v2317 = vpop.f32.mrb[0].mxu0
    %v2318 = vadd.f32 0.0, %v2317
    %v2319 = vpop.f32.mrb[0].mxu0
    %v2320 = vadd.f32 0.0, %v2319
    %2321 = vmatprep.mubr.bf16.mxu0 0
    %2322 = vmatmul.mubr.bf16.gmra.mrb[0].mxu0 %v1179
    %v2323 = vpop.f32.mrb[0].mxu0
    %v2324 = vadd.f32 0.0, %v2323
    %v2325 = vpop.f32.mrb[0].mxu0
    %v2326 = vadd.f32 0.0, %v2325
    %v2327 = vpop.f32.mrb[0].mxu0
    %v2328 = vadd.f32 0.0, %v2327
    %v2329 = vpop.f32.mrb[0].mxu0
    %v2330 = vadd.f32 0.0, %v2329
    %2331 = vmatprep.mubr.bf16.mxu0 0
    %2332 = vmatmul.mubr.bf16.gmra.mrb[0].mxu0 %v1180
    %v2333 = vpop.f32.mrb[0].mxu0
    %v2334 = vadd.f32 0.0, %v2333
    %v2335 = vpop.f32.mrb[0].mxu0
    %v2336 = vadd.f32 0.0, %v2335
    %v2337 = vpop.f32.mrb[0].mxu0
    %v2338 = vadd.f32 0.0, %v2337
    %v2339 = vpop.f32.mrb[0].mxu0
    %v2340 = vadd.f32 0.0, %v2339
    %2341 = vmatprep.mubr.bf16.mxu0 0
    %2342 = vmatmul.mubr.bf16.gmra.mrb[0].mxu0 %v1181
    %v2343 = vpop.f32.mrb[0].mxu0
    %v2344 = vadd.f32 0.0, %v2343
    %v2345 = vpop.f32.mrb[0].mxu0
    %v2346 = vadd.f32 0.0, %v2345
    %v2347 = vpop.f32.mrb[0].mxu0
    %v2348 = vadd.f32 0.0, %v2347
    %v2349 = vpop.f32.mrb[0].mxu0
    %v2350 = vadd.f32 0.0, %v2349
    %2351 = vmatprep.mubr.bf16.mxu0 0
    %2352 = vmatmul.mubr.bf16.gmra.mrb[0].mxu0 %v1182
    %v2353 = vpop.f32.mrb[0].mxu0
    %v2354 = vadd.f32 0.0, %v2353
    %v2355 = vpop.f32.mrb[0].mxu0
    %v2356 = vadd.f32 0.0, %v2355
    %v2357 = vpop.f32.mrb[0].mxu0
    %v2358 = vadd.f32 0.0, %v2357
    %v2359 = vpop.f32.mrb[0].mxu0
    %v2360 = vadd.f32 0.0, %v2359
    %2361 = vmatprep.mubr.bf16.mxu0 0
    %2362 = vmatmul.mubr.bf16.gmra.mrb[0].mxu0 %v1183
    %v2363 = vpop.f32.mrb[0].mxu0
    %v2364 = vadd.f32 0.0, %v2363
    %v2365 = vpop.f32.mrb[0].mxu0
    %v2366 = vadd.f32 0.0, %v2365
    %v2367 = vpop.f32.mrb[0].mxu0
    %v2368 = vadd.f32 0.0, %v2367
    %v2369 = vpop.f32.mrb[0].mxu0
    %v2370 = vadd.f32 0.0, %v2369
    %2371 = vmatprep.mubr.bf16.mxu0 0
    %2372 = vmatmul.mubr.bf16.gmra.mrb[0].mxu0 %v1184
    %v2373 = vpop.f32.mrb[0].mxu0
    %v2374 = vadd.f32 0.0, %v2373
    %v2375 = vpop.f32.mrb[0].mxu0
    %v2376 = vadd.f32 0.0, %v2375
    %v2377 = vpop.f32.mrb[0].mxu0
    %v2378 = vadd.f32 0.0, %v2377
    %v2379 = vpop.f32.mrb[0].mxu0
    %v2380 = vadd.f32 0.0, %v2379
    %2381 = vmatprep.mubr.bf16.mxu0 0
    %2382 = vmatmul.mubr.bf16.gmra.mrb[0].mxu0 %v1185
    %v2383 = vpop.f32.mrb[0].mxu0
    %v2384 = vadd.f32 0.0, %v2383
    %v2385 = vpop.f32.mrb[0].mxu0
    %v2386 = vadd.f32 0.0, %v2385
    %v2387 = vpop.f32.mrb[0].mxu0
    %v2388 = vadd.f32 0.0, %v2387
    %v2389 = vpop.f32.mrb[0].mxu0
    %v2390 = vadd.f32 0.0, %v2389
    %2391 = vmatprep.mubr.bf16.mxu0 0
    %2392 = vmatmul.mubr.bf16.gmra.mrb[0].mxu0 %v1186
    %v2393 = vpop.f32.mrb[0].mxu0
    %v2394 = vadd.f32 0.0, %v2393
    %v2395 = vpop.f32.mrb[0].mxu0
    %v2396 = vadd.f32 0.0, %v2395
    %v2397 = vpop.f32.mrb[0].mxu0
    %v2398 = vadd.f32 0.0, %v2397
    %v2399 = vpop.f32.mrb[0].mxu0
    %v2400 = vadd.f32 0.0, %v2399
    %2401 = vmatprep.mubr.bf16.mxu0 0
    %2402 = vmatmul.mubr.bf16.gmra.mrb[0].mxu0 %v1187
    %v2403 = vpop.f32.mrb[0].mxu0
    %v2404 = vadd.f32 0.0, %v2403
    %v2405 = vpop.f32.mrb[0].mxu0
    %v2406 = vadd.f32 0.0, %v2405
    %v2407 = vpop.f32.mrb[0].mxu0
    %v2408 = vadd.f32 0.0, %v2407
    %v2409 = vpop.f32.mrb[0].mxu0
    %v2410 = vadd.f32 0.0, %v2409
    %2411 = vmatprep.mubr.bf16.mxu0 0
    %2412 = vmatmul.mubr.bf16.gmra.mrb[0].mxu0 %v1188
    %v2413 = vpop.f32.mrb[0].mxu0
    %v2414 = vadd.f32 0.0, %v2413
    %v2415 = vpop.f32.mrb[0].mxu0
    %v2416 = vadd.f32 0.0, %v2415
    %v2417 = vpop.f32.mrb[0].mxu0
    %v2418 = vadd.f32 0.0, %v2417
    %v2419 = vpop.f32.mrb[0].mxu0
    %v2420 = vadd.f32 0.0, %v2419
    %2421 = vmatprep.mubr.bf16.mxu0 0
    %2422 = vmatmul.mubr.bf16.gmra.mrb[0].mxu0 %v1189
    %v2423 = vpop.f32.mrb[0].mxu0
    %v2424 = vadd.f32 0.0, %v2423
    %v2425 = vpop.f32.mrb[0].mxu0
    %v2426 = vadd.f32 0.0, %v2425
    %v2427 = vpop.f32.mrb[0].mxu0
    %v2428 = vadd.f32 0.0, %v2427
    %v2429 = vpop.f32.mrb[0].mxu0
    %v2430 = vadd.f32 0.0, %v2429
    %2431 = vmatprep.mubr.bf16.mxu0 0
    %2432 = vmatmul.mubr.bf16.gmra.mrb[0].mxu0 %v1190
    %v2433 = vpop.f32.mrb[0].mxu0
    %v2434 = vadd.f32 0.0, %v2433
    %v2435 = vpop.f32.mrb[0].mxu0
    %v2436 = vadd.f32 0.0, %v2435
    %v2437 = vpop.f32.mrb[0].mxu0
    %v2438 = vadd.f32 0.0, %v2437
    %v2439 = vpop.f32.mrb[0].mxu0
    %v2440 = vadd.f32 0.0, %v2439
    %2441 = vmatprep.mubr.bf16.mxu0 0
    %2442 = vmatmul.mubr.bf16.gmra.mrb[0].mxu0 %v1191
    %v2443 = vpop.f32.mrb[0].mxu0
    %v2444 = vadd.f32 0.0, %v2443
    %v2445 = vpop.f32.mrb[0].mxu0
    %v2446 = vadd.f32 0.0, %v2445
    %v2447 = vpop.f32.mrb[0].mxu0
    %v2448 = vadd.f32 0.0, %v2447
    %v2449 = vpop.f32.mrb[0].mxu0
    %v2450 = vadd.f32 0.0, %v2449
    %2451 = vmatprep.mubr.bf16.mxu0 0
    %2452 = vmatmul.mubr.bf16.gmra.mrb[0].mxu0 %v1192
    %v2453 = vpop.f32.mrb[0].mxu0
    %v2454 = vadd.f32 0.0, %v2453
    %v2455 = vpop.f32.mrb[0].mxu0
    %v2456 = vadd.f32 0.0, %v2455
    %v2457 = vpop.f32.mrb[0].mxu0
    %v2458 = vadd.f32 0.0, %v2457
    %v2459 = vpop.f32.mrb[0].mxu0
    %v2460 = vadd.f32 0.0, %v2459
    %2461 = vmatprep.mubr.bf16.mxu0 0
    %2462 = vmatmul.mubr.bf16.gmra.mrb[0].mxu0 %v1193
    %v2463 = vpop.f32.mrb[0].mxu0
    %v2464 = vadd.f32 0.0, %v2463
    %v2465 = vpop.f32.mrb[0].mxu0
    %v2466 = vadd.f32 0.0, %v2465
    %v2467 = vpop.f32.mrb[0].mxu0
    %v2468 = vadd.f32 0.0, %v2467
    %v2469 = vpop.f32.mrb[0].mxu0
    %v2470 = vadd.f32 0.0, %v2469
    %2471 = vmatprep.mubr.bf16.mxu0 0
    %2472 = vmatmul.mubr.bf16.gmra.mrb[0].mxu0 %v1194
    %v2473 = vpop.f32.mrb[0].mxu0
    %v2474 = vadd.f32 0.0, %v2473
    %v2475 = vpop.f32.mrb[0].mxu0
    %v2476 = vadd.f32 0.0, %v2475
    %v2477 = vpop.f32.mrb[0].mxu0
    %v2478 = vadd.f32 0.0, %v2477
    %v2479 = vpop.f32.mrb[0].mxu0
    %v2480 = vadd.f32 0.0, %v2479
    %2481 = vmatprep.mubr.bf16.mxu0 0
    %2482 = vmatmul.mubr.bf16.gmra.mrb[0].mxu0 %v1195
    %v2483 = vpop.f32.mrb[0].mxu0
    %v2484 = vadd.f32 0.0, %v2483
    %v2485 = vpop.f32.mrb[0].mxu0
    %v2486 = vadd.f32 0.0, %v2485
    %v2487 = vpop.f32.mrb[0].mxu0
    %v2488 = vadd.f32 0.0, %v2487
    %v2489 = vpop.f32.mrb[0].mxu0
    %v2490 = vadd.f32 0.0, %v2489
    %2491 = vmatprep.mubr.bf16.mxu0 0
    %2492 = vmatmul.mubr.bf16.gmra.mrb[0].mxu0 %v1196
    %v2493 = vpop.f32.mrb[0].mxu0
    %v2494 = vadd.f32 0.0, %v2493
    %v2495 = vpop.f32.mrb[0].mxu0
    %v2496 = vadd.f32 0.0, %v2495
    %v2497 = vpop.f32.mrb[0].mxu0
    %v2498 = vadd.f32 0.0, %v2497
    %v2499 = vpop.f32.mrb[0].mxu0
    %v2500 = vadd.f32 0.0, %v2499
    %2501 = vmatprep.mubr.bf16.mxu0 0
    %2502 = vmatmul.mubr.bf16.gmra.mrb[0].mxu0 %v1197
    %v2503 = vpop.f32.mrb[0].mxu0
    %v2504 = vadd.f32 0.0, %v2503
    %v2505 = vpop.f32.mrb[0].mxu0
    %v2506 = vadd.f32 0.0, %v2505
    %v2507 = vpop.f32.mrb[0].mxu0
    %v2508 = vadd.f32 0.0, %v2507
    %v2509 = vpop.f32.mrb[0].mxu0
    %v2510 = vadd.f32 0.0, %v2509
    %2511 = vmatprep.mubr.bf16.mxu0 0
    %2512 = vmatmul.mubr.bf16.gmra.mrb[0].mxu0 %v1198
    %v2513 = vpop.f32.mrb[0].mxu0
    %v2514 = vadd.f32 0.0, %v2513
    %v2515 = vpop.f32.mrb[0].mxu0
    %v2516 = vadd.f32 0.0, %v2515
    %v2517 = vpop.f32.mrb[0].mxu0
    %v2518 = vadd.f32 0.0, %v2517
    %v2519 = vpop.f32.mrb[0].mxu0
    %v2520 = vadd.f32 0.0, %v2519
    %2521 = vmatprep.mubr.bf16.mxu0 0
    %2522 = vmatmul.mubr.bf16.gmra.mrb[0].mxu0 %v1199
    %v2523 = vpop.f32.mrb[0].mxu0
    %v2524 = vadd.f32 0.0, %v2523
    %v2525 = vpop.f32.mrb[0].mxu0
    %v2526 = vadd.f32 0.0, %v2525
    %v2527 = vpop.f32.mrb[0].mxu0
    %v2528 = vadd.f32 0.0, %v2527
    %v2529 = vpop.f32.mrb[0].mxu0
    %v2530 = vadd.f32 0.0, %v2529
    %2531 = vmatprep.mubr.bf16.mxu0 0
    %2532 = vmatmul.mubr.bf16.gmra.mrb[0].mxu0 %v1200
    %v2533 = vpop.f32.mrb[0].mxu0
    %v2534 = vadd.f32 0.0, %v2533
    %v2535 = vpop.f32.mrb[0].mxu0
    %v2536 = vadd.f32 0.0, %v2535
    %v2537 = vpop.f32.mrb[0].mxu0
    %v2538 = vadd.f32 0.0, %v2537
    %v2539 = vpop.f32.mrb[0].mxu0
    %v2540 = vadd.f32 0.0, %v2539
    %2541 = vmatprep.mubr.bf16.mxu0 0
    %2542 = vmatmul.mubr.bf16.gmra.mrb[0].mxu0 %v1201
    %v2543 = vpop.f32.mrb[0].mxu0
    %v2544 = vadd.f32 0.0, %v2543
    %v2545 = vpop.f32.mrb[0].mxu0
    %v2546 = vadd.f32 0.0, %v2545
    %v2547 = vpop.f32.mrb[0].mxu0
    %v2548 = vadd.f32 0.0, %v2547
    %v2549 = vpop.f32.mrb[0].mxu0
    %v2550 = vadd.f32 0.0, %v2549
    %2551 = vmatprep.mubr.bf16.mxu0 0
    %2552 = vmatmul.mubr.bf16.gmra.mrb[0].mxu0 %v1202
    %v2553 = vpop.f32.mrb[0].mxu0
    %v2554 = vadd.f32 0.0, %v2553
    %v2555 = vpop.f32.mrb[0].mxu0
    %v2556 = vadd.f32 0.0, %v2555
    %v2557 = vpop.f32.mrb[0].mxu0
    %v2558 = vadd.f32 0.0, %v2557
    %v2559 = vpop.f32.mrb[0].mxu0
    %v2560 = vadd.f32 0.0, %v2559
    %2561 = vmatprep.mubr.bf16.mxu0 0
    %2562 = vmatmul.mubr.bf16.gmra.mrb[0].mxu0 %v1203
    %v2563 = vpop.f32.mrb[0].mxu0
    %v2564 = vadd.f32 0.0, %v2563
    %v2565 = vpop.f32.mrb[0].mxu0
    %v2566 = vadd.f32 0.0, %v2565
    %v2567 = vpop.f32.mrb[0].mxu0
    %v2568 = vadd.f32 0.0, %v2567
    %v2569 = vpop.f32.mrb[0].mxu0
    %v2570 = vadd.f32 0.0, %v2569
    %2571 = vmatprep.mubr.bf16.mxu0 0
    %2572 = vmatmul.mubr.bf16.gmra.mrb[0].mxu0 %v1204
    %v2573 = vpop.f32.mrb[0].mxu0
    %v2574 = vadd.f32 0.0, %v2573
    %v2575 = vpop.f32.mrb[0].mxu0
    %v2576 = vadd.f32 0.0, %v2575
    %v2577 = vpop.f32.mrb[0].mxu0
    %v2578 = vadd.f32 0.0, %v2577
    %v2579 = vpop.f32.mrb[0].mxu0
    %v2580 = vadd.f32 0.0, %v2579
    %2581 = vmatprep.mubr.bf16.mxu0 0
    %2582 = vmatmul.mubr.bf16.gmra.mrb[0].mxu0 %v1205
    %v2583 = vpop.f32.mrb[0].mxu0
    %v2584 = vadd.f32 0.0, %v2583
    %v2585 = vpop.f32.mrb[0].mxu0
    %v2586 = vadd.f32 0.0, %v2585
    %v2587 = vpop.f32.mrb[0].mxu0
    %v2588 = vadd.f32 0.0, %v2587
    %v2589 = vpop.f32.mrb[0].mxu0
    %v2590 = vadd.f32 0.0, %v2589
    %2591 = vmatprep.mubr.bf16.mxu0 0
    %2592 = vmatmul.mubr.bf16.gmra.mrb[0].mxu0 %v1206
    %v2593 = vpop.f32.mrb[0].mxu0
    %v2594 = vadd.f32 0.0, %v2593
    %v2595 = vpop.f32.mrb[0].mxu0
    %v2596 = vadd.f32 0.0, %v2595
    %v2597 = vpop.f32.mrb[0].mxu0
    %v2598 = vadd.f32 0.0, %v2597
    %v2599 = vpop.f32.mrb[0].mxu0
    %v2600 = vadd.f32 0.0, %v2599
    %2601 = vmatprep.mubr.bf16.mxu0 0
    %2602 = vmatmul.mubr.bf16.gmra.mrb[0].mxu0 %v1207
    %v2603 = vpop.f32.mrb[0].mxu0
    %v2604 = vadd.f32 0.0, %v2603
    %v2605 = vpop.f32.mrb[0].mxu0
    %v2606 = vadd.f32 0.0, %v2605
    %v2607 = vpop.f32.mrb[0].mxu0
    %v2608 = vadd.f32 0.0, %v2607
    %v2609 = vpop.f32.mrb[0].mxu0
    %v2610 = vadd.f32 0.0, %v2609
    %2611 = vmatprep.mubr.bf16.mxu0 0
    %2612 = vmatmul.mubr.bf16.gmra.mrb[0].mxu0 %v1208
    %v2613 = vpop.f32.mrb[0].mxu0
    %v2614 = vadd.f32 0.0, %v2613
    %v2615 = vpop.f32.mrb[0].mxu0
    %v2616 = vadd.f32 0.0, %v2615
    %v2617 = vpop.f32.mrb[0].mxu0
    %v2618 = vadd.f32 0.0, %v2617
    %v2619 = vpop.f32.mrb[0].mxu0
    %v2620 = vadd.f32 0.0, %v2619
    %2621 = vmatprep.mubr.bf16.mxu0 0
    %2622 = vmatmul.mubr.bf16.gmra.mrb[0].mxu0 %v1209
    %v2623 = vpop.f32.mrb[0].mxu0
    %v2624 = vadd.f32 0.0, %v2623
    %v2625 = vpop.f32.mrb[0].mxu0
    %v2626 = vadd.f32 0.0, %v2625
    %v2627 = vpop.f32.mrb[0].mxu0
    %v2628 = vadd.f32 0.0, %v2627
    %v2629 = vpop.f32.mrb[0].mxu0
    %v2630 = vadd.f32 0.0, %v2629
    %2631 = vmatprep.mubr.bf16.mxu0 0
    %2632 = vmatmul.mubr.bf16.gmra.mrb[0].mxu0 %v1210
    %v2633 = vpop.f32.mrb[0].mxu0
    %v2634 = vadd.f32 0.0, %v2633
    %v2635 = vpop.f32.mrb[0].mxu0
    %v2636 = vadd.f32 0.0, %v2635
    %v2637 = vpop.f32.mrb[0].mxu0
    %v2638 = vadd.f32 0.0, %v2637
    %v2639 = vpop.f32.mrb[0].mxu0
    %v2640 = vadd.f32 0.0, %v2639
    %2641 = vmatprep.mubr.bf16.mxu0 0
    %2642 = vmatmul.mubr.bf16.gmra.mrb[0].mxu0 %v1211
    %v2643 = vpop.f32.mrb[0].mxu0
    %v2644 = vadd.f32 0.0, %v2643
    %v2645 = vpop.f32.mrb[0].mxu0
    %v2646 = vadd.f32 0.0, %v2645
    %v2647 = vpop.f32.mrb[0].mxu0
    %v2648 = vadd.f32 0.0, %v2647
    %v2649 = vpop.f32.mrb[0].mxu0
    %v2650 = vadd.f32 0.0, %v2649
    %2651 = vmatprep.mubr.bf16.mxu0 0
    %2652 = vmatmul.mubr.bf16.gmra.mrb[0].mxu0 %v1212
    %v2653 = vpop.f32.mrb[0].mxu0
    %v2654 = vadd.f32 0.0, %v2653
    %v2655 = vpop.f32.mrb[0].mxu0
    %v2656 = vadd.f32 0.0, %v2655
    %v2657 = vpop.f32.mrb[0].mxu0
    %v2658 = vadd.f32 0.0, %v2657
    %v2659 = vpop.f32.mrb[0].mxu0
    %v2660 = vadd.f32 0.0, %v2659
    %2661 = vmatprep.mubr.bf16.mxu0 0
    %2662 = vmatmul.mubr.bf16.gmra.mrb[0].mxu0 %v1213
    %v2663 = vpop.f32.mrb[0].mxu0
    %v2664 = vadd.f32 0.0, %v2663
    %v2665 = vpop.f32.mrb[0].mxu0
    %v2666 = vadd.f32 0.0, %v2665
    %v2667 = vpop.f32.mrb[0].mxu0
    %v2668 = vadd.f32 0.0, %v2667
    %v2669 = vpop.f32.mrb[0].mxu0
    %v2670 = vadd.f32 0.0, %v2669
    %2671 = vmatprep.mubr.bf16.mxu0 0
    %2672 = vmatmul.mubr.bf16.gmra.mrb[0].mxu0 %v1214
    %v2673 = vpop.f32.mrb[0].mxu0
    %v2674 = vadd.f32 0.0, %v2673
    %v2675 = vpop.f32.mrb[0].mxu0
    %v2676 = vadd.f32 0.0, %v2675
    %v2677 = vpop.f32.mrb[0].mxu0
    %v2678 = vadd.f32 0.0, %v2677
    %v2679 = vpop.f32.mrb[0].mxu0
    %v2680 = vadd.f32 0.0, %v2679
    %2681 = vmatprep.mubr.bf16.mxu0 0
    %2682 = vmatmul.mubr.bf16.gmra.mrb[0].mxu0 %v1215
    %v2683 = vpop.f32.mrb[0].mxu0
    %v2684 = vadd.f32 0.0, %v2683
    %v2685 = vpop.f32.mrb[0].mxu0
    %v2686 = vadd.f32 0.0, %v2685
    %v2687 = vpop.f32.mrb[0].mxu0
    %v2688 = vadd.f32 0.0, %v2687
    %v2689 = vpop.f32.mrb[0].mxu0
    %v2690 = vadd.f32 0.0, %v2689
    %2691 = vmatprep.mubr.bf16.mxu0 0
    %2692 = vmatmul.mubr.bf16.gmra.mrb[0].mxu0 %v1216
    %v2693 = vpop.f32.mrb[0].mxu0
    %v2694 = vadd.f32 0.0, %v2693
    %v2695 = vpop.f32.mrb[0].mxu0
    %v2696 = vadd.f32 0.0, %v2695
    %v2697 = vpop.f32.mrb[0].mxu0
    %v2698 = vadd.f32 0.0, %v2697
    %v2699 = vpop.f32.mrb[0].mxu0
    %v2700 = vadd.f32 0.0, %v2699
    %2701 = vmatprep.mubr.bf16.mxu0 0
    %2702 = vmatmul.mubr.bf16.gmra.mrb[0].mxu0 %v1217
    %v2703 = vpop.f32.mrb[0].mxu0
    %v2704 = vadd.f32 0.0, %v2703
    %v2705 = vpop.f32.mrb[0].mxu0
    %v2706 = vadd.f32 0.0, %v2705
    %v2707 = vpop.f32.mrb[0].mxu0
    %v2708 = vadd.f32 0.0, %v2707
    %v2709 = vpop.f32.mrb[0].mxu0
    %v2710 = vadd.f32 0.0, %v2709
    %2711 = vmatprep.mubr.bf16.mxu0 0
    %2712 = vmatmul.mubr.bf16.gmra.mrb[0].mxu0 %v1218
    %v2713 = vpop.f32.mrb[0].mxu0
    %v2714 = vadd.f32 0.0, %v2713
    %v2715 = vpop.f32.mrb[0].mxu0
    %v2716 = vadd.f32 0.0, %v2715
    %v2717 = vpop.f32.mrb[0].mxu0
    %v2718 = vadd.f32 0.0, %v2717
    %v2719 = vpop.f32.mrb[0].mxu0
    %v2720 = vadd.f32 0.0, %v2719
    %2721 = vmatprep.mubr.bf16.mxu0 0
    %2722 = vmatmul.mubr.bf16.gmra.mrb[0].mxu0 %v1219
    %v2723 = vpop.f32.mrb[0].mxu0
    %v2724 = vadd.f32 0.0, %v2723
    %v2725 = vpop.f32.mrb[0].mxu0
    %v2726 = vadd.f32 0.0, %v2725
    %v2727 = vpop.f32.mrb[0].mxu0
    %v2728 = vadd.f32 0.0, %v2727
    %v2729 = vpop.f32.mrb[0].mxu0
    %v2730 = vadd.f32 0.0, %v2729
    %2731 = vmatprep.mubr.bf16.mxu0 0
    %2732 = vmatmul.mubr.bf16.gmra.mrb[0].mxu0 %v1220
    %v2733 = vpop.f32.mrb[0].mxu0
    %v2734 = vadd.f32 0.0, %v2733
    %v2735 = vpop.f32.mrb[0].mxu0
    %v2736 = vadd.f32 0.0, %v2735
    %v2737 = vpop.f32.mrb[0].mxu0
    %v2738 = vadd.f32 0.0, %v2737
    %v2739 = vpop.f32.mrb[0].mxu0
    %v2740 = vadd.f32 0.0, %v2739
    %2741 = vdwg.mxu0
    %v2742 = vld [vmem:[%s3] sm:$0x1]
    %v2744 = vlaneseq
    %v2745 = vshrl.u32 %v2744, 7
    %v2746 = vsub.s32 0, %v2745
    %v2747 = vrot.slane %v2742, %v2746
    %v2749 = vadd.f32 %v1466, %v2747
    %v2750 = vadd.f32 %v1470, %v2747
    %v2751 = vadd.f32 %v1476, %v2747
    %v2752 = vadd.f32 %v1480, %v2747
    %v2753 = vadd.f32 %v1486, %v2747
    %v2754 = vadd.f32 %v1490, %v2747
    %v2755 = vadd.f32 %v1496, %v2747
    %v2756 = vadd.f32 %v1500, %v2747
    %v2757 = vadd.f32 %v1506, %v2747
    %v2758 = vadd.f32 %v1510, %v2747
    %v2759 = vadd.f32 %v1516, %v2747
    %v2760 = vadd.f32 %v1520, %v2747
    %v2761 = vadd.f32 %v1526, %v2747
    %v2762 = vadd.f32 %v1530, %v2747
    %v2763 = vadd.f32 %v1536, %v2747
    %v2764 = vadd.f32 %v1540, %v2747
    %v2765 = vadd.f32 %v1546, %v2747
    %v2766 = vadd.f32 %v1550, %v2747
    %v2767 = vadd.f32 %v1556, %v2747
    %v2768 = vadd.f32 %v1560, %v2747
    %v2769 = vadd.f32 %v1566, %v2747
    %v2770 = vadd.f32 %v1570, %v2747
    %v2771 = vadd.f32 %v1576, %v2747
    %v2772 = vadd.f32 %v1580, %v2747
    %v2773 = vadd.f32 %v1586, %v2747
    %v2774 = vadd.f32 %v1590, %v2747
    %v2775 = vadd.f32 %v1596, %v2747
    %v2776 = vadd.f32 %v1600, %v2747
    %v2777 = vadd.f32 %v1606, %v2747
    %v2778 = vadd.f32 %v1610, %v2747
    %v2779 = vadd.f32 %v1616, %v2747
    %v2780 = vadd.f32 %v1620, %v2747
    %v2781 = vadd.f32 %v1626, %v2747
    %v2782 = vadd.f32 %v1630, %v2747
    %v2783 = vadd.f32 %v1636, %v2747
    %v2784 = vadd.f32 %v1640, %v2747
    %v2785 = vadd.f32 %v1646, %v2747
    %v2786 = vadd.f32 %v1650, %v2747
    %v2787 = vadd.f32 %v1656, %v2747
    %v2788 = vadd.f32 %v1660, %v2747
    %v2789 = vadd.f32 %v1666, %v2747
    %v2790 = vadd.f32 %v1670, %v2747
    %v2791 = vadd.f32 %v1676, %v2747
    %v2792 = vadd.f32 %v1680, %v2747
    %v2793 = vadd.f32 %v1686, %v2747
    %v2794 = vadd.f32 %v1690, %v2747
    %v2795 = vadd.f32 %v1696, %v2747
    %v2796 = vadd.f32 %v1700, %v2747
    %v2797 = vadd.f32 %v1706, %v2747
    %v2798 = vadd.f32 %v1710, %v2747
    %v2799 = vadd.f32 %v1716, %v2747
    %v2800 = vadd.f32 %v1720, %v2747
    %v2801 = vadd.f32 %v1726, %v2747
    %v2802 = vadd.f32 %v1730, %v2747
    %v2803 = vadd.f32 %v1736, %v2747
    %v2804 = vadd.f32 %v1740, %v2747
    %v2805 = vadd.f32 %v1746, %v2747
    %v2806 = vadd.f32 %v1750, %v2747
    %v2807 = vadd.f32 %v1756, %v2747
    %v2808 = vadd.f32 %v1760, %v2747
    %v2809 = vadd.f32 %v1766, %v2747
    %v2810 = vadd.f32 %v1770, %v2747
    %v2811 = vadd.f32 %v1776, %v2747
    %v2812 = vadd.f32 %v1780, %v2747
    %v2813 = vadd.f32 %v1786, %v2747
    %v2814 = vadd.f32 %v1790, %v2747
    %v2815 = vadd.f32 %v1796, %v2747
    %v2816 = vadd.f32 %v1800, %v2747
    %v2817 = vadd.f32 %v1806, %v2747
    %v2818 = vadd.f32 %v1810, %v2747
    %v2819 = vadd.f32 %v1816, %v2747
    %v2820 = vadd.f32 %v1820, %v2747
    %v2821 = vadd.f32 %v1826, %v2747
    %v2822 = vadd.f32 %v1830, %v2747
    %v2823 = vadd.f32 %v1836, %v2747
    %v2824 = vadd.f32 %v1840, %v2747
    %v2825 = vadd.f32 %v1846, %v2747
    %v2826 = vadd.f32 %v1850, %v2747
    %v2827 = vadd.f32 %v1856, %v2747
    %v2828 = vadd.f32 %v1860, %v2747
    %v2829 = vadd.f32 %v1866, %v2747
    %v2830 = vadd.f32 %v1870, %v2747
    %v2831 = vadd.f32 %v1876, %v2747
    %v2832 = vadd.f32 %v1880, %v2747
    %v2833 = vadd.f32 %v1886, %v2747
    %v2834 = vadd.f32 %v1890, %v2747
    %v2835 = vadd.f32 %v1896, %v2747
    %v2836 = vadd.f32 %v1900, %v2747
    %v2837 = vadd.f32 %v1906, %v2747
    %v2838 = vadd.f32 %v1910, %v2747
    %v2839 = vadd.f32 %v1916, %v2747
    %v2840 = vadd.f32 %v1920, %v2747
    %v2841 = vadd.f32 %v1926, %v2747
    %v2842 = vadd.f32 %v1930, %v2747
    %v2843 = vadd.f32 %v1936, %v2747
    %v2844 = vadd.f32 %v1940, %v2747
    %v2845 = vadd.f32 %v1946, %v2747
    %v2846 = vadd.f32 %v1950, %v2747
    %v2847 = vadd.f32 %v1956, %v2747
    %v2848 = vadd.f32 %v1960, %v2747
    %v2849 = vadd.f32 %v1966, %v2747
    %v2850 = vadd.f32 %v1970, %v2747
    %v2851 = vadd.f32 %v1976, %v2747
    %v2852 = vadd.f32 %v1980, %v2747
    %v2853 = vadd.f32 %v1986, %v2747
    %v2854 = vadd.f32 %v1990, %v2747
    %v2855 = vadd.f32 %v1996, %v2747
    %v2856 = vadd.f32 %v2000, %v2747
    %v2857 = vadd.f32 %v2006, %v2747
    %v2858 = vadd.f32 %v2010, %v2747
    %v2859 = vadd.f32 %v2016, %v2747
    %v2860 = vadd.f32 %v2020, %v2747
    %v2861 = vadd.f32 %v2026, %v2747
    %v2862 = vadd.f32 %v2030, %v2747
    %v2863 = vadd.f32 %v2036, %v2747
    %v2864 = vadd.f32 %v2040, %v2747
    %v2865 = vadd.f32 %v2046, %v2747
    %v2866 = vadd.f32 %v2050, %v2747
    %v2867 = vadd.f32 %v2056, %v2747
    %v2868 = vadd.f32 %v2060, %v2747
    %v2869 = vadd.f32 %v2066, %v2747
    %v2870 = vadd.f32 %v2070, %v2747
    %v2871 = vadd.f32 %v2076, %v2747
    %v2872 = vadd.f32 %v2080, %v2747
    %v2873 = vadd.f32 %v2086, %v2747
    %v2874 = vadd.f32 %v2090, %v2747
    %v2875 = vadd.f32 %v2096, %v2747
    %v2876 = vadd.f32 %v2100, %v2747
    %v2877 = vadd.f32 %v2106, %v2747
    %v2878 = vadd.f32 %v2110, %v2747
    %v2879 = vadd.f32 %v2116, %v2747
    %v2880 = vadd.f32 %v2120, %v2747
    %v2881 = vadd.f32 %v2126, %v2747
    %v2882 = vadd.f32 %v2130, %v2747
    %v2883 = vadd.f32 %v2136, %v2747
    %v2884 = vadd.f32 %v2140, %v2747
    %v2885 = vadd.f32 %v2146, %v2747
    %v2886 = vadd.f32 %v2150, %v2747
    %v2887 = vadd.f32 %v2156, %v2747
    %v2888 = vadd.f32 %v2160, %v2747
    %v2889 = vadd.f32 %v2166, %v2747
    %v2890 = vadd.f32 %v2170, %v2747
    %v2891 = vadd.f32 %v2176, %v2747
    %v2892 = vadd.f32 %v2180, %v2747
    %v2893 = vadd.f32 %v2186, %v2747
    %v2894 = vadd.f32 %v2190, %v2747
    %v2895 = vadd.f32 %v2196, %v2747
    %v2896 = vadd.f32 %v2200, %v2747
    %v2897 = vadd.f32 %v2206, %v2747
    %v2898 = vadd.f32 %v2210, %v2747
    %v2899 = vadd.f32 %v2216, %v2747
    %v2900 = vadd.f32 %v2220, %v2747
    %v2901 = vadd.f32 %v2226, %v2747
    %v2902 = vadd.f32 %v2230, %v2747
    %v2903 = vadd.f32 %v2236, %v2747
    %v2904 = vadd.f32 %v2240, %v2747
    %v2905 = vadd.f32 %v2246, %v2747
    %v2906 = vadd.f32 %v2250, %v2747
    %v2907 = vadd.f32 %v2256, %v2747
    %v2908 = vadd.f32 %v2260, %v2747
    %v2909 = vadd.f32 %v2266, %v2747
    %v2910 = vadd.f32 %v2270, %v2747
    %v2911 = vadd.f32 %v2276, %v2747
    %v2912 = vadd.f32 %v2280, %v2747
    %v2913 = vadd.f32 %v2286, %v2747
    %v2914 = vadd.f32 %v2290, %v2747
    %v2915 = vadd.f32 %v2296, %v2747
    %v2916 = vadd.f32 %v2300, %v2747
    %v2917 = vadd.f32 %v2306, %v2747
    %v2918 = vadd.f32 %v2310, %v2747
    %v2919 = vadd.f32 %v2316, %v2747
    %v2920 = vadd.f32 %v2320, %v2747
    %v2921 = vadd.f32 %v2326, %v2747
    %v2922 = vadd.f32 %v2330, %v2747
    %v2923 = vadd.f32 %v2336, %v2747
    %v2924 = vadd.f32 %v2340, %v2747
    %v2925 = vadd.f32 %v2346, %v2747
    %v2926 = vadd.f32 %v2350, %v2747
    %v2927 = vadd.f32 %v2356, %v2747
    %v2928 = vadd.f32 %v2360, %v2747
    %v2929 = vadd.f32 %v2366, %v2747
    %v2930 = vadd.f32 %v2370, %v2747
    %v2931 = vadd.f32 %v2376, %v2747
    %v2932 = vadd.f32 %v2380, %v2747
    %v2933 = vadd.f32 %v2386, %v2747
    %v2934 = vadd.f32 %v2390, %v2747
    %v2935 = vadd.f32 %v2396, %v2747
    %v2936 = vadd.f32 %v2400, %v2747
    %v2937 = vadd.f32 %v2406, %v2747
    %v2938 = vadd.f32 %v2410, %v2747
    %v2939 = vadd.f32 %v2416, %v2747
    %v2940 = vadd.f32 %v2420, %v2747
    %v2941 = vadd.f32 %v2426, %v2747
    %v2942 = vadd.f32 %v2430, %v2747
    %v2943 = vadd.f32 %v2436, %v2747
    %v2944 = vadd.f32 %v2440, %v2747
    %v2945 = vadd.f32 %v2446, %v2747
    %v2946 = vadd.f32 %v2450, %v2747
    %v2947 = vadd.f32 %v2456, %v2747
    %v2948 = vadd.f32 %v2460, %v2747
    %v2949 = vadd.f32 %v2466, %v2747
    %v2950 = vadd.f32 %v2470, %v2747
    %v2951 = vadd.f32 %v2476, %v2747
    %v2952 = vadd.f32 %v2480, %v2747
    %v2953 = vadd.f32 %v2486, %v2747
    %v2954 = vadd.f32 %v2490, %v2747
    %v2955 = vadd.f32 %v2496, %v2747
    %v2956 = vadd.f32 %v2500, %v2747
    %v2957 = vadd.f32 %v2506, %v2747
    %v2958 = vadd.f32 %v2510, %v2747
    %v2959 = vadd.f32 %v2516, %v2747
    %v2960 = vadd.f32 %v2520, %v2747
    %v2961 = vadd.f32 %v2526, %v2747
    %v2962 = vadd.f32 %v2530, %v2747
    %v2963 = vadd.f32 %v2536, %v2747
    %v2964 = vadd.f32 %v2540, %v2747
    %v2965 = vadd.f32 %v2546, %v2747
    %v2966 = vadd.f32 %v2550, %v2747
    %v2967 = vadd.f32 %v2556, %v2747
    %v2968 = vadd.f32 %v2560, %v2747
    %v2969 = vadd.f32 %v2566, %v2747
    %v2970 = vadd.f32 %v2570, %v2747
    %v2971 = vadd.f32 %v2576, %v2747
    %v2972 = vadd.f32 %v2580, %v2747
    %v2973 = vadd.f32 %v2586, %v2747
    %v2974 = vadd.f32 %v2590, %v2747
    %v2975 = vadd.f32 %v2596, %v2747
    %v2976 = vadd.f32 %v2600, %v2747
    %v2977 = vadd.f32 %v2606, %v2747
    %v2978 = vadd.f32 %v2610, %v2747
    %v2979 = vadd.f32 %v2616, %v2747
    %v2980 = vadd.f32 %v2620, %v2747
    %v2981 = vadd.f32 %v2626, %v2747
    %v2982 = vadd.f32 %v2630, %v2747
    %v2983 = vadd.f32 %v2636, %v2747
    %v2984 = vadd.f32 %v2640, %v2747
    %v2985 = vadd.f32 %v2646, %v2747
    %v2986 = vadd.f32 %v2650, %v2747
    %v2987 = vadd.f32 %v2656, %v2747
    %v2988 = vadd.f32 %v2660, %v2747
    %v2989 = vadd.f32 %v2666, %v2747
    %v2990 = vadd.f32 %v2670, %v2747
    %v2991 = vadd.f32 %v2676, %v2747
    %v2992 = vadd.f32 %v2680, %v2747
    %v2993 = vadd.f32 %v2686, %v2747
    %v2994 = vadd.f32 %v2690, %v2747
    %v2995 = vadd.f32 %v2696, %v2747
    %v2996 = vadd.f32 %v2700, %v2747
    %v2997 = vadd.f32 %v2706, %v2747
    %v2998 = vadd.f32 %v2710, %v2747
    %v2999 = vadd.f32 %v2716, %v2747
    %v3000 = vadd.f32 %v2720, %v2747
    %v3001 = vadd.f32 %v2726, %v2747
    %v3002 = vadd.f32 %v2730, %v2747
    %v3003 = vadd.f32 %v2736, %v2747
    %v3004 = vadd.f32 %v2740, %v2747
    %v3005 = vmax.f32 %v2749, 0.0
    %v3006 = vmax.f32 %v2750, 0.0
    %v3007 = vmax.f32 %v2751, 0.0
    %v3008 = vmax.f32 %v2752, 0.0
    %v3009 = vmax.f32 %v2753, 0.0
    %v3010 = vmax.f32 %v2754, 0.0
    %v3011 = vmax.f32 %v2755, 0.0
    %v3012 = vmax.f32 %v2756, 0.0
    %v3013 = vmax.f32 %v2757, 0.0
    %v3014 = vmax.f32 %v2758, 0.0
    %v3015 = vmax.f32 %v2759, 0.0
    %v3016 = vmax.f32 %v2760, 0.0
    %v3017 = vmax.f32 %v2761, 0.0
    %v3018 = vmax.f32 %v2762, 0.0
    %v3019 = vmax.f32 %v2763, 0.0
    %v3020 = vmax.f32 %v2764, 0.0
    %v3021 = vmax.f32 %v2765, 0.0
    %v3022 = vmax.f32 %v2766, 0.0
    %v3023 = vmax.f32 %v2767, 0.0
    %v3024 = vmax.f32 %v2768, 0.0
    %v3025 = vmax.f32 %v2769, 0.0
    %v3026 = vmax.f32 %v2770, 0.0
    %v3027 = vmax.f32 %v2771, 0.0
    %v3028 = vmax.f32 %v2772, 0.0
    %v3029 = vmax.f32 %v2773, 0.0
    %v3030 = vmax.f32 %v2774, 0.0
    %v3031 = vmax.f32 %v2775, 0.0
    %v3032 = vmax.f32 %v2776, 0.0
    %v3033 = vmax.f32 %v2777, 0.0
    %v3034 = vmax.f32 %v2778, 0.0
    %v3035 = vmax.f32 %v2779, 0.0
    %v3036 = vmax.f32 %v2780, 0.0
    %v3037 = vmax.f32 %v2781, 0.0
    %v3038 = vmax.f32 %v2782, 0.0
    %v3039 = vmax.f32 %v2783, 0.0
    %v3040 = vmax.f32 %v2784, 0.0
    %v3041 = vmax.f32 %v2785, 0.0
    %v3042 = vmax.f32 %v2786, 0.0
    %v3043 = vmax.f32 %v2787, 0.0
    %v3044 = vmax.f32 %v2788, 0.0
    %v3045 = vmax.f32 %v2789, 0.0
    %v3046 = vmax.f32 %v2790, 0.0
    %v3047 = vmax.f32 %v2791, 0.0
    %v3048 = vmax.f32 %v2792, 0.0
    %v3049 = vmax.f32 %v2793, 0.0
    %v3050 = vmax.f32 %v2794, 0.0
    %v3051 = vmax.f32 %v2795, 0.0
    %v3052 = vmax.f32 %v2796, 0.0
    %v3053 = vmax.f32 %v2797, 0.0
    %v3054 = vmax.f32 %v2798, 0.0
    %v3055 = vmax.f32 %v2799, 0.0
    %v3056 = vmax.f32 %v2800, 0.0
    %v3057 = vmax.f32 %v2801, 0.0
    %v3058 = vmax.f32 %v2802, 0.0
    %v3059 = vmax.f32 %v2803, 0.0
    %v3060 = vmax.f32 %v2804, 0.0
    %v3061 = vmax.f32 %v2805, 0.0
    %v3062 = vmax.f32 %v2806, 0.0
    %v3063 = vmax.f32 %v2807, 0.0
    %v3064 = vmax.f32 %v2808, 0.0
    %v3065 = vmax.f32 %v2809, 0.0
    %v3066 = vmax.f32 %v2810, 0.0
    %v3067 = vmax.f32 %v2811, 0.0
    %v3068 = vmax.f32 %v2812, 0.0
    %v3069 = vmax.f32 %v2813, 0.0
    %v3070 = vmax.f32 %v2814, 0.0
    %v3071 = vmax.f32 %v2815, 0.0
    %v3072 = vmax.f32 %v2816, 0.0
    %v3073 = vmax.f32 %v2817, 0.0
    %v3074 = vmax.f32 %v2818, 0.0
    %v3075 = vmax.f32 %v2819, 0.0
    %v3076 = vmax.f32 %v2820, 0.0
    %v3077 = vmax.f32 %v2821, 0.0
    %v3078 = vmax.f32 %v2822, 0.0
    %v3079 = vmax.f32 %v2823, 0.0
    %v3080 = vmax.f32 %v2824, 0.0
    %v3081 = vmax.f32 %v2825, 0.0
    %v3082 = vmax.f32 %v2826, 0.0
    %v3083 = vmax.f32 %v2827, 0.0
    %v3084 = vmax.f32 %v2828, 0.0
    %v3085 = vmax.f32 %v2829, 0.0
    %v3086 = vmax.f32 %v2830, 0.0
    %v3087 = vmax.f32 %v2831, 0.0
    %v3088 = vmax.f32 %v2832, 0.0
    %v3089 = vmax.f32 %v2833, 0.0
    %v3090 = vmax.f32 %v2834, 0.0
    %v3091 = vmax.f32 %v2835, 0.0
    %v3092 = vmax.f32 %v2836, 0.0
    %v3093 = vmax.f32 %v2837, 0.0
    %v3094 = vmax.f32 %v2838, 0.0
    %v3095 = vmax.f32 %v2839, 0.0
    %v3096 = vmax.f32 %v2840, 0.0
    %v3097 = vmax.f32 %v2841, 0.0
    %v3098 = vmax.f32 %v2842, 0.0
    %v3099 = vmax.f32 %v2843, 0.0
    %v3100 = vmax.f32 %v2844, 0.0
    %v3101 = vmax.f32 %v2845, 0.0
    %v3102 = vmax.f32 %v2846, 0.0
    %v3103 = vmax.f32 %v2847, 0.0
    %v3104 = vmax.f32 %v2848, 0.0
    %v3105 = vmax.f32 %v2849, 0.0
    %v3106 = vmax.f32 %v2850, 0.0
    %v3107 = vmax.f32 %v2851, 0.0
    %v3108 = vmax.f32 %v2852, 0.0
    %v3109 = vmax.f32 %v2853, 0.0
    %v3110 = vmax.f32 %v2854, 0.0
    %v3111 = vmax.f32 %v2855, 0.0
    %v3112 = vmax.f32 %v2856, 0.0
    %v3113 = vmax.f32 %v2857, 0.0
    %v3114 = vmax.f32 %v2858, 0.0
    %v3115 = vmax.f32 %v2859, 0.0
    %v3116 = vmax.f32 %v2860, 0.0
    %v3117 = vmax.f32 %v2861, 0.0
    %v3118 = vmax.f32 %v2862, 0.0
    %v3119 = vmax.f32 %v2863, 0.0
    %v3120 = vmax.f32 %v2864, 0.0
    %v3121 = vmax.f32 %v2865, 0.0
    %v3122 = vmax.f32 %v2866, 0.0
    %v3123 = vmax.f32 %v2867, 0.0
    %v3124 = vmax.f32 %v2868, 0.0
    %v3125 = vmax.f32 %v2869, 0.0
    %v3126 = vmax.f32 %v2870, 0.0
    %v3127 = vmax.f32 %v2871, 0.0
    %v3128 = vmax.f32 %v2872, 0.0
    %v3129 = vmax.f32 %v2873, 0.0
    %v3130 = vmax.f32 %v2874, 0.0
    %v3131 = vmax.f32 %v2875, 0.0
    %v3132 = vmax.f32 %v2876, 0.0
    %v3133 = vmax.f32 %v2877, 0.0
    %v3134 = vmax.f32 %v2878, 0.0
    %v3135 = vmax.f32 %v2879, 0.0
    %v3136 = vmax.f32 %v2880, 0.0
    %v3137 = vmax.f32 %v2881, 0.0
    %v3138 = vmax.f32 %v2882, 0.0
    %v3139 = vmax.f32 %v2883, 0.0
    %v3140 = vmax.f32 %v2884, 0.0
    %v3141 = vmax.f32 %v2885, 0.0
    %v3142 = vmax.f32 %v2886, 0.0
    %v3143 = vmax.f32 %v2887, 0.0
    %v3144 = vmax.f32 %v2888, 0.0
    %v3145 = vmax.f32 %v2889, 0.0
    %v3146 = vmax.f32 %v2890, 0.0
    %v3147 = vmax.f32 %v2891, 0.0
    %v3148 = vmax.f32 %v2892, 0.0
    %v3149 = vmax.f32 %v2893, 0.0
    %v3150 = vmax.f32 %v2894, 0.0
    %v3151 = vmax.f32 %v2895, 0.0
    %v3152 = vmax.f32 %v2896, 0.0
    %v3153 = vmax.f32 %v2897, 0.0
    %v3154 = vmax.f32 %v2898, 0.0
    %v3155 = vmax.f32 %v2899, 0.0
    %v3156 = vmax.f32 %v2900, 0.0
    %v3157 = vmax.f32 %v2901, 0.0
    %v3158 = vmax.f32 %v2902, 0.0
    %v3159 = vmax.f32 %v2903, 0.0
    %v3160 = vmax.f32 %v2904, 0.0
    %v3161 = vmax.f32 %v2905, 0.0
    %v3162 = vmax.f32 %v2906, 0.0
    %v3163 = vmax.f32 %v2907, 0.0
    %v3164 = vmax.f32 %v2908, 0.0
    %v3165 = vmax.f32 %v2909, 0.0
    %v3166 = vmax.f32 %v2910, 0.0
    %v3167 = vmax.f32 %v2911, 0.0
    %v3168 = vmax.f32 %v2912, 0.0
    %v3169 = vmax.f32 %v2913, 0.0
    %v3170 = vmax.f32 %v2914, 0.0
    %v3171 = vmax.f32 %v2915, 0.0
    %v3172 = vmax.f32 %v2916, 0.0
    %v3173 = vmax.f32 %v2917, 0.0
    %v3174 = vmax.f32 %v2918, 0.0
    %v3175 = vmax.f32 %v2919, 0.0
    %v3176 = vmax.f32 %v2920, 0.0
    %v3177 = vmax.f32 %v2921, 0.0
    %v3178 = vmax.f32 %v2922, 0.0
    %v3179 = vmax.f32 %v2923, 0.0
    %v3180 = vmax.f32 %v2924, 0.0
    %v3181 = vmax.f32 %v2925, 0.0
    %v3182 = vmax.f32 %v2926, 0.0
    %v3183 = vmax.f32 %v2927, 0.0
    %v3184 = vmax.f32 %v2928, 0.0
    %v3185 = vmax.f32 %v2929, 0.0
    %v3186 = vmax.f32 %v2930, 0.0
    %v3187 = vmax.f32 %v2931, 0.0
    %v3188 = vmax.f32 %v2932, 0.0
    %v3189 = vmax.f32 %v2933, 0.0
    %v3190 = vmax.f32 %v2934, 0.0
    %v3191 = vmax.f32 %v2935, 0.0
    %v3192 = vmax.f32 %v2936, 0.0
    %v3193 = vmax.f32 %v2937, 0.0
    %v3194 = vmax.f32 %v2938, 0.0
    %v3195 = vmax.f32 %v2939, 0.0
    %v3196 = vmax.f32 %v2940, 0.0
    %v3197 = vmax.f32 %v2941, 0.0
    %v3198 = vmax.f32 %v2942, 0.0
    %v3199 = vmax.f32 %v2943, 0.0
    %v3200 = vmax.f32 %v2944, 0.0
    %v3201 = vmax.f32 %v2945, 0.0
    %v3202 = vmax.f32 %v2946, 0.0
    %v3203 = vmax.f32 %v2947, 0.0
    %v3204 = vmax.f32 %v2948, 0.0
    %v3205 = vmax.f32 %v2949, 0.0
    %v3206 = vmax.f32 %v2950, 0.0
    %v3207 = vmax.f32 %v2951, 0.0
    %v3208 = vmax.f32 %v2952, 0.0
    %v3209 = vmax.f32 %v2953, 0.0
    %v3210 = vmax.f32 %v2954, 0.0
    %v3211 = vmax.f32 %v2955, 0.0
    %v3212 = vmax.f32 %v2956, 0.0
    %v3213 = vmax.f32 %v2957, 0.0
    %v3214 = vmax.f32 %v2958, 0.0
    %v3215 = vmax.f32 %v2959, 0.0
    %v3216 = vmax.f32 %v2960, 0.0
    %v3217 = vmax.f32 %v2961, 0.0
    %v3218 = vmax.f32 %v2962, 0.0
    %v3219 = vmax.f32 %v2963, 0.0
    %v3220 = vmax.f32 %v2964, 0.0
    %v3221 = vmax.f32 %v2965, 0.0
    %v3222 = vmax.f32 %v2966, 0.0
    %v3223 = vmax.f32 %v2967, 0.0
    %v3224 = vmax.f32 %v2968, 0.0
    %v3225 = vmax.f32 %v2969, 0.0
    %v3226 = vmax.f32 %v2970, 0.0
    %v3227 = vmax.f32 %v2971, 0.0
    %v3228 = vmax.f32 %v2972, 0.0
    %v3229 = vmax.f32 %v2973, 0.0
    %v3230 = vmax.f32 %v2974, 0.0
    %v3231 = vmax.f32 %v2975, 0.0
    %v3232 = vmax.f32 %v2976, 0.0
    %v3233 = vmax.f32 %v2977, 0.0
    %v3234 = vmax.f32 %v2978, 0.0
    %v3235 = vmax.f32 %v2979, 0.0
    %v3236 = vmax.f32 %v2980, 0.0
    %v3237 = vmax.f32 %v2981, 0.0
    %v3238 = vmax.f32 %v2982, 0.0
    %v3239 = vmax.f32 %v2983, 0.0
    %v3240 = vmax.f32 %v2984, 0.0
    %v3241 = vmax.f32 %v2985, 0.0
    %v3242 = vmax.f32 %v2986, 0.0
    %v3243 = vmax.f32 %v2987, 0.0
    %v3244 = vmax.f32 %v2988, 0.0
    %v3245 = vmax.f32 %v2989, 0.0
    %v3246 = vmax.f32 %v2990, 0.0
    %v3247 = vmax.f32 %v2991, 0.0
    %v3248 = vmax.f32 %v2992, 0.0
    %v3249 = vmax.f32 %v2993, 0.0
    %v3250 = vmax.f32 %v2994, 0.0
    %v3251 = vmax.f32 %v2995, 0.0
    %v3252 = vmax.f32 %v2996, 0.0
    %v3253 = vmax.f32 %v2997, 0.0
    %v3254 = vmax.f32 %v2998, 0.0
    %v3255 = vmax.f32 %v2999, 0.0
    %v3256 = vmax.f32 %v3000, 0.0
    %v3257 = vmax.f32 %v3001, 0.0
    %v3258 = vmax.f32 %v3002, 0.0
    %v3259 = vmax.f32 %v3003, 0.0
    %v3260 = vmax.f32 %v3004, 0.0
    %vm3261 = vcmask 64512
    %v3262 = vsel %vm3261, %v51, 0.0
    %3263 = vadd.xlane.f32.xlu0 %v3262
    %v3264 = vpop.xlane.xlu0 %3263
    %v3265 = vsel %vm3261, %v52, 0.0
    %3266 = vadd.xlane.f32.xlu0 %v3265
    %v3267 = vpop.xlane.xlu0 %3266
    %v3268 = vsel %vm3261, %v53, 0.0
    %3269 = vadd.xlane.f32.xlu0 %v3268
    %v3270 = vpop.xlane.xlu0 %3269
    %v3271 = vsel %vm3261, %v54, 0.0
    %3272 = vadd.xlane.f32.xlu0 %v3271
    %v3273 = vpop.xlane.xlu0 %3272
    %v3274 = vsel %vm3261, %v55, 0.0
    %3275 = vadd.xlane.f32.xlu0 %v3274
    %v3276 = vpop.xlane.xlu0 %3275
    %v3277 = vsel %vm3261, %v56, 0.0
    %3278 = vadd.xlane.f32.xlu0 %v3277
    %v3279 = vpop.xlane.xlu0 %3278
    %v3280 = vsel %vm3261, %v57, 0.0
    %3281 = vadd.xlane.f32.xlu0 %v3280
    %v3282 = vpop.xlane.xlu0 %3281
    %v3283 = vsel %vm3261, %v58, 0.0
    %3284 = vadd.xlane.f32.xlu0 %v3283
    %v3285 = vpop.xlane.xlu0 %3284
    %v3286 = vsel %vm3261, %v59, 0.0
    %3287 = vadd.xlane.f32.xlu0 %v3286
    %v3288 = vpop.xlane.xlu0 %3287
    %v3289 = vsel %vm3261, %v60, 0.0
    %3290 = vadd.xlane.f32.xlu0 %v3289
    %v3291 = vpop.xlane.xlu0 %3290
    %v3292 = vsel %vm3261, %v61, 0.0
    %3293 = vadd.xlane.f32.xlu0 %v3292
    %v3294 = vpop.xlane.xlu0 %3293
    %v3295 = vsel %vm3261, %v62, 0.0
    %3296 = vadd.xlane.f32.xlu0 %v3295
    %v3297 = vpop.xlane.xlu0 %3296
    %v3298 = vsel %vm3261, %v63, 0.0
    %3299 = vadd.xlane.f32.xlu0 %v3298
    %v3300 = vpop.xlane.xlu0 %3299
    %v3301 = vsel %vm3261, %v64, 0.0
    %3302 = vadd.xlane.f32.xlu0 %v3301
    %v3303 = vpop.xlane.xlu0 %3302
    %v3304 = vsel %vm3261, %v65, 0.0
    %3305 = vadd.xlane.f32.xlu0 %v3304
    %v3306 = vpop.xlane.xlu0 %3305
    %v3307 = vsel %vm3261, %v66, 0.0
    %3308 = vadd.xlane.f32.xlu0 %v3307
    %v3309 = vpop.xlane.xlu0 %3308
    %v3310 = vsel %vm3261, %v67, 0.0
    %3311 = vadd.xlane.f32.xlu0 %v3310
    %v3312 = vpop.xlane.xlu0 %3311
    %v3313 = vsel %vm3261, %v68, 0.0
    %3314 = vadd.xlane.f32.xlu0 %v3313
    %v3315 = vpop.xlane.xlu0 %3314
    %v3316 = vsel %vm3261, %v69, 0.0
    %3317 = vadd.xlane.f32.xlu0 %v3316
    %v3318 = vpop.xlane.xlu0 %3317
    %v3319 = vsel %vm3261, %v70, 0.0
    %3320 = vadd.xlane.f32.xlu0 %v3319
    %v3321 = vpop.xlane.xlu0 %3320
    %v3322 = vsel %vm3261, %v71, 0.0
    %3323 = vadd.xlane.f32.xlu0 %v3322
    %v3324 = vpop.xlane.xlu0 %3323
    %v3325 = vsel %vm3261, %v72, 0.0
    %3326 = vadd.xlane.f32.xlu0 %v3325
    %v3327 = vpop.xlane.xlu0 %3326
    %v3328 = vsel %vm3261, %v73, 0.0
    %3329 = vadd.xlane.f32.xlu0 %v3328
    %v3330 = vpop.xlane.xlu0 %3329
    %v3331 = vsel %vm3261, %v74, 0.0
    %3332 = vadd.xlane.f32.xlu0 %v3331
    %v3333 = vpop.xlane.xlu0 %3332
    %v3334 = vsel %vm3261, %v75, 0.0
    %3335 = vadd.xlane.f32.xlu0 %v3334
    %v3336 = vpop.xlane.xlu0 %3335
    %v3337 = vsel %vm3261, %v76, 0.0
    %3338 = vadd.xlane.f32.xlu0 %v3337
    %v3339 = vpop.xlane.xlu0 %3338
    %v3340 = vsel %vm3261, %v77, 0.0
    %3341 = vadd.xlane.f32.xlu0 %v3340
    %v3342 = vpop.xlane.xlu0 %3341
    %v3343 = vsel %vm3261, %v78, 0.0
    %3344 = vadd.xlane.f32.xlu0 %v3343
    %v3345 = vpop.xlane.xlu0 %3344
    %v3346 = vsel %vm3261, %v79, 0.0
    %3347 = vadd.xlane.f32.xlu0 %v3346
    %v3348 = vpop.xlane.xlu0 %3347
    %v3349 = vsel %vm3261, %v80, 0.0
    %3350 = vadd.xlane.f32.xlu0 %v3349
    %v3351 = vpop.xlane.xlu0 %3350
    %v3352 = vsel %vm3261, %v81, 0.0
    %3353 = vadd.xlane.f32.xlu0 %v3352
    %v3354 = vpop.xlane.xlu0 %3353
    %v3355 = vsel %vm3261, %v82, 0.0
    %3356 = vadd.xlane.f32.xlu0 %v3355
    %v3357 = vpop.xlane.xlu0 %3356
    %v3358 = vsel %vm3261, %v83, 0.0
    %3359 = vadd.xlane.f32.xlu0 %v3358
    %v3360 = vpop.xlane.xlu0 %3359
    %v3361 = vsel %vm3261, %v84, 0.0
    %3362 = vadd.xlane.f32.xlu0 %v3361
    %v3363 = vpop.xlane.xlu0 %3362
    %v3364 = vsel %vm3261, %v85, 0.0
    %3365 = vadd.xlane.f32.xlu0 %v3364
    %v3366 = vpop.xlane.xlu0 %3365
    %v3367 = vsel %vm3261, %v86, 0.0
    %3368 = vadd.xlane.f32.xlu0 %v3367
    %v3369 = vpop.xlane.xlu0 %3368
    %v3370 = vsel %vm3261, %v87, 0.0
    %3371 = vadd.xlane.f32.xlu0 %v3370
    %v3372 = vpop.xlane.xlu0 %3371
    %v3373 = vsel %vm3261, %v88, 0.0
    %3374 = vadd.xlane.f32.xlu0 %v3373
    %v3375 = vpop.xlane.xlu0 %3374
    %v3376 = vsel %vm3261, %v89, 0.0
    %3377 = vadd.xlane.f32.xlu0 %v3376
    %v3378 = vpop.xlane.xlu0 %3377
    %v3379 = vsel %vm3261, %v90, 0.0
    %3380 = vadd.xlane.f32.xlu0 %v3379
    %v3381 = vpop.xlane.xlu0 %3380
    %v3382 = vsel %vm3261, %v91, 0.0
    %3383 = vadd.xlane.f32.xlu0 %v3382
    %v3384 = vpop.xlane.xlu0 %3383
    %v3385 = vsel %vm3261, %v92, 0.0
    %3386 = vadd.xlane.f32.xlu0 %v3385
    %v3387 = vpop.xlane.xlu0 %3386
    %v3388 = vsel %vm3261, %v93, 0.0
    %3389 = vadd.xlane.f32.xlu0 %v3388
    %v3390 = vpop.xlane.xlu0 %3389
    %v3391 = vsel %vm3261, %v94, 0.0
    %3392 = vadd.xlane.f32.xlu0 %v3391
    %v3393 = vpop.xlane.xlu0 %3392
    %v3394 = vsel %vm3261, %v95, 0.0
    %3395 = vadd.xlane.f32.xlu0 %v3394
    %v3396 = vpop.xlane.xlu0 %3395
    %v3397 = vsel %vm3261, %v96, 0.0
    %3398 = vadd.xlane.f32.xlu0 %v3397
    %v3399 = vpop.xlane.xlu0 %3398
    %v3400 = vsel %vm3261, %v97, 0.0
    %3401 = vadd.xlane.f32.xlu0 %v3400
    %v3402 = vpop.xlane.xlu0 %3401
    %v3403 = vsel %vm3261, %v98, 0.0
    %3404 = vadd.xlane.f32.xlu0 %v3403
    %v3405 = vpop.xlane.xlu0 %3404
    %v3406 = vsel %vm3261, %v99, 0.0
    %3407 = vadd.xlane.f32.xlu0 %v3406
    %v3408 = vpop.xlane.xlu0 %3407
    %v3409 = vsel %vm3261, %v100, 0.0
    %3410 = vadd.xlane.f32.xlu0 %v3409
    %v3411 = vpop.xlane.xlu0 %3410
    %v3412 = vsel %vm3261, %v101, 0.0
    %3413 = vadd.xlane.f32.xlu0 %v3412
    %v3414 = vpop.xlane.xlu0 %3413
    %v3415 = vsel %vm3261, %v102, 0.0
    %3416 = vadd.xlane.f32.xlu0 %v3415
    %v3417 = vpop.xlane.xlu0 %3416
    %v3418 = vsel %vm3261, %v103, 0.0
    %3419 = vadd.xlane.f32.xlu0 %v3418
    %v3420 = vpop.xlane.xlu0 %3419
    %v3421 = vsel %vm3261, %v104, 0.0
    %3422 = vadd.xlane.f32.xlu0 %v3421
    %v3423 = vpop.xlane.xlu0 %3422
    %v3424 = vsel %vm3261, %v105, 0.0
    %3425 = vadd.xlane.f32.xlu0 %v3424
    %v3426 = vpop.xlane.xlu0 %3425
    %v3427 = vsel %vm3261, %v106, 0.0
    %3428 = vadd.xlane.f32.xlu0 %v3427
    %v3429 = vpop.xlane.xlu0 %3428
    %v3430 = vsel %vm3261, %v107, 0.0
    %3431 = vadd.xlane.f32.xlu0 %v3430
    %v3432 = vpop.xlane.xlu0 %3431
    %v3433 = vsel %vm3261, %v108, 0.0
    %3434 = vadd.xlane.f32.xlu0 %v3433
    %v3435 = vpop.xlane.xlu0 %3434
    %v3436 = vsel %vm3261, %v109, 0.0
    %3437 = vadd.xlane.f32.xlu0 %v3436
    %v3438 = vpop.xlane.xlu0 %3437
    %v3439 = vsel %vm3261, %v110, 0.0
    %3440 = vadd.xlane.f32.xlu0 %v3439
    %v3441 = vpop.xlane.xlu0 %3440
    %v3442 = vsel %vm3261, %v111, 0.0
    %3443 = vadd.xlane.f32.xlu0 %v3442
    %v3444 = vpop.xlane.xlu0 %3443
    %v3445 = vsel %vm3261, %v112, 0.0
    %3446 = vadd.xlane.f32.xlu0 %v3445
    %v3447 = vpop.xlane.xlu0 %3446
    %v3448 = vsel %vm3261, %v113, 0.0
    %3449 = vadd.xlane.f32.xlu0 %v3448
    %v3450 = vpop.xlane.xlu0 %3449
    %v3451 = vsel %vm3261, %v114, 0.0
    %3452 = vadd.xlane.f32.xlu0 %v3451
    %v3453 = vpop.xlane.xlu0 %3452
    %v3454 = vsel %vm3261, %v115, 0.0
    %3455 = vadd.xlane.f32.xlu0 %v3454
    %v3456 = vpop.xlane.xlu0 %3455
    %v3457 = vsel %vm3261, %v116, 0.0
    %3458 = vadd.xlane.f32.xlu0 %v3457
    %v3459 = vpop.xlane.xlu0 %3458
    %v3460 = vsel %vm3261, %v117, 0.0
    %3461 = vadd.xlane.f32.xlu0 %v3460
    %v3462 = vpop.xlane.xlu0 %3461
    %v3463 = vsel %vm3261, %v118, 0.0
    %3464 = vadd.xlane.f32.xlu0 %v3463
    %v3465 = vpop.xlane.xlu0 %3464
    %v3466 = vsel %vm3261, %v119, 0.0
    %3467 = vadd.xlane.f32.xlu0 %v3466
    %v3468 = vpop.xlane.xlu0 %3467
    %v3469 = vsel %vm3261, %v120, 0.0
    %3470 = vadd.xlane.f32.xlu0 %v3469
    %v3471 = vpop.xlane.xlu0 %3470
    %v3472 = vsel %vm3261, %v121, 0.0
    %3473 = vadd.xlane.f32.xlu0 %v3472
    %v3474 = vpop.xlane.xlu0 %3473
    %v3475 = vsel %vm3261, %v122, 0.0
    %3476 = vadd.xlane.f32.xlu0 %v3475
    %v3477 = vpop.xlane.xlu0 %3476
    %v3478 = vsel %vm3261, %v123, 0.0
    %3479 = vadd.xlane.f32.xlu0 %v3478
    %v3480 = vpop.xlane.xlu0 %3479
    %v3481 = vsel %vm3261, %v124, 0.0
    %3482 = vadd.xlane.f32.xlu0 %v3481
    %v3483 = vpop.xlane.xlu0 %3482
    %v3484 = vsel %vm3261, %v125, 0.0
    %3485 = vadd.xlane.f32.xlu0 %v3484
    %v3486 = vpop.xlane.xlu0 %3485
    %v3487 = vsel %vm3261, %v126, 0.0
    %3488 = vadd.xlane.f32.xlu0 %v3487
    %v3489 = vpop.xlane.xlu0 %3488
    %v3490 = vsel %vm3261, %v127, 0.0
    %3491 = vadd.xlane.f32.xlu0 %v3490
    %v3492 = vpop.xlane.xlu0 %3491
    %v3493 = vsel %vm3261, %v128, 0.0
    %3494 = vadd.xlane.f32.xlu0 %v3493
    %v3495 = vpop.xlane.xlu0 %3494
    %v3496 = vsel %vm3261, %v129, 0.0
    %3497 = vadd.xlane.f32.xlu0 %v3496
    %v3498 = vpop.xlane.xlu0 %3497
    %v3499 = vsel %vm3261, %v130, 0.0
    %3500 = vadd.xlane.f32.xlu0 %v3499
    %v3501 = vpop.xlane.xlu0 %3500
    %v3502 = vsel %vm3261, %v131, 0.0
    %3503 = vadd.xlane.f32.xlu0 %v3502
    %v3504 = vpop.xlane.xlu0 %3503
    %v3505 = vsel %vm3261, %v132, 0.0
    %3506 = vadd.xlane.f32.xlu0 %v3505
    %v3507 = vpop.xlane.xlu0 %3506
    %v3508 = vsel %vm3261, %v133, 0.0
    %3509 = vadd.xlane.f32.xlu0 %v3508
    %v3510 = vpop.xlane.xlu0 %3509
    %v3511 = vsel %vm3261, %v134, 0.0
    %3512 = vadd.xlane.f32.xlu0 %v3511
    %v3513 = vpop.xlane.xlu0 %3512
    %v3514 = vsel %vm3261, %v135, 0.0
    %3515 = vadd.xlane.f32.xlu0 %v3514
    %v3516 = vpop.xlane.xlu0 %3515
    %v3517 = vsel %vm3261, %v136, 0.0
    %3518 = vadd.xlane.f32.xlu0 %v3517
    %v3519 = vpop.xlane.xlu0 %3518
    %v3520 = vsel %vm3261, %v137, 0.0
    %3521 = vadd.xlane.f32.xlu0 %v3520
    %v3522 = vpop.xlane.xlu0 %3521
    %v3523 = vsel %vm3261, %v138, 0.0
    %3524 = vadd.xlane.f32.xlu0 %v3523
    %v3525 = vpop.xlane.xlu0 %3524
    %v3526 = vsel %vm3261, %v139, 0.0
    %3527 = vadd.xlane.f32.xlu0 %v3526
    %v3528 = vpop.xlane.xlu0 %3527
    %v3529 = vsel %vm3261, %v140, 0.0
    %3530 = vadd.xlane.f32.xlu0 %v3529
    %v3531 = vpop.xlane.xlu0 %3530
    %v3532 = vsel %vm3261, %v141, 0.0
    %3533 = vadd.xlane.f32.xlu0 %v3532
    %v3534 = vpop.xlane.xlu0 %3533
    %v3535 = vsel %vm3261, %v142, 0.0
    %3536 = vadd.xlane.f32.xlu0 %v3535
    %v3537 = vpop.xlane.xlu0 %3536
    %v3538 = vsel %vm3261, %v143, 0.0
    %3539 = vadd.xlane.f32.xlu0 %v3538
    %v3540 = vpop.xlane.xlu0 %3539
    %v3541 = vsel %vm3261, %v144, 0.0
    %3542 = vadd.xlane.f32.xlu0 %v3541
    %v3543 = vpop.xlane.xlu0 %3542
    %v3544 = vsel %vm3261, %v145, 0.0
    %3545 = vadd.xlane.f32.xlu0 %v3544
    %v3546 = vpop.xlane.xlu0 %3545
    %v3547 = vsel %vm3261, %v146, 0.0
    %3548 = vadd.xlane.f32.xlu0 %v3547
    %v3549 = vpop.xlane.xlu0 %3548
    %v3550 = vsel %vm3261, %v147, 0.0
    %3551 = vadd.xlane.f32.xlu0 %v3550
    %v3552 = vpop.xlane.xlu0 %3551
    %v3553 = vsel %vm3261, %v148, 0.0
    %3554 = vadd.xlane.f32.xlu0 %v3553
    %v3555 = vpop.xlane.xlu0 %3554
    %v3556 = vsel %vm3261, %v149, 0.0
    %3557 = vadd.xlane.f32.xlu0 %v3556
    %v3558 = vpop.xlane.xlu0 %3557
    %v3559 = vsel %vm3261, %v150, 0.0
    %3560 = vadd.xlane.f32.xlu0 %v3559
    %v3561 = vpop.xlane.xlu0 %3560
    %v3562 = vsel %vm3261, %v151, 0.0
    %3563 = vadd.xlane.f32.xlu0 %v3562
    %v3564 = vpop.xlane.xlu0 %3563
    %v3565 = vsel %vm3261, %v152, 0.0
    %3566 = vadd.xlane.f32.xlu0 %v3565
    %v3567 = vpop.xlane.xlu0 %3566
    %v3568 = vsel %vm3261, %v153, 0.0
    %3569 = vadd.xlane.f32.xlu0 %v3568
    %v3570 = vpop.xlane.xlu0 %3569
    %v3571 = vsel %vm3261, %v154, 0.0
    %3572 = vadd.xlane.f32.xlu0 %v3571
    %v3573 = vpop.xlane.xlu0 %3572
    %v3574 = vsel %vm3261, %v155, 0.0
    %3575 = vadd.xlane.f32.xlu0 %v3574
    %v3576 = vpop.xlane.xlu0 %3575
    %v3577 = vsel %vm3261, %v156, 0.0
    %3578 = vadd.xlane.f32.xlu0 %v3577
    %v3579 = vpop.xlane.xlu0 %3578
    %v3580 = vsel %vm3261, %v157, 0.0
    %3581 = vadd.xlane.f32.xlu0 %v3580
    %v3582 = vpop.xlane.xlu0 %3581
    %v3583 = vsel %vm3261, %v158, 0.0
    %3584 = vadd.xlane.f32.xlu0 %v3583
    %v3585 = vpop.xlane.xlu0 %3584
    %v3586 = vsel %vm3261, %v159, 0.0
    %3587 = vadd.xlane.f32.xlu0 %v3586
    %v3588 = vpop.xlane.xlu0 %3587
    %v3589 = vsel %vm3261, %v160, 0.0
    %3590 = vadd.xlane.f32.xlu0 %v3589
    %v3591 = vpop.xlane.xlu0 %3590
    %v3592 = vsel %vm3261, %v161, 0.0
    %3593 = vadd.xlane.f32.xlu0 %v3592
    %v3594 = vpop.xlane.xlu0 %3593
    %v3595 = vsel %vm3261, %v162, 0.0
    %3596 = vadd.xlane.f32.xlu0 %v3595
    %v3597 = vpop.xlane.xlu0 %3596
    %v3598 = vsel %vm3261, %v163, 0.0
    %3599 = vadd.xlane.f32.xlu0 %v3598
    %v3600 = vpop.xlane.xlu0 %3599
    %v3601 = vsel %vm3261, %v164, 0.0
    %3602 = vadd.xlane.f32.xlu0 %v3601
    %v3603 = vpop.xlane.xlu0 %3602
    %v3604 = vsel %vm3261, %v165, 0.0
    %3605 = vadd.xlane.f32.xlu0 %v3604
    %v3606 = vpop.xlane.xlu0 %3605
    %v3607 = vsel %vm3261, %v166, 0.0
    %3608 = vadd.xlane.f32.xlu0 %v3607
    %v3609 = vpop.xlane.xlu0 %3608
    %v3610 = vsel %vm3261, %v167, 0.0
    %3611 = vadd.xlane.f32.xlu0 %v3610
    %v3612 = vpop.xlane.xlu0 %3611
    %v3613 = vsel %vm3261, %v168, 0.0
    %3614 = vadd.xlane.f32.xlu0 %v3613
    %v3615 = vpop.xlane.xlu0 %3614
    %v3616 = vsel %vm3261, %v169, 0.0
    %3617 = vadd.xlane.f32.xlu0 %v3616
    %v3618 = vpop.xlane.xlu0 %3617
    %v3619 = vsel %vm3261, %v170, 0.0
    %3620 = vadd.xlane.f32.xlu0 %v3619
    %v3621 = vpop.xlane.xlu0 %3620
    %v3622 = vsel %vm3261, %v171, 0.0
    %3623 = vadd.xlane.f32.xlu0 %v3622
    %v3624 = vpop.xlane.xlu0 %3623
    %v3625 = vsel %vm3261, %v172, 0.0
    %3626 = vadd.xlane.f32.xlu0 %v3625
    %v3627 = vpop.xlane.xlu0 %3626
    %v3628 = vsel %vm3261, %v173, 0.0
    %3629 = vadd.xlane.f32.xlu0 %v3628
    %v3630 = vpop.xlane.xlu0 %3629
    %v3631 = vsel %vm3261, %v174, 0.0
    %3632 = vadd.xlane.f32.xlu0 %v3631
    %v3633 = vpop.xlane.xlu0 %3632
    %v3634 = vsel %vm3261, %v175, 0.0
    %3635 = vadd.xlane.f32.xlu0 %v3634
    %v3636 = vpop.xlane.xlu0 %3635
    %v3637 = vsel %vm3261, %v176, 0.0
    %3638 = vadd.xlane.f32.xlu0 %v3637
    %v3639 = vpop.xlane.xlu0 %3638
    %v3640 = vsel %vm3261, %v177, 0.0
    %3641 = vadd.xlane.f32.xlu0 %v3640
    %v3642 = vpop.xlane.xlu0 %3641
    %v3643 = vsel %vm3261, %v178, 0.0
    %3644 = vadd.xlane.f32.xlu0 %v3643
    %v3645 = vpop.xlane.xlu0 %3644
    %v3646 = vsel %vm3261, %v179, 0.0
    %3647 = vadd.xlane.f32.xlu0 %v3646
    %v3648 = vpop.xlane.xlu0 %3647
    %v3649 = vsel %vm3261, %v180, 0.0
    %3650 = vadd.xlane.f32.xlu0 %v3649
    %v3651 = vpop.xlane.xlu0 %3650
    %v3652 = vsel %vm3261, %v181, 0.0
    %3653 = vadd.xlane.f32.xlu0 %v3652
    %v3654 = vpop.xlane.xlu0 %3653
    %v3655 = vsel %vm3261, %v182, 0.0
    %3656 = vadd.xlane.f32.xlu0 %v3655
    %v3657 = vpop.xlane.xlu0 %3656
    %v3658 = vsel %vm3261, %v183, 0.0
    %3659 = vadd.xlane.f32.xlu0 %v3658
    %v3660 = vpop.xlane.xlu0 %3659
    %v3661 = vsel %vm3261, %v184, 0.0
    %3662 = vadd.xlane.f32.xlu0 %v3661
    %v3663 = vpop.xlane.xlu0 %3662
    %v3664 = vsel %vm3261, %v185, 0.0
    %3665 = vadd.xlane.f32.xlu0 %v3664
    %v3666 = vpop.xlane.xlu0 %3665
    %v3667 = vsel %vm3261, %v186, 0.0
    %3668 = vadd.xlane.f32.xlu0 %v3667
    %v3669 = vpop.xlane.xlu0 %3668
    %v3670 = vsel %vm3261, %v187, 0.0
    %3671 = vadd.xlane.f32.xlu0 %v3670
    %v3672 = vpop.xlane.xlu0 %3671
    %v3673 = vsel %vm3261, %v188, 0.0
    %3674 = vadd.xlane.f32.xlu0 %v3673
    %v3675 = vpop.xlane.xlu0 %3674
    %v3676 = vsel %vm3261, %v189, 0.0
    %3677 = vadd.xlane.f32.xlu0 %v3676
    %v3678 = vpop.xlane.xlu0 %3677
    %v3679 = vsel %vm3261, %v190, 0.0
    %3680 = vadd.xlane.f32.xlu0 %v3679
    %v3681 = vpop.xlane.xlu0 %3680
    %v3682 = vsel %vm3261, %v191, 0.0
    %3683 = vadd.xlane.f32.xlu0 %v3682
    %v3684 = vpop.xlane.xlu0 %3683
    %v3685 = vsel %vm3261, %v192, 0.0
    %3686 = vadd.xlane.f32.xlu0 %v3685
    %v3687 = vpop.xlane.xlu0 %3686
    %v3688 = vsel %vm3261, %v193, 0.0
    %3689 = vadd.xlane.f32.xlu0 %v3688
    %v3690 = vpop.xlane.xlu0 %3689
    %v3691 = vsel %vm3261, %v194, 0.0
    %3692 = vadd.xlane.f32.xlu0 %v3691
    %v3693 = vpop.xlane.xlu0 %3692
    %v3694 = vsel %vm3261, %v195, 0.0
    %3695 = vadd.xlane.f32.xlu0 %v3694
    %v3696 = vpop.xlane.xlu0 %3695
    %v3697 = vsel %vm3261, %v196, 0.0
    %3698 = vadd.xlane.f32.xlu0 %v3697
    %v3699 = vpop.xlane.xlu0 %3698
    %v3700 = vsel %vm3261, %v197, 0.0
    %3701 = vadd.xlane.f32.xlu0 %v3700
    %v3702 = vpop.xlane.xlu0 %3701
    %v3703 = vsel %vm3261, %v198, 0.0
    %3704 = vadd.xlane.f32.xlu0 %v3703
    %v3705 = vpop.xlane.xlu0 %3704
    %v3706 = vsel %vm3261, %v199, 0.0
    %3707 = vadd.xlane.f32.xlu0 %v3706
    %v3708 = vpop.xlane.xlu0 %3707
    %v3709 = vsel %vm3261, %v200, 0.0
    %3710 = vadd.xlane.f32.xlu0 %v3709
    %v3711 = vpop.xlane.xlu0 %3710
    %v3712 = vsel %vm3261, %v201, 0.0
    %3713 = vadd.xlane.f32.xlu0 %v3712
    %v3714 = vpop.xlane.xlu0 %3713
    %v3715 = vsel %vm3261, %v202, 0.0
    %3716 = vadd.xlane.f32.xlu0 %v3715
    %v3717 = vpop.xlane.xlu0 %3716
    %v3718 = vsel %vm3261, %v203, 0.0
    %3719 = vadd.xlane.f32.xlu0 %v3718
    %v3720 = vpop.xlane.xlu0 %3719
    %v3721 = vsel %vm3261, %v204, 0.0
    %3722 = vadd.xlane.f32.xlu0 %v3721
    %v3723 = vpop.xlane.xlu0 %3722
    %v3724 = vsel %vm3261, %v205, 0.0
    %3725 = vadd.xlane.f32.xlu0 %v3724
    %v3726 = vpop.xlane.xlu0 %3725
    %v3727 = vsel %vm3261, %v206, 0.0
    %3728 = vadd.xlane.f32.xlu0 %v3727
    %v3729 = vpop.xlane.xlu0 %3728
    %v3730 = vsel %vm3261, %v207, 0.0
    %3731 = vadd.xlane.f32.xlu0 %v3730
    %v3732 = vpop.xlane.xlu0 %3731
    %v3733 = vsel %vm3261, %v208, 0.0
    %3734 = vadd.xlane.f32.xlu0 %v3733
    %v3735 = vpop.xlane.xlu0 %3734
    %v3736 = vsel %vm3261, %v209, 0.0
    %3737 = vadd.xlane.f32.xlu0 %v3736
    %v3738 = vpop.xlane.xlu0 %3737
    %v3739 = vsel %vm3261, %v210, 0.0
    %3740 = vadd.xlane.f32.xlu0 %v3739
    %v3741 = vpop.xlane.xlu0 %3740
    %v3742 = vsel %vm3261, %v211, 0.0
    %3743 = vadd.xlane.f32.xlu0 %v3742
    %v3744 = vpop.xlane.xlu0 %3743
    %v3745 = vsel %vm3261, %v212, 0.0
    %3746 = vadd.xlane.f32.xlu0 %v3745
    %v3747 = vpop.xlane.xlu0 %3746
    %v3748 = vsel %vm3261, %v213, 0.0
    %3749 = vadd.xlane.f32.xlu0 %v3748
    %v3750 = vpop.xlane.xlu0 %3749
    %v3751 = vsel %vm3261, %v214, 0.0
    %3752 = vadd.xlane.f32.xlu0 %v3751
    %v3753 = vpop.xlane.xlu0 %3752
    %v3754 = vsel %vm3261, %v215, 0.0
    %3755 = vadd.xlane.f32.xlu0 %v3754
    %v3756 = vpop.xlane.xlu0 %3755
    %v3757 = vsel %vm3261, %v216, 0.0
    %3758 = vadd.xlane.f32.xlu0 %v3757
    %v3759 = vpop.xlane.xlu0 %3758
    %v3760 = vsel %vm3261, %v217, 0.0
    %3761 = vadd.xlane.f32.xlu0 %v3760
    %v3762 = vpop.xlane.xlu0 %3761
    %v3763 = vsel %vm3261, %v218, 0.0
    %3764 = vadd.xlane.f32.xlu0 %v3763
    %v3765 = vpop.xlane.xlu0 %3764
    %v3766 = vsel %vm3261, %v219, 0.0
    %3767 = vadd.xlane.f32.xlu0 %v3766
    %v3768 = vpop.xlane.xlu0 %3767
    %v3769 = vsel %vm3261, %v220, 0.0
    %3770 = vadd.xlane.f32.xlu0 %v3769
    %v3771 = vpop.xlane.xlu0 %3770
    %v3772 = vsel %vm3261, %v221, 0.0
    %3773 = vadd.xlane.f32.xlu0 %v3772
    %v3774 = vpop.xlane.xlu0 %3773
    %v3775 = vsel %vm3261, %v222, 0.0
    %3776 = vadd.xlane.f32.xlu0 %v3775
    %v3777 = vpop.xlane.xlu0 %3776
    %v3778 = vsel %vm3261, %v223, 0.0
    %3779 = vadd.xlane.f32.xlu0 %v3778
    %v3780 = vpop.xlane.xlu0 %3779
    %v3781 = vsel %vm3261, %v224, 0.0
    %3782 = vadd.xlane.f32.xlu0 %v3781
    %v3783 = vpop.xlane.xlu0 %3782
    %v3784 = vsel %vm3261, %v225, 0.0
    %3785 = vadd.xlane.f32.xlu0 %v3784
    %v3786 = vpop.xlane.xlu0 %3785
    %v3787 = vsel %vm3261, %v226, 0.0
    %3788 = vadd.xlane.f32.xlu0 %v3787
    %v3789 = vpop.xlane.xlu0 %3788
    %v3790 = vsel %vm3261, %v227, 0.0
    %3791 = vadd.xlane.f32.xlu0 %v3790
    %v3792 = vpop.xlane.xlu0 %3791
    %v3793 = vsel %vm3261, %v228, 0.0
    %3794 = vadd.xlane.f32.xlu0 %v3793
    %v3795 = vpop.xlane.xlu0 %3794
    %v3796 = vsel %vm3261, %v229, 0.0
    %3797 = vadd.xlane.f32.xlu0 %v3796
    %v3798 = vpop.xlane.xlu0 %3797
    %v3799 = vsel %vm3261, %v230, 0.0
    %3800 = vadd.xlane.f32.xlu0 %v3799
    %v3801 = vpop.xlane.xlu0 %3800
    %v3802 = vsel %vm3261, %v231, 0.0
    %3803 = vadd.xlane.f32.xlu0 %v3802
    %v3804 = vpop.xlane.xlu0 %3803
    %v3805 = vsel %vm3261, %v232, 0.0
    %3806 = vadd.xlane.f32.xlu0 %v3805
    %v3807 = vpop.xlane.xlu0 %3806
    %v3808 = vsel %vm3261, %v233, 0.0
    %3809 = vadd.xlane.f32.xlu0 %v3808
    %v3810 = vpop.xlane.xlu0 %3809
    %v3811 = vsel %vm3261, %v234, 0.0
    %3812 = vadd.xlane.f32.xlu0 %v3811
    %v3813 = vpop.xlane.xlu0 %3812
    %v3814 = vsel %vm3261, %v235, 0.0
    %3815 = vadd.xlane.f32.xlu0 %v3814
    %v3816 = vpop.xlane.xlu0 %3815
    %v3817 = vsel %vm3261, %v236, 0.0
    %3818 = vadd.xlane.f32.xlu0 %v3817
    %v3819 = vpop.xlane.xlu0 %3818
    %v3820 = vsel %vm3261, %v237, 0.0
    %3821 = vadd.xlane.f32.xlu0 %v3820
    %v3822 = vpop.xlane.xlu0 %3821
    %v3823 = vsel %vm3261, %v238, 0.0
    %3824 = vadd.xlane.f32.xlu0 %v3823
    %v3825 = vpop.xlane.xlu0 %3824
    %v3826 = vsel %vm3261, %v239, 0.0
    %3827 = vadd.xlane.f32.xlu0 %v3826
    %v3828 = vpop.xlane.xlu0 %3827
    %v3829 = vsel %vm3261, %v240, 0.0
    %3830 = vadd.xlane.f32.xlu0 %v3829
    %v3831 = vpop.xlane.xlu0 %3830
    %v3832 = vsel %vm3261, %v241, 0.0
    %3833 = vadd.xlane.f32.xlu0 %v3832
    %v3834 = vpop.xlane.xlu0 %3833
    %v3835 = vsel %vm3261, %v242, 0.0
    %3836 = vadd.xlane.f32.xlu0 %v3835
    %v3837 = vpop.xlane.xlu0 %3836
    %v3838 = vsel %vm3261, %v243, 0.0
    %3839 = vadd.xlane.f32.xlu0 %v3838
    %v3840 = vpop.xlane.xlu0 %3839
    %v3841 = vsel %vm3261, %v244, 0.0
    %3842 = vadd.xlane.f32.xlu0 %v3841
    %v3843 = vpop.xlane.xlu0 %3842
    %v3844 = vsel %vm3261, %v245, 0.0
    %3845 = vadd.xlane.f32.xlu0 %v3844
    %v3846 = vpop.xlane.xlu0 %3845
    %v3847 = vsel %vm3261, %v246, 0.0
    %3848 = vadd.xlane.f32.xlu0 %v3847
    %v3849 = vpop.xlane.xlu0 %3848
    %v3850 = vsel %vm3261, %v247, 0.0
    %3851 = vadd.xlane.f32.xlu0 %v3850
    %v3852 = vpop.xlane.xlu0 %3851
    %v3853 = vsel %vm3261, %v248, 0.0
    %3854 = vadd.xlane.f32.xlu0 %v3853
    %v3855 = vpop.xlane.xlu0 %3854
    %v3856 = vsel %vm3261, %v249, 0.0
    %3857 = vadd.xlane.f32.xlu0 %v3856
    %v3858 = vpop.xlane.xlu0 %3857
    %v3859 = vsel %vm3261, %v250, 0.0
    %3860 = vadd.xlane.f32.xlu0 %v3859
    %v3861 = vpop.xlane.xlu0 %3860
    %v3862 = vsel %vm3261, %v251, 0.0
    %3863 = vadd.xlane.f32.xlu0 %v3862
    %v3864 = vpop.xlane.xlu0 %3863
    %v3865 = vsel %vm3261, %v252, 0.0
    %3866 = vadd.xlane.f32.xlu0 %v3865
    %v3867 = vpop.xlane.xlu0 %3866
    %v3868 = vsel %vm3261, %v253, 0.0
    %3869 = vadd.xlane.f32.xlu0 %v3868
    %v3870 = vpop.xlane.xlu0 %3869
    %v3871 = vsel %vm3261, %v254, 0.0
    %3872 = vadd.xlane.f32.xlu0 %v3871
    %v3873 = vpop.xlane.xlu0 %3872
    %v3874 = vsel %vm3261, %v255, 0.0
    %3875 = vadd.xlane.f32.xlu0 %v3874
    %v3876 = vpop.xlane.xlu0 %3875
    %v3877 = vsel %vm3261, %v256, 0.0
    %3878 = vadd.xlane.f32.xlu0 %v3877
    %v3879 = vpop.xlane.xlu0 %3878
    %v3880 = vsel %vm3261, %v257, 0.0
    %3881 = vadd.xlane.f32.xlu0 %v3880
    %v3882 = vpop.xlane.xlu0 %3881
    %v3883 = vsel %vm3261, %v258, 0.0
    %3884 = vadd.xlane.f32.xlu0 %v3883
    %v3885 = vpop.xlane.xlu0 %3884
    %v3886 = vsel %vm3261, %v259, 0.0
    %3887 = vadd.xlane.f32.xlu0 %v3886
    %v3888 = vpop.xlane.xlu0 %3887
    %v3889 = vsel %vm3261, %v260, 0.0
    %3890 = vadd.xlane.f32.xlu0 %v3889
    %v3891 = vpop.xlane.xlu0 %3890
    %v3892 = vsel %vm3261, %v261, 0.0
    %3893 = vadd.xlane.f32.xlu0 %v3892
    %v3894 = vpop.xlane.xlu0 %3893
    %v3895 = vsel %vm3261, %v262, 0.0
    %3896 = vadd.xlane.f32.xlu0 %v3895
    %v3897 = vpop.xlane.xlu0 %3896
    %v3898 = vsel %vm3261, %v263, 0.0
    %3899 = vadd.xlane.f32.xlu0 %v3898
    %v3900 = vpop.xlane.xlu0 %3899
    %v3901 = vsel %vm3261, %v264, 0.0
    %3902 = vadd.xlane.f32.xlu0 %v3901
    %v3903 = vpop.xlane.xlu0 %3902
    %v3904 = vsel %vm3261, %v265, 0.0
    %3905 = vadd.xlane.f32.xlu0 %v3904
    %v3906 = vpop.xlane.xlu0 %3905
    %v3907 = vsel %vm3261, %v266, 0.0
    %3908 = vadd.xlane.f32.xlu0 %v3907
    %v3909 = vpop.xlane.xlu0 %3908
    %v3910 = vsel %vm3261, %v267, 0.0
    %3911 = vadd.xlane.f32.xlu0 %v3910
    %v3912 = vpop.xlane.xlu0 %3911
    %v3913 = vsel %vm3261, %v268, 0.0
    %3914 = vadd.xlane.f32.xlu0 %v3913
    %v3915 = vpop.xlane.xlu0 %3914
    %v3916 = vsel %vm3261, %v269, 0.0
    %3917 = vadd.xlane.f32.xlu0 %v3916
    %v3918 = vpop.xlane.xlu0 %3917
    %v3919 = vsel %vm3261, %v270, 0.0
    %3920 = vadd.xlane.f32.xlu0 %v3919
    %v3921 = vpop.xlane.xlu0 %3920
    %v3922 = vsel %vm3261, %v271, 0.0
    %3923 = vadd.xlane.f32.xlu0 %v3922
    %v3924 = vpop.xlane.xlu0 %3923
    %v3925 = vsel %vm3261, %v272, 0.0
    %3926 = vadd.xlane.f32.xlu0 %v3925
    %v3927 = vpop.xlane.xlu0 %3926
    %v3928 = vsel %vm3261, %v273, 0.0
    %3929 = vadd.xlane.f32.xlu0 %v3928
    %v3930 = vpop.xlane.xlu0 %3929
    %v3931 = vsel %vm3261, %v274, 0.0
    %3932 = vadd.xlane.f32.xlu0 %v3931
    %v3933 = vpop.xlane.xlu0 %3932
    %v3934 = vsel %vm3261, %v275, 0.0
    %3935 = vadd.xlane.f32.xlu0 %v3934
    %v3936 = vpop.xlane.xlu0 %3935
    %v3937 = vsel %vm3261, %v276, 0.0
    %3938 = vadd.xlane.f32.xlu0 %v3937
    %v3939 = vpop.xlane.xlu0 %3938
    %v3940 = vsel %vm3261, %v277, 0.0
    %3941 = vadd.xlane.f32.xlu0 %v3940
    %v3942 = vpop.xlane.xlu0 %3941
    %v3943 = vsel %vm3261, %v278, 0.0
    %3944 = vadd.xlane.f32.xlu0 %v3943
    %v3945 = vpop.xlane.xlu0 %3944
    %v3946 = vsel %vm3261, %v279, 0.0
    %3947 = vadd.xlane.f32.xlu0 %v3946
    %v3948 = vpop.xlane.xlu0 %3947
    %v3949 = vsel %vm3261, %v280, 0.0
    %3950 = vadd.xlane.f32.xlu0 %v3949
    %v3951 = vpop.xlane.xlu0 %3950
    %v3952 = vsel %vm3261, %v281, 0.0
    %3953 = vadd.xlane.f32.xlu0 %v3952
    %v3954 = vpop.xlane.xlu0 %3953
    %v3955 = vsel %vm3261, %v282, 0.0
    %3956 = vadd.xlane.f32.xlu0 %v3955
    %v3957 = vpop.xlane.xlu0 %3956
    %v3958 = vsel %vm3261, %v283, 0.0
    %3959 = vadd.xlane.f32.xlu0 %v3958
    %v3960 = vpop.xlane.xlu0 %3959
    %v3961 = vsel %vm3261, %v284, 0.0
    %3962 = vadd.xlane.f32.xlu0 %v3961
    %v3963 = vpop.xlane.xlu0 %3962
    %v3964 = vsel %vm3261, %v285, 0.0
    %3965 = vadd.xlane.f32.xlu0 %v3964
    %v3966 = vpop.xlane.xlu0 %3965
    %v3967 = vsel %vm3261, %v286, 0.0
    %3968 = vadd.xlane.f32.xlu0 %v3967
    %v3969 = vpop.xlane.xlu0 %3968
    %v3970 = vsel %vm3261, %v287, 0.0
    %3971 = vadd.xlane.f32.xlu0 %v3970
    %v3972 = vpop.xlane.xlu0 %3971
    %v3973 = vsel %vm3261, %v288, 0.0
    %3974 = vadd.xlane.f32.xlu0 %v3973
    %v3975 = vpop.xlane.xlu0 %3974
    %v3976 = vsel %vm3261, %v289, 0.0
    %3977 = vadd.xlane.f32.xlu0 %v3976
    %v3978 = vpop.xlane.xlu0 %3977
    %v3979 = vsel %vm3261, %v290, 0.0
    %3980 = vadd.xlane.f32.xlu0 %v3979
    %v3981 = vpop.xlane.xlu0 %3980
    %v3982 = vsel %vm3261, %v291, 0.0
    %3983 = vadd.xlane.f32.xlu0 %v3982
    %v3984 = vpop.xlane.xlu0 %3983
    %v3985 = vsel %vm3261, %v292, 0.0
    %3986 = vadd.xlane.f32.xlu0 %v3985
    %v3987 = vpop.xlane.xlu0 %3986
    %v3988 = vsel %vm3261, %v293, 0.0
    %3989 = vadd.xlane.f32.xlu0 %v3988
    %v3990 = vpop.xlane.xlu0 %3989
    %v3991 = vsel %vm3261, %v294, 0.0
    %3992 = vadd.xlane.f32.xlu0 %v3991
    %v3993 = vpop.xlane.xlu0 %3992
    %v3994 = vsel %vm3261, %v295, 0.0
    %3995 = vadd.xlane.f32.xlu0 %v3994
    %v3996 = vpop.xlane.xlu0 %3995
    %v3997 = vsel %vm3261, %v296, 0.0
    %3998 = vadd.xlane.f32.xlu0 %v3997
    %v3999 = vpop.xlane.xlu0 %3998
    %v4000 = vsel %vm3261, %v297, 0.0
    %4001 = vadd.xlane.f32.xlu0 %v4000
    %v4002 = vpop.xlane.xlu0 %4001
    %v4003 = vsel %vm3261, %v298, 0.0
    %4004 = vadd.xlane.f32.xlu0 %v4003
    %v4005 = vpop.xlane.xlu0 %4004
    %v4006 = vsel %vm3261, %v299, 0.0
    %4007 = vadd.xlane.f32.xlu0 %v4006
    %v4008 = vpop.xlane.xlu0 %4007
    %v4009 = vsel %vm3261, %v300, 0.0
    %4010 = vadd.xlane.f32.xlu0 %v4009
    %v4011 = vpop.xlane.xlu0 %4010
    %v4012 = vsel %vm3261, %v301, 0.0
    %4013 = vadd.xlane.f32.xlu0 %v4012
    %v4014 = vpop.xlane.xlu0 %4013
    %v4015 = vsel %vm3261, %v302, 0.0
    %4016 = vadd.xlane.f32.xlu0 %v4015
    %v4017 = vpop.xlane.xlu0 %4016
    %v4018 = vsel %vm3261, %v303, 0.0
    %4019 = vadd.xlane.f32.xlu0 %v4018
    %v4020 = vpop.xlane.xlu0 %4019
    %v4021 = vsel %vm3261, %v304, 0.0
    %4022 = vadd.xlane.f32.xlu0 %v4021
    %v4023 = vpop.xlane.xlu0 %4022
    %v4024 = vsel %vm3261, %v305, 0.0
    %4025 = vadd.xlane.f32.xlu0 %v4024
    %v4026 = vpop.xlane.xlu0 %4025
    %v4027 = vsel %vm3261, %v306, 0.0
    %4028 = vadd.xlane.f32.xlu0 %v4027
    %v4029 = vpop.xlane.xlu0 %4028
    %v4030 = vstv %s563
    %v4031 = vadd.f32 %v4030, %v3264
    %v4032 = vadd.f32 %v4030, %v3267
    %v4033 = vadd.f32 %v4030, %v3270
    %v4034 = vadd.f32 %v4030, %v3273
    %v4035 = vadd.f32 %v4030, %v3276
    %v4036 = vadd.f32 %v4030, %v3279
    %v4037 = vadd.f32 %v4030, %v3282
    %v4038 = vadd.f32 %v4030, %v3285
    %v4039 = vadd.f32 %v4030, %v3288
    %v4040 = vadd.f32 %v4030, %v3291
    %v4041 = vadd.f32 %v4030, %v3294
    %v4042 = vadd.f32 %v4030, %v3297
    %v4043 = vadd.f32 %v4030, %v3300
    %v4044 = vadd.f32 %v4030, %v3303
    %v4045 = vadd.f32 %v4030, %v3306
    %v4046 = vadd.f32 %v4030, %v3309
    %v4047 = vadd.f32 %v4030, %v3312
    %v4048 = vadd.f32 %v4030, %v3315
    %v4049 = vadd.f32 %v4030, %v3318
    %v4050 = vadd.f32 %v4030, %v3321
    %v4051 = vadd.f32 %v4030, %v3324
    %v4052 = vadd.f32 %v4030, %v3327
    %v4053 = vadd.f32 %v4030, %v3330
    %v4054 = vadd.f32 %v4030, %v3333
    %v4055 = vadd.f32 %v4030, %v3336
    %v4056 = vadd.f32 %v4030, %v3339
    %v4057 = vadd.f32 %v4030, %v3342
    %v4058 = vadd.f32 %v4030, %v3345
    %v4059 = vadd.f32 %v4030, %v3348
    %v4060 = vadd.f32 %v4030, %v3351
    %v4061 = vadd.f32 %v4030, %v3354
    %v4062 = vadd.f32 %v4030, %v3357
    %v4063 = vadd.f32 %v4030, %v3360
    %v4064 = vadd.f32 %v4030, %v3363
    %v4065 = vadd.f32 %v4030, %v3366
    %v4066 = vadd.f32 %v4030, %v3369
    %v4067 = vadd.f32 %v4030, %v3372
    %v4068 = vadd.f32 %v4030, %v3375
    %v4069 = vadd.f32 %v4030, %v3378
    %v4070 = vadd.f32 %v4030, %v3381
    %v4071 = vadd.f32 %v4030, %v3384
    %v4072 = vadd.f32 %v4030, %v3387
    %v4073 = vadd.f32 %v4030, %v3390
    %v4074 = vadd.f32 %v4030, %v3393
    %v4075 = vadd.f32 %v4030, %v3396
    %v4076 = vadd.f32 %v4030, %v3399
    %v4077 = vadd.f32 %v4030, %v3402
    %v4078 = vadd.f32 %v4030, %v3405
    %v4079 = vadd.f32 %v4030, %v3408
    %v4080 = vadd.f32 %v4030, %v3411
    %v4081 = vadd.f32 %v4030, %v3414
    %v4082 = vadd.f32 %v4030, %v3417
    %v4083 = vadd.f32 %v4030, %v3420
    %v4084 = vadd.f32 %v4030, %v3423
    %v4085 = vadd.f32 %v4030, %v3426
    %v4086 = vadd.f32 %v4030, %v3429
    %v4087 = vadd.f32 %v4030, %v3432
    %v4088 = vadd.f32 %v4030, %v3435
    %v4089 = vadd.f32 %v4030, %v3438
    %v4090 = vadd.f32 %v4030, %v3441
    %v4091 = vadd.f32 %v4030, %v3444
    %v4092 = vadd.f32 %v4030, %v3447
    %v4093 = vadd.f32 %v4030, %v3450
    %v4094 = vadd.f32 %v4030, %v3453
    %v4095 = vadd.f32 %v4030, %v3456
    %v4096 = vadd.f32 %v4030, %v3459
    %v4097 = vadd.f32 %v4030, %v3462
    %v4098 = vadd.f32 %v4030, %v3465
    %v4099 = vadd.f32 %v4030, %v3468
    %v4100 = vadd.f32 %v4030, %v3471
    %v4101 = vadd.f32 %v4030, %v3474
    %v4102 = vadd.f32 %v4030, %v3477
    %v4103 = vadd.f32 %v4030, %v3480
    %v4104 = vadd.f32 %v4030, %v3483
    %v4105 = vadd.f32 %v4030, %v3486
    %v4106 = vadd.f32 %v4030, %v3489
    %v4107 = vadd.f32 %v4030, %v3492
    %v4108 = vadd.f32 %v4030, %v3495
    %v4109 = vadd.f32 %v4030, %v3498
    %v4110 = vadd.f32 %v4030, %v3501
    %v4111 = vadd.f32 %v4030, %v3504
    %v4112 = vadd.f32 %v4030, %v3507
    %v4113 = vadd.f32 %v4030, %v3510
    %v4114 = vadd.f32 %v4030, %v3513
    %v4115 = vadd.f32 %v4030, %v3516
    %v4116 = vadd.f32 %v4030, %v3519
    %v4117 = vadd.f32 %v4030, %v3522
    %v4118 = vadd.f32 %v4030, %v3525
    %v4119 = vadd.f32 %v4030, %v3528
    %v4120 = vadd.f32 %v4030, %v3531
    %v4121 = vadd.f32 %v4030, %v3534
    %v4122 = vadd.f32 %v4030, %v3537
    %v4123 = vadd.f32 %v4030, %v3540
    %v4124 = vadd.f32 %v4030, %v3543
    %v4125 = vadd.f32 %v4030, %v3546
    %v4126 = vadd.f32 %v4030, %v3549
    %v4127 = vadd.f32 %v4030, %v3552
    %v4128 = vadd.f32 %v4030, %v3555
    %v4129 = vadd.f32 %v4030, %v3558
    %v4130 = vadd.f32 %v4030, %v3561
    %v4131 = vadd.f32 %v4030, %v3564
    %v4132 = vadd.f32 %v4030, %v3567
    %v4133 = vadd.f32 %v4030, %v3570
    %v4134 = vadd.f32 %v4030, %v3573
    %v4135 = vadd.f32 %v4030, %v3576
    %v4136 = vadd.f32 %v4030, %v3579
    %v4137 = vadd.f32 %v4030, %v3582
    %v4138 = vadd.f32 %v4030, %v3585
    %v4139 = vadd.f32 %v4030, %v3588
    %v4140 = vadd.f32 %v4030, %v3591
    %v4141 = vadd.f32 %v4030, %v3594
    %v4142 = vadd.f32 %v4030, %v3597
    %v4143 = vadd.f32 %v4030, %v3600
    %v4144 = vadd.f32 %v4030, %v3603
    %v4145 = vadd.f32 %v4030, %v3606
    %v4146 = vadd.f32 %v4030, %v3609
    %v4147 = vadd.f32 %v4030, %v3612
    %v4148 = vadd.f32 %v4030, %v3615
    %v4149 = vadd.f32 %v4030, %v3618
    %v4150 = vadd.f32 %v4030, %v3621
    %v4151 = vadd.f32 %v4030, %v3624
    %v4152 = vadd.f32 %v4030, %v3627
    %v4153 = vadd.f32 %v4030, %v3630
    %v4154 = vadd.f32 %v4030, %v3633
    %v4155 = vadd.f32 %v4030, %v3636
    %v4156 = vadd.f32 %v4030, %v3639
    %v4157 = vadd.f32 %v4030, %v3642
    %v4158 = vadd.f32 %v4030, %v3645
    %v4159 = vadd.f32 %v4030, %v3648
    %v4160 = vadd.f32 %v4030, %v3651
    %v4161 = vadd.f32 %v4030, %v3654
    %v4162 = vadd.f32 %v4030, %v3657
    %v4163 = vadd.f32 %v4030, %v3660
    %v4164 = vadd.f32 %v4030, %v3663
    %v4165 = vadd.f32 %v4030, %v3666
    %v4166 = vadd.f32 %v4030, %v3669
    %v4167 = vadd.f32 %v4030, %v3672
    %v4168 = vadd.f32 %v4030, %v3675
    %v4169 = vadd.f32 %v4030, %v3678
    %v4170 = vadd.f32 %v4030, %v3681
    %v4171 = vadd.f32 %v4030, %v3684
    %v4172 = vadd.f32 %v4030, %v3687
    %v4173 = vadd.f32 %v4030, %v3690
    %v4174 = vadd.f32 %v4030, %v3693
    %v4175 = vadd.f32 %v4030, %v3696
    %v4176 = vadd.f32 %v4030, %v3699
    %v4177 = vadd.f32 %v4030, %v3702
    %v4178 = vadd.f32 %v4030, %v3705
    %v4179 = vadd.f32 %v4030, %v3708
    %v4180 = vadd.f32 %v4030, %v3711
    %v4181 = vadd.f32 %v4030, %v3714
    %v4182 = vadd.f32 %v4030, %v3717
    %v4183 = vadd.f32 %v4030, %v3720
    %v4184 = vadd.f32 %v4030, %v3723
    %v4185 = vadd.f32 %v4030, %v3726
    %v4186 = vadd.f32 %v4030, %v3729
    %v4187 = vadd.f32 %v4030, %v3732
    %v4188 = vadd.f32 %v4030, %v3735
    %v4189 = vadd.f32 %v4030, %v3738
    %v4190 = vadd.f32 %v4030, %v3741
    %v4191 = vadd.f32 %v4030, %v3744
    %v4192 = vadd.f32 %v4030, %v3747
    %v4193 = vadd.f32 %v4030, %v3750
    %v4194 = vadd.f32 %v4030, %v3753
    %v4195 = vadd.f32 %v4030, %v3756
    %v4196 = vadd.f32 %v4030, %v3759
    %v4197 = vadd.f32 %v4030, %v3762
    %v4198 = vadd.f32 %v4030, %v3765
    %v4199 = vadd.f32 %v4030, %v3768
    %v4200 = vadd.f32 %v4030, %v3771
    %v4201 = vadd.f32 %v4030, %v3774
    %v4202 = vadd.f32 %v4030, %v3777
    %v4203 = vadd.f32 %v4030, %v3780
    %v4204 = vadd.f32 %v4030, %v3783
    %v4205 = vadd.f32 %v4030, %v3786
    %v4206 = vadd.f32 %v4030, %v3789
    %v4207 = vadd.f32 %v4030, %v3792
    %v4208 = vadd.f32 %v4030, %v3795
    %v4209 = vadd.f32 %v4030, %v3798
    %v4210 = vadd.f32 %v4030, %v3801
    %v4211 = vadd.f32 %v4030, %v3804
    %v4212 = vadd.f32 %v4030, %v3807
    %v4213 = vadd.f32 %v4030, %v3810
    %v4214 = vadd.f32 %v4030, %v3813
    %v4215 = vadd.f32 %v4030, %v3816
    %v4216 = vadd.f32 %v4030, %v3819
    %v4217 = vadd.f32 %v4030, %v3822
    %v4218 = vadd.f32 %v4030, %v3825
    %v4219 = vadd.f32 %v4030, %v3828
    %v4220 = vadd.f32 %v4030, %v3831
    %v4221 = vadd.f32 %v4030, %v3834
    %v4222 = vadd.f32 %v4030, %v3837
    %v4223 = vadd.f32 %v4030, %v3840
    %v4224 = vadd.f32 %v4030, %v3843
    %v4225 = vadd.f32 %v4030, %v3846
    %v4226 = vadd.f32 %v4030, %v3849
    %v4227 = vadd.f32 %v4030, %v3852
    %v4228 = vadd.f32 %v4030, %v3855
    %v4229 = vadd.f32 %v4030, %v3858
    %v4230 = vadd.f32 %v4030, %v3861
    %v4231 = vadd.f32 %v4030, %v3864
    %v4232 = vadd.f32 %v4030, %v3867
    %v4233 = vadd.f32 %v4030, %v3870
    %v4234 = vadd.f32 %v4030, %v3873
    %v4235 = vadd.f32 %v4030, %v3876
    %v4236 = vadd.f32 %v4030, %v3879
    %v4237 = vadd.f32 %v4030, %v3882
    %v4238 = vadd.f32 %v4030, %v3885
    %v4239 = vadd.f32 %v4030, %v3888
    %v4240 = vadd.f32 %v4030, %v3891
    %v4241 = vadd.f32 %v4030, %v3894
    %v4242 = vadd.f32 %v4030, %v3897
    %v4243 = vadd.f32 %v4030, %v3900
    %v4244 = vadd.f32 %v4030, %v3903
    %v4245 = vadd.f32 %v4030, %v3906
    %v4246 = vadd.f32 %v4030, %v3909
    %v4247 = vadd.f32 %v4030, %v3912
    %v4248 = vadd.f32 %v4030, %v3915
    %v4249 = vadd.f32 %v4030, %v3918
    %v4250 = vadd.f32 %v4030, %v3921
    %v4251 = vadd.f32 %v4030, %v3924
    %v4252 = vadd.f32 %v4030, %v3927
    %v4253 = vadd.f32 %v4030, %v3930
    %v4254 = vadd.f32 %v4030, %v3933
    %v4255 = vadd.f32 %v4030, %v3936
    %v4256 = vadd.f32 %v4030, %v3939
    %v4257 = vadd.f32 %v4030, %v3942
    %v4258 = vadd.f32 %v4030, %v3945
    %v4259 = vadd.f32 %v4030, %v3948
    %v4260 = vadd.f32 %v4030, %v3951
    %v4261 = vadd.f32 %v4030, %v3954
    %v4262 = vadd.f32 %v4030, %v3957
    %v4263 = vadd.f32 %v4030, %v3960
    %v4264 = vadd.f32 %v4030, %v3963
    %v4265 = vadd.f32 %v4030, %v3966
    %v4266 = vadd.f32 %v4030, %v3969
    %v4267 = vadd.f32 %v4030, %v3972
    %v4268 = vadd.f32 %v4030, %v3975
    %v4269 = vadd.f32 %v4030, %v3978
    %v4270 = vadd.f32 %v4030, %v3981
    %v4271 = vadd.f32 %v4030, %v3984
    %v4272 = vadd.f32 %v4030, %v3987
    %v4273 = vadd.f32 %v4030, %v3990
    %v4274 = vadd.f32 %v4030, %v3993
    %v4275 = vadd.f32 %v4030, %v3996
    %v4276 = vadd.f32 %v4030, %v3999
    %v4277 = vadd.f32 %v4030, %v4002
    %v4278 = vadd.f32 %v4030, %v4005
    %v4279 = vadd.f32 %v4030, %v4008
    %v4280 = vadd.f32 %v4030, %v4011
    %v4281 = vadd.f32 %v4030, %v4014
    %v4282 = vadd.f32 %v4030, %v4017
    %v4283 = vadd.f32 %v4030, %v4020
    %v4284 = vadd.f32 %v4030, %v4023
    %v4285 = vadd.f32 %v4030, %v4026
    %v4286 = vadd.f32 %v4030, %v4029
    %v4287 = vmul.f32 %v1466, %v1466
    %v4288 = vmul.f32 %v1470, %v1470
    %v4289 = vmul.f32 %v1476, %v1476
    %v4290 = vmul.f32 %v1480, %v1480
    %v4291 = vmul.f32 %v1486, %v1486
    %v4292 = vmul.f32 %v1490, %v1490
    %v4293 = vmul.f32 %v1496, %v1496
    %v4294 = vmul.f32 %v1500, %v1500
    %v4295 = vmul.f32 %v1506, %v1506
    %v4296 = vmul.f32 %v1510, %v1510
    %v4297 = vmul.f32 %v1516, %v1516
    %v4298 = vmul.f32 %v1520, %v1520
    %v4299 = vmul.f32 %v1526, %v1526
    %v4300 = vmul.f32 %v1530, %v1530
    %v4301 = vmul.f32 %v1536, %v1536
    %v4302 = vmul.f32 %v1540, %v1540
    %v4303 = vmul.f32 %v1546, %v1546
    %v4304 = vmul.f32 %v1550, %v1550
    %v4305 = vmul.f32 %v1556, %v1556
    %v4306 = vmul.f32 %v1560, %v1560
    %v4307 = vmul.f32 %v1566, %v1566
    %v4308 = vmul.f32 %v1570, %v1570
    %v4309 = vmul.f32 %v1576, %v1576
    %v4310 = vmul.f32 %v1580, %v1580
    %v4311 = vmul.f32 %v1586, %v1586
    %v4312 = vmul.f32 %v1590, %v1590
    %v4313 = vmul.f32 %v1596, %v1596
    %v4314 = vmul.f32 %v1600, %v1600
    %v4315 = vmul.f32 %v1606, %v1606
    %v4316 = vmul.f32 %v1610, %v1610
    %v4317 = vmul.f32 %v1616, %v1616
    %v4318 = vmul.f32 %v1620, %v1620
    %v4319 = vmul.f32 %v1626, %v1626
    %v4320 = vmul.f32 %v1630, %v1630
    %v4321 = vmul.f32 %v1636, %v1636
    %v4322 = vmul.f32 %v1640, %v1640
    %v4323 = vmul.f32 %v1646, %v1646
    %v4324 = vmul.f32 %v1650, %v1650
    %v4325 = vmul.f32 %v1656, %v1656
    %v4326 = vmul.f32 %v1660, %v1660
    %v4327 = vmul.f32 %v1666, %v1666
    %v4328 = vmul.f32 %v1670, %v1670
    %v4329 = vmul.f32 %v1676, %v1676
    %v4330 = vmul.f32 %v1680, %v1680
    %v4331 = vmul.f32 %v1686, %v1686
    %v4332 = vmul.f32 %v1690, %v1690
    %v4333 = vmul.f32 %v1696, %v1696
    %v4334 = vmul.f32 %v1700, %v1700
    %v4335 = vmul.f32 %v1706, %v1706
    %v4336 = vmul.f32 %v1710, %v1710
    %v4337 = vmul.f32 %v1716, %v1716
    %v4338 = vmul.f32 %v1720, %v1720
    %v4339 = vmul.f32 %v1726, %v1726
    %v4340 = vmul.f32 %v1730, %v1730
    %v4341 = vmul.f32 %v1736, %v1736
    %v4342 = vmul.f32 %v1740, %v1740
    %v4343 = vmul.f32 %v1746, %v1746
    %v4344 = vmul.f32 %v1750, %v1750
    %v4345 = vmul.f32 %v1756, %v1756
    %v4346 = vmul.f32 %v1760, %v1760
    %v4347 = vmul.f32 %v1766, %v1766
    %v4348 = vmul.f32 %v1770, %v1770
    %v4349 = vmul.f32 %v1776, %v1776
    %v4350 = vmul.f32 %v1780, %v1780
    %v4351 = vmul.f32 %v1786, %v1786
    %v4352 = vmul.f32 %v1790, %v1790
    %v4353 = vmul.f32 %v1796, %v1796
    %v4354 = vmul.f32 %v1800, %v1800
    %v4355 = vmul.f32 %v1806, %v1806
    %v4356 = vmul.f32 %v1810, %v1810
    %v4357 = vmul.f32 %v1816, %v1816
    %v4358 = vmul.f32 %v1820, %v1820
    %v4359 = vmul.f32 %v1826, %v1826
    %v4360 = vmul.f32 %v1830, %v1830
    %v4361 = vmul.f32 %v1836, %v1836
    %v4362 = vmul.f32 %v1840, %v1840
    %v4363 = vmul.f32 %v1846, %v1846
    %v4364 = vmul.f32 %v1850, %v1850
    %v4365 = vmul.f32 %v1856, %v1856
    %v4366 = vmul.f32 %v1860, %v1860
    %v4367 = vmul.f32 %v1866, %v1866
    %v4368 = vmul.f32 %v1870, %v1870
    %v4369 = vmul.f32 %v1876, %v1876
    %v4370 = vmul.f32 %v1880, %v1880
    %v4371 = vmul.f32 %v1886, %v1886
    %v4372 = vmul.f32 %v1890, %v1890
    %v4373 = vmul.f32 %v1896, %v1896
    %v4374 = vmul.f32 %v1900, %v1900
    %v4375 = vmul.f32 %v1906, %v1906
    %v4376 = vmul.f32 %v1910, %v1910
    %v4377 = vmul.f32 %v1916, %v1916
    %v4378 = vmul.f32 %v1920, %v1920
    %v4379 = vmul.f32 %v1926, %v1926
    %v4380 = vmul.f32 %v1930, %v1930
    %v4381 = vmul.f32 %v1936, %v1936
    %v4382 = vmul.f32 %v1940, %v1940
    %v4383 = vmul.f32 %v1946, %v1946
    %v4384 = vmul.f32 %v1950, %v1950
    %v4385 = vmul.f32 %v1956, %v1956
    %v4386 = vmul.f32 %v1960, %v1960
    %v4387 = vmul.f32 %v1966, %v1966
    %v4388 = vmul.f32 %v1970, %v1970
    %v4389 = vmul.f32 %v1976, %v1976
    %v4390 = vmul.f32 %v1980, %v1980
    %v4391 = vmul.f32 %v1986, %v1986
    %v4392 = vmul.f32 %v1990, %v1990
    %v4393 = vmul.f32 %v1996, %v1996
    %v4394 = vmul.f32 %v2000, %v2000
    %v4395 = vmul.f32 %v2006, %v2006
    %v4396 = vmul.f32 %v2010, %v2010
    %v4397 = vmul.f32 %v2016, %v2016
    %v4398 = vmul.f32 %v2020, %v2020
    %v4399 = vmul.f32 %v2026, %v2026
    %v4400 = vmul.f32 %v2030, %v2030
    %v4401 = vmul.f32 %v2036, %v2036
    %v4402 = vmul.f32 %v2040, %v2040
    %v4403 = vmul.f32 %v2046, %v2046
    %v4404 = vmul.f32 %v2050, %v2050
    %v4405 = vmul.f32 %v2056, %v2056
    %v4406 = vmul.f32 %v2060, %v2060
    %v4407 = vmul.f32 %v2066, %v2066
    %v4408 = vmul.f32 %v2070, %v2070
    %v4409 = vmul.f32 %v2076, %v2076
    %v4410 = vmul.f32 %v2080, %v2080
    %v4411 = vmul.f32 %v2086, %v2086
    %v4412 = vmul.f32 %v2090, %v2090
    %v4413 = vmul.f32 %v2096, %v2096
    %v4414 = vmul.f32 %v2100, %v2100
    %v4415 = vmul.f32 %v2106, %v2106
    %v4416 = vmul.f32 %v2110, %v2110
    %v4417 = vmul.f32 %v2116, %v2116
    %v4418 = vmul.f32 %v2120, %v2120
    %v4419 = vmul.f32 %v2126, %v2126
    %v4420 = vmul.f32 %v2130, %v2130
    %v4421 = vmul.f32 %v2136, %v2136
    %v4422 = vmul.f32 %v2140, %v2140
    %v4423 = vmul.f32 %v2146, %v2146
    %v4424 = vmul.f32 %v2150, %v2150
    %v4425 = vmul.f32 %v2156, %v2156
    %v4426 = vmul.f32 %v2160, %v2160
    %v4427 = vmul.f32 %v2166, %v2166
    %v4428 = vmul.f32 %v2170, %v2170
    %v4429 = vmul.f32 %v2176, %v2176
    %v4430 = vmul.f32 %v2180, %v2180
    %v4431 = vmul.f32 %v2186, %v2186
    %v4432 = vmul.f32 %v2190, %v2190
    %v4433 = vmul.f32 %v2196, %v2196
    %v4434 = vmul.f32 %v2200, %v2200
    %v4435 = vmul.f32 %v2206, %v2206
    %v4436 = vmul.f32 %v2210, %v2210
    %v4437 = vmul.f32 %v2216, %v2216
    %v4438 = vmul.f32 %v2220, %v2220
    %v4439 = vmul.f32 %v2226, %v2226
    %v4440 = vmul.f32 %v2230, %v2230
    %v4441 = vmul.f32 %v2236, %v2236
    %v4442 = vmul.f32 %v2240, %v2240
    %v4443 = vmul.f32 %v2246, %v2246
    %v4444 = vmul.f32 %v2250, %v2250
    %v4445 = vmul.f32 %v2256, %v2256
    %v4446 = vmul.f32 %v2260, %v2260
    %v4447 = vmul.f32 %v2266, %v2266
    %v4448 = vmul.f32 %v2270, %v2270
    %v4449 = vmul.f32 %v2276, %v2276
    %v4450 = vmul.f32 %v2280, %v2280
    %v4451 = vmul.f32 %v2286, %v2286
    %v4452 = vmul.f32 %v2290, %v2290
    %v4453 = vmul.f32 %v2296, %v2296
    %v4454 = vmul.f32 %v2300, %v2300
    %v4455 = vmul.f32 %v2306, %v2306
    %v4456 = vmul.f32 %v2310, %v2310
    %v4457 = vmul.f32 %v2316, %v2316
    %v4458 = vmul.f32 %v2320, %v2320
    %v4459 = vmul.f32 %v2326, %v2326
    %v4460 = vmul.f32 %v2330, %v2330
    %v4461 = vmul.f32 %v2336, %v2336
    %v4462 = vmul.f32 %v2340, %v2340
    %v4463 = vmul.f32 %v2346, %v2346
    %v4464 = vmul.f32 %v2350, %v2350
    %v4465 = vmul.f32 %v2356, %v2356
    %v4466 = vmul.f32 %v2360, %v2360
    %v4467 = vmul.f32 %v2366, %v2366
    %v4468 = vmul.f32 %v2370, %v2370
    %v4469 = vmul.f32 %v2376, %v2376
    %v4470 = vmul.f32 %v2380, %v2380
    %v4471 = vmul.f32 %v2386, %v2386
    %v4472 = vmul.f32 %v2390, %v2390
    %v4473 = vmul.f32 %v2396, %v2396
    %v4474 = vmul.f32 %v2400, %v2400
    %v4475 = vmul.f32 %v2406, %v2406
    %v4476 = vmul.f32 %v2410, %v2410
    %v4477 = vmul.f32 %v2416, %v2416
    %v4478 = vmul.f32 %v2420, %v2420
    %v4479 = vmul.f32 %v2426, %v2426
    %v4480 = vmul.f32 %v2430, %v2430
    %v4481 = vmul.f32 %v2436, %v2436
    %v4482 = vmul.f32 %v2440, %v2440
    %v4483 = vmul.f32 %v2446, %v2446
    %v4484 = vmul.f32 %v2450, %v2450
    %v4485 = vmul.f32 %v2456, %v2456
    %v4486 = vmul.f32 %v2460, %v2460
    %v4487 = vmul.f32 %v2466, %v2466
    %v4488 = vmul.f32 %v2470, %v2470
    %v4489 = vmul.f32 %v2476, %v2476
    %v4490 = vmul.f32 %v2480, %v2480
    %v4491 = vmul.f32 %v2486, %v2486
    %v4492 = vmul.f32 %v2490, %v2490
    %v4493 = vmul.f32 %v2496, %v2496
    %v4494 = vmul.f32 %v2500, %v2500
    %v4495 = vmul.f32 %v2506, %v2506
    %v4496 = vmul.f32 %v2510, %v2510
    %v4497 = vmul.f32 %v2516, %v2516
    %v4498 = vmul.f32 %v2520, %v2520
    %v4499 = vmul.f32 %v2526, %v2526
    %v4500 = vmul.f32 %v2530, %v2530
    %v4501 = vmul.f32 %v2536, %v2536
    %v4502 = vmul.f32 %v2540, %v2540
    %v4503 = vmul.f32 %v2546, %v2546
    %v4504 = vmul.f32 %v2550, %v2550
    %v4505 = vmul.f32 %v2556, %v2556
    %v4506 = vmul.f32 %v2560, %v2560
    %v4507 = vmul.f32 %v2566, %v2566
    %v4508 = vmul.f32 %v2570, %v2570
    %v4509 = vmul.f32 %v2576, %v2576
    %v4510 = vmul.f32 %v2580, %v2580
    %v4511 = vmul.f32 %v2586, %v2586
    %v4512 = vmul.f32 %v2590, %v2590
    %v4513 = vmul.f32 %v2596, %v2596
    %v4514 = vmul.f32 %v2600, %v2600
    %v4515 = vmul.f32 %v2606, %v2606
    %v4516 = vmul.f32 %v2610, %v2610
    %v4517 = vmul.f32 %v2616, %v2616
    %v4518 = vmul.f32 %v2620, %v2620
    %v4519 = vmul.f32 %v2626, %v2626
    %v4520 = vmul.f32 %v2630, %v2630
    %v4521 = vmul.f32 %v2636, %v2636
    %v4522 = vmul.f32 %v2640, %v2640
    %v4523 = vmul.f32 %v2646, %v2646
    %v4524 = vmul.f32 %v2650, %v2650
    %v4525 = vmul.f32 %v2656, %v2656
    %v4526 = vmul.f32 %v2660, %v2660
    %v4527 = vmul.f32 %v2666, %v2666
    %v4528 = vmul.f32 %v2670, %v2670
    %v4529 = vmul.f32 %v2676, %v2676
    %v4530 = vmul.f32 %v2680, %v2680
    %v4531 = vmul.f32 %v2686, %v2686
    %v4532 = vmul.f32 %v2690, %v2690
    %v4533 = vmul.f32 %v2696, %v2696
    %v4534 = vmul.f32 %v2700, %v2700
    %v4535 = vmul.f32 %v2706, %v2706
    %v4536 = vmul.f32 %v2710, %v2710
    %v4537 = vmul.f32 %v2716, %v2716
    %v4538 = vmul.f32 %v2720, %v2720
    %v4539 = vmul.f32 %v2726, %v2726
    %v4540 = vmul.f32 %v2730, %v2730
    %v4541 = vmul.f32 %v2736, %v2736
    %v4542 = vmul.f32 %v2740, %v2740
    %4799 = vrot.lane.b32.xlu0 %v4287, 96
    %v4800 = vpop.permute.xlu0 %4799
    %4801 = vrot.lane.b32.xlu0 %v4288, 96
    %v4802 = vpop.permute.xlu0 %4801
    %4803 = vrot.lane.b32.xlu0 %v4289, 96
    %v4804 = vpop.permute.xlu0 %4803
    %4805 = vrot.lane.b32.xlu0 %v4290, 96
    %v4806 = vpop.permute.xlu0 %4805
    %4807 = vrot.lane.b32.xlu0 %v4291, 96
    %v4808 = vpop.permute.xlu0 %4807
    %4809 = vrot.lane.b32.xlu0 %v4292, 96
    %v4810 = vpop.permute.xlu0 %4809
    %4811 = vrot.lane.b32.xlu0 %v4293, 96
    %v4812 = vpop.permute.xlu0 %4811
    %4813 = vrot.lane.b32.xlu0 %v4294, 96
    %v4814 = vpop.permute.xlu0 %4813
    %4815 = vrot.lane.b32.xlu0 %v4295, 96
    %v4816 = vpop.permute.xlu0 %4815
    %4817 = vrot.lane.b32.xlu0 %v4296, 96
    %v4818 = vpop.permute.xlu0 %4817
    %4819 = vrot.lane.b32.xlu0 %v4297, 96
    %v4820 = vpop.permute.xlu0 %4819
    %4821 = vrot.lane.b32.xlu0 %v4298, 96
    %v4822 = vpop.permute.xlu0 %4821
    %4823 = vrot.lane.b32.xlu0 %v4299, 96
    %v4824 = vpop.permute.xlu0 %4823
    %4825 = vrot.lane.b32.xlu0 %v4300, 96
    %v4826 = vpop.permute.xlu0 %4825
    %4827 = vrot.lane.b32.xlu0 %v4301, 96
    %v4828 = vpop.permute.xlu0 %4827
    %4829 = vrot.lane.b32.xlu0 %v4302, 96
    %v4830 = vpop.permute.xlu0 %4829
    %4831 = vrot.lane.b32.xlu0 %v4303, 96
    %v4832 = vpop.permute.xlu0 %4831
    %4833 = vrot.lane.b32.xlu0 %v4304, 96
    %v4834 = vpop.permute.xlu0 %4833
    %4835 = vrot.lane.b32.xlu0 %v4305, 96
    %v4836 = vpop.permute.xlu0 %4835
    %4837 = vrot.lane.b32.xlu0 %v4306, 96
    %v4838 = vpop.permute.xlu0 %4837
    %4839 = vrot.lane.b32.xlu0 %v4307, 96
    %v4840 = vpop.permute.xlu0 %4839
    %4841 = vrot.lane.b32.xlu0 %v4308, 96
    %v4842 = vpop.permute.xlu0 %4841
    %4843 = vrot.lane.b32.xlu0 %v4309, 96
    %v4844 = vpop.permute.xlu0 %4843
    %4845 = vrot.lane.b32.xlu0 %v4310, 96
    %v4846 = vpop.permute.xlu0 %4845
    %4847 = vrot.lane.b32.xlu0 %v4311, 96
    %v4848 = vpop.permute.xlu0 %4847
    %4849 = vrot.lane.b32.xlu0 %v4312, 96
    %v4850 = vpop.permute.xlu0 %4849
    %4851 = vrot.lane.b32.xlu0 %v4313, 96
    %v4852 = vpop.permute.xlu0 %4851
    %4853 = vrot.lane.b32.xlu0 %v4314, 96
    %v4854 = vpop.permute.xlu0 %4853
    %4855 = vrot.lane.b32.xlu0 %v4315, 96
    %v4856 = vpop.permute.xlu0 %4855
    %4857 = vrot.lane.b32.xlu0 %v4316, 96
    %v4858 = vpop.permute.xlu0 %4857
    %4859 = vrot.lane.b32.xlu0 %v4317, 96
    %v4860 = vpop.permute.xlu0 %4859
    %4861 = vrot.lane.b32.xlu0 %v4318, 96
    %v4862 = vpop.permute.xlu0 %4861
    %4863 = vrot.lane.b32.xlu0 %v4319, 96
    %v4864 = vpop.permute.xlu0 %4863
    %4865 = vrot.lane.b32.xlu0 %v4320, 96
    %v4866 = vpop.permute.xlu0 %4865
    %4867 = vrot.lane.b32.xlu0 %v4321, 96
    %v4868 = vpop.permute.xlu0 %4867
    %4869 = vrot.lane.b32.xlu0 %v4322, 96
    %v4870 = vpop.permute.xlu0 %4869
    %4871 = vrot.lane.b32.xlu0 %v4323, 96
    %v4872 = vpop.permute.xlu0 %4871
    %4873 = vrot.lane.b32.xlu0 %v4324, 96
    %v4874 = vpop.permute.xlu0 %4873
    %4875 = vrot.lane.b32.xlu0 %v4325, 96
    %v4876 = vpop.permute.xlu0 %4875
    %4877 = vrot.lane.b32.xlu0 %v4326, 96
    %v4878 = vpop.permute.xlu0 %4877
    %4879 = vrot.lane.b32.xlu0 %v4327, 96
    %v4880 = vpop.permute.xlu0 %4879
    %4881 = vrot.lane.b32.xlu0 %v4328, 96
    %v4882 = vpop.permute.xlu0 %4881
    %4883 = vrot.lane.b32.xlu0 %v4329, 96
    %v4884 = vpop.permute.xlu0 %4883
    %4885 = vrot.lane.b32.xlu0 %v4330, 96
    %v4886 = vpop.permute.xlu0 %4885
    %4887 = vrot.lane.b32.xlu0 %v4331, 96
    %v4888 = vpop.permute.xlu0 %4887
    %4889 = vrot.lane.b32.xlu0 %v4332, 96
    %v4890 = vpop.permute.xlu0 %4889
    %4891 = vrot.lane.b32.xlu0 %v4333, 96
    %v4892 = vpop.permute.xlu0 %4891
    %4893 = vrot.lane.b32.xlu0 %v4334, 96
    %v4894 = vpop.permute.xlu0 %4893
    %4895 = vrot.lane.b32.xlu0 %v4335, 96
    %v4896 = vpop.permute.xlu0 %4895
    %4897 = vrot.lane.b32.xlu0 %v4336, 96
    %v4898 = vpop.permute.xlu0 %4897
    %4899 = vrot.lane.b32.xlu0 %v4337, 96
    %v4900 = vpop.permute.xlu0 %4899
    %4901 = vrot.lane.b32.xlu0 %v4338, 96
    %v4902 = vpop.permute.xlu0 %4901
    %4903 = vrot.lane.b32.xlu0 %v4339, 96
    %v4904 = vpop.permute.xlu0 %4903
    %4905 = vrot.lane.b32.xlu0 %v4340, 96
    %v4906 = vpop.permute.xlu0 %4905
    %4907 = vrot.lane.b32.xlu0 %v4341, 96
    %v4908 = vpop.permute.xlu0 %4907
    %4909 = vrot.lane.b32.xlu0 %v4342, 96
    %v4910 = vpop.permute.xlu0 %4909
    %4911 = vrot.lane.b32.xlu0 %v4343, 96
    %v4912 = vpop.permute.xlu0 %4911
    %4913 = vrot.lane.b32.xlu0 %v4344, 96
    %v4914 = vpop.permute.xlu0 %4913
    %4915 = vrot.lane.b32.xlu0 %v4345, 96
    %v4916 = vpop.permute.xlu0 %4915
    %4917 = vrot.lane.b32.xlu0 %v4346, 96
    %v4918 = vpop.permute.xlu0 %4917
    %4919 = vrot.lane.b32.xlu0 %v4347, 96
    %v4920 = vpop.permute.xlu0 %4919
    %4921 = vrot.lane.b32.xlu0 %v4348, 96
    %v4922 = vpop.permute.xlu0 %4921
    %4923 = vrot.lane.b32.xlu0 %v4349, 96
    %v4924 = vpop.permute.xlu0 %4923
    %4925 = vrot.lane.b32.xlu0 %v4350, 96
    %v4926 = vpop.permute.xlu0 %4925
    %4927 = vrot.lane.b32.xlu0 %v4351, 96
    %v4928 = vpop.permute.xlu0 %4927
    %4929 = vrot.lane.b32.xlu0 %v4352, 96
    %v4930 = vpop.permute.xlu0 %4929
    %4931 = vrot.lane.b32.xlu0 %v4353, 96
    %v4932 = vpop.permute.xlu0 %4931
    %4933 = vrot.lane.b32.xlu0 %v4354, 96
    %v4934 = vpop.permute.xlu0 %4933
    %4935 = vrot.lane.b32.xlu0 %v4355, 96
    %v4936 = vpop.permute.xlu0 %4935
    %4937 = vrot.lane.b32.xlu0 %v4356, 96
    %v4938 = vpop.permute.xlu0 %4937
    %4939 = vrot.lane.b32.xlu0 %v4357, 96
    %v4940 = vpop.permute.xlu0 %4939
    %4941 = vrot.lane.b32.xlu0 %v4358, 96
    %v4942 = vpop.permute.xlu0 %4941
    %4943 = vrot.lane.b32.xlu0 %v4359, 96
    %v4944 = vpop.permute.xlu0 %4943
    %4945 = vrot.lane.b32.xlu0 %v4360, 96
    %v4946 = vpop.permute.xlu0 %4945
    %4947 = vrot.lane.b32.xlu0 %v4361, 96
    %v4948 = vpop.permute.xlu0 %4947
    %4949 = vrot.lane.b32.xlu0 %v4362, 96
    %v4950 = vpop.permute.xlu0 %4949
    %4951 = vrot.lane.b32.xlu0 %v4363, 96
    %v4952 = vpop.permute.xlu0 %4951
    %4953 = vrot.lane.b32.xlu0 %v4364, 96
    %v4954 = vpop.permute.xlu0 %4953
    %4955 = vrot.lane.b32.xlu0 %v4365, 96
    %v4956 = vpop.permute.xlu0 %4955
    %4957 = vrot.lane.b32.xlu0 %v4366, 96
    %v4958 = vpop.permute.xlu0 %4957
    %4959 = vrot.lane.b32.xlu0 %v4367, 96
    %v4960 = vpop.permute.xlu0 %4959
    %4961 = vrot.lane.b32.xlu0 %v4368, 96
    %v4962 = vpop.permute.xlu0 %4961
    %4963 = vrot.lane.b32.xlu0 %v4369, 96
    %v4964 = vpop.permute.xlu0 %4963
    %4965 = vrot.lane.b32.xlu0 %v4370, 96
    %v4966 = vpop.permute.xlu0 %4965
    %4967 = vrot.lane.b32.xlu0 %v4371, 96
    %v4968 = vpop.permute.xlu0 %4967
    %4969 = vrot.lane.b32.xlu0 %v4372, 96
    %v4970 = vpop.permute.xlu0 %4969
    %4971 = vrot.lane.b32.xlu0 %v4373, 96
    %v4972 = vpop.permute.xlu0 %4971
    %4973 = vrot.lane.b32.xlu0 %v4374, 96
    %v4974 = vpop.permute.xlu0 %4973
    %4975 = vrot.lane.b32.xlu0 %v4375, 96
    %v4976 = vpop.permute.xlu0 %4975
    %4977 = vrot.lane.b32.xlu0 %v4376, 96
    %v4978 = vpop.permute.xlu0 %4977
    %4979 = vrot.lane.b32.xlu0 %v4377, 96
    %v4980 = vpop.permute.xlu0 %4979
    %4981 = vrot.lane.b32.xlu0 %v4378, 96
    %v4982 = vpop.permute.xlu0 %4981
    %4983 = vrot.lane.b32.xlu0 %v4379, 96
    %v4984 = vpop.permute.xlu0 %4983
    %4985 = vrot.lane.b32.xlu0 %v4380, 96
    %v4986 = vpop.permute.xlu0 %4985
    %4987 = vrot.lane.b32.xlu0 %v4381, 96
    %v4988 = vpop.permute.xlu0 %4987
    %4989 = vrot.lane.b32.xlu0 %v4382, 96
    %v4990 = vpop.permute.xlu0 %4989
    %4991 = vrot.lane.b32.xlu0 %v4383, 96
    %v4992 = vpop.permute.xlu0 %4991
    %4993 = vrot.lane.b32.xlu0 %v4384, 96
    %v4994 = vpop.permute.xlu0 %4993
    %4995 = vrot.lane.b32.xlu0 %v4385, 96
    %v4996 = vpop.permute.xlu0 %4995
    %4997 = vrot.lane.b32.xlu0 %v4386, 96
    %v4998 = vpop.permute.xlu0 %4997
    %4999 = vrot.lane.b32.xlu0 %v4387, 96
    %v5000 = vpop.permute.xlu0 %4999
    %5001 = vrot.lane.b32.xlu0 %v4388, 96
    %v5002 = vpop.permute.xlu0 %5001
    %5003 = vrot.lane.b32.xlu0 %v4389, 96
    %v5004 = vpop.permute.xlu0 %5003
    %5005 = vrot.lane.b32.xlu0 %v4390, 96
    %v5006 = vpop.permute.xlu0 %5005
    %5007 = vrot.lane.b32.xlu0 %v4391, 96
    %v5008 = vpop.permute.xlu0 %5007
    %5009 = vrot.lane.b32.xlu0 %v4392, 96
    %v5010 = vpop.permute.xlu0 %5009
    %5011 = vrot.lane.b32.xlu0 %v4393, 96
    %v5012 = vpop.permute.xlu0 %5011
    %5013 = vrot.lane.b32.xlu0 %v4394, 96
    %v5014 = vpop.permute.xlu0 %5013
    %5015 = vrot.lane.b32.xlu0 %v4395, 96
    %v5016 = vpop.permute.xlu0 %5015
    %5017 = vrot.lane.b32.xlu0 %v4396, 96
    %v5018 = vpop.permute.xlu0 %5017
    %5019 = vrot.lane.b32.xlu0 %v4397, 96
    %v5020 = vpop.permute.xlu0 %5019
    %5021 = vrot.lane.b32.xlu0 %v4398, 96
    %v5022 = vpop.permute.xlu0 %5021
    %5023 = vrot.lane.b32.xlu0 %v4399, 96
    %v5024 = vpop.permute.xlu0 %5023
    %5025 = vrot.lane.b32.xlu0 %v4400, 96
    %v5026 = vpop.permute.xlu0 %5025
    %5027 = vrot.lane.b32.xlu0 %v4401, 96
    %v5028 = vpop.permute.xlu0 %5027
    %5029 = vrot.lane.b32.xlu0 %v4402, 96
    %v5030 = vpop.permute.xlu0 %5029
    %5031 = vrot.lane.b32.xlu0 %v4403, 96
    %v5032 = vpop.permute.xlu0 %5031
    %5033 = vrot.lane.b32.xlu0 %v4404, 96
    %v5034 = vpop.permute.xlu0 %5033
    %5035 = vrot.lane.b32.xlu0 %v4405, 96
    %v5036 = vpop.permute.xlu0 %5035
    %5037 = vrot.lane.b32.xlu0 %v4406, 96
    %v5038 = vpop.permute.xlu0 %5037
    %5039 = vrot.lane.b32.xlu0 %v4407, 96
    %v5040 = vpop.permute.xlu0 %5039
    %5041 = vrot.lane.b32.xlu0 %v4408, 96
    %v5042 = vpop.permute.xlu0 %5041
    %5043 = vrot.lane.b32.xlu0 %v4409, 96
    %v5044 = vpop.permute.xlu0 %5043
    %5045 = vrot.lane.b32.xlu0 %v4410, 96
    %v5046 = vpop.permute.xlu0 %5045
    %5047 = vrot.lane.b32.xlu0 %v4411, 96
    %v5048 = vpop.permute.xlu0 %5047
    %5049 = vrot.lane.b32.xlu0 %v4412, 96
    %v5050 = vpop.permute.xlu0 %5049
    %5051 = vrot.lane.b32.xlu0 %v4413, 96
    %v5052 = vpop.permute.xlu0 %5051
    %5053 = vrot.lane.b32.xlu0 %v4414, 96
    %v5054 = vpop.permute.xlu0 %5053
    %5055 = vrot.lane.b32.xlu0 %v4415, 96
    %v5056 = vpop.permute.xlu0 %5055
    %5057 = vrot.lane.b32.xlu0 %v4416, 96
    %v5058 = vpop.permute.xlu0 %5057
    %5059 = vrot.lane.b32.xlu0 %v4417, 96
    %v5060 = vpop.permute.xlu0 %5059
    %5061 = vrot.lane.b32.xlu0 %v4418, 96
    %v5062 = vpop.permute.xlu0 %5061
    %5063 = vrot.lane.b32.xlu0 %v4419, 96
    %v5064 = vpop.permute.xlu0 %5063
    %5065 = vrot.lane.b32.xlu0 %v4420, 96
    %v5066 = vpop.permute.xlu0 %5065
    %5067 = vrot.lane.b32.xlu0 %v4421, 96
    %v5068 = vpop.permute.xlu0 %5067
    %5069 = vrot.lane.b32.xlu0 %v4422, 96
    %v5070 = vpop.permute.xlu0 %5069
    %5071 = vrot.lane.b32.xlu0 %v4423, 96
    %v5072 = vpop.permute.xlu0 %5071
    %5073 = vrot.lane.b32.xlu0 %v4424, 96
    %v5074 = vpop.permute.xlu0 %5073
    %5075 = vrot.lane.b32.xlu0 %v4425, 96
    %v5076 = vpop.permute.xlu0 %5075
    %5077 = vrot.lane.b32.xlu0 %v4426, 96
    %v5078 = vpop.permute.xlu0 %5077
    %5079 = vrot.lane.b32.xlu0 %v4427, 96
    %v5080 = vpop.permute.xlu0 %5079
    %5081 = vrot.lane.b32.xlu0 %v4428, 96
    %v5082 = vpop.permute.xlu0 %5081
    %5083 = vrot.lane.b32.xlu0 %v4429, 96
    %v5084 = vpop.permute.xlu0 %5083
    %5085 = vrot.lane.b32.xlu0 %v4430, 96
    %v5086 = vpop.permute.xlu0 %5085
    %5087 = vrot.lane.b32.xlu0 %v4431, 96
    %v5088 = vpop.permute.xlu0 %5087
    %5089 = vrot.lane.b32.xlu0 %v4432, 96
    %v5090 = vpop.permute.xlu0 %5089
    %5091 = vrot.lane.b32.xlu0 %v4433, 96
    %v5092 = vpop.permute.xlu0 %5091
    %5093 = vrot.lane.b32.xlu0 %v4434, 96
    %v5094 = vpop.permute.xlu0 %5093
    %5095 = vrot.lane.b32.xlu0 %v4435, 96
    %v5096 = vpop.permute.xlu0 %5095
    %5097 = vrot.lane.b32.xlu0 %v4436, 96
    %v5098 = vpop.permute.xlu0 %5097
    %5099 = vrot.lane.b32.xlu0 %v4437, 96
    %v5100 = vpop.permute.xlu0 %5099
    %5101 = vrot.lane.b32.xlu0 %v4438, 96
    %v5102 = vpop.permute.xlu0 %5101
    %5103 = vrot.lane.b32.xlu0 %v4439, 96
    %v5104 = vpop.permute.xlu0 %5103
    %5105 = vrot.lane.b32.xlu0 %v4440, 96
    %v5106 = vpop.permute.xlu0 %5105
    %5107 = vrot.lane.b32.xlu0 %v4441, 96
    %v5108 = vpop.permute.xlu0 %5107
    %5109 = vrot.lane.b32.xlu0 %v4442, 96
    %v5110 = vpop.permute.xlu0 %5109
    %5111 = vrot.lane.b32.xlu0 %v4443, 96
    %v5112 = vpop.permute.xlu0 %5111
    %5113 = vrot.lane.b32.xlu0 %v4444, 96
    %v5114 = vpop.permute.xlu0 %5113
    %5115 = vrot.lane.b32.xlu0 %v4445, 96
    %v5116 = vpop.permute.xlu0 %5115
    %5117 = vrot.lane.b32.xlu0 %v4446, 96
    %v5118 = vpop.permute.xlu0 %5117
    %5119 = vrot.lane.b32.xlu0 %v4447, 96
    %v5120 = vpop.permute.xlu0 %5119
    %5121 = vrot.lane.b32.xlu0 %v4448, 96
    %v5122 = vpop.permute.xlu0 %5121
    %5123 = vrot.lane.b32.xlu0 %v4449, 96
    %v5124 = vpop.permute.xlu0 %5123
    %5125 = vrot.lane.b32.xlu0 %v4450, 96
    %v5126 = vpop.permute.xlu0 %5125
    %5127 = vrot.lane.b32.xlu0 %v4451, 96
    %v5128 = vpop.permute.xlu0 %5127
    %5129 = vrot.lane.b32.xlu0 %v4452, 96
    %v5130 = vpop.permute.xlu0 %5129
    %5131 = vrot.lane.b32.xlu0 %v4453, 96
    %v5132 = vpop.permute.xlu0 %5131
    %5133 = vrot.lane.b32.xlu0 %v4454, 96
    %v5134 = vpop.permute.xlu0 %5133
    %5135 = vrot.lane.b32.xlu0 %v4455, 96
    %v5136 = vpop.permute.xlu0 %5135
    %5137 = vrot.lane.b32.xlu0 %v4456, 96
    %v5138 = vpop.permute.xlu0 %5137
    %5139 = vrot.lane.b32.xlu0 %v4457, 96
    %v5140 = vpop.permute.xlu0 %5139
    %5141 = vrot.lane.b32.xlu0 %v4458, 96
    %v5142 = vpop.permute.xlu0 %5141
    %5143 = vrot.lane.b32.xlu0 %v4459, 96
    %v5144 = vpop.permute.xlu0 %5143
    %5145 = vrot.lane.b32.xlu0 %v4460, 96
    %v5146 = vpop.permute.xlu0 %5145
    %5147 = vrot.lane.b32.xlu0 %v4461, 96
    %v5148 = vpop.permute.xlu0 %5147
    %5149 = vrot.lane.b32.xlu0 %v4462, 96
    %v5150 = vpop.permute.xlu0 %5149
    %5151 = vrot.lane.b32.xlu0 %v4463, 96
    %v5152 = vpop.permute.xlu0 %5151
    %5153 = vrot.lane.b32.xlu0 %v4464, 96
    %v5154 = vpop.permute.xlu0 %5153
    %5155 = vrot.lane.b32.xlu0 %v4465, 96
    %v5156 = vpop.permute.xlu0 %5155
    %5157 = vrot.lane.b32.xlu0 %v4466, 96
    %v5158 = vpop.permute.xlu0 %5157
    %5159 = vrot.lane.b32.xlu0 %v4467, 96
    %v5160 = vpop.permute.xlu0 %5159
    %5161 = vrot.lane.b32.xlu0 %v4468, 96
    %v5162 = vpop.permute.xlu0 %5161
    %5163 = vrot.lane.b32.xlu0 %v4469, 96
    %v5164 = vpop.permute.xlu0 %5163
    %5165 = vrot.lane.b32.xlu0 %v4470, 96
    %v5166 = vpop.permute.xlu0 %5165
    %5167 = vrot.lane.b32.xlu0 %v4471, 96
    %v5168 = vpop.permute.xlu0 %5167
    %5169 = vrot.lane.b32.xlu0 %v4472, 96
    %v5170 = vpop.permute.xlu0 %5169
    %5171 = vrot.lane.b32.xlu0 %v4473, 96
    %v5172 = vpop.permute.xlu0 %5171
    %5173 = vrot.lane.b32.xlu0 %v4474, 96
    %v5174 = vpop.permute.xlu0 %5173
    %5175 = vrot.lane.b32.xlu0 %v4475, 96
    %v5176 = vpop.permute.xlu0 %5175
    %5177 = vrot.lane.b32.xlu0 %v4476, 96
    %v5178 = vpop.permute.xlu0 %5177
    %5179 = vrot.lane.b32.xlu0 %v4477, 96
    %v5180 = vpop.permute.xlu0 %5179
    %5181 = vrot.lane.b32.xlu0 %v4478, 96
    %v5182 = vpop.permute.xlu0 %5181
    %5183 = vrot.lane.b32.xlu0 %v4479, 96
    %v5184 = vpop.permute.xlu0 %5183
    %5185 = vrot.lane.b32.xlu0 %v4480, 96
    %v5186 = vpop.permute.xlu0 %5185
    %5187 = vrot.lane.b32.xlu0 %v4481, 96
    %v5188 = vpop.permute.xlu0 %5187
    %5189 = vrot.lane.b32.xlu0 %v4482, 96
    %v5190 = vpop.permute.xlu0 %5189
    %5191 = vrot.lane.b32.xlu0 %v4483, 96
    %v5192 = vpop.permute.xlu0 %5191
    %5193 = vrot.lane.b32.xlu0 %v4484, 96
    %v5194 = vpop.permute.xlu0 %5193
    %5195 = vrot.lane.b32.xlu0 %v4485, 96
    %v5196 = vpop.permute.xlu0 %5195
    %5197 = vrot.lane.b32.xlu0 %v4486, 96
    %v5198 = vpop.permute.xlu0 %5197
    %5199 = vrot.lane.b32.xlu0 %v4487, 96
    %v5200 = vpop.permute.xlu0 %5199
    %5201 = vrot.lane.b32.xlu0 %v4488, 96
    %v5202 = vpop.permute.xlu0 %5201
    %5203 = vrot.lane.b32.xlu0 %v4489, 96
    %v5204 = vpop.permute.xlu0 %5203
    %5205 = vrot.lane.b32.xlu0 %v4490, 96
    %v5206 = vpop.permute.xlu0 %5205
    %5207 = vrot.lane.b32.xlu0 %v4491, 96
    %v5208 = vpop.permute.xlu0 %5207
    %5209 = vrot.lane.b32.xlu0 %v4492, 96
    %v5210 = vpop.permute.xlu0 %5209
    %5211 = vrot.lane.b32.xlu0 %v4493, 96
    %v5212 = vpop.permute.xlu0 %5211
    %5213 = vrot.lane.b32.xlu0 %v4494, 96
    %v5214 = vpop.permute.xlu0 %5213
    %5215 = vrot.lane.b32.xlu0 %v4495, 96
    %v5216 = vpop.permute.xlu0 %5215
    %5217 = vrot.lane.b32.xlu0 %v4496, 96
    %v5218 = vpop.permute.xlu0 %5217
    %5219 = vrot.lane.b32.xlu0 %v4497, 96
    %v5220 = vpop.permute.xlu0 %5219
    %5221 = vrot.lane.b32.xlu0 %v4498, 96
    %v5222 = vpop.permute.xlu0 %5221
    %5223 = vrot.lane.b32.xlu0 %v4499, 96
    %v5224 = vpop.permute.xlu0 %5223
    %5225 = vrot.lane.b32.xlu0 %v4500, 96
    %v5226 = vpop.permute.xlu0 %5225
    %5227 = vrot.lane.b32.xlu0 %v4501, 96
    %v5228 = vpop.permute.xlu0 %5227
    %5229 = vrot.lane.b32.xlu0 %v4502, 96
    %v5230 = vpop.permute.xlu0 %5229
    %5231 = vrot.lane.b32.xlu0 %v4503, 96
    %v5232 = vpop.permute.xlu0 %5231
    %5233 = vrot.lane.b32.xlu0 %v4504, 96
    %v5234 = vpop.permute.xlu0 %5233
    %5235 = vrot.lane.b32.xlu0 %v4505, 96
    %v5236 = vpop.permute.xlu0 %5235
    %5237 = vrot.lane.b32.xlu0 %v4506, 96
    %v5238 = vpop.permute.xlu0 %5237
    %5239 = vrot.lane.b32.xlu0 %v4507, 96
    %v5240 = vpop.permute.xlu0 %5239
    %5241 = vrot.lane.b32.xlu0 %v4508, 96
    %v5242 = vpop.permute.xlu0 %5241
    %5243 = vrot.lane.b32.xlu0 %v4509, 96
    %v5244 = vpop.permute.xlu0 %5243
    %5245 = vrot.lane.b32.xlu0 %v4510, 96
    %v5246 = vpop.permute.xlu0 %5245
    %5247 = vrot.lane.b32.xlu0 %v4511, 96
    %v5248 = vpop.permute.xlu0 %5247
    %5249 = vrot.lane.b32.xlu0 %v4512, 96
    %v5250 = vpop.permute.xlu0 %5249
    %5251 = vrot.lane.b32.xlu0 %v4513, 96
    %v5252 = vpop.permute.xlu0 %5251
    %5253 = vrot.lane.b32.xlu0 %v4514, 96
    %v5254 = vpop.permute.xlu0 %5253
    %5255 = vrot.lane.b32.xlu0 %v4515, 96
    %v5256 = vpop.permute.xlu0 %5255
    %5257 = vrot.lane.b32.xlu0 %v4516, 96
    %v5258 = vpop.permute.xlu0 %5257
    %5259 = vrot.lane.b32.xlu0 %v4517, 96
    %v5260 = vpop.permute.xlu0 %5259
    %5261 = vrot.lane.b32.xlu0 %v4518, 96
    %v5262 = vpop.permute.xlu0 %5261
    %5263 = vrot.lane.b32.xlu0 %v4519, 96
    %v5264 = vpop.permute.xlu0 %5263
    %5265 = vrot.lane.b32.xlu0 %v4520, 96
    %v5266 = vpop.permute.xlu0 %5265
    %5267 = vrot.lane.b32.xlu0 %v4521, 96
    %v5268 = vpop.permute.xlu0 %5267
    %5269 = vrot.lane.b32.xlu0 %v4522, 96
    %v5270 = vpop.permute.xlu0 %5269
    %5271 = vrot.lane.b32.xlu0 %v4523, 96
    %v5272 = vpop.permute.xlu0 %5271
    %5273 = vrot.lane.b32.xlu0 %v4524, 96
    %v5274 = vpop.permute.xlu0 %5273
    %5275 = vrot.lane.b32.xlu0 %v4525, 96
    %v5276 = vpop.permute.xlu0 %5275
    %5277 = vrot.lane.b32.xlu0 %v4526, 96
    %v5278 = vpop.permute.xlu0 %5277
    %5279 = vrot.lane.b32.xlu0 %v4527, 96
    %v5280 = vpop.permute.xlu0 %5279
    %5281 = vrot.lane.b32.xlu0 %v4528, 96
    %v5282 = vpop.permute.xlu0 %5281
    %5283 = vrot.lane.b32.xlu0 %v4529, 96
    %v5284 = vpop.permute.xlu0 %5283
    %5285 = vrot.lane.b32.xlu0 %v4530, 96
    %v5286 = vpop.permute.xlu0 %5285
    %5287 = vrot.lane.b32.xlu0 %v4531, 96
    %v5288 = vpop.permute.xlu0 %5287
    %5289 = vrot.lane.b32.xlu0 %v4532, 96
    %v5290 = vpop.permute.xlu0 %5289
    %5291 = vrot.lane.b32.xlu0 %v4533, 96
    %v5292 = vpop.permute.xlu0 %5291
    %5293 = vrot.lane.b32.xlu0 %v4534, 96
    %v5294 = vpop.permute.xlu0 %5293
    %5295 = vrot.lane.b32.xlu0 %v4535, 96
    %v5296 = vpop.permute.xlu0 %5295
    %5297 = vrot.lane.b32.xlu0 %v4536, 96
    %v5298 = vpop.permute.xlu0 %5297
    %5299 = vrot.lane.b32.xlu0 %v4537, 96
    %v5300 = vpop.permute.xlu0 %5299
    %5301 = vrot.lane.b32.xlu0 %v4538, 96
    %v5302 = vpop.permute.xlu0 %5301
    %5303 = vrot.lane.b32.xlu0 %v4539, 96
    %v5304 = vpop.permute.xlu0 %5303
    %5305 = vrot.lane.b32.xlu0 %v4540, 96
    %v5306 = vpop.permute.xlu0 %5305
    %5307 = vrot.lane.b32.xlu0 %v4541, 96
    %v5308 = vpop.permute.xlu0 %5307
    %5309 = vrot.lane.b32.xlu0 %v4542, 96
    %v5310 = vpop.permute.xlu0 %5309
    %vm5567 = vcmask 130048
    %v5568 = vsel %vm5567, %v4800, 0.0
    %5569 = vadd.xlane.f32.xlu0 %v5568
    %v5570 = vpop.xlane.xlu0 %5569
    %v5571 = vsel %vm5567, %v4802, 0.0
    %5572 = vadd.xlane.f32.xlu0 %v5571
    %v5573 = vpop.xlane.xlu0 %5572
    %v5574 = vsel %vm5567, %v4804, 0.0
    %5575 = vadd.xlane.f32.xlu0 %v5574
    %v5576 = vpop.xlane.xlu0 %5575
    %v5577 = vsel %vm5567, %v4806, 0.0
    %5578 = vadd.xlane.f32.xlu0 %v5577
    %v5579 = vpop.xlane.xlu0 %5578
    %v5580 = vsel %vm5567, %v4808, 0.0
    %5581 = vadd.xlane.f32.xlu0 %v5580
    %v5582 = vpop.xlane.xlu0 %5581
    %v5583 = vsel %vm5567, %v4810, 0.0
    %5584 = vadd.xlane.f32.xlu0 %v5583
    %v5585 = vpop.xlane.xlu0 %5584
    %v5586 = vsel %vm5567, %v4812, 0.0
    %5587 = vadd.xlane.f32.xlu0 %v5586
    %v5588 = vpop.xlane.xlu0 %5587
    %v5589 = vsel %vm5567, %v4814, 0.0
    %5590 = vadd.xlane.f32.xlu0 %v5589
    %v5591 = vpop.xlane.xlu0 %5590
    %v5592 = vsel %vm5567, %v4816, 0.0
    %5593 = vadd.xlane.f32.xlu0 %v5592
    %v5594 = vpop.xlane.xlu0 %5593
    %v5595 = vsel %vm5567, %v4818, 0.0
    %5596 = vadd.xlane.f32.xlu0 %v5595
    %v5597 = vpop.xlane.xlu0 %5596
    %v5598 = vsel %vm5567, %v4820, 0.0
    %5599 = vadd.xlane.f32.xlu0 %v5598
    %v5600 = vpop.xlane.xlu0 %5599
    %v5601 = vsel %vm5567, %v4822, 0.0
    %5602 = vadd.xlane.f32.xlu0 %v5601
    %v5603 = vpop.xlane.xlu0 %5602
    %v5604 = vsel %vm5567, %v4824, 0.0
    %5605 = vadd.xlane.f32.xlu0 %v5604
    %v5606 = vpop.xlane.xlu0 %5605
    %v5607 = vsel %vm5567, %v4826, 0.0
    %5608 = vadd.xlane.f32.xlu0 %v5607
    %v5609 = vpop.xlane.xlu0 %5608
    %v5610 = vsel %vm5567, %v4828, 0.0
    %5611 = vadd.xlane.f32.xlu0 %v5610
    %v5612 = vpop.xlane.xlu0 %5611
    %v5613 = vsel %vm5567, %v4830, 0.0
    %5614 = vadd.xlane.f32.xlu0 %v5613
    %v5615 = vpop.xlane.xlu0 %5614
    %v5616 = vsel %vm5567, %v4832, 0.0
    %5617 = vadd.xlane.f32.xlu0 %v5616
    %v5618 = vpop.xlane.xlu0 %5617
    %v5619 = vsel %vm5567, %v4834, 0.0
    %5620 = vadd.xlane.f32.xlu0 %v5619
    %v5621 = vpop.xlane.xlu0 %5620
    %v5622 = vsel %vm5567, %v4836, 0.0
    %5623 = vadd.xlane.f32.xlu0 %v5622
    %v5624 = vpop.xlane.xlu0 %5623
    %v5625 = vsel %vm5567, %v4838, 0.0
    %5626 = vadd.xlane.f32.xlu0 %v5625
    %v5627 = vpop.xlane.xlu0 %5626
    %v5628 = vsel %vm5567, %v4840, 0.0
    %5629 = vadd.xlane.f32.xlu0 %v5628
    %v5630 = vpop.xlane.xlu0 %5629
    %v5631 = vsel %vm5567, %v4842, 0.0
    %5632 = vadd.xlane.f32.xlu0 %v5631
    %v5633 = vpop.xlane.xlu0 %5632
    %v5634 = vsel %vm5567, %v4844, 0.0
    %5635 = vadd.xlane.f32.xlu0 %v5634
    %v5636 = vpop.xlane.xlu0 %5635
    %v5637 = vsel %vm5567, %v4846, 0.0
    %5638 = vadd.xlane.f32.xlu0 %v5637
    %v5639 = vpop.xlane.xlu0 %5638
    %v5640 = vsel %vm5567, %v4848, 0.0
    %5641 = vadd.xlane.f32.xlu0 %v5640
    %v5642 = vpop.xlane.xlu0 %5641
    %v5643 = vsel %vm5567, %v4850, 0.0
    %5644 = vadd.xlane.f32.xlu0 %v5643
    %v5645 = vpop.xlane.xlu0 %5644
    %v5646 = vsel %vm5567, %v4852, 0.0
    %5647 = vadd.xlane.f32.xlu0 %v5646
    %v5648 = vpop.xlane.xlu0 %5647
    %v5649 = vsel %vm5567, %v4854, 0.0
    %5650 = vadd.xlane.f32.xlu0 %v5649
    %v5651 = vpop.xlane.xlu0 %5650
    %v5652 = vsel %vm5567, %v4856, 0.0
    %5653 = vadd.xlane.f32.xlu0 %v5652
    %v5654 = vpop.xlane.xlu0 %5653
    %v5655 = vsel %vm5567, %v4858, 0.0
    %5656 = vadd.xlane.f32.xlu0 %v5655
    %v5657 = vpop.xlane.xlu0 %5656
    %v5658 = vsel %vm5567, %v4860, 0.0
    %5659 = vadd.xlane.f32.xlu0 %v5658
    %v5660 = vpop.xlane.xlu0 %5659
    %v5661 = vsel %vm5567, %v4862, 0.0
    %5662 = vadd.xlane.f32.xlu0 %v5661
    %v5663 = vpop.xlane.xlu0 %5662
    %v5664 = vsel %vm5567, %v4864, 0.0
    %5665 = vadd.xlane.f32.xlu0 %v5664
    %v5666 = vpop.xlane.xlu0 %5665
    %v5667 = vsel %vm5567, %v4866, 0.0
    %5668 = vadd.xlane.f32.xlu0 %v5667
    %v5669 = vpop.xlane.xlu0 %5668
    %v5670 = vsel %vm5567, %v4868, 0.0
    %5671 = vadd.xlane.f32.xlu0 %v5670
    %v5672 = vpop.xlane.xlu0 %5671
    %v5673 = vsel %vm5567, %v4870, 0.0
    %5674 = vadd.xlane.f32.xlu0 %v5673
    %v5675 = vpop.xlane.xlu0 %5674
    %v5676 = vsel %vm5567, %v4872, 0.0
    %5677 = vadd.xlane.f32.xlu0 %v5676
    %v5678 = vpop.xlane.xlu0 %5677
    %v5679 = vsel %vm5567, %v4874, 0.0
    %5680 = vadd.xlane.f32.xlu0 %v5679
    %v5681 = vpop.xlane.xlu0 %5680
    %v5682 = vsel %vm5567, %v4876, 0.0
    %5683 = vadd.xlane.f32.xlu0 %v5682
    %v5684 = vpop.xlane.xlu0 %5683
    %v5685 = vsel %vm5567, %v4878, 0.0
    %5686 = vadd.xlane.f32.xlu0 %v5685
    %v5687 = vpop.xlane.xlu0 %5686
    %v5688 = vsel %vm5567, %v4880, 0.0
    %5689 = vadd.xlane.f32.xlu0 %v5688
    %v5690 = vpop.xlane.xlu0 %5689
    %v5691 = vsel %vm5567, %v4882, 0.0
    %5692 = vadd.xlane.f32.xlu0 %v5691
    %v5693 = vpop.xlane.xlu0 %5692
    %v5694 = vsel %vm5567, %v4884, 0.0
    %5695 = vadd.xlane.f32.xlu0 %v5694
    %v5696 = vpop.xlane.xlu0 %5695
    %v5697 = vsel %vm5567, %v4886, 0.0
    %5698 = vadd.xlane.f32.xlu0 %v5697
    %v5699 = vpop.xlane.xlu0 %5698
    %v5700 = vsel %vm5567, %v4888, 0.0
    %5701 = vadd.xlane.f32.xlu0 %v5700
    %v5702 = vpop.xlane.xlu0 %5701
    %v5703 = vsel %vm5567, %v4890, 0.0
    %5704 = vadd.xlane.f32.xlu0 %v5703
    %v5705 = vpop.xlane.xlu0 %5704
    %v5706 = vsel %vm5567, %v4892, 0.0
    %5707 = vadd.xlane.f32.xlu0 %v5706
    %v5708 = vpop.xlane.xlu0 %5707
    %v5709 = vsel %vm5567, %v4894, 0.0
    %5710 = vadd.xlane.f32.xlu0 %v5709
    %v5711 = vpop.xlane.xlu0 %5710
    %v5712 = vsel %vm5567, %v4896, 0.0
    %5713 = vadd.xlane.f32.xlu0 %v5712
    %v5714 = vpop.xlane.xlu0 %5713
    %v5715 = vsel %vm5567, %v4898, 0.0
    %5716 = vadd.xlane.f32.xlu0 %v5715
    %v5717 = vpop.xlane.xlu0 %5716
    %v5718 = vsel %vm5567, %v4900, 0.0
    %5719 = vadd.xlane.f32.xlu0 %v5718
    %v5720 = vpop.xlane.xlu0 %5719
    %v5721 = vsel %vm5567, %v4902, 0.0
    %5722 = vadd.xlane.f32.xlu0 %v5721
    %v5723 = vpop.xlane.xlu0 %5722
    %v5724 = vsel %vm5567, %v4904, 0.0
    %5725 = vadd.xlane.f32.xlu0 %v5724
    %v5726 = vpop.xlane.xlu0 %5725
    %v5727 = vsel %vm5567, %v4906, 0.0
    %5728 = vadd.xlane.f32.xlu0 %v5727
    %v5729 = vpop.xlane.xlu0 %5728
    %v5730 = vsel %vm5567, %v4908, 0.0
    %5731 = vadd.xlane.f32.xlu0 %v5730
    %v5732 = vpop.xlane.xlu0 %5731
    %v5733 = vsel %vm5567, %v4910, 0.0
    %5734 = vadd.xlane.f32.xlu0 %v5733
    %v5735 = vpop.xlane.xlu0 %5734
    %v5736 = vsel %vm5567, %v4912, 0.0
    %5737 = vadd.xlane.f32.xlu0 %v5736
    %v5738 = vpop.xlane.xlu0 %5737
    %v5739 = vsel %vm5567, %v4914, 0.0
    %5740 = vadd.xlane.f32.xlu0 %v5739
    %v5741 = vpop.xlane.xlu0 %5740
    %v5742 = vsel %vm5567, %v4916, 0.0
    %5743 = vadd.xlane.f32.xlu0 %v5742
    %v5744 = vpop.xlane.xlu0 %5743
    %v5745 = vsel %vm5567, %v4918, 0.0
    %5746 = vadd.xlane.f32.xlu0 %v5745
    %v5747 = vpop.xlane.xlu0 %5746
    %v5748 = vsel %vm5567, %v4920, 0.0
    %5749 = vadd.xlane.f32.xlu0 %v5748
    %v5750 = vpop.xlane.xlu0 %5749
    %v5751 = vsel %vm5567, %v4922, 0.0
    %5752 = vadd.xlane.f32.xlu0 %v5751
    %v5753 = vpop.xlane.xlu0 %5752
    %v5754 = vsel %vm5567, %v4924, 0.0
    %5755 = vadd.xlane.f32.xlu0 %v5754
    %v5756 = vpop.xlane.xlu0 %5755
    %v5757 = vsel %vm5567, %v4926, 0.0
    %5758 = vadd.xlane.f32.xlu0 %v5757
    %v5759 = vpop.xlane.xlu0 %5758
    %v5760 = vsel %vm5567, %v4928, 0.0
    %5761 = vadd.xlane.f32.xlu0 %v5760
    %v5762 = vpop.xlane.xlu0 %5761
    %v5763 = vsel %vm5567, %v4930, 0.0
    %5764 = vadd.xlane.f32.xlu0 %v5763
    %v5765 = vpop.xlane.xlu0 %5764
    %v5766 = vsel %vm5567, %v4932, 0.0
    %5767 = vadd.xlane.f32.xlu0 %v5766
    %v5768 = vpop.xlane.xlu0 %5767
    %v5769 = vsel %vm5567, %v4934, 0.0
    %5770 = vadd.xlane.f32.xlu0 %v5769
    %v5771 = vpop.xlane.xlu0 %5770
    %v5772 = vsel %vm5567, %v4936, 0.0
    %5773 = vadd.xlane.f32.xlu0 %v5772
    %v5774 = vpop.xlane.xlu0 %5773
    %v5775 = vsel %vm5567, %v4938, 0.0
    %5776 = vadd.xlane.f32.xlu0 %v5775
    %v5777 = vpop.xlane.xlu0 %5776
    %v5778 = vsel %vm5567, %v4940, 0.0
    %5779 = vadd.xlane.f32.xlu0 %v5778
    %v5780 = vpop.xlane.xlu0 %5779
    %v5781 = vsel %vm5567, %v4942, 0.0
    %5782 = vadd.xlane.f32.xlu0 %v5781
    %v5783 = vpop.xlane.xlu0 %5782
    %v5784 = vsel %vm5567, %v4944, 0.0
    %5785 = vadd.xlane.f32.xlu0 %v5784
    %v5786 = vpop.xlane.xlu0 %5785
    %v5787 = vsel %vm5567, %v4946, 0.0
    %5788 = vadd.xlane.f32.xlu0 %v5787
    %v5789 = vpop.xlane.xlu0 %5788
    %v5790 = vsel %vm5567, %v4948, 0.0
    %5791 = vadd.xlane.f32.xlu0 %v5790
    %v5792 = vpop.xlane.xlu0 %5791
    %v5793 = vsel %vm5567, %v4950, 0.0
    %5794 = vadd.xlane.f32.xlu0 %v5793
    %v5795 = vpop.xlane.xlu0 %5794
    %v5796 = vsel %vm5567, %v4952, 0.0
    %5797 = vadd.xlane.f32.xlu0 %v5796
    %v5798 = vpop.xlane.xlu0 %5797
    %v5799 = vsel %vm5567, %v4954, 0.0
    %5800 = vadd.xlane.f32.xlu0 %v5799
    %v5801 = vpop.xlane.xlu0 %5800
    %v5802 = vsel %vm5567, %v4956, 0.0
    %5803 = vadd.xlane.f32.xlu0 %v5802
    %v5804 = vpop.xlane.xlu0 %5803
    %v5805 = vsel %vm5567, %v4958, 0.0
    %5806 = vadd.xlane.f32.xlu0 %v5805
    %v5807 = vpop.xlane.xlu0 %5806
    %v5808 = vsel %vm5567, %v4960, 0.0
    %5809 = vadd.xlane.f32.xlu0 %v5808
    %v5810 = vpop.xlane.xlu0 %5809
    %v5811 = vsel %vm5567, %v4962, 0.0
    %5812 = vadd.xlane.f32.xlu0 %v5811
    %v5813 = vpop.xlane.xlu0 %5812
    %v5814 = vsel %vm5567, %v4964, 0.0
    %5815 = vadd.xlane.f32.xlu0 %v5814
    %v5816 = vpop.xlane.xlu0 %5815
    %v5817 = vsel %vm5567, %v4966, 0.0
    %5818 = vadd.xlane.f32.xlu0 %v5817
    %v5819 = vpop.xlane.xlu0 %5818
    %v5820 = vsel %vm5567, %v4968, 0.0
    %5821 = vadd.xlane.f32.xlu0 %v5820
    %v5822 = vpop.xlane.xlu0 %5821
    %v5823 = vsel %vm5567, %v4970, 0.0
    %5824 = vadd.xlane.f32.xlu0 %v5823
    %v5825 = vpop.xlane.xlu0 %5824
    %v5826 = vsel %vm5567, %v4972, 0.0
    %5827 = vadd.xlane.f32.xlu0 %v5826
    %v5828 = vpop.xlane.xlu0 %5827
    %v5829 = vsel %vm5567, %v4974, 0.0
    %5830 = vadd.xlane.f32.xlu0 %v5829
    %v5831 = vpop.xlane.xlu0 %5830
    %v5832 = vsel %vm5567, %v4976, 0.0
    %5833 = vadd.xlane.f32.xlu0 %v5832
    %v5834 = vpop.xlane.xlu0 %5833
    %v5835 = vsel %vm5567, %v4978, 0.0
    %5836 = vadd.xlane.f32.xlu0 %v5835
    %v5837 = vpop.xlane.xlu0 %5836
    %v5838 = vsel %vm5567, %v4980, 0.0
    %5839 = vadd.xlane.f32.xlu0 %v5838
    %v5840 = vpop.xlane.xlu0 %5839
    %v5841 = vsel %vm5567, %v4982, 0.0
    %5842 = vadd.xlane.f32.xlu0 %v5841
    %v5843 = vpop.xlane.xlu0 %5842
    %v5844 = vsel %vm5567, %v4984, 0.0
    %5845 = vadd.xlane.f32.xlu0 %v5844
    %v5846 = vpop.xlane.xlu0 %5845
    %v5847 = vsel %vm5567, %v4986, 0.0
    %5848 = vadd.xlane.f32.xlu0 %v5847
    %v5849 = vpop.xlane.xlu0 %5848
    %v5850 = vsel %vm5567, %v4988, 0.0
    %5851 = vadd.xlane.f32.xlu0 %v5850
    %v5852 = vpop.xlane.xlu0 %5851
    %v5853 = vsel %vm5567, %v4990, 0.0
    %5854 = vadd.xlane.f32.xlu0 %v5853
    %v5855 = vpop.xlane.xlu0 %5854
    %v5856 = vsel %vm5567, %v4992, 0.0
    %5857 = vadd.xlane.f32.xlu0 %v5856
    %v5858 = vpop.xlane.xlu0 %5857
    %v5859 = vsel %vm5567, %v4994, 0.0
    %5860 = vadd.xlane.f32.xlu0 %v5859
    %v5861 = vpop.xlane.xlu0 %5860
    %v5862 = vsel %vm5567, %v4996, 0.0
    %5863 = vadd.xlane.f32.xlu0 %v5862
    %v5864 = vpop.xlane.xlu0 %5863
    %v5865 = vsel %vm5567, %v4998, 0.0
    %5866 = vadd.xlane.f32.xlu0 %v5865
    %v5867 = vpop.xlane.xlu0 %5866
    %v5868 = vsel %vm5567, %v5000, 0.0
    %5869 = vadd.xlane.f32.xlu0 %v5868
    %v5870 = vpop.xlane.xlu0 %5869
    %v5871 = vsel %vm5567, %v5002, 0.0
    %5872 = vadd.xlane.f32.xlu0 %v5871
    %v5873 = vpop.xlane.xlu0 %5872
    %v5874 = vsel %vm5567, %v5004, 0.0
    %5875 = vadd.xlane.f32.xlu0 %v5874
    %v5876 = vpop.xlane.xlu0 %5875
    %v5877 = vsel %vm5567, %v5006, 0.0
    %5878 = vadd.xlane.f32.xlu0 %v5877
    %v5879 = vpop.xlane.xlu0 %5878
    %v5880 = vsel %vm5567, %v5008, 0.0
    %5881 = vadd.xlane.f32.xlu0 %v5880
    %v5882 = vpop.xlane.xlu0 %5881
    %v5883 = vsel %vm5567, %v5010, 0.0
    %5884 = vadd.xlane.f32.xlu0 %v5883
    %v5885 = vpop.xlane.xlu0 %5884
    %v5886 = vsel %vm5567, %v5012, 0.0
    %5887 = vadd.xlane.f32.xlu0 %v5886
    %v5888 = vpop.xlane.xlu0 %5887
    %v5889 = vsel %vm5567, %v5014, 0.0
    %5890 = vadd.xlane.f32.xlu0 %v5889
    %v5891 = vpop.xlane.xlu0 %5890
    %v5892 = vsel %vm5567, %v5016, 0.0
    %5893 = vadd.xlane.f32.xlu0 %v5892
    %v5894 = vpop.xlane.xlu0 %5893
    %v5895 = vsel %vm5567, %v5018, 0.0
    %5896 = vadd.xlane.f32.xlu0 %v5895
    %v5897 = vpop.xlane.xlu0 %5896
    %v5898 = vsel %vm5567, %v5020, 0.0
    %5899 = vadd.xlane.f32.xlu0 %v5898
    %v5900 = vpop.xlane.xlu0 %5899
    %v5901 = vsel %vm5567, %v5022, 0.0
    %5902 = vadd.xlane.f32.xlu0 %v5901
    %v5903 = vpop.xlane.xlu0 %5902
    %v5904 = vsel %vm5567, %v5024, 0.0
    %5905 = vadd.xlane.f32.xlu0 %v5904
    %v5906 = vpop.xlane.xlu0 %5905
    %v5907 = vsel %vm5567, %v5026, 0.0
    %5908 = vadd.xlane.f32.xlu0 %v5907
    %v5909 = vpop.xlane.xlu0 %5908
    %v5910 = vsel %vm5567, %v5028, 0.0
    %5911 = vadd.xlane.f32.xlu0 %v5910
    %v5912 = vpop.xlane.xlu0 %5911
    %v5913 = vsel %vm5567, %v5030, 0.0
    %5914 = vadd.xlane.f32.xlu0 %v5913
    %v5915 = vpop.xlane.xlu0 %5914
    %v5916 = vsel %vm5567, %v5032, 0.0
    %5917 = vadd.xlane.f32.xlu0 %v5916
    %v5918 = vpop.xlane.xlu0 %5917
    %v5919 = vsel %vm5567, %v5034, 0.0
    %5920 = vadd.xlane.f32.xlu0 %v5919
    %v5921 = vpop.xlane.xlu0 %5920
    %v5922 = vsel %vm5567, %v5036, 0.0
    %5923 = vadd.xlane.f32.xlu0 %v5922
    %v5924 = vpop.xlane.xlu0 %5923
    %v5925 = vsel %vm5567, %v5038, 0.0
    %5926 = vadd.xlane.f32.xlu0 %v5925
    %v5927 = vpop.xlane.xlu0 %5926
    %v5928 = vsel %vm5567, %v5040, 0.0
    %5929 = vadd.xlane.f32.xlu0 %v5928
    %v5930 = vpop.xlane.xlu0 %5929
    %v5931 = vsel %vm5567, %v5042, 0.0
    %5932 = vadd.xlane.f32.xlu0 %v5931
    %v5933 = vpop.xlane.xlu0 %5932
    %v5934 = vsel %vm5567, %v5044, 0.0
    %5935 = vadd.xlane.f32.xlu0 %v5934
    %v5936 = vpop.xlane.xlu0 %5935
    %v5937 = vsel %vm5567, %v5046, 0.0
    %5938 = vadd.xlane.f32.xlu0 %v5937
    %v5939 = vpop.xlane.xlu0 %5938
    %v5940 = vsel %vm5567, %v5048, 0.0
    %5941 = vadd.xlane.f32.xlu0 %v5940
    %v5942 = vpop.xlane.xlu0 %5941
    %v5943 = vsel %vm5567, %v5050, 0.0
    %5944 = vadd.xlane.f32.xlu0 %v5943
    %v5945 = vpop.xlane.xlu0 %5944
    %v5946 = vsel %vm5567, %v5052, 0.0
    %5947 = vadd.xlane.f32.xlu0 %v5946
    %v5948 = vpop.xlane.xlu0 %5947
    %v5949 = vsel %vm5567, %v5054, 0.0
    %5950 = vadd.xlane.f32.xlu0 %v5949
    %v5951 = vpop.xlane.xlu0 %5950
    %v5952 = vsel %vm5567, %v5056, 0.0
    %5953 = vadd.xlane.f32.xlu0 %v5952
    %v5954 = vpop.xlane.xlu0 %5953
    %v5955 = vsel %vm5567, %v5058, 0.0
    %5956 = vadd.xlane.f32.xlu0 %v5955
    %v5957 = vpop.xlane.xlu0 %5956
    %v5958 = vsel %vm5567, %v5060, 0.0
    %5959 = vadd.xlane.f32.xlu0 %v5958
    %v5960 = vpop.xlane.xlu0 %5959
    %v5961 = vsel %vm5567, %v5062, 0.0
    %5962 = vadd.xlane.f32.xlu0 %v5961
    %v5963 = vpop.xlane.xlu0 %5962
    %v5964 = vsel %vm5567, %v5064, 0.0
    %5965 = vadd.xlane.f32.xlu0 %v5964
    %v5966 = vpop.xlane.xlu0 %5965
    %v5967 = vsel %vm5567, %v5066, 0.0
    %5968 = vadd.xlane.f32.xlu0 %v5967
    %v5969 = vpop.xlane.xlu0 %5968
    %v5970 = vsel %vm5567, %v5068, 0.0
    %5971 = vadd.xlane.f32.xlu0 %v5970
    %v5972 = vpop.xlane.xlu0 %5971
    %v5973 = vsel %vm5567, %v5070, 0.0
    %5974 = vadd.xlane.f32.xlu0 %v5973
    %v5975 = vpop.xlane.xlu0 %5974
    %v5976 = vsel %vm5567, %v5072, 0.0
    %5977 = vadd.xlane.f32.xlu0 %v5976
    %v5978 = vpop.xlane.xlu0 %5977
    %v5979 = vsel %vm5567, %v5074, 0.0
    %5980 = vadd.xlane.f32.xlu0 %v5979
    %v5981 = vpop.xlane.xlu0 %5980
    %v5982 = vsel %vm5567, %v5076, 0.0
    %5983 = vadd.xlane.f32.xlu0 %v5982
    %v5984 = vpop.xlane.xlu0 %5983
    %v5985 = vsel %vm5567, %v5078, 0.0
    %5986 = vadd.xlane.f32.xlu0 %v5985
    %v5987 = vpop.xlane.xlu0 %5986
    %v5988 = vsel %vm5567, %v5080, 0.0
    %5989 = vadd.xlane.f32.xlu0 %v5988
    %v5990 = vpop.xlane.xlu0 %5989
    %v5991 = vsel %vm5567, %v5082, 0.0
    %5992 = vadd.xlane.f32.xlu0 %v5991
    %v5993 = vpop.xlane.xlu0 %5992
    %v5994 = vsel %vm5567, %v5084, 0.0
    %5995 = vadd.xlane.f32.xlu0 %v5994
    %v5996 = vpop.xlane.xlu0 %5995
    %v5997 = vsel %vm5567, %v5086, 0.0
    %5998 = vadd.xlane.f32.xlu0 %v5997
    %v5999 = vpop.xlane.xlu0 %5998
    %v6000 = vsel %vm5567, %v5088, 0.0
    %6001 = vadd.xlane.f32.xlu0 %v6000
    %v6002 = vpop.xlane.xlu0 %6001
    %v6003 = vsel %vm5567, %v5090, 0.0
    %6004 = vadd.xlane.f32.xlu0 %v6003
    %v6005 = vpop.xlane.xlu0 %6004
    %v6006 = vsel %vm5567, %v5092, 0.0
    %6007 = vadd.xlane.f32.xlu0 %v6006
    %v6008 = vpop.xlane.xlu0 %6007
    %v6009 = vsel %vm5567, %v5094, 0.0
    %6010 = vadd.xlane.f32.xlu0 %v6009
    %v6011 = vpop.xlane.xlu0 %6010
    %v6012 = vsel %vm5567, %v5096, 0.0
    %6013 = vadd.xlane.f32.xlu0 %v6012
    %v6014 = vpop.xlane.xlu0 %6013
    %v6015 = vsel %vm5567, %v5098, 0.0
    %6016 = vadd.xlane.f32.xlu0 %v6015
    %v6017 = vpop.xlane.xlu0 %6016
    %v6018 = vsel %vm5567, %v5100, 0.0
    %6019 = vadd.xlane.f32.xlu0 %v6018
    %v6020 = vpop.xlane.xlu0 %6019
    %v6021 = vsel %vm5567, %v5102, 0.0
    %6022 = vadd.xlane.f32.xlu0 %v6021
    %v6023 = vpop.xlane.xlu0 %6022
    %v6024 = vsel %vm5567, %v5104, 0.0
    %6025 = vadd.xlane.f32.xlu0 %v6024
    %v6026 = vpop.xlane.xlu0 %6025
    %v6027 = vsel %vm5567, %v5106, 0.0
    %6028 = vadd.xlane.f32.xlu0 %v6027
    %v6029 = vpop.xlane.xlu0 %6028
    %v6030 = vsel %vm5567, %v5108, 0.0
    %6031 = vadd.xlane.f32.xlu0 %v6030
    %v6032 = vpop.xlane.xlu0 %6031
    %v6033 = vsel %vm5567, %v5110, 0.0
    %6034 = vadd.xlane.f32.xlu0 %v6033
    %v6035 = vpop.xlane.xlu0 %6034
    %v6036 = vsel %vm5567, %v5112, 0.0
    %6037 = vadd.xlane.f32.xlu0 %v6036
    %v6038 = vpop.xlane.xlu0 %6037
    %v6039 = vsel %vm5567, %v5114, 0.0
    %6040 = vadd.xlane.f32.xlu0 %v6039
    %v6041 = vpop.xlane.xlu0 %6040
    %v6042 = vsel %vm5567, %v5116, 0.0
    %6043 = vadd.xlane.f32.xlu0 %v6042
    %v6044 = vpop.xlane.xlu0 %6043
    %v6045 = vsel %vm5567, %v5118, 0.0
    %6046 = vadd.xlane.f32.xlu0 %v6045
    %v6047 = vpop.xlane.xlu0 %6046
    %v6048 = vsel %vm5567, %v5120, 0.0
    %6049 = vadd.xlane.f32.xlu0 %v6048
    %v6050 = vpop.xlane.xlu0 %6049
    %v6051 = vsel %vm5567, %v5122, 0.0
    %6052 = vadd.xlane.f32.xlu0 %v6051
    %v6053 = vpop.xlane.xlu0 %6052
    %v6054 = vsel %vm5567, %v5124, 0.0
    %6055 = vadd.xlane.f32.xlu0 %v6054
    %v6056 = vpop.xlane.xlu0 %6055
    %v6057 = vsel %vm5567, %v5126, 0.0
    %6058 = vadd.xlane.f32.xlu0 %v6057
    %v6059 = vpop.xlane.xlu0 %6058
    %v6060 = vsel %vm5567, %v5128, 0.0
    %6061 = vadd.xlane.f32.xlu0 %v6060
    %v6062 = vpop.xlane.xlu0 %6061
    %v6063 = vsel %vm5567, %v5130, 0.0
    %6064 = vadd.xlane.f32.xlu0 %v6063
    %v6065 = vpop.xlane.xlu0 %6064
    %v6066 = vsel %vm5567, %v5132, 0.0
    %6067 = vadd.xlane.f32.xlu0 %v6066
    %v6068 = vpop.xlane.xlu0 %6067
    %v6069 = vsel %vm5567, %v5134, 0.0
    %6070 = vadd.xlane.f32.xlu0 %v6069
    %v6071 = vpop.xlane.xlu0 %6070
    %v6072 = vsel %vm5567, %v5136, 0.0
    %6073 = vadd.xlane.f32.xlu0 %v6072
    %v6074 = vpop.xlane.xlu0 %6073
    %v6075 = vsel %vm5567, %v5138, 0.0
    %6076 = vadd.xlane.f32.xlu0 %v6075
    %v6077 = vpop.xlane.xlu0 %6076
    %v6078 = vsel %vm5567, %v5140, 0.0
    %6079 = vadd.xlane.f32.xlu0 %v6078
    %v6080 = vpop.xlane.xlu0 %6079
    %v6081 = vsel %vm5567, %v5142, 0.0
    %6082 = vadd.xlane.f32.xlu0 %v6081
    %v6083 = vpop.xlane.xlu0 %6082
    %v6084 = vsel %vm5567, %v5144, 0.0
    %6085 = vadd.xlane.f32.xlu0 %v6084
    %v6086 = vpop.xlane.xlu0 %6085
    %v6087 = vsel %vm5567, %v5146, 0.0
    %6088 = vadd.xlane.f32.xlu0 %v6087
    %v6089 = vpop.xlane.xlu0 %6088
    %v6090 = vsel %vm5567, %v5148, 0.0
    %6091 = vadd.xlane.f32.xlu0 %v6090
    %v6092 = vpop.xlane.xlu0 %6091
    %v6093 = vsel %vm5567, %v5150, 0.0
    %6094 = vadd.xlane.f32.xlu0 %v6093
    %v6095 = vpop.xlane.xlu0 %6094
    %v6096 = vsel %vm5567, %v5152, 0.0
    %6097 = vadd.xlane.f32.xlu0 %v6096
    %v6098 = vpop.xlane.xlu0 %6097
    %v6099 = vsel %vm5567, %v5154, 0.0
    %6100 = vadd.xlane.f32.xlu0 %v6099
    %v6101 = vpop.xlane.xlu0 %6100
    %v6102 = vsel %vm5567, %v5156, 0.0
    %6103 = vadd.xlane.f32.xlu0 %v6102
    %v6104 = vpop.xlane.xlu0 %6103
    %v6105 = vsel %vm5567, %v5158, 0.0
    %6106 = vadd.xlane.f32.xlu0 %v6105
    %v6107 = vpop.xlane.xlu0 %6106
    %v6108 = vsel %vm5567, %v5160, 0.0
    %6109 = vadd.xlane.f32.xlu0 %v6108
    %v6110 = vpop.xlane.xlu0 %6109
    %v6111 = vsel %vm5567, %v5162, 0.0
    %6112 = vadd.xlane.f32.xlu0 %v6111
    %v6113 = vpop.xlane.xlu0 %6112
    %v6114 = vsel %vm5567, %v5164, 0.0
    %6115 = vadd.xlane.f32.xlu0 %v6114
    %v6116 = vpop.xlane.xlu0 %6115
    %v6117 = vsel %vm5567, %v5166, 0.0
    %6118 = vadd.xlane.f32.xlu0 %v6117
    %v6119 = vpop.xlane.xlu0 %6118
    %v6120 = vsel %vm5567, %v5168, 0.0
    %6121 = vadd.xlane.f32.xlu0 %v6120
    %v6122 = vpop.xlane.xlu0 %6121
    %v6123 = vsel %vm5567, %v5170, 0.0
    %6124 = vadd.xlane.f32.xlu0 %v6123
    %v6125 = vpop.xlane.xlu0 %6124
    %v6126 = vsel %vm5567, %v5172, 0.0
    %6127 = vadd.xlane.f32.xlu0 %v6126
    %v6128 = vpop.xlane.xlu0 %6127
    %v6129 = vsel %vm5567, %v5174, 0.0
    %6130 = vadd.xlane.f32.xlu0 %v6129
    %v6131 = vpop.xlane.xlu0 %6130
    %v6132 = vsel %vm5567, %v5176, 0.0
    %6133 = vadd.xlane.f32.xlu0 %v6132
    %v6134 = vpop.xlane.xlu0 %6133
    %v6135 = vsel %vm5567, %v5178, 0.0
    %6136 = vadd.xlane.f32.xlu0 %v6135
    %v6137 = vpop.xlane.xlu0 %6136
    %v6138 = vsel %vm5567, %v5180, 0.0
    %6139 = vadd.xlane.f32.xlu0 %v6138
    %v6140 = vpop.xlane.xlu0 %6139
    %v6141 = vsel %vm5567, %v5182, 0.0
    %6142 = vadd.xlane.f32.xlu0 %v6141
    %v6143 = vpop.xlane.xlu0 %6142
    %v6144 = vsel %vm5567, %v5184, 0.0
    %6145 = vadd.xlane.f32.xlu0 %v6144
    %v6146 = vpop.xlane.xlu0 %6145
    %v6147 = vsel %vm5567, %v5186, 0.0
    %6148 = vadd.xlane.f32.xlu0 %v6147
    %v6149 = vpop.xlane.xlu0 %6148
    %v6150 = vsel %vm5567, %v5188, 0.0
    %6151 = vadd.xlane.f32.xlu0 %v6150
    %v6152 = vpop.xlane.xlu0 %6151
    %v6153 = vsel %vm5567, %v5190, 0.0
    %6154 = vadd.xlane.f32.xlu0 %v6153
    %v6155 = vpop.xlane.xlu0 %6154
    %v6156 = vsel %vm5567, %v5192, 0.0
    %6157 = vadd.xlane.f32.xlu0 %v6156
    %v6158 = vpop.xlane.xlu0 %6157
    %v6159 = vsel %vm5567, %v5194, 0.0
    %6160 = vadd.xlane.f32.xlu0 %v6159
    %v6161 = vpop.xlane.xlu0 %6160
    %v6162 = vsel %vm5567, %v5196, 0.0
    %6163 = vadd.xlane.f32.xlu0 %v6162
    %v6164 = vpop.xlane.xlu0 %6163
    %v6165 = vsel %vm5567, %v5198, 0.0
    %6166 = vadd.xlane.f32.xlu0 %v6165
    %v6167 = vpop.xlane.xlu0 %6166
    %v6168 = vsel %vm5567, %v5200, 0.0
    %6169 = vadd.xlane.f32.xlu0 %v6168
    %v6170 = vpop.xlane.xlu0 %6169
    %v6171 = vsel %vm5567, %v5202, 0.0
    %6172 = vadd.xlane.f32.xlu0 %v6171
    %v6173 = vpop.xlane.xlu0 %6172
    %v6174 = vsel %vm5567, %v5204, 0.0
    %6175 = vadd.xlane.f32.xlu0 %v6174
    %v6176 = vpop.xlane.xlu0 %6175
    %v6177 = vsel %vm5567, %v5206, 0.0
    %6178 = vadd.xlane.f32.xlu0 %v6177
    %v6179 = vpop.xlane.xlu0 %6178
    %v6180 = vsel %vm5567, %v5208, 0.0
    %6181 = vadd.xlane.f32.xlu0 %v6180
    %v6182 = vpop.xlane.xlu0 %6181
    %v6183 = vsel %vm5567, %v5210, 0.0
    %6184 = vadd.xlane.f32.xlu0 %v6183
    %v6185 = vpop.xlane.xlu0 %6184
    %v6186 = vsel %vm5567, %v5212, 0.0
    %6187 = vadd.xlane.f32.xlu0 %v6186
    %v6188 = vpop.xlane.xlu0 %6187
    %v6189 = vsel %vm5567, %v5214, 0.0
    %6190 = vadd.xlane.f32.xlu0 %v6189
    %v6191 = vpop.xlane.xlu0 %6190
    %v6192 = vsel %vm5567, %v5216, 0.0
    %6193 = vadd.xlane.f32.xlu0 %v6192
    %v6194 = vpop.xlane.xlu0 %6193
    %v6195 = vsel %vm5567, %v5218, 0.0
    %6196 = vadd.xlane.f32.xlu0 %v6195
    %v6197 = vpop.xlane.xlu0 %6196
    %v6198 = vsel %vm5567, %v5220, 0.0
    %6199 = vadd.xlane.f32.xlu0 %v6198
    %v6200 = vpop.xlane.xlu0 %6199
    %v6201 = vsel %vm5567, %v5222, 0.0
    %6202 = vadd.xlane.f32.xlu0 %v6201
    %v6203 = vpop.xlane.xlu0 %6202
    %v6204 = vsel %vm5567, %v5224, 0.0
    %6205 = vadd.xlane.f32.xlu0 %v6204
    %v6206 = vpop.xlane.xlu0 %6205
    %v6207 = vsel %vm5567, %v5226, 0.0
    %6208 = vadd.xlane.f32.xlu0 %v6207
    %v6209 = vpop.xlane.xlu0 %6208
    %v6210 = vsel %vm5567, %v5228, 0.0
    %6211 = vadd.xlane.f32.xlu0 %v6210
    %v6212 = vpop.xlane.xlu0 %6211
    %v6213 = vsel %vm5567, %v5230, 0.0
    %6214 = vadd.xlane.f32.xlu0 %v6213
    %v6215 = vpop.xlane.xlu0 %6214
    %v6216 = vsel %vm5567, %v5232, 0.0
    %6217 = vadd.xlane.f32.xlu0 %v6216
    %v6218 = vpop.xlane.xlu0 %6217
    %v6219 = vsel %vm5567, %v5234, 0.0
    %6220 = vadd.xlane.f32.xlu0 %v6219
    %v6221 = vpop.xlane.xlu0 %6220
    %v6222 = vsel %vm5567, %v5236, 0.0
    %6223 = vadd.xlane.f32.xlu0 %v6222
    %v6224 = vpop.xlane.xlu0 %6223
    %v6225 = vsel %vm5567, %v5238, 0.0
    %6226 = vadd.xlane.f32.xlu0 %v6225
    %v6227 = vpop.xlane.xlu0 %6226
    %v6228 = vsel %vm5567, %v5240, 0.0
    %6229 = vadd.xlane.f32.xlu0 %v6228
    %v6230 = vpop.xlane.xlu0 %6229
    %v6231 = vsel %vm5567, %v5242, 0.0
    %6232 = vadd.xlane.f32.xlu0 %v6231
    %v6233 = vpop.xlane.xlu0 %6232
    %v6234 = vsel %vm5567, %v5244, 0.0
    %6235 = vadd.xlane.f32.xlu0 %v6234
    %v6236 = vpop.xlane.xlu0 %6235
    %v6237 = vsel %vm5567, %v5246, 0.0
    %6238 = vadd.xlane.f32.xlu0 %v6237
    %v6239 = vpop.xlane.xlu0 %6238
    %v6240 = vsel %vm5567, %v5248, 0.0
    %6241 = vadd.xlane.f32.xlu0 %v6240
    %v6242 = vpop.xlane.xlu0 %6241
    %v6243 = vsel %vm5567, %v5250, 0.0
    %6244 = vadd.xlane.f32.xlu0 %v6243
    %v6245 = vpop.xlane.xlu0 %6244
    %v6246 = vsel %vm5567, %v5252, 0.0
    %6247 = vadd.xlane.f32.xlu0 %v6246
    %v6248 = vpop.xlane.xlu0 %6247
    %v6249 = vsel %vm5567, %v5254, 0.0
    %6250 = vadd.xlane.f32.xlu0 %v6249
    %v6251 = vpop.xlane.xlu0 %6250
    %v6252 = vsel %vm5567, %v5256, 0.0
    %6253 = vadd.xlane.f32.xlu0 %v6252
    %v6254 = vpop.xlane.xlu0 %6253
    %v6255 = vsel %vm5567, %v5258, 0.0
    %6256 = vadd.xlane.f32.xlu0 %v6255
    %v6257 = vpop.xlane.xlu0 %6256
    %v6258 = vsel %vm5567, %v5260, 0.0
    %6259 = vadd.xlane.f32.xlu0 %v6258
    %v6260 = vpop.xlane.xlu0 %6259
    %v6261 = vsel %vm5567, %v5262, 0.0
    %6262 = vadd.xlane.f32.xlu0 %v6261
    %v6263 = vpop.xlane.xlu0 %6262
    %v6264 = vsel %vm5567, %v5264, 0.0
    %6265 = vadd.xlane.f32.xlu0 %v6264
    %v6266 = vpop.xlane.xlu0 %6265
    %v6267 = vsel %vm5567, %v5266, 0.0
    %6268 = vadd.xlane.f32.xlu0 %v6267
    %v6269 = vpop.xlane.xlu0 %6268
    %v6270 = vsel %vm5567, %v5268, 0.0
    %6271 = vadd.xlane.f32.xlu0 %v6270
    %v6272 = vpop.xlane.xlu0 %6271
    %v6273 = vsel %vm5567, %v5270, 0.0
    %6274 = vadd.xlane.f32.xlu0 %v6273
    %v6275 = vpop.xlane.xlu0 %6274
    %v6276 = vsel %vm5567, %v5272, 0.0
    %6277 = vadd.xlane.f32.xlu0 %v6276
    %v6278 = vpop.xlane.xlu0 %6277
    %v6279 = vsel %vm5567, %v5274, 0.0
    %6280 = vadd.xlane.f32.xlu0 %v6279
    %v6281 = vpop.xlane.xlu0 %6280
    %v6282 = vsel %vm5567, %v5276, 0.0
    %6283 = vadd.xlane.f32.xlu0 %v6282
    %v6284 = vpop.xlane.xlu0 %6283
    %v6285 = vsel %vm5567, %v5278, 0.0
    %6286 = vadd.xlane.f32.xlu0 %v6285
    %v6287 = vpop.xlane.xlu0 %6286
    %v6288 = vsel %vm5567, %v5280, 0.0
    %6289 = vadd.xlane.f32.xlu0 %v6288
    %v6290 = vpop.xlane.xlu0 %6289
    %v6291 = vsel %vm5567, %v5282, 0.0
    %6292 = vadd.xlane.f32.xlu0 %v6291
    %v6293 = vpop.xlane.xlu0 %6292
    %v6294 = vsel %vm5567, %v5284, 0.0
    %6295 = vadd.xlane.f32.xlu0 %v6294
    %v6296 = vpop.xlane.xlu0 %6295
    %v6297 = vsel %vm5567, %v5286, 0.0
    %6298 = vadd.xlane.f32.xlu0 %v6297
    %v6299 = vpop.xlane.xlu0 %6298
    %v6300 = vsel %vm5567, %v5288, 0.0
    %6301 = vadd.xlane.f32.xlu0 %v6300
    %v6302 = vpop.xlane.xlu0 %6301
    %v6303 = vsel %vm5567, %v5290, 0.0
    %6304 = vadd.xlane.f32.xlu0 %v6303
    %v6305 = vpop.xlane.xlu0 %6304
    %v6306 = vsel %vm5567, %v5292, 0.0
    %6307 = vadd.xlane.f32.xlu0 %v6306
    %v6308 = vpop.xlane.xlu0 %6307
    %v6309 = vsel %vm5567, %v5294, 0.0
    %6310 = vadd.xlane.f32.xlu0 %v6309
    %v6311 = vpop.xlane.xlu0 %6310
    %v6312 = vsel %vm5567, %v5296, 0.0
    %6313 = vadd.xlane.f32.xlu0 %v6312
    %v6314 = vpop.xlane.xlu0 %6313
    %v6315 = vsel %vm5567, %v5298, 0.0
    %6316 = vadd.xlane.f32.xlu0 %v6315
    %v6317 = vpop.xlane.xlu0 %6316
    %v6318 = vsel %vm5567, %v5300, 0.0
    %6319 = vadd.xlane.f32.xlu0 %v6318
    %v6320 = vpop.xlane.xlu0 %6319
    %v6321 = vsel %vm5567, %v5302, 0.0
    %6322 = vadd.xlane.f32.xlu0 %v6321
    %v6323 = vpop.xlane.xlu0 %6322
    %v6324 = vsel %vm5567, %v5304, 0.0
    %6325 = vadd.xlane.f32.xlu0 %v6324
    %v6326 = vpop.xlane.xlu0 %6325
    %v6327 = vsel %vm5567, %v5306, 0.0
    %6328 = vadd.xlane.f32.xlu0 %v6327
    %v6329 = vpop.xlane.xlu0 %6328
    %v6330 = vsel %vm5567, %v5308, 0.0
    %6331 = vadd.xlane.f32.xlu0 %v6330
    %v6332 = vpop.xlane.xlu0 %6331
    %v6333 = vsel %vm5567, %v5310, 0.0
    %6334 = vadd.xlane.f32.xlu0 %v6333
    %v6335 = vpop.xlane.xlu0 %6334
    %v6336 = vmul.f32 %v1464, %v1464
    %v6337 = vmul.f32 %v1468, %v1468
    %v6338 = vmul.f32 %v1474, %v1474
    %v6339 = vmul.f32 %v1478, %v1478
    %v6340 = vmul.f32 %v1484, %v1484
    %v6341 = vmul.f32 %v1488, %v1488
    %v6342 = vmul.f32 %v1494, %v1494
    %v6343 = vmul.f32 %v1498, %v1498
    %v6344 = vmul.f32 %v1504, %v1504
    %v6345 = vmul.f32 %v1508, %v1508
    %v6346 = vmul.f32 %v1514, %v1514
    %v6347 = vmul.f32 %v1518, %v1518
    %v6348 = vmul.f32 %v1524, %v1524
    %v6349 = vmul.f32 %v1528, %v1528
    %v6350 = vmul.f32 %v1534, %v1534
    %v6351 = vmul.f32 %v1538, %v1538
    %v6352 = vmul.f32 %v1544, %v1544
    %v6353 = vmul.f32 %v1548, %v1548
    %v6354 = vmul.f32 %v1554, %v1554
    %v6355 = vmul.f32 %v1558, %v1558
    %v6356 = vmul.f32 %v1564, %v1564
    %v6357 = vmul.f32 %v1568, %v1568
    %v6358 = vmul.f32 %v1574, %v1574
    %v6359 = vmul.f32 %v1578, %v1578
    %v6360 = vmul.f32 %v1584, %v1584
    %v6361 = vmul.f32 %v1588, %v1588
    %v6362 = vmul.f32 %v1594, %v1594
    %v6363 = vmul.f32 %v1598, %v1598
    %v6364 = vmul.f32 %v1604, %v1604
    %v6365 = vmul.f32 %v1608, %v1608
    %v6366 = vmul.f32 %v1614, %v1614
    %v6367 = vmul.f32 %v1618, %v1618
    %v6368 = vmul.f32 %v1624, %v1624
    %v6369 = vmul.f32 %v1628, %v1628
    %v6370 = vmul.f32 %v1634, %v1634
    %v6371 = vmul.f32 %v1638, %v1638
    %v6372 = vmul.f32 %v1644, %v1644
    %v6373 = vmul.f32 %v1648, %v1648
    %v6374 = vmul.f32 %v1654, %v1654
    %v6375 = vmul.f32 %v1658, %v1658
    %v6376 = vmul.f32 %v1664, %v1664
    %v6377 = vmul.f32 %v1668, %v1668
    %v6378 = vmul.f32 %v1674, %v1674
    %v6379 = vmul.f32 %v1678, %v1678
    %v6380 = vmul.f32 %v1684, %v1684
    %v6381 = vmul.f32 %v1688, %v1688
    %v6382 = vmul.f32 %v1694, %v1694
    %v6383 = vmul.f32 %v1698, %v1698
    %v6384 = vmul.f32 %v1704, %v1704
    %v6385 = vmul.f32 %v1708, %v1708
    %v6386 = vmul.f32 %v1714, %v1714
    %v6387 = vmul.f32 %v1718, %v1718
    %v6388 = vmul.f32 %v1724, %v1724
    %v6389 = vmul.f32 %v1728, %v1728
    %v6390 = vmul.f32 %v1734, %v1734
    %v6391 = vmul.f32 %v1738, %v1738
    %v6392 = vmul.f32 %v1744, %v1744
    %v6393 = vmul.f32 %v1748, %v1748
    %v6394 = vmul.f32 %v1754, %v1754
    %v6395 = vmul.f32 %v1758, %v1758
    %v6396 = vmul.f32 %v1764, %v1764
    %v6397 = vmul.f32 %v1768, %v1768
    %v6398 = vmul.f32 %v1774, %v1774
    %v6399 = vmul.f32 %v1778, %v1778
    %v6400 = vmul.f32 %v1784, %v1784
    %v6401 = vmul.f32 %v1788, %v1788
    %v6402 = vmul.f32 %v1794, %v1794
    %v6403 = vmul.f32 %v1798, %v1798
    %v6404 = vmul.f32 %v1804, %v1804
    %v6405 = vmul.f32 %v1808, %v1808
    %v6406 = vmul.f32 %v1814, %v1814
    %v6407 = vmul.f32 %v1818, %v1818
    %v6408 = vmul.f32 %v1824, %v1824
    %v6409 = vmul.f32 %v1828, %v1828
    %v6410 = vmul.f32 %v1834, %v1834
    %v6411 = vmul.f32 %v1838, %v1838
    %v6412 = vmul.f32 %v1844, %v1844
    %v6413 = vmul.f32 %v1848, %v1848
    %v6414 = vmul.f32 %v1854, %v1854
    %v6415 = vmul.f32 %v1858, %v1858
    %v6416 = vmul.f32 %v1864, %v1864
    %v6417 = vmul.f32 %v1868, %v1868
    %v6418 = vmul.f32 %v1874, %v1874
    %v6419 = vmul.f32 %v1878, %v1878
    %v6420 = vmul.f32 %v1884, %v1884
    %v6421 = vmul.f32 %v1888, %v1888
    %v6422 = vmul.f32 %v1894, %v1894
    %v6423 = vmul.f32 %v1898, %v1898
    %v6424 = vmul.f32 %v1904, %v1904
    %v6425 = vmul.f32 %v1908, %v1908
    %v6426 = vmul.f32 %v1914, %v1914
    %v6427 = vmul.f32 %v1918, %v1918
    %v6428 = vmul.f32 %v1924, %v1924
    %v6429 = vmul.f32 %v1928, %v1928
    %v6430 = vmul.f32 %v1934, %v1934
    %v6431 = vmul.f32 %v1938, %v1938
    %v6432 = vmul.f32 %v1944, %v1944
    %v6433 = vmul.f32 %v1948, %v1948
    %v6434 = vmul.f32 %v1954, %v1954
    %v6435 = vmul.f32 %v1958, %v1958
    %v6436 = vmul.f32 %v1964, %v1964
    %v6437 = vmul.f32 %v1968, %v1968
    %v6438 = vmul.f32 %v1974, %v1974
    %v6439 = vmul.f32 %v1978, %v1978
    %v6440 = vmul.f32 %v1984, %v1984
    %v6441 = vmul.f32 %v1988, %v1988
    %v6442 = vmul.f32 %v1994, %v1994
    %v6443 = vmul.f32 %v1998, %v1998
    %v6444 = vmul.f32 %v2004, %v2004
    %v6445 = vmul.f32 %v2008, %v2008
    %v6446 = vmul.f32 %v2014, %v2014
    %v6447 = vmul.f32 %v2018, %v2018
    %v6448 = vmul.f32 %v2024, %v2024
    %v6449 = vmul.f32 %v2028, %v2028
    %v6450 = vmul.f32 %v2034, %v2034
    %v6451 = vmul.f32 %v2038, %v2038
    %v6452 = vmul.f32 %v2044, %v2044
    %v6453 = vmul.f32 %v2048, %v2048
    %v6454 = vmul.f32 %v2054, %v2054
    %v6455 = vmul.f32 %v2058, %v2058
    %v6456 = vmul.f32 %v2064, %v2064
    %v6457 = vmul.f32 %v2068, %v2068
    %v6458 = vmul.f32 %v2074, %v2074
    %v6459 = vmul.f32 %v2078, %v2078
    %v6460 = vmul.f32 %v2084, %v2084
    %v6461 = vmul.f32 %v2088, %v2088
    %v6462 = vmul.f32 %v2094, %v2094
    %v6463 = vmul.f32 %v2098, %v2098
    %v6464 = vmul.f32 %v2104, %v2104
    %v6465 = vmul.f32 %v2108, %v2108
    %v6466 = vmul.f32 %v2114, %v2114
    %v6467 = vmul.f32 %v2118, %v2118
    %v6468 = vmul.f32 %v2124, %v2124
    %v6469 = vmul.f32 %v2128, %v2128
    %v6470 = vmul.f32 %v2134, %v2134
    %v6471 = vmul.f32 %v2138, %v2138
    %v6472 = vmul.f32 %v2144, %v2144
    %v6473 = vmul.f32 %v2148, %v2148
    %v6474 = vmul.f32 %v2154, %v2154
    %v6475 = vmul.f32 %v2158, %v2158
    %v6476 = vmul.f32 %v2164, %v2164
    %v6477 = vmul.f32 %v2168, %v2168
    %v6478 = vmul.f32 %v2174, %v2174
    %v6479 = vmul.f32 %v2178, %v2178
    %v6480 = vmul.f32 %v2184, %v2184
    %v6481 = vmul.f32 %v2188, %v2188
    %v6482 = vmul.f32 %v2194, %v2194
    %v6483 = vmul.f32 %v2198, %v2198
    %v6484 = vmul.f32 %v2204, %v2204
    %v6485 = vmul.f32 %v2208, %v2208
    %v6486 = vmul.f32 %v2214, %v2214
    %v6487 = vmul.f32 %v2218, %v2218
    %v6488 = vmul.f32 %v2224, %v2224
    %v6489 = vmul.f32 %v2228, %v2228
    %v6490 = vmul.f32 %v2234, %v2234
    %v6491 = vmul.f32 %v2238, %v2238
    %v6492 = vmul.f32 %v2244, %v2244
    %v6493 = vmul.f32 %v2248, %v2248
    %v6494 = vmul.f32 %v2254, %v2254
    %v6495 = vmul.f32 %v2258, %v2258
    %v6496 = vmul.f32 %v2264, %v2264
    %v6497 = vmul.f32 %v2268, %v2268
    %v6498 = vmul.f32 %v2274, %v2274
    %v6499 = vmul.f32 %v2278, %v2278
    %v6500 = vmul.f32 %v2284, %v2284
    %v6501 = vmul.f32 %v2288, %v2288
    %v6502 = vmul.f32 %v2294, %v2294
    %v6503 = vmul.f32 %v2298, %v2298
    %v6504 = vmul.f32 %v2304, %v2304
    %v6505 = vmul.f32 %v2308, %v2308
    %v6506 = vmul.f32 %v2314, %v2314
    %v6507 = vmul.f32 %v2318, %v2318
    %v6508 = vmul.f32 %v2324, %v2324
    %v6509 = vmul.f32 %v2328, %v2328
    %v6510 = vmul.f32 %v2334, %v2334
    %v6511 = vmul.f32 %v2338, %v2338
    %v6512 = vmul.f32 %v2344, %v2344
    %v6513 = vmul.f32 %v2348, %v2348
    %v6514 = vmul.f32 %v2354, %v2354
    %v6515 = vmul.f32 %v2358, %v2358
    %v6516 = vmul.f32 %v2364, %v2364
    %v6517 = vmul.f32 %v2368, %v2368
    %v6518 = vmul.f32 %v2374, %v2374
    %v6519 = vmul.f32 %v2378, %v2378
    %v6520 = vmul.f32 %v2384, %v2384
    %v6521 = vmul.f32 %v2388, %v2388
    %v6522 = vmul.f32 %v2394, %v2394
    %v6523 = vmul.f32 %v2398, %v2398
    %v6524 = vmul.f32 %v2404, %v2404
    %v6525 = vmul.f32 %v2408, %v2408
    %v6526 = vmul.f32 %v2414, %v2414
    %v6527 = vmul.f32 %v2418, %v2418
    %v6528 = vmul.f32 %v2424, %v2424
    %v6529 = vmul.f32 %v2428, %v2428
    %v6530 = vmul.f32 %v2434, %v2434
    %v6531 = vmul.f32 %v2438, %v2438
    %v6532 = vmul.f32 %v2444, %v2444
    %v6533 = vmul.f32 %v2448, %v2448
    %v6534 = vmul.f32 %v2454, %v2454
    %v6535 = vmul.f32 %v2458, %v2458
    %v6536 = vmul.f32 %v2464, %v2464
    %v6537 = vmul.f32 %v2468, %v2468
    %v6538 = vmul.f32 %v2474, %v2474
    %v6539 = vmul.f32 %v2478, %v2478
    %v6540 = vmul.f32 %v2484, %v2484
    %v6541 = vmul.f32 %v2488, %v2488
    %v6542 = vmul.f32 %v2494, %v2494
    %v6543 = vmul.f32 %v2498, %v2498
    %v6544 = vmul.f32 %v2504, %v2504
    %v6545 = vmul.f32 %v2508, %v2508
    %v6546 = vmul.f32 %v2514, %v2514
    %v6547 = vmul.f32 %v2518, %v2518
    %v6548 = vmul.f32 %v2524, %v2524
    %v6549 = vmul.f32 %v2528, %v2528
    %v6550 = vmul.f32 %v2534, %v2534
    %v6551 = vmul.f32 %v2538, %v2538
    %v6552 = vmul.f32 %v2544, %v2544
    %v6553 = vmul.f32 %v2548, %v2548
    %v6554 = vmul.f32 %v2554, %v2554
    %v6555 = vmul.f32 %v2558, %v2558
    %v6556 = vmul.f32 %v2564, %v2564
    %v6557 = vmul.f32 %v2568, %v2568
    %v6558 = vmul.f32 %v2574, %v2574
    %v6559 = vmul.f32 %v2578, %v2578
    %v6560 = vmul.f32 %v2584, %v2584
    %v6561 = vmul.f32 %v2588, %v2588
    %v6562 = vmul.f32 %v2594, %v2594
    %v6563 = vmul.f32 %v2598, %v2598
    %v6564 = vmul.f32 %v2604, %v2604
    %v6565 = vmul.f32 %v2608, %v2608
    %v6566 = vmul.f32 %v2614, %v2614
    %v6567 = vmul.f32 %v2618, %v2618
    %v6568 = vmul.f32 %v2624, %v2624
    %v6569 = vmul.f32 %v2628, %v2628
    %v6570 = vmul.f32 %v2634, %v2634
    %v6571 = vmul.f32 %v2638, %v2638
    %v6572 = vmul.f32 %v2644, %v2644
    %v6573 = vmul.f32 %v2648, %v2648
    %v6574 = vmul.f32 %v2654, %v2654
    %v6575 = vmul.f32 %v2658, %v2658
    %v6576 = vmul.f32 %v2664, %v2664
    %v6577 = vmul.f32 %v2668, %v2668
    %v6578 = vmul.f32 %v2674, %v2674
    %v6579 = vmul.f32 %v2678, %v2678
    %v6580 = vmul.f32 %v2684, %v2684
    %v6581 = vmul.f32 %v2688, %v2688
    %v6582 = vmul.f32 %v2694, %v2694
    %v6583 = vmul.f32 %v2698, %v2698
    %v6584 = vmul.f32 %v2704, %v2704
    %v6585 = vmul.f32 %v2708, %v2708
    %v6586 = vmul.f32 %v2714, %v2714
    %v6587 = vmul.f32 %v2718, %v2718
    %v6588 = vmul.f32 %v2724, %v2724
    %v6589 = vmul.f32 %v2728, %v2728
    %v6590 = vmul.f32 %v2734, %v2734
    %v6591 = vmul.f32 %v2738, %v2738
    %6592 = vadd.xlane.f32.xlu0 %v6336
    %v6593 = vpop.xlane.xlu0 %6592
    %6594 = vadd.xlane.f32.xlu0 %v6337
    %v6595 = vpop.xlane.xlu0 %6594
    %6596 = vadd.xlane.f32.xlu0 %v6338
    %v6597 = vpop.xlane.xlu0 %6596
    %6598 = vadd.xlane.f32.xlu0 %v6339
    %v6599 = vpop.xlane.xlu0 %6598
    %6600 = vadd.xlane.f32.xlu0 %v6340
    %v6601 = vpop.xlane.xlu0 %6600
    %6602 = vadd.xlane.f32.xlu0 %v6341
    %v6603 = vpop.xlane.xlu0 %6602
    %6604 = vadd.xlane.f32.xlu0 %v6342
    %v6605 = vpop.xlane.xlu0 %6604
    %6606 = vadd.xlane.f32.xlu0 %v6343
    %v6607 = vpop.xlane.xlu0 %6606
    %6608 = vadd.xlane.f32.xlu0 %v6344
    %v6609 = vpop.xlane.xlu0 %6608
    %6610 = vadd.xlane.f32.xlu0 %v6345
    %v6611 = vpop.xlane.xlu0 %6610
    %6612 = vadd.xlane.f32.xlu0 %v6346
    %v6613 = vpop.xlane.xlu0 %6612
    %6614 = vadd.xlane.f32.xlu0 %v6347
    %v6615 = vpop.xlane.xlu0 %6614
    %6616 = vadd.xlane.f32.xlu0 %v6348
    %v6617 = vpop.xlane.xlu0 %6616
    %6618 = vadd.xlane.f32.xlu0 %v6349
    %v6619 = vpop.xlane.xlu0 %6618
    %6620 = vadd.xlane.f32.xlu0 %v6350
    %v6621 = vpop.xlane.xlu0 %6620
    %6622 = vadd.xlane.f32.xlu0 %v6351
    %v6623 = vpop.xlane.xlu0 %6622
    %6624 = vadd.xlane.f32.xlu0 %v6352
    %v6625 = vpop.xlane.xlu0 %6624
    %6626 = vadd.xlane.f32.xlu0 %v6353
    %v6627 = vpop.xlane.xlu0 %6626
    %6628 = vadd.xlane.f32.xlu0 %v6354
    %v6629 = vpop.xlane.xlu0 %6628
    %6630 = vadd.xlane.f32.xlu0 %v6355
    %v6631 = vpop.xlane.xlu0 %6630
    %6632 = vadd.xlane.f32.xlu0 %v6356
    %v6633 = vpop.xlane.xlu0 %6632
    %6634 = vadd.xlane.f32.xlu0 %v6357
    %v6635 = vpop.xlane.xlu0 %6634
    %6636 = vadd.xlane.f32.xlu0 %v6358
    %v6637 = vpop.xlane.xlu0 %6636
    %6638 = vadd.xlane.f32.xlu0 %v6359
    %v6639 = vpop.xlane.xlu0 %6638
    %6640 = vadd.xlane.f32.xlu0 %v6360
    %v6641 = vpop.xlane.xlu0 %6640
    %6642 = vadd.xlane.f32.xlu0 %v6361
    %v6643 = vpop.xlane.xlu0 %6642
    %6644 = vadd.xlane.f32.xlu0 %v6362
    %v6645 = vpop.xlane.xlu0 %6644
    %6646 = vadd.xlane.f32.xlu0 %v6363
    %v6647 = vpop.xlane.xlu0 %6646
    %6648 = vadd.xlane.f32.xlu0 %v6364
    %v6649 = vpop.xlane.xlu0 %6648
    %6650 = vadd.xlane.f32.xlu0 %v6365
    %v6651 = vpop.xlane.xlu0 %6650
    %6652 = vadd.xlane.f32.xlu0 %v6366
    %v6653 = vpop.xlane.xlu0 %6652
    %6654 = vadd.xlane.f32.xlu0 %v6367
    %v6655 = vpop.xlane.xlu0 %6654
    %6656 = vadd.xlane.f32.xlu0 %v6368
    %v6657 = vpop.xlane.xlu0 %6656
    %6658 = vadd.xlane.f32.xlu0 %v6369
    %v6659 = vpop.xlane.xlu0 %6658
    %6660 = vadd.xlane.f32.xlu0 %v6370
    %v6661 = vpop.xlane.xlu0 %6660
    %6662 = vadd.xlane.f32.xlu0 %v6371
    %v6663 = vpop.xlane.xlu0 %6662
    %6664 = vadd.xlane.f32.xlu0 %v6372
    %v6665 = vpop.xlane.xlu0 %6664
    %6666 = vadd.xlane.f32.xlu0 %v6373
    %v6667 = vpop.xlane.xlu0 %6666
    %6668 = vadd.xlane.f32.xlu0 %v6374
    %v6669 = vpop.xlane.xlu0 %6668
    %6670 = vadd.xlane.f32.xlu0 %v6375
    %v6671 = vpop.xlane.xlu0 %6670
    %6672 = vadd.xlane.f32.xlu0 %v6376
    %v6673 = vpop.xlane.xlu0 %6672
    %6674 = vadd.xlane.f32.xlu0 %v6377
    %v6675 = vpop.xlane.xlu0 %6674
    %6676 = vadd.xlane.f32.xlu0 %v6378
    %v6677 = vpop.xlane.xlu0 %6676
    %6678 = vadd.xlane.f32.xlu0 %v6379
    %v6679 = vpop.xlane.xlu0 %6678
    %6680 = vadd.xlane.f32.xlu0 %v6380
    %v6681 = vpop.xlane.xlu0 %6680
    %6682 = vadd.xlane.f32.xlu0 %v6381
    %v6683 = vpop.xlane.xlu0 %6682
    %6684 = vadd.xlane.f32.xlu0 %v6382
    %v6685 = vpop.xlane.xlu0 %6684
    %6686 = vadd.xlane.f32.xlu0 %v6383
    %v6687 = vpop.xlane.xlu0 %6686
    %6688 = vadd.xlane.f32.xlu0 %v6384
    %v6689 = vpop.xlane.xlu0 %6688
    %6690 = vadd.xlane.f32.xlu0 %v6385
    %v6691 = vpop.xlane.xlu0 %6690
    %6692 = vadd.xlane.f32.xlu0 %v6386
    %v6693 = vpop.xlane.xlu0 %6692
    %6694 = vadd.xlane.f32.xlu0 %v6387
    %v6695 = vpop.xlane.xlu0 %6694
    %6696 = vadd.xlane.f32.xlu0 %v6388
    %v6697 = vpop.xlane.xlu0 %6696
    %6698 = vadd.xlane.f32.xlu0 %v6389
    %v6699 = vpop.xlane.xlu0 %6698
    %6700 = vadd.xlane.f32.xlu0 %v6390
    %v6701 = vpop.xlane.xlu0 %6700
    %6702 = vadd.xlane.f32.xlu0 %v6391
    %v6703 = vpop.xlane.xlu0 %6702
    %6704 = vadd.xlane.f32.xlu0 %v6392
    %v6705 = vpop.xlane.xlu0 %6704
    %6706 = vadd.xlane.f32.xlu0 %v6393
    %v6707 = vpop.xlane.xlu0 %6706
    %6708 = vadd.xlane.f32.xlu0 %v6394
    %v6709 = vpop.xlane.xlu0 %6708
    %6710 = vadd.xlane.f32.xlu0 %v6395
    %v6711 = vpop.xlane.xlu0 %6710
    %6712 = vadd.xlane.f32.xlu0 %v6396
    %v6713 = vpop.xlane.xlu0 %6712
    %6714 = vadd.xlane.f32.xlu0 %v6397
    %v6715 = vpop.xlane.xlu0 %6714
    %6716 = vadd.xlane.f32.xlu0 %v6398
    %v6717 = vpop.xlane.xlu0 %6716
    %6718 = vadd.xlane.f32.xlu0 %v6399
    %v6719 = vpop.xlane.xlu0 %6718
    %6720 = vadd.xlane.f32.xlu0 %v6400
    %v6721 = vpop.xlane.xlu0 %6720
    %6722 = vadd.xlane.f32.xlu0 %v6401
    %v6723 = vpop.xlane.xlu0 %6722
    %6724 = vadd.xlane.f32.xlu0 %v6402
    %v6725 = vpop.xlane.xlu0 %6724
    %6726 = vadd.xlane.f32.xlu0 %v6403
    %v6727 = vpop.xlane.xlu0 %6726
    %6728 = vadd.xlane.f32.xlu0 %v6404
    %v6729 = vpop.xlane.xlu0 %6728
    %6730 = vadd.xlane.f32.xlu0 %v6405
    %v6731 = vpop.xlane.xlu0 %6730
    %6732 = vadd.xlane.f32.xlu0 %v6406
    %v6733 = vpop.xlane.xlu0 %6732
    %6734 = vadd.xlane.f32.xlu0 %v6407
    %v6735 = vpop.xlane.xlu0 %6734
    %6736 = vadd.xlane.f32.xlu0 %v6408
    %v6737 = vpop.xlane.xlu0 %6736
    %6738 = vadd.xlane.f32.xlu0 %v6409
    %v6739 = vpop.xlane.xlu0 %6738
    %6740 = vadd.xlane.f32.xlu0 %v6410
    %v6741 = vpop.xlane.xlu0 %6740
    %6742 = vadd.xlane.f32.xlu0 %v6411
    %v6743 = vpop.xlane.xlu0 %6742
    %6744 = vadd.xlane.f32.xlu0 %v6412
    %v6745 = vpop.xlane.xlu0 %6744
    %6746 = vadd.xlane.f32.xlu0 %v6413
    %v6747 = vpop.xlane.xlu0 %6746
    %6748 = vadd.xlane.f32.xlu0 %v6414
    %v6749 = vpop.xlane.xlu0 %6748
    %6750 = vadd.xlane.f32.xlu0 %v6415
    %v6751 = vpop.xlane.xlu0 %6750
    %6752 = vadd.xlane.f32.xlu0 %v6416
    %v6753 = vpop.xlane.xlu0 %6752
    %6754 = vadd.xlane.f32.xlu0 %v6417
    %v6755 = vpop.xlane.xlu0 %6754
    %6756 = vadd.xlane.f32.xlu0 %v6418
    %v6757 = vpop.xlane.xlu0 %6756
    %6758 = vadd.xlane.f32.xlu0 %v6419
    %v6759 = vpop.xlane.xlu0 %6758
    %6760 = vadd.xlane.f32.xlu0 %v6420
    %v6761 = vpop.xlane.xlu0 %6760
    %6762 = vadd.xlane.f32.xlu0 %v6421
    %v6763 = vpop.xlane.xlu0 %6762
    %6764 = vadd.xlane.f32.xlu0 %v6422
    %v6765 = vpop.xlane.xlu0 %6764
    %6766 = vadd.xlane.f32.xlu0 %v6423
    %v6767 = vpop.xlane.xlu0 %6766
    %6768 = vadd.xlane.f32.xlu0 %v6424
    %v6769 = vpop.xlane.xlu0 %6768
    %6770 = vadd.xlane.f32.xlu0 %v6425
    %v6771 = vpop.xlane.xlu0 %6770
    %6772 = vadd.xlane.f32.xlu0 %v6426
    %v6773 = vpop.xlane.xlu0 %6772
    %6774 = vadd.xlane.f32.xlu0 %v6427
    %v6775 = vpop.xlane.xlu0 %6774
    %6776 = vadd.xlane.f32.xlu0 %v6428
    %v6777 = vpop.xlane.xlu0 %6776
    %6778 = vadd.xlane.f32.xlu0 %v6429
    %v6779 = vpop.xlane.xlu0 %6778
    %6780 = vadd.xlane.f32.xlu0 %v6430
    %v6781 = vpop.xlane.xlu0 %6780
    %6782 = vadd.xlane.f32.xlu0 %v6431
    %v6783 = vpop.xlane.xlu0 %6782
    %6784 = vadd.xlane.f32.xlu0 %v6432
    %v6785 = vpop.xlane.xlu0 %6784
    %6786 = vadd.xlane.f32.xlu0 %v6433
    %v6787 = vpop.xlane.xlu0 %6786
    %6788 = vadd.xlane.f32.xlu0 %v6434
    %v6789 = vpop.xlane.xlu0 %6788
    %6790 = vadd.xlane.f32.xlu0 %v6435
    %v6791 = vpop.xlane.xlu0 %6790
    %6792 = vadd.xlane.f32.xlu0 %v6436
    %v6793 = vpop.xlane.xlu0 %6792
    %6794 = vadd.xlane.f32.xlu0 %v6437
    %v6795 = vpop.xlane.xlu0 %6794
    %6796 = vadd.xlane.f32.xlu0 %v6438
    %v6797 = vpop.xlane.xlu0 %6796
    %6798 = vadd.xlane.f32.xlu0 %v6439
    %v6799 = vpop.xlane.xlu0 %6798
    %6800 = vadd.xlane.f32.xlu0 %v6440
    %v6801 = vpop.xlane.xlu0 %6800
    %6802 = vadd.xlane.f32.xlu0 %v6441
    %v6803 = vpop.xlane.xlu0 %6802
    %6804 = vadd.xlane.f32.xlu0 %v6442
    %v6805 = vpop.xlane.xlu0 %6804
    %6806 = vadd.xlane.f32.xlu0 %v6443
    %v6807 = vpop.xlane.xlu0 %6806
    %6808 = vadd.xlane.f32.xlu0 %v6444
    %v6809 = vpop.xlane.xlu0 %6808
    %6810 = vadd.xlane.f32.xlu0 %v6445
    %v6811 = vpop.xlane.xlu0 %6810
    %6812 = vadd.xlane.f32.xlu0 %v6446
    %v6813 = vpop.xlane.xlu0 %6812
    %6814 = vadd.xlane.f32.xlu0 %v6447
    %v6815 = vpop.xlane.xlu0 %6814
    %6816 = vadd.xlane.f32.xlu0 %v6448
    %v6817 = vpop.xlane.xlu0 %6816
    %6818 = vadd.xlane.f32.xlu0 %v6449
    %v6819 = vpop.xlane.xlu0 %6818
    %6820 = vadd.xlane.f32.xlu0 %v6450
    %v6821 = vpop.xlane.xlu0 %6820
    %6822 = vadd.xlane.f32.xlu0 %v6451
    %v6823 = vpop.xlane.xlu0 %6822
    %6824 = vadd.xlane.f32.xlu0 %v6452
    %v6825 = vpop.xlane.xlu0 %6824
    %6826 = vadd.xlane.f32.xlu0 %v6453
    %v6827 = vpop.xlane.xlu0 %6826
    %6828 = vadd.xlane.f32.xlu0 %v6454
    %v6829 = vpop.xlane.xlu0 %6828
    %6830 = vadd.xlane.f32.xlu0 %v6455
    %v6831 = vpop.xlane.xlu0 %6830
    %6832 = vadd.xlane.f32.xlu0 %v6456
    %v6833 = vpop.xlane.xlu0 %6832
    %6834 = vadd.xlane.f32.xlu0 %v6457
    %v6835 = vpop.xlane.xlu0 %6834
    %6836 = vadd.xlane.f32.xlu0 %v6458
    %v6837 = vpop.xlane.xlu0 %6836
    %6838 = vadd.xlane.f32.xlu0 %v6459
    %v6839 = vpop.xlane.xlu0 %6838
    %6840 = vadd.xlane.f32.xlu0 %v6460
    %v6841 = vpop.xlane.xlu0 %6840
    %6842 = vadd.xlane.f32.xlu0 %v6461
    %v6843 = vpop.xlane.xlu0 %6842
    %6844 = vadd.xlane.f32.xlu0 %v6462
    %v6845 = vpop.xlane.xlu0 %6844
    %6846 = vadd.xlane.f32.xlu0 %v6463
    %v6847 = vpop.xlane.xlu0 %6846
    %6848 = vadd.xlane.f32.xlu0 %v6464
    %v6849 = vpop.xlane.xlu0 %6848
    %6850 = vadd.xlane.f32.xlu0 %v6465
    %v6851 = vpop.xlane.xlu0 %6850
    %6852 = vadd.xlane.f32.xlu0 %v6466
    %v6853 = vpop.xlane.xlu0 %6852
    %6854 = vadd.xlane.f32.xlu0 %v6467
    %v6855 = vpop.xlane.xlu0 %6854
    %6856 = vadd.xlane.f32.xlu0 %v6468
    %v6857 = vpop.xlane.xlu0 %6856
    %6858 = vadd.xlane.f32.xlu0 %v6469
    %v6859 = vpop.xlane.xlu0 %6858
    %6860 = vadd.xlane.f32.xlu0 %v6470
    %v6861 = vpop.xlane.xlu0 %6860
    %6862 = vadd.xlane.f32.xlu0 %v6471
    %v6863 = vpop.xlane.xlu0 %6862
    %6864 = vadd.xlane.f32.xlu0 %v6472
    %v6865 = vpop.xlane.xlu0 %6864
    %6866 = vadd.xlane.f32.xlu0 %v6473
    %v6867 = vpop.xlane.xlu0 %6866
    %6868 = vadd.xlane.f32.xlu0 %v6474
    %v6869 = vpop.xlane.xlu0 %6868
    %6870 = vadd.xlane.f32.xlu0 %v6475
    %v6871 = vpop.xlane.xlu0 %6870
    %6872 = vadd.xlane.f32.xlu0 %v6476
    %v6873 = vpop.xlane.xlu0 %6872
    %6874 = vadd.xlane.f32.xlu0 %v6477
    %v6875 = vpop.xlane.xlu0 %6874
    %6876 = vadd.xlane.f32.xlu0 %v6478
    %v6877 = vpop.xlane.xlu0 %6876
    %6878 = vadd.xlane.f32.xlu0 %v6479
    %v6879 = vpop.xlane.xlu0 %6878
    %6880 = vadd.xlane.f32.xlu0 %v6480
    %v6881 = vpop.xlane.xlu0 %6880
    %6882 = vadd.xlane.f32.xlu0 %v6481
    %v6883 = vpop.xlane.xlu0 %6882
    %6884 = vadd.xlane.f32.xlu0 %v6482
    %v6885 = vpop.xlane.xlu0 %6884
    %6886 = vadd.xlane.f32.xlu0 %v6483
    %v6887 = vpop.xlane.xlu0 %6886
    %6888 = vadd.xlane.f32.xlu0 %v6484
    %v6889 = vpop.xlane.xlu0 %6888
    %6890 = vadd.xlane.f32.xlu0 %v6485
    %v6891 = vpop.xlane.xlu0 %6890
    %6892 = vadd.xlane.f32.xlu0 %v6486
    %v6893 = vpop.xlane.xlu0 %6892
    %6894 = vadd.xlane.f32.xlu0 %v6487
    %v6895 = vpop.xlane.xlu0 %6894
    %6896 = vadd.xlane.f32.xlu0 %v6488
    %v6897 = vpop.xlane.xlu0 %6896
    %6898 = vadd.xlane.f32.xlu0 %v6489
    %v6899 = vpop.xlane.xlu0 %6898
    %6900 = vadd.xlane.f32.xlu0 %v6490
    %v6901 = vpop.xlane.xlu0 %6900
    %6902 = vadd.xlane.f32.xlu0 %v6491
    %v6903 = vpop.xlane.xlu0 %6902
    %6904 = vadd.xlane.f32.xlu0 %v6492
    %v6905 = vpop.xlane.xlu0 %6904
    %6906 = vadd.xlane.f32.xlu0 %v6493
    %v6907 = vpop.xlane.xlu0 %6906
    %6908 = vadd.xlane.f32.xlu0 %v6494
    %v6909 = vpop.xlane.xlu0 %6908
    %6910 = vadd.xlane.f32.xlu0 %v6495
    %v6911 = vpop.xlane.xlu0 %6910
    %6912 = vadd.xlane.f32.xlu0 %v6496
    %v6913 = vpop.xlane.xlu0 %6912
    %6914 = vadd.xlane.f32.xlu0 %v6497
    %v6915 = vpop.xlane.xlu0 %6914
    %6916 = vadd.xlane.f32.xlu0 %v6498
    %v6917 = vpop.xlane.xlu0 %6916
    %6918 = vadd.xlane.f32.xlu0 %v6499
    %v6919 = vpop.xlane.xlu0 %6918
    %6920 = vadd.xlane.f32.xlu0 %v6500
    %v6921 = vpop.xlane.xlu0 %6920
    %6922 = vadd.xlane.f32.xlu0 %v6501
    %v6923 = vpop.xlane.xlu0 %6922
    %6924 = vadd.xlane.f32.xlu0 %v6502
    %v6925 = vpop.xlane.xlu0 %6924
    %6926 = vadd.xlane.f32.xlu0 %v6503
    %v6927 = vpop.xlane.xlu0 %6926
    %6928 = vadd.xlane.f32.xlu0 %v6504
    %v6929 = vpop.xlane.xlu0 %6928
    %6930 = vadd.xlane.f32.xlu0 %v6505
    %v6931 = vpop.xlane.xlu0 %6930
    %6932 = vadd.xlane.f32.xlu0 %v6506
    %v6933 = vpop.xlane.xlu0 %6932
    %6934 = vadd.xlane.f32.xlu0 %v6507
    %v6935 = vpop.xlane.xlu0 %6934
    %6936 = vadd.xlane.f32.xlu0 %v6508
    %v6937 = vpop.xlane.xlu0 %6936
    %6938 = vadd.xlane.f32.xlu0 %v6509
    %v6939 = vpop.xlane.xlu0 %6938
    %6940 = vadd.xlane.f32.xlu0 %v6510
    %v6941 = vpop.xlane.xlu0 %6940
    %6942 = vadd.xlane.f32.xlu0 %v6511
    %v6943 = vpop.xlane.xlu0 %6942
    %6944 = vadd.xlane.f32.xlu0 %v6512
    %v6945 = vpop.xlane.xlu0 %6944
    %6946 = vadd.xlane.f32.xlu0 %v6513
    %v6947 = vpop.xlane.xlu0 %6946
    %6948 = vadd.xlane.f32.xlu0 %v6514
    %v6949 = vpop.xlane.xlu0 %6948
    %6950 = vadd.xlane.f32.xlu0 %v6515
    %v6951 = vpop.xlane.xlu0 %6950
    %6952 = vadd.xlane.f32.xlu0 %v6516
    %v6953 = vpop.xlane.xlu0 %6952
    %6954 = vadd.xlane.f32.xlu0 %v6517
    %v6955 = vpop.xlane.xlu0 %6954
    %6956 = vadd.xlane.f32.xlu0 %v6518
    %v6957 = vpop.xlane.xlu0 %6956
    %6958 = vadd.xlane.f32.xlu0 %v6519
    %v6959 = vpop.xlane.xlu0 %6958
    %6960 = vadd.xlane.f32.xlu0 %v6520
    %v6961 = vpop.xlane.xlu0 %6960
    %6962 = vadd.xlane.f32.xlu0 %v6521
    %v6963 = vpop.xlane.xlu0 %6962
    %6964 = vadd.xlane.f32.xlu0 %v6522
    %v6965 = vpop.xlane.xlu0 %6964
    %6966 = vadd.xlane.f32.xlu0 %v6523
    %v6967 = vpop.xlane.xlu0 %6966
    %6968 = vadd.xlane.f32.xlu0 %v6524
    %v6969 = vpop.xlane.xlu0 %6968
    %6970 = vadd.xlane.f32.xlu0 %v6525
    %v6971 = vpop.xlane.xlu0 %6970
    %6972 = vadd.xlane.f32.xlu0 %v6526
    %v6973 = vpop.xlane.xlu0 %6972
    %6974 = vadd.xlane.f32.xlu0 %v6527
    %v6975 = vpop.xlane.xlu0 %6974
    %6976 = vadd.xlane.f32.xlu0 %v6528
    %v6977 = vpop.xlane.xlu0 %6976
    %6978 = vadd.xlane.f32.xlu0 %v6529
    %v6979 = vpop.xlane.xlu0 %6978
    %6980 = vadd.xlane.f32.xlu0 %v6530
    %v6981 = vpop.xlane.xlu0 %6980
    %6982 = vadd.xlane.f32.xlu0 %v6531
    %v6983 = vpop.xlane.xlu0 %6982
    %6984 = vadd.xlane.f32.xlu0 %v6532
    %v6985 = vpop.xlane.xlu0 %6984
    %6986 = vadd.xlane.f32.xlu0 %v6533
    %v6987 = vpop.xlane.xlu0 %6986
    %6988 = vadd.xlane.f32.xlu0 %v6534
    %v6989 = vpop.xlane.xlu0 %6988
    %6990 = vadd.xlane.f32.xlu0 %v6535
    %v6991 = vpop.xlane.xlu0 %6990
    %6992 = vadd.xlane.f32.xlu0 %v6536
    %v6993 = vpop.xlane.xlu0 %6992
    %6994 = vadd.xlane.f32.xlu0 %v6537
    %v6995 = vpop.xlane.xlu0 %6994
    %6996 = vadd.xlane.f32.xlu0 %v6538
    %v6997 = vpop.xlane.xlu0 %6996
    %6998 = vadd.xlane.f32.xlu0 %v6539
    %v6999 = vpop.xlane.xlu0 %6998
    %7000 = vadd.xlane.f32.xlu0 %v6540
    %v7001 = vpop.xlane.xlu0 %7000
    %7002 = vadd.xlane.f32.xlu0 %v6541
    %v7003 = vpop.xlane.xlu0 %7002
    %7004 = vadd.xlane.f32.xlu0 %v6542
    %v7005 = vpop.xlane.xlu0 %7004
    %7006 = vadd.xlane.f32.xlu0 %v6543
    %v7007 = vpop.xlane.xlu0 %7006
    %7008 = vadd.xlane.f32.xlu0 %v6544
    %v7009 = vpop.xlane.xlu0 %7008
    %7010 = vadd.xlane.f32.xlu0 %v6545
    %v7011 = vpop.xlane.xlu0 %7010
    %7012 = vadd.xlane.f32.xlu0 %v6546
    %v7013 = vpop.xlane.xlu0 %7012
    %7014 = vadd.xlane.f32.xlu0 %v6547
    %v7015 = vpop.xlane.xlu0 %7014
    %7016 = vadd.xlane.f32.xlu0 %v6548
    %v7017 = vpop.xlane.xlu0 %7016
    %7018 = vadd.xlane.f32.xlu0 %v6549
    %v7019 = vpop.xlane.xlu0 %7018
    %7020 = vadd.xlane.f32.xlu0 %v6550
    %v7021 = vpop.xlane.xlu0 %7020
    %7022 = vadd.xlane.f32.xlu0 %v6551
    %v7023 = vpop.xlane.xlu0 %7022
    %7024 = vadd.xlane.f32.xlu0 %v6552
    %v7025 = vpop.xlane.xlu0 %7024
    %7026 = vadd.xlane.f32.xlu0 %v6553
    %v7027 = vpop.xlane.xlu0 %7026
    %7028 = vadd.xlane.f32.xlu0 %v6554
    %v7029 = vpop.xlane.xlu0 %7028
    %7030 = vadd.xlane.f32.xlu0 %v6555
    %v7031 = vpop.xlane.xlu0 %7030
    %7032 = vadd.xlane.f32.xlu0 %v6556
    %v7033 = vpop.xlane.xlu0 %7032
    %7034 = vadd.xlane.f32.xlu0 %v6557
    %v7035 = vpop.xlane.xlu0 %7034
    %7036 = vadd.xlane.f32.xlu0 %v6558
    %v7037 = vpop.xlane.xlu0 %7036
    %7038 = vadd.xlane.f32.xlu0 %v6559
    %v7039 = vpop.xlane.xlu0 %7038
    %7040 = vadd.xlane.f32.xlu0 %v6560
    %v7041 = vpop.xlane.xlu0 %7040
    %7042 = vadd.xlane.f32.xlu0 %v6561
    %v7043 = vpop.xlane.xlu0 %7042
    %7044 = vadd.xlane.f32.xlu0 %v6562
    %v7045 = vpop.xlane.xlu0 %7044
    %7046 = vadd.xlane.f32.xlu0 %v6563
    %v7047 = vpop.xlane.xlu0 %7046
    %7048 = vadd.xlane.f32.xlu0 %v6564
    %v7049 = vpop.xlane.xlu0 %7048
    %7050 = vadd.xlane.f32.xlu0 %v6565
    %v7051 = vpop.xlane.xlu0 %7050
    %7052 = vadd.xlane.f32.xlu0 %v6566
    %v7053 = vpop.xlane.xlu0 %7052
    %7054 = vadd.xlane.f32.xlu0 %v6567
    %v7055 = vpop.xlane.xlu0 %7054
    %7056 = vadd.xlane.f32.xlu0 %v6568
    %v7057 = vpop.xlane.xlu0 %7056
    %7058 = vadd.xlane.f32.xlu0 %v6569
    %v7059 = vpop.xlane.xlu0 %7058
    %7060 = vadd.xlane.f32.xlu0 %v6570
    %v7061 = vpop.xlane.xlu0 %7060
    %7062 = vadd.xlane.f32.xlu0 %v6571
    %v7063 = vpop.xlane.xlu0 %7062
    %7064 = vadd.xlane.f32.xlu0 %v6572
    %v7065 = vpop.xlane.xlu0 %7064
    %7066 = vadd.xlane.f32.xlu0 %v6573
    %v7067 = vpop.xlane.xlu0 %7066
    %7068 = vadd.xlane.f32.xlu0 %v6574
    %v7069 = vpop.xlane.xlu0 %7068
    %7070 = vadd.xlane.f32.xlu0 %v6575
    %v7071 = vpop.xlane.xlu0 %7070
    %7072 = vadd.xlane.f32.xlu0 %v6576
    %v7073 = vpop.xlane.xlu0 %7072
    %7074 = vadd.xlane.f32.xlu0 %v6577
    %v7075 = vpop.xlane.xlu0 %7074
    %7076 = vadd.xlane.f32.xlu0 %v6578
    %v7077 = vpop.xlane.xlu0 %7076
    %7078 = vadd.xlane.f32.xlu0 %v6579
    %v7079 = vpop.xlane.xlu0 %7078
    %7080 = vadd.xlane.f32.xlu0 %v6580
    %v7081 = vpop.xlane.xlu0 %7080
    %7082 = vadd.xlane.f32.xlu0 %v6581
    %v7083 = vpop.xlane.xlu0 %7082
    %7084 = vadd.xlane.f32.xlu0 %v6582
    %v7085 = vpop.xlane.xlu0 %7084
    %7086 = vadd.xlane.f32.xlu0 %v6583
    %v7087 = vpop.xlane.xlu0 %7086
    %7088 = vadd.xlane.f32.xlu0 %v6584
    %v7089 = vpop.xlane.xlu0 %7088
    %7090 = vadd.xlane.f32.xlu0 %v6585
    %v7091 = vpop.xlane.xlu0 %7090
    %7092 = vadd.xlane.f32.xlu0 %v6586
    %v7093 = vpop.xlane.xlu0 %7092
    %7094 = vadd.xlane.f32.xlu0 %v6587
    %v7095 = vpop.xlane.xlu0 %7094
    %7096 = vadd.xlane.f32.xlu0 %v6588
    %v7097 = vpop.xlane.xlu0 %7096
    %7098 = vadd.xlane.f32.xlu0 %v6589
    %v7099 = vpop.xlane.xlu0 %7098
    %7100 = vadd.xlane.f32.xlu0 %v6590
    %v7101 = vpop.xlane.xlu0 %7100
    %7102 = vadd.xlane.f32.xlu0 %v6591
    %v7103 = vpop.xlane.xlu0 %7102
    %v7104 = vsub.f32 %v5570, %v6593
    %v7105 = vsub.f32 %v5573, %v6595
    %v7106 = vsub.f32 %v5576, %v6597
    %v7107 = vsub.f32 %v5579, %v6599
    %v7108 = vsub.f32 %v5582, %v6601
    %v7109 = vsub.f32 %v5585, %v6603
    %v7110 = vsub.f32 %v5588, %v6605
    %v7111 = vsub.f32 %v5591, %v6607
    %v7112 = vsub.f32 %v5594, %v6609
    %v7113 = vsub.f32 %v5597, %v6611
    %v7114 = vsub.f32 %v5600, %v6613
    %v7115 = vsub.f32 %v5603, %v6615
    %v7116 = vsub.f32 %v5606, %v6617
    %v7117 = vsub.f32 %v5609, %v6619
    %v7118 = vsub.f32 %v5612, %v6621
    %v7119 = vsub.f32 %v5615, %v6623
    %v7120 = vsub.f32 %v5618, %v6625
    %v7121 = vsub.f32 %v5621, %v6627
    %v7122 = vsub.f32 %v5624, %v6629
    %v7123 = vsub.f32 %v5627, %v6631
    %v7124 = vsub.f32 %v5630, %v6633
    %v7125 = vsub.f32 %v5633, %v6635
    %v7126 = vsub.f32 %v5636, %v6637
    %v7127 = vsub.f32 %v5639, %v6639
    %v7128 = vsub.f32 %v5642, %v6641
    %v7129 = vsub.f32 %v5645, %v6643
    %v7130 = vsub.f32 %v5648, %v6645
    %v7131 = vsub.f32 %v5651, %v6647
    %v7132 = vsub.f32 %v5654, %v6649
    %v7133 = vsub.f32 %v5657, %v6651
    %v7134 = vsub.f32 %v5660, %v6653
    %v7135 = vsub.f32 %v5663, %v6655
    %v7136 = vsub.f32 %v5666, %v6657
    %v7137 = vsub.f32 %v5669, %v6659
    %v7138 = vsub.f32 %v5672, %v6661
    %v7139 = vsub.f32 %v5675, %v6663
    %v7140 = vsub.f32 %v5678, %v6665
    %v7141 = vsub.f32 %v5681, %v6667
    %v7142 = vsub.f32 %v5684, %v6669
    %v7143 = vsub.f32 %v5687, %v6671
    %v7144 = vsub.f32 %v5690, %v6673
    %v7145 = vsub.f32 %v5693, %v6675
    %v7146 = vsub.f32 %v5696, %v6677
    %v7147 = vsub.f32 %v5699, %v6679
    %v7148 = vsub.f32 %v5702, %v6681
    %v7149 = vsub.f32 %v5705, %v6683
    %v7150 = vsub.f32 %v5708, %v6685
    %v7151 = vsub.f32 %v5711, %v6687
    %v7152 = vsub.f32 %v5714, %v6689
    %v7153 = vsub.f32 %v5717, %v6691
    %v7154 = vsub.f32 %v5720, %v6693
    %v7155 = vsub.f32 %v5723, %v6695
    %v7156 = vsub.f32 %v5726, %v6697
    %v7157 = vsub.f32 %v5729, %v6699
    %v7158 = vsub.f32 %v5732, %v6701
    %v7159 = vsub.f32 %v5735, %v6703
    %v7160 = vsub.f32 %v5738, %v6705
    %v7161 = vsub.f32 %v5741, %v6707
    %v7162 = vsub.f32 %v5744, %v6709
    %v7163 = vsub.f32 %v5747, %v6711
    %v7164 = vsub.f32 %v5750, %v6713
    %v7165 = vsub.f32 %v5753, %v6715
    %v7166 = vsub.f32 %v5756, %v6717
    %v7167 = vsub.f32 %v5759, %v6719
    %v7168 = vsub.f32 %v5762, %v6721
    %v7169 = vsub.f32 %v5765, %v6723
    %v7170 = vsub.f32 %v5768, %v6725
    %v7171 = vsub.f32 %v5771, %v6727
    %v7172 = vsub.f32 %v5774, %v6729
    %v7173 = vsub.f32 %v5777, %v6731
    %v7174 = vsub.f32 %v5780, %v6733
    %v7175 = vsub.f32 %v5783, %v6735
    %v7176 = vsub.f32 %v5786, %v6737
    %v7177 = vsub.f32 %v5789, %v6739
    %v7178 = vsub.f32 %v5792, %v6741
    %v7179 = vsub.f32 %v5795, %v6743
    %v7180 = vsub.f32 %v5798, %v6745
    %v7181 = vsub.f32 %v5801, %v6747
    %v7182 = vsub.f32 %v5804, %v6749
    %v7183 = vsub.f32 %v5807, %v6751
    %v7184 = vsub.f32 %v5810, %v6753
    %v7185 = vsub.f32 %v5813, %v6755
    %v7186 = vsub.f32 %v5816, %v6757
    %v7187 = vsub.f32 %v5819, %v6759
    %v7188 = vsub.f32 %v5822, %v6761
    %v7189 = vsub.f32 %v5825, %v6763
    %v7190 = vsub.f32 %v5828, %v6765
    %v7191 = vsub.f32 %v5831, %v6767
    %v7192 = vsub.f32 %v5834, %v6769
    %v7193 = vsub.f32 %v5837, %v6771
    %v7194 = vsub.f32 %v5840, %v6773
    %v7195 = vsub.f32 %v5843, %v6775
    %v7196 = vsub.f32 %v5846, %v6777
    %v7197 = vsub.f32 %v5849, %v6779
    %v7198 = vsub.f32 %v5852, %v6781
    %v7199 = vsub.f32 %v5855, %v6783
    %v7200 = vsub.f32 %v5858, %v6785
    %v7201 = vsub.f32 %v5861, %v6787
    %v7202 = vsub.f32 %v5864, %v6789
    %v7203 = vsub.f32 %v5867, %v6791
    %v7204 = vsub.f32 %v5870, %v6793
    %v7205 = vsub.f32 %v5873, %v6795
    %v7206 = vsub.f32 %v5876, %v6797
    %v7207 = vsub.f32 %v5879, %v6799
    %v7208 = vsub.f32 %v5882, %v6801
    %v7209 = vsub.f32 %v5885, %v6803
    %v7210 = vsub.f32 %v5888, %v6805
    %v7211 = vsub.f32 %v5891, %v6807
    %v7212 = vsub.f32 %v5894, %v6809
    %v7213 = vsub.f32 %v5897, %v6811
    %v7214 = vsub.f32 %v5900, %v6813
    %v7215 = vsub.f32 %v5903, %v6815
    %v7216 = vsub.f32 %v5906, %v6817
    %v7217 = vsub.f32 %v5909, %v6819
    %v7218 = vsub.f32 %v5912, %v6821
    %v7219 = vsub.f32 %v5915, %v6823
    %v7220 = vsub.f32 %v5918, %v6825
    %v7221 = vsub.f32 %v5921, %v6827
    %v7222 = vsub.f32 %v5924, %v6829
    %v7223 = vsub.f32 %v5927, %v6831
    %v7224 = vsub.f32 %v5930, %v6833
    %v7225 = vsub.f32 %v5933, %v6835
    %v7226 = vsub.f32 %v5936, %v6837
    %v7227 = vsub.f32 %v5939, %v6839
    %v7228 = vsub.f32 %v5942, %v6841
    %v7229 = vsub.f32 %v5945, %v6843
    %v7230 = vsub.f32 %v5948, %v6845
    %v7231 = vsub.f32 %v5951, %v6847
    %v7232 = vsub.f32 %v5954, %v6849
    %v7233 = vsub.f32 %v5957, %v6851
    %v7234 = vsub.f32 %v5960, %v6853
    %v7235 = vsub.f32 %v5963, %v6855
    %v7236 = vsub.f32 %v5966, %v6857
    %v7237 = vsub.f32 %v5969, %v6859
    %v7238 = vsub.f32 %v5972, %v6861
    %v7239 = vsub.f32 %v5975, %v6863
    %v7240 = vsub.f32 %v5978, %v6865
    %v7241 = vsub.f32 %v5981, %v6867
    %v7242 = vsub.f32 %v5984, %v6869
    %v7243 = vsub.f32 %v5987, %v6871
    %v7244 = vsub.f32 %v5990, %v6873
    %v7245 = vsub.f32 %v5993, %v6875
    %v7246 = vsub.f32 %v5996, %v6877
    %v7247 = vsub.f32 %v5999, %v6879
    %v7248 = vsub.f32 %v6002, %v6881
    %v7249 = vsub.f32 %v6005, %v6883
    %v7250 = vsub.f32 %v6008, %v6885
    %v7251 = vsub.f32 %v6011, %v6887
    %v7252 = vsub.f32 %v6014, %v6889
    %v7253 = vsub.f32 %v6017, %v6891
    %v7254 = vsub.f32 %v6020, %v6893
    %v7255 = vsub.f32 %v6023, %v6895
    %v7256 = vsub.f32 %v6026, %v6897
    %v7257 = vsub.f32 %v6029, %v6899
    %v7258 = vsub.f32 %v6032, %v6901
    %v7259 = vsub.f32 %v6035, %v6903
    %v7260 = vsub.f32 %v6038, %v6905
    %v7261 = vsub.f32 %v6041, %v6907
    %v7262 = vsub.f32 %v6044, %v6909
    %v7263 = vsub.f32 %v6047, %v6911
    %v7264 = vsub.f32 %v6050, %v6913
    %v7265 = vsub.f32 %v6053, %v6915
    %v7266 = vsub.f32 %v6056, %v6917
    %v7267 = vsub.f32 %v6059, %v6919
    %v7268 = vsub.f32 %v6062, %v6921
    %v7269 = vsub.f32 %v6065, %v6923
    %v7270 = vsub.f32 %v6068, %v6925
    %v7271 = vsub.f32 %v6071, %v6927
    %v7272 = vsub.f32 %v6074, %v6929
    %v7273 = vsub.f32 %v6077, %v6931
    %v7274 = vsub.f32 %v6080, %v6933
    %v7275 = vsub.f32 %v6083, %v6935
    %v7276 = vsub.f32 %v6086, %v6937
    %v7277 = vsub.f32 %v6089, %v6939
    %v7278 = vsub.f32 %v6092, %v6941
    %v7279 = vsub.f32 %v6095, %v6943
    %v7280 = vsub.f32 %v6098, %v6945
    %v7281 = vsub.f32 %v6101, %v6947
    %v7282 = vsub.f32 %v6104, %v6949
    %v7283 = vsub.f32 %v6107, %v6951
    %v7284 = vsub.f32 %v6110, %v6953
    %v7285 = vsub.f32 %v6113, %v6955
    %v7286 = vsub.f32 %v6116, %v6957
    %v7287 = vsub.f32 %v6119, %v6959
    %v7288 = vsub.f32 %v6122, %v6961
    %v7289 = vsub.f32 %v6125, %v6963
    %v7290 = vsub.f32 %v6128, %v6965
    %v7291 = vsub.f32 %v6131, %v6967
    %v7292 = vsub.f32 %v6134, %v6969
    %v7293 = vsub.f32 %v6137, %v6971
    %v7294 = vsub.f32 %v6140, %v6973
    %v7295 = vsub.f32 %v6143, %v6975
    %v7296 = vsub.f32 %v6146, %v6977
    %v7297 = vsub.f32 %v6149, %v6979
    %v7298 = vsub.f32 %v6152, %v6981
    %v7299 = vsub.f32 %v6155, %v6983
    %v7300 = vsub.f32 %v6158, %v6985
    %v7301 = vsub.f32 %v6161, %v6987
    %v7302 = vsub.f32 %v6164, %v6989
    %v7303 = vsub.f32 %v6167, %v6991
    %v7304 = vsub.f32 %v6170, %v6993
    %v7305 = vsub.f32 %v6173, %v6995
    %v7306 = vsub.f32 %v6176, %v6997
    %v7307 = vsub.f32 %v6179, %v6999
    %v7308 = vsub.f32 %v6182, %v7001
    %v7309 = vsub.f32 %v6185, %v7003
    %v7310 = vsub.f32 %v6188, %v7005
    %v7311 = vsub.f32 %v6191, %v7007
    %v7312 = vsub.f32 %v6194, %v7009
    %v7313 = vsub.f32 %v6197, %v7011
    %v7314 = vsub.f32 %v6200, %v7013
    %v7315 = vsub.f32 %v6203, %v7015
    %v7316 = vsub.f32 %v6206, %v7017
    %v7317 = vsub.f32 %v6209, %v7019
    %v7318 = vsub.f32 %v6212, %v7021
    %v7319 = vsub.f32 %v6215, %v7023
    %v7320 = vsub.f32 %v6218, %v7025
    %v7321 = vsub.f32 %v6221, %v7027
    %v7322 = vsub.f32 %v6224, %v7029
    %v7323 = vsub.f32 %v6227, %v7031
    %v7324 = vsub.f32 %v6230, %v7033
    %v7325 = vsub.f32 %v6233, %v7035
    %v7326 = vsub.f32 %v6236, %v7037
    %v7327 = vsub.f32 %v6239, %v7039
    %v7328 = vsub.f32 %v6242, %v7041
    %v7329 = vsub.f32 %v6245, %v7043
    %v7330 = vsub.f32 %v6248, %v7045
    %v7331 = vsub.f32 %v6251, %v7047
    %v7332 = vsub.f32 %v6254, %v7049
    %v7333 = vsub.f32 %v6257, %v7051
    %v7334 = vsub.f32 %v6260, %v7053
    %v7335 = vsub.f32 %v6263, %v7055
    %v7336 = vsub.f32 %v6266, %v7057
    %v7337 = vsub.f32 %v6269, %v7059
    %v7338 = vsub.f32 %v6272, %v7061
    %v7339 = vsub.f32 %v6275, %v7063
    %v7340 = vsub.f32 %v6278, %v7065
    %v7341 = vsub.f32 %v6281, %v7067
    %v7342 = vsub.f32 %v6284, %v7069
    %v7343 = vsub.f32 %v6287, %v7071
    %v7344 = vsub.f32 %v6290, %v7073
    %v7345 = vsub.f32 %v6293, %v7075
    %v7346 = vsub.f32 %v6296, %v7077
    %v7347 = vsub.f32 %v6299, %v7079
    %v7348 = vsub.f32 %v6302, %v7081
    %v7349 = vsub.f32 %v6305, %v7083
    %v7350 = vsub.f32 %v6308, %v7085
    %v7351 = vsub.f32 %v6311, %v7087
    %v7352 = vsub.f32 %v6314, %v7089
    %v7353 = vsub.f32 %v6317, %v7091
    %v7354 = vsub.f32 %v6320, %v7093
    %v7355 = vsub.f32 %v6323, %v7095
    %v7356 = vsub.f32 %v6326, %v7097
    %v7357 = vsub.f32 %v6329, %v7099
    %v7358 = vsub.f32 %v6332, %v7101
    %v7359 = vsub.f32 %v6335, %v7103
    %v7360 = vmul.f32 %v7104, 0.5
    %v7361 = vmul.f32 %v7105, 0.5
    %v7362 = vmul.f32 %v7106, 0.5
    %v7363 = vmul.f32 %v7107, 0.5
    %v7364 = vmul.f32 %v7108, 0.5
    %v7365 = vmul.f32 %v7109, 0.5
    %v7366 = vmul.f32 %v7110, 0.5
    %v7367 = vmul.f32 %v7111, 0.5
    %v7368 = vmul.f32 %v7112, 0.5
    %v7369 = vmul.f32 %v7113, 0.5
    %v7370 = vmul.f32 %v7114, 0.5
    %v7371 = vmul.f32 %v7115, 0.5
    %v7372 = vmul.f32 %v7116, 0.5
    %v7373 = vmul.f32 %v7117, 0.5
    %v7374 = vmul.f32 %v7118, 0.5
    %v7375 = vmul.f32 %v7119, 0.5
    %v7376 = vmul.f32 %v7120, 0.5
    %v7377 = vmul.f32 %v7121, 0.5
    %v7378 = vmul.f32 %v7122, 0.5
    %v7379 = vmul.f32 %v7123, 0.5
    %v7380 = vmul.f32 %v7124, 0.5
    %v7381 = vmul.f32 %v7125, 0.5
    %v7382 = vmul.f32 %v7126, 0.5
    %v7383 = vmul.f32 %v7127, 0.5
    %v7384 = vmul.f32 %v7128, 0.5
    %v7385 = vmul.f32 %v7129, 0.5
    %v7386 = vmul.f32 %v7130, 0.5
    %v7387 = vmul.f32 %v7131, 0.5
    %v7388 = vmul.f32 %v7132, 0.5
    %v7389 = vmul.f32 %v7133, 0.5
    %v7390 = vmul.f32 %v7134, 0.5
    %v7391 = vmul.f32 %v7135, 0.5
    %v7392 = vmul.f32 %v7136, 0.5
    %v7393 = vmul.f32 %v7137, 0.5
    %v7394 = vmul.f32 %v7138, 0.5
    %v7395 = vmul.f32 %v7139, 0.5
    %v7396 = vmul.f32 %v7140, 0.5
    %v7397 = vmul.f32 %v7141, 0.5
    %v7398 = vmul.f32 %v7142, 0.5
    %v7399 = vmul.f32 %v7143, 0.5
    %v7400 = vmul.f32 %v7144, 0.5
    %v7401 = vmul.f32 %v7145, 0.5
    %v7402 = vmul.f32 %v7146, 0.5
    %v7403 = vmul.f32 %v7147, 0.5
    %v7404 = vmul.f32 %v7148, 0.5
    %v7405 = vmul.f32 %v7149, 0.5
    %v7406 = vmul.f32 %v7150, 0.5
    %v7407 = vmul.f32 %v7151, 0.5
    %v7408 = vmul.f32 %v7152, 0.5
    %v7409 = vmul.f32 %v7153, 0.5
    %v7410 = vmul.f32 %v7154, 0.5
    %v7411 = vmul.f32 %v7155, 0.5
    %v7412 = vmul.f32 %v7156, 0.5
    %v7413 = vmul.f32 %v7157, 0.5
    %v7414 = vmul.f32 %v7158, 0.5
    %v7415 = vmul.f32 %v7159, 0.5
    %v7416 = vmul.f32 %v7160, 0.5
    %v7417 = vmul.f32 %v7161, 0.5
    %v7418 = vmul.f32 %v7162, 0.5
    %v7419 = vmul.f32 %v7163, 0.5
    %v7420 = vmul.f32 %v7164, 0.5
    %v7421 = vmul.f32 %v7165, 0.5
    %v7422 = vmul.f32 %v7166, 0.5
    %v7423 = vmul.f32 %v7167, 0.5
    %v7424 = vmul.f32 %v7168, 0.5
    %v7425 = vmul.f32 %v7169, 0.5
    %v7426 = vmul.f32 %v7170, 0.5
    %v7427 = vmul.f32 %v7171, 0.5
    %v7428 = vmul.f32 %v7172, 0.5
    %v7429 = vmul.f32 %v7173, 0.5
    %v7430 = vmul.f32 %v7174, 0.5
    %v7431 = vmul.f32 %v7175, 0.5
    %v7432 = vmul.f32 %v7176, 0.5
    %v7433 = vmul.f32 %v7177, 0.5
    %v7434 = vmul.f32 %v7178, 0.5
    %v7435 = vmul.f32 %v7179, 0.5
    %v7436 = vmul.f32 %v7180, 0.5
    %v7437 = vmul.f32 %v7181, 0.5
    %v7438 = vmul.f32 %v7182, 0.5
    %v7439 = vmul.f32 %v7183, 0.5
    %v7440 = vmul.f32 %v7184, 0.5
    %v7441 = vmul.f32 %v7185, 0.5
    %v7442 = vmul.f32 %v7186, 0.5
    %v7443 = vmul.f32 %v7187, 0.5
    %v7444 = vmul.f32 %v7188, 0.5
    %v7445 = vmul.f32 %v7189, 0.5
    %v7446 = vmul.f32 %v7190, 0.5
    %v7447 = vmul.f32 %v7191, 0.5
    %v7448 = vmul.f32 %v7192, 0.5
    %v7449 = vmul.f32 %v7193, 0.5
    %v7450 = vmul.f32 %v7194, 0.5
    %v7451 = vmul.f32 %v7195, 0.5
    %v7452 = vmul.f32 %v7196, 0.5
    %v7453 = vmul.f32 %v7197, 0.5
    %v7454 = vmul.f32 %v7198, 0.5
    %v7455 = vmul.f32 %v7199, 0.5
    %v7456 = vmul.f32 %v7200, 0.5
    %v7457 = vmul.f32 %v7201, 0.5
    %v7458 = vmul.f32 %v7202, 0.5
    %v7459 = vmul.f32 %v7203, 0.5
    %v7460 = vmul.f32 %v7204, 0.5
    %v7461 = vmul.f32 %v7205, 0.5
    %v7462 = vmul.f32 %v7206, 0.5
    %v7463 = vmul.f32 %v7207, 0.5
    %v7464 = vmul.f32 %v7208, 0.5
    %v7465 = vmul.f32 %v7209, 0.5
    %v7466 = vmul.f32 %v7210, 0.5
    %v7467 = vmul.f32 %v7211, 0.5
    %v7468 = vmul.f32 %v7212, 0.5
    %v7469 = vmul.f32 %v7213, 0.5
    %v7470 = vmul.f32 %v7214, 0.5
    %v7471 = vmul.f32 %v7215, 0.5
    %v7472 = vmul.f32 %v7216, 0.5
    %v7473 = vmul.f32 %v7217, 0.5
    %v7474 = vmul.f32 %v7218, 0.5
    %v7475 = vmul.f32 %v7219, 0.5
    %v7476 = vmul.f32 %v7220, 0.5
    %v7477 = vmul.f32 %v7221, 0.5
    %v7478 = vmul.f32 %v7222, 0.5
    %v7479 = vmul.f32 %v7223, 0.5
    %v7480 = vmul.f32 %v7224, 0.5
    %v7481 = vmul.f32 %v7225, 0.5
    %v7482 = vmul.f32 %v7226, 0.5
    %v7483 = vmul.f32 %v7227, 0.5
    %v7484 = vmul.f32 %v7228, 0.5
    %v7485 = vmul.f32 %v7229, 0.5
    %v7486 = vmul.f32 %v7230, 0.5
    %v7487 = vmul.f32 %v7231, 0.5
    %v7488 = vmul.f32 %v7232, 0.5
    %v7489 = vmul.f32 %v7233, 0.5
    %v7490 = vmul.f32 %v7234, 0.5
    %v7491 = vmul.f32 %v7235, 0.5
    %v7492 = vmul.f32 %v7236, 0.5
    %v7493 = vmul.f32 %v7237, 0.5
    %v7494 = vmul.f32 %v7238, 0.5
    %v7495 = vmul.f32 %v7239, 0.5
    %v7496 = vmul.f32 %v7240, 0.5
    %v7497 = vmul.f32 %v7241, 0.5
    %v7498 = vmul.f32 %v7242, 0.5
    %v7499 = vmul.f32 %v7243, 0.5
    %v7500 = vmul.f32 %v7244, 0.5
    %v7501 = vmul.f32 %v7245, 0.5
    %v7502 = vmul.f32 %v7246, 0.5
    %v7503 = vmul.f32 %v7247, 0.5
    %v7504 = vmul.f32 %v7248, 0.5
    %v7505 = vmul.f32 %v7249, 0.5
    %v7506 = vmul.f32 %v7250, 0.5
    %v7507 = vmul.f32 %v7251, 0.5
    %v7508 = vmul.f32 %v7252, 0.5
    %v7509 = vmul.f32 %v7253, 0.5
    %v7510 = vmul.f32 %v7254, 0.5
    %v7511 = vmul.f32 %v7255, 0.5
    %v7512 = vmul.f32 %v7256, 0.5
    %v7513 = vmul.f32 %v7257, 0.5
    %v7514 = vmul.f32 %v7258, 0.5
    %v7515 = vmul.f32 %v7259, 0.5
    %v7516 = vmul.f32 %v7260, 0.5
    %v7517 = vmul.f32 %v7261, 0.5
    %v7518 = vmul.f32 %v7262, 0.5
    %v7519 = vmul.f32 %v7263, 0.5
    %v7520 = vmul.f32 %v7264, 0.5
    %v7521 = vmul.f32 %v7265, 0.5
    %v7522 = vmul.f32 %v7266, 0.5
    %v7523 = vmul.f32 %v7267, 0.5
    %v7524 = vmul.f32 %v7268, 0.5
    %v7525 = vmul.f32 %v7269, 0.5
    %v7526 = vmul.f32 %v7270, 0.5
    %v7527 = vmul.f32 %v7271, 0.5
    %v7528 = vmul.f32 %v7272, 0.5
    %v7529 = vmul.f32 %v7273, 0.5
    %v7530 = vmul.f32 %v7274, 0.5
    %v7531 = vmul.f32 %v7275, 0.5
    %v7532 = vmul.f32 %v7276, 0.5
    %v7533 = vmul.f32 %v7277, 0.5
    %v7534 = vmul.f32 %v7278, 0.5
    %v7535 = vmul.f32 %v7279, 0.5
    %v7536 = vmul.f32 %v7280, 0.5
    %v7537 = vmul.f32 %v7281, 0.5
    %v7538 = vmul.f32 %v7282, 0.5
    %v7539 = vmul.f32 %v7283, 0.5
    %v7540 = vmul.f32 %v7284, 0.5
    %v7541 = vmul.f32 %v7285, 0.5
    %v7542 = vmul.f32 %v7286, 0.5
    %v7543 = vmul.f32 %v7287, 0.5
    %v7544 = vmul.f32 %v7288, 0.5
    %v7545 = vmul.f32 %v7289, 0.5
    %v7546 = vmul.f32 %v7290, 0.5
    %v7547 = vmul.f32 %v7291, 0.5
    %v7548 = vmul.f32 %v7292, 0.5
    %v7549 = vmul.f32 %v7293, 0.5
    %v7550 = vmul.f32 %v7294, 0.5
    %v7551 = vmul.f32 %v7295, 0.5
    %v7552 = vmul.f32 %v7296, 0.5
    %v7553 = vmul.f32 %v7297, 0.5
    %v7554 = vmul.f32 %v7298, 0.5
    %v7555 = vmul.f32 %v7299, 0.5
    %v7556 = vmul.f32 %v7300, 0.5
    %v7557 = vmul.f32 %v7301, 0.5
    %v7558 = vmul.f32 %v7302, 0.5
    %v7559 = vmul.f32 %v7303, 0.5
    %v7560 = vmul.f32 %v7304, 0.5
    %v7561 = vmul.f32 %v7305, 0.5
    %v7562 = vmul.f32 %v7306, 0.5
    %v7563 = vmul.f32 %v7307, 0.5
    %v7564 = vmul.f32 %v7308, 0.5
    %v7565 = vmul.f32 %v7309, 0.5
    %v7566 = vmul.f32 %v7310, 0.5
    %v7567 = vmul.f32 %v7311, 0.5
    %v7568 = vmul.f32 %v7312, 0.5
    %v7569 = vmul.f32 %v7313, 0.5
    %v7570 = vmul.f32 %v7314, 0.5
    %v7571 = vmul.f32 %v7315, 0.5
    %v7572 = vmul.f32 %v7316, 0.5
    %v7573 = vmul.f32 %v7317, 0.5
    %v7574 = vmul.f32 %v7318, 0.5
    %v7575 = vmul.f32 %v7319, 0.5
    %v7576 = vmul.f32 %v7320, 0.5
    %v7577 = vmul.f32 %v7321, 0.5
    %v7578 = vmul.f32 %v7322, 0.5
    %v7579 = vmul.f32 %v7323, 0.5
    %v7580 = vmul.f32 %v7324, 0.5
    %v7581 = vmul.f32 %v7325, 0.5
    %v7582 = vmul.f32 %v7326, 0.5
    %v7583 = vmul.f32 %v7327, 0.5
    %v7584 = vmul.f32 %v7328, 0.5
    %v7585 = vmul.f32 %v7329, 0.5
    %v7586 = vmul.f32 %v7330, 0.5
    %v7587 = vmul.f32 %v7331, 0.5
    %v7588 = vmul.f32 %v7332, 0.5
    %v7589 = vmul.f32 %v7333, 0.5
    %v7590 = vmul.f32 %v7334, 0.5
    %v7591 = vmul.f32 %v7335, 0.5
    %v7592 = vmul.f32 %v7336, 0.5
    %v7593 = vmul.f32 %v7337, 0.5
    %v7594 = vmul.f32 %v7338, 0.5
    %v7595 = vmul.f32 %v7339, 0.5
    %v7596 = vmul.f32 %v7340, 0.5
    %v7597 = vmul.f32 %v7341, 0.5
    %v7598 = vmul.f32 %v7342, 0.5
    %v7599 = vmul.f32 %v7343, 0.5
    %v7600 = vmul.f32 %v7344, 0.5
    %v7601 = vmul.f32 %v7345, 0.5
    %v7602 = vmul.f32 %v7346, 0.5
    %v7603 = vmul.f32 %v7347, 0.5
    %v7604 = vmul.f32 %v7348, 0.5
    %v7605 = vmul.f32 %v7349, 0.5
    %v7606 = vmul.f32 %v7350, 0.5
    %v7607 = vmul.f32 %v7351, 0.5
    %v7608 = vmul.f32 %v7352, 0.5
    %v7609 = vmul.f32 %v7353, 0.5
    %v7610 = vmul.f32 %v7354, 0.5
    %v7611 = vmul.f32 %v7355, 0.5
    %v7612 = vmul.f32 %v7356, 0.5
    %v7613 = vmul.f32 %v7357, 0.5
    %v7614 = vmul.f32 %v7358, 0.5
    %v7615 = vmul.f32 %v7359, 0.5
    %v7616 = vadd.f32 %v4031, %v7360
    %v7617 = vadd.f32 %v4032, %v7361
    %v7618 = vadd.f32 %v4033, %v7362
    %v7619 = vadd.f32 %v4034, %v7363
    %v7620 = vadd.f32 %v4035, %v7364
    %v7621 = vadd.f32 %v4036, %v7365
    %v7622 = vadd.f32 %v4037, %v7366
    %v7623 = vadd.f32 %v4038, %v7367
    %v7624 = vadd.f32 %v4039, %v7368
    %v7625 = vadd.f32 %v4040, %v7369
    %v7626 = vadd.f32 %v4041, %v7370
    %v7627 = vadd.f32 %v4042, %v7371
    %v7628 = vadd.f32 %v4043, %v7372
    %v7629 = vadd.f32 %v4044, %v7373
    %v7630 = vadd.f32 %v4045, %v7374
    %v7631 = vadd.f32 %v4046, %v7375
    %v7632 = vadd.f32 %v4047, %v7376
    %v7633 = vadd.f32 %v4048, %v7377
    %v7634 = vadd.f32 %v4049, %v7378
    %v7635 = vadd.f32 %v4050, %v7379
    %v7636 = vadd.f32 %v4051, %v7380
    %v7637 = vadd.f32 %v4052, %v7381
    %v7638 = vadd.f32 %v4053, %v7382
    %v7639 = vadd.f32 %v4054, %v7383
    %v7640 = vadd.f32 %v4055, %v7384
    %v7641 = vadd.f32 %v4056, %v7385
    %v7642 = vadd.f32 %v4057, %v7386
    %v7643 = vadd.f32 %v4058, %v7387
    %v7644 = vadd.f32 %v4059, %v7388
    %v7645 = vadd.f32 %v4060, %v7389
    %v7646 = vadd.f32 %v4061, %v7390
    %v7647 = vadd.f32 %v4062, %v7391
    %v7648 = vadd.f32 %v4063, %v7392
    %v7649 = vadd.f32 %v4064, %v7393
    %v7650 = vadd.f32 %v4065, %v7394
    %v7651 = vadd.f32 %v4066, %v7395
    %v7652 = vadd.f32 %v4067, %v7396
    %v7653 = vadd.f32 %v4068, %v7397
    %v7654 = vadd.f32 %v4069, %v7398
    %v7655 = vadd.f32 %v4070, %v7399
    %v7656 = vadd.f32 %v4071, %v7400
    %v7657 = vadd.f32 %v4072, %v7401
    %v7658 = vadd.f32 %v4073, %v7402
    %v7659 = vadd.f32 %v4074, %v7403
    %v7660 = vadd.f32 %v4075, %v7404
    %v7661 = vadd.f32 %v4076, %v7405
    %v7662 = vadd.f32 %v4077, %v7406
    %v7663 = vadd.f32 %v4078, %v7407
    %v7664 = vadd.f32 %v4079, %v7408
    %v7665 = vadd.f32 %v4080, %v7409
    %v7666 = vadd.f32 %v4081, %v7410
    %v7667 = vadd.f32 %v4082, %v7411
    %v7668 = vadd.f32 %v4083, %v7412
    %v7669 = vadd.f32 %v4084, %v7413
    %v7670 = vadd.f32 %v4085, %v7414
    %v7671 = vadd.f32 %v4086, %v7415
    %v7672 = vadd.f32 %v4087, %v7416
    %v7673 = vadd.f32 %v4088, %v7417
    %v7674 = vadd.f32 %v4089, %v7418
    %v7675 = vadd.f32 %v4090, %v7419
    %v7676 = vadd.f32 %v4091, %v7420
    %v7677 = vadd.f32 %v4092, %v7421
    %v7678 = vadd.f32 %v4093, %v7422
    %v7679 = vadd.f32 %v4094, %v7423
    %v7680 = vadd.f32 %v4095, %v7424
    %v7681 = vadd.f32 %v4096, %v7425
    %v7682 = vadd.f32 %v4097, %v7426
    %v7683 = vadd.f32 %v4098, %v7427
    %v7684 = vadd.f32 %v4099, %v7428
    %v7685 = vadd.f32 %v4100, %v7429
    %v7686 = vadd.f32 %v4101, %v7430
    %v7687 = vadd.f32 %v4102, %v7431
    %v7688 = vadd.f32 %v4103, %v7432
    %v7689 = vadd.f32 %v4104, %v7433
    %v7690 = vadd.f32 %v4105, %v7434
    %v7691 = vadd.f32 %v4106, %v7435
    %v7692 = vadd.f32 %v4107, %v7436
    %v7693 = vadd.f32 %v4108, %v7437
    %v7694 = vadd.f32 %v4109, %v7438
    %v7695 = vadd.f32 %v4110, %v7439
    %v7696 = vadd.f32 %v4111, %v7440
    %v7697 = vadd.f32 %v4112, %v7441
    %v7698 = vadd.f32 %v4113, %v7442
    %v7699 = vadd.f32 %v4114, %v7443
    %v7700 = vadd.f32 %v4115, %v7444
    %v7701 = vadd.f32 %v4116, %v7445
    %v7702 = vadd.f32 %v4117, %v7446
    %v7703 = vadd.f32 %v4118, %v7447
    %v7704 = vadd.f32 %v4119, %v7448
    %v7705 = vadd.f32 %v4120, %v7449
    %v7706 = vadd.f32 %v4121, %v7450
    %v7707 = vadd.f32 %v4122, %v7451
    %v7708 = vadd.f32 %v4123, %v7452
    %v7709 = vadd.f32 %v4124, %v7453
    %v7710 = vadd.f32 %v4125, %v7454
    %v7711 = vadd.f32 %v4126, %v7455
    %v7712 = vadd.f32 %v4127, %v7456
    %v7713 = vadd.f32 %v4128, %v7457
    %v7714 = vadd.f32 %v4129, %v7458
    %v7715 = vadd.f32 %v4130, %v7459
    %v7716 = vadd.f32 %v4131, %v7460
    %v7717 = vadd.f32 %v4132, %v7461
    %v7718 = vadd.f32 %v4133, %v7462
    %v7719 = vadd.f32 %v4134, %v7463
    %v7720 = vadd.f32 %v4135, %v7464
    %v7721 = vadd.f32 %v4136, %v7465
    %v7722 = vadd.f32 %v4137, %v7466
    %v7723 = vadd.f32 %v4138, %v7467
    %v7724 = vadd.f32 %v4139, %v7468
    %v7725 = vadd.f32 %v4140, %v7469
    %v7726 = vadd.f32 %v4141, %v7470
    %v7727 = vadd.f32 %v4142, %v7471
    %v7728 = vadd.f32 %v4143, %v7472
    %v7729 = vadd.f32 %v4144, %v7473
    %v7730 = vadd.f32 %v4145, %v7474
    %v7731 = vadd.f32 %v4146, %v7475
    %v7732 = vadd.f32 %v4147, %v7476
    %v7733 = vadd.f32 %v4148, %v7477
    %v7734 = vadd.f32 %v4149, %v7478
    %v7735 = vadd.f32 %v4150, %v7479
    %v7736 = vadd.f32 %v4151, %v7480
    %v7737 = vadd.f32 %v4152, %v7481
    %v7738 = vadd.f32 %v4153, %v7482
    %v7739 = vadd.f32 %v4154, %v7483
    %v7740 = vadd.f32 %v4155, %v7484
    %v7741 = vadd.f32 %v4156, %v7485
    %v7742 = vadd.f32 %v4157, %v7486
    %v7743 = vadd.f32 %v4158, %v7487
    %v7744 = vadd.f32 %v4159, %v7488
    %v7745 = vadd.f32 %v4160, %v7489
    %v7746 = vadd.f32 %v4161, %v7490
    %v7747 = vadd.f32 %v4162, %v7491
    %v7748 = vadd.f32 %v4163, %v7492
    %v7749 = vadd.f32 %v4164, %v7493
    %v7750 = vadd.f32 %v4165, %v7494
    %v7751 = vadd.f32 %v4166, %v7495
    %v7752 = vadd.f32 %v4167, %v7496
    %v7753 = vadd.f32 %v4168, %v7497
    %v7754 = vadd.f32 %v4169, %v7498
    %v7755 = vadd.f32 %v4170, %v7499
    %v7756 = vadd.f32 %v4171, %v7500
    %v7757 = vadd.f32 %v4172, %v7501
    %v7758 = vadd.f32 %v4173, %v7502
    %v7759 = vadd.f32 %v4174, %v7503
    %v7760 = vadd.f32 %v4175, %v7504
    %v7761 = vadd.f32 %v4176, %v7505
    %v7762 = vadd.f32 %v4177, %v7506
    %v7763 = vadd.f32 %v4178, %v7507
    %v7764 = vadd.f32 %v4179, %v7508
    %v7765 = vadd.f32 %v4180, %v7509
    %v7766 = vadd.f32 %v4181, %v7510
    %v7767 = vadd.f32 %v4182, %v7511
    %v7768 = vadd.f32 %v4183, %v7512
    %v7769 = vadd.f32 %v4184, %v7513
    %v7770 = vadd.f32 %v4185, %v7514
    %v7771 = vadd.f32 %v4186, %v7515
    %v7772 = vadd.f32 %v4187, %v7516
    %v7773 = vadd.f32 %v4188, %v7517
    %v7774 = vadd.f32 %v4189, %v7518
    %v7775 = vadd.f32 %v4190, %v7519
    %v7776 = vadd.f32 %v4191, %v7520
    %v7777 = vadd.f32 %v4192, %v7521
    %v7778 = vadd.f32 %v4193, %v7522
    %v7779 = vadd.f32 %v4194, %v7523
    %v7780 = vadd.f32 %v4195, %v7524
    %v7781 = vadd.f32 %v4196, %v7525
    %v7782 = vadd.f32 %v4197, %v7526
    %v7783 = vadd.f32 %v4198, %v7527
    %v7784 = vadd.f32 %v4199, %v7528
    %v7785 = vadd.f32 %v4200, %v7529
    %v7786 = vadd.f32 %v4201, %v7530
    %v7787 = vadd.f32 %v4202, %v7531
    %v7788 = vadd.f32 %v4203, %v7532
    %v7789 = vadd.f32 %v4204, %v7533
    %v7790 = vadd.f32 %v4205, %v7534
    %v7791 = vadd.f32 %v4206, %v7535
    %v7792 = vadd.f32 %v4207, %v7536
    %v7793 = vadd.f32 %v4208, %v7537
    %v7794 = vadd.f32 %v4209, %v7538
    %v7795 = vadd.f32 %v4210, %v7539
    %v7796 = vadd.f32 %v4211, %v7540
    %v7797 = vadd.f32 %v4212, %v7541
    %v7798 = vadd.f32 %v4213, %v7542
    %v7799 = vadd.f32 %v4214, %v7543
    %v7800 = vadd.f32 %v4215, %v7544
    %v7801 = vadd.f32 %v4216, %v7545
    %v7802 = vadd.f32 %v4217, %v7546
    %v7803 = vadd.f32 %v4218, %v7547
    %v7804 = vadd.f32 %v4219, %v7548
    %v7805 = vadd.f32 %v4220, %v7549
    %v7806 = vadd.f32 %v4221, %v7550
    %v7807 = vadd.f32 %v4222, %v7551
    %v7808 = vadd.f32 %v4223, %v7552
    %v7809 = vadd.f32 %v4224, %v7553
    %v7810 = vadd.f32 %v4225, %v7554
    %v7811 = vadd.f32 %v4226, %v7555
    %v7812 = vadd.f32 %v4227, %v7556
    %v7813 = vadd.f32 %v4228, %v7557
    %v7814 = vadd.f32 %v4229, %v7558
    %v7815 = vadd.f32 %v4230, %v7559
    %v7816 = vadd.f32 %v4231, %v7560
    %v7817 = vadd.f32 %v4232, %v7561
    %v7818 = vadd.f32 %v4233, %v7562
    %v7819 = vadd.f32 %v4234, %v7563
    %v7820 = vadd.f32 %v4235, %v7564
    %v7821 = vadd.f32 %v4236, %v7565
    %v7822 = vadd.f32 %v4237, %v7566
    %v7823 = vadd.f32 %v4238, %v7567
    %v7824 = vadd.f32 %v4239, %v7568
    %v7825 = vadd.f32 %v4240, %v7569
    %v7826 = vadd.f32 %v4241, %v7570
    %v7827 = vadd.f32 %v4242, %v7571
    %v7828 = vadd.f32 %v4243, %v7572
    %v7829 = vadd.f32 %v4244, %v7573
    %v7830 = vadd.f32 %v4245, %v7574
    %v7831 = vadd.f32 %v4246, %v7575
    %v7832 = vadd.f32 %v4247, %v7576
    %v7833 = vadd.f32 %v4248, %v7577
    %v7834 = vadd.f32 %v4249, %v7578
    %v7835 = vadd.f32 %v4250, %v7579
    %v7836 = vadd.f32 %v4251, %v7580
    %v7837 = vadd.f32 %v4252, %v7581
    %v7838 = vadd.f32 %v4253, %v7582
    %v7839 = vadd.f32 %v4254, %v7583
    %v7840 = vadd.f32 %v4255, %v7584
    %v7841 = vadd.f32 %v4256, %v7585
    %v7842 = vadd.f32 %v4257, %v7586
    %v7843 = vadd.f32 %v4258, %v7587
    %v7844 = vadd.f32 %v4259, %v7588
    %v7845 = vadd.f32 %v4260, %v7589
    %v7846 = vadd.f32 %v4261, %v7590
    %v7847 = vadd.f32 %v4262, %v7591
    %v7848 = vadd.f32 %v4263, %v7592
    %v7849 = vadd.f32 %v4264, %v7593
    %v7850 = vadd.f32 %v4265, %v7594
    %v7851 = vadd.f32 %v4266, %v7595
    %v7852 = vadd.f32 %v4267, %v7596
    %v7853 = vadd.f32 %v4268, %v7597
    %v7854 = vadd.f32 %v4269, %v7598
    %v7855 = vadd.f32 %v4270, %v7599
    %v7856 = vadd.f32 %v4271, %v7600
    %v7857 = vadd.f32 %v4272, %v7601
    %v7858 = vadd.f32 %v4273, %v7602
    %v7859 = vadd.f32 %v4274, %v7603
    %v7860 = vadd.f32 %v4275, %v7604
    %v7861 = vadd.f32 %v4276, %v7605
    %v7862 = vadd.f32 %v4277, %v7606
    %v7863 = vadd.f32 %v4278, %v7607
    %v7864 = vadd.f32 %v4279, %v7608
    %v7865 = vadd.f32 %v4280, %v7609
    %v7866 = vadd.f32 %v4281, %v7610
    %v7867 = vadd.f32 %v4282, %v7611
    %v7868 = vadd.f32 %v4283, %v7612
    %v7869 = vadd.f32 %v4284, %v7613
    %v7870 = vadd.f32 %v4285, %v7614
    %v7871 = vadd.f32 %v4286, %v7615
    %v7872 = vpack.c.bf16 %v3006, %v3005
    %v7873 = vpack.c.bf16 %v3008, %v3007
    %v7874 = vpack.c.bf16 %v3010, %v3009
    %v7875 = vpack.c.bf16 %v3012, %v3011
    %v7876 = vpack.c.bf16 %v3014, %v3013
    %v7877 = vpack.c.bf16 %v3016, %v3015
    %v7878 = vpack.c.bf16 %v3018, %v3017
    %v7879 = vpack.c.bf16 %v3020, %v3019
    %v7880 = vpack.c.bf16 %v3022, %v3021
    %v7881 = vpack.c.bf16 %v3024, %v3023
    %v7882 = vpack.c.bf16 %v3026, %v3025
    %v7883 = vpack.c.bf16 %v3028, %v3027
    %v7884 = vpack.c.bf16 %v3030, %v3029
    %v7885 = vpack.c.bf16 %v3032, %v3031
    %v7886 = vpack.c.bf16 %v3034, %v3033
    %v7887 = vpack.c.bf16 %v3036, %v3035
    %v7888 = vpack.c.bf16 %v3038, %v3037
    %v7889 = vpack.c.bf16 %v3040, %v3039
    %v7890 = vpack.c.bf16 %v3042, %v3041
    %v7891 = vpack.c.bf16 %v3044, %v3043
    %v7892 = vpack.c.bf16 %v3046, %v3045
    %v7893 = vpack.c.bf16 %v3048, %v3047
    %v7894 = vpack.c.bf16 %v3050, %v3049
    %v7895 = vpack.c.bf16 %v3052, %v3051
    %v7896 = vpack.c.bf16 %v3054, %v3053
    %v7897 = vpack.c.bf16 %v3056, %v3055
    %v7898 = vpack.c.bf16 %v3058, %v3057
    %v7899 = vpack.c.bf16 %v3060, %v3059
    %v7900 = vpack.c.bf16 %v3062, %v3061
    %v7901 = vpack.c.bf16 %v3064, %v3063
    %v7902 = vpack.c.bf16 %v3066, %v3065
    %v7903 = vpack.c.bf16 %v3068, %v3067
    %v7904 = vpack.c.bf16 %v3070, %v3069
    %v7905 = vpack.c.bf16 %v3072, %v3071
    %v7906 = vpack.c.bf16 %v3074, %v3073
    %v7907 = vpack.c.bf16 %v3076, %v3075
    %v7908 = vpack.c.bf16 %v3078, %v3077
    %v7909 = vpack.c.bf16 %v3080, %v3079
    %v7910 = vpack.c.bf16 %v3082, %v3081
    %v7911 = vpack.c.bf16 %v3084, %v3083
    %v7912 = vpack.c.bf16 %v3086, %v3085
    %v7913 = vpack.c.bf16 %v3088, %v3087
    %v7914 = vpack.c.bf16 %v3090, %v3089
    %v7915 = vpack.c.bf16 %v3092, %v3091
    %v7916 = vpack.c.bf16 %v3094, %v3093
    %v7917 = vpack.c.bf16 %v3096, %v3095
    %v7918 = vpack.c.bf16 %v3098, %v3097
    %v7919 = vpack.c.bf16 %v3100, %v3099
    %v7920 = vpack.c.bf16 %v3102, %v3101
    %v7921 = vpack.c.bf16 %v3104, %v3103
    %v7922 = vpack.c.bf16 %v3106, %v3105
    %v7923 = vpack.c.bf16 %v3108, %v3107
    %v7924 = vpack.c.bf16 %v3110, %v3109
    %v7925 = vpack.c.bf16 %v3112, %v3111
    %v7926 = vpack.c.bf16 %v3114, %v3113
    %v7927 = vpack.c.bf16 %v3116, %v3115
    %v7928 = vpack.c.bf16 %v3118, %v3117
    %v7929 = vpack.c.bf16 %v3120, %v3119
    %v7930 = vpack.c.bf16 %v3122, %v3121
    %v7931 = vpack.c.bf16 %v3124, %v3123
    %v7932 = vpack.c.bf16 %v3126, %v3125
    %v7933 = vpack.c.bf16 %v3128, %v3127
    %v7934 = vpack.c.bf16 %v3130, %v3129
    %v7935 = vpack.c.bf16 %v3132, %v3131
    %v7936 = vpack.c.bf16 %v3134, %v3133
    %v7937 = vpack.c.bf16 %v3136, %v3135
    %v7938 = vpack.c.bf16 %v3138, %v3137
    %v7939 = vpack.c.bf16 %v3140, %v3139
    %v7940 = vpack.c.bf16 %v3142, %v3141
    %v7941 = vpack.c.bf16 %v3144, %v3143
    %v7942 = vpack.c.bf16 %v3146, %v3145
    %v7943 = vpack.c.bf16 %v3148, %v3147
    %v7944 = vpack.c.bf16 %v3150, %v3149
    %v7945 = vpack.c.bf16 %v3152, %v3151
    %v7946 = vpack.c.bf16 %v3154, %v3153
    %v7947 = vpack.c.bf16 %v3156, %v3155
    %v7948 = vpack.c.bf16 %v3158, %v3157
    %v7949 = vpack.c.bf16 %v3160, %v3159
    %v7950 = vpack.c.bf16 %v3162, %v3161
    %v7951 = vpack.c.bf16 %v3164, %v3163
    %v7952 = vpack.c.bf16 %v3166, %v3165
    %v7953 = vpack.c.bf16 %v3168, %v3167
    %v7954 = vpack.c.bf16 %v3170, %v3169
    %v7955 = vpack.c.bf16 %v3172, %v3171
    %v7956 = vpack.c.bf16 %v3174, %v3173
    %v7957 = vpack.c.bf16 %v3176, %v3175
    %v7958 = vpack.c.bf16 %v3178, %v3177
    %v7959 = vpack.c.bf16 %v3180, %v3179
    %v7960 = vpack.c.bf16 %v3182, %v3181
    %v7961 = vpack.c.bf16 %v3184, %v3183
    %v7962 = vpack.c.bf16 %v3186, %v3185
    %v7963 = vpack.c.bf16 %v3188, %v3187
    %v7964 = vpack.c.bf16 %v3190, %v3189
    %v7965 = vpack.c.bf16 %v3192, %v3191
    %v7966 = vpack.c.bf16 %v3194, %v3193
    %v7967 = vpack.c.bf16 %v3196, %v3195
    %v7968 = vpack.c.bf16 %v3198, %v3197
    %v7969 = vpack.c.bf16 %v3200, %v3199
    %v7970 = vpack.c.bf16 %v3202, %v3201
    %v7971 = vpack.c.bf16 %v3204, %v3203
    %v7972 = vpack.c.bf16 %v3206, %v3205
    %v7973 = vpack.c.bf16 %v3208, %v3207
    %v7974 = vpack.c.bf16 %v3210, %v3209
    %v7975 = vpack.c.bf16 %v3212, %v3211
    %v7976 = vpack.c.bf16 %v3214, %v3213
    %v7977 = vpack.c.bf16 %v3216, %v3215
    %v7978 = vpack.c.bf16 %v3218, %v3217
    %v7979 = vpack.c.bf16 %v3220, %v3219
    %v7980 = vpack.c.bf16 %v3222, %v3221
    %v7981 = vpack.c.bf16 %v3224, %v3223
    %v7982 = vpack.c.bf16 %v3226, %v3225
    %v7983 = vpack.c.bf16 %v3228, %v3227
    %v7984 = vpack.c.bf16 %v3230, %v3229
    %v7985 = vpack.c.bf16 %v3232, %v3231
    %v7986 = vpack.c.bf16 %v3234, %v3233
    %v7987 = vpack.c.bf16 %v3236, %v3235
    %v7988 = vpack.c.bf16 %v3238, %v3237
    %v7989 = vpack.c.bf16 %v3240, %v3239
    %v7990 = vpack.c.bf16 %v3242, %v3241
    %v7991 = vpack.c.bf16 %v3244, %v3243
    %v7992 = vpack.c.bf16 %v3246, %v3245
    %v7993 = vpack.c.bf16 %v3248, %v3247
    %v7994 = vpack.c.bf16 %v3250, %v3249
    %v7995 = vpack.c.bf16 %v3252, %v3251
    %v7996 = vpack.c.bf16 %v3254, %v3253
    %v7997 = vpack.c.bf16 %v3256, %v3255
    %v7998 = vpack.c.bf16 %v3258, %v3257
    %v7999 = vpack.c.bf16 %v3260, %v3259
    %v8000 = vld [vmem:[%s4] sm:$0xf]
    %v8001 = vld [vmem:[%s4 + $0x4] sm:$0xf]
    %v8002 = vld [vmem:[%s4 + $0x8] sm:$0xf]
    %v8003 = vld [vmem:[%s4 + $0xc] sm:$0xf]
    %v8004 = vld [vmem:[%s5] sm:$0x1]
    %v8006 = vlaneseq
    %v8007 = vshrl.u32 %v8006, 7
    %v8008 = vsub.s32 0, %v8007
    %v8009 = vrot.slane %v8004, %v8008
    %v8015 = vunpack.c.l.b16 %v8000
    %v8016 = vunpack.c.l.b16 %v8001
    %v8017 = vunpack.c.l.b16 %v8002
    %v8018 = vunpack.c.l.b16 %v8003
    %v8019 = vpack.c.b16 %v8016, %v8015
    %v8020 = vpack.c.b16 %v8018, %v8017
    %vm8023 = vcmask 261120
    %v8025 = vsel %vm8023, %v7872, 0
    %v8028 = vsel %vm8023, %v7873, 0
    %v8031 = vsel %vm8023, %v7874, 0
    %v8034 = vsel %vm8023, %v7875, 0
    %v8037 = vsel %vm8023, %v7876, 0
    %v8040 = vsel %vm8023, %v7877, 0
    %v8043 = vsel %vm8023, %v7878, 0
    %v8046 = vsel %vm8023, %v7879, 0
    %v8049 = vsel %vm8023, %v7880, 0
    %v8052 = vsel %vm8023, %v7881, 0
    %v8055 = vsel %vm8023, %v7882, 0
    %v8058 = vsel %vm8023, %v7883, 0
    %v8061 = vsel %vm8023, %v7884, 0
    %v8064 = vsel %vm8023, %v7885, 0
    %v8067 = vsel %vm8023, %v7886, 0
    %v8070 = vsel %vm8023, %v7887, 0
    %v8073 = vsel %vm8023, %v7888, 0
    %v8076 = vsel %vm8023, %v7889, 0
    %v8079 = vsel %vm8023, %v7890, 0
    %v8082 = vsel %vm8023, %v7891, 0
    %v8085 = vsel %vm8023, %v7892, 0
    %v8088 = vsel %vm8023, %v7893, 0
    %v8091 = vsel %vm8023, %v7894, 0
    %v8094 = vsel %vm8023, %v7895, 0
    %v8097 = vsel %vm8023, %v7896, 0
    %v8100 = vsel %vm8023, %v7897, 0
    %v8103 = vsel %vm8023, %v7898, 0
    %v8106 = vsel %vm8023, %v7899, 0
    %v8109 = vsel %vm8023, %v7900, 0
    %v8112 = vsel %vm8023, %v7901, 0
    %v8115 = vsel %vm8023, %v7902, 0
    %v8118 = vsel %vm8023, %v7903, 0
    %v8121 = vsel %vm8023, %v7904, 0
    %v8124 = vsel %vm8023, %v7905, 0
    %v8127 = vsel %vm8023, %v7906, 0
    %v8130 = vsel %vm8023, %v7907, 0
    %v8133 = vsel %vm8023, %v7908, 0
    %v8136 = vsel %vm8023, %v7909, 0
    %v8139 = vsel %vm8023, %v7910, 0
    %v8142 = vsel %vm8023, %v7911, 0
    %v8145 = vsel %vm8023, %v7912, 0
    %v8148 = vsel %vm8023, %v7913, 0
    %v8151 = vsel %vm8023, %v7914, 0
    %v8154 = vsel %vm8023, %v7915, 0
    %v8157 = vsel %vm8023, %v7916, 0
    %v8160 = vsel %vm8023, %v7917, 0
    %v8163 = vsel %vm8023, %v7918, 0
    %v8166 = vsel %vm8023, %v7919, 0
    %v8169 = vsel %vm8023, %v7920, 0
    %v8172 = vsel %vm8023, %v7921, 0
    %v8175 = vsel %vm8023, %v7922, 0
    %v8178 = vsel %vm8023, %v7923, 0
    %v8181 = vsel %vm8023, %v7924, 0
    %v8184 = vsel %vm8023, %v7925, 0
    %v8187 = vsel %vm8023, %v7926, 0
    %v8190 = vsel %vm8023, %v7927, 0
    %v8193 = vsel %vm8023, %v7928, 0
    %v8196 = vsel %vm8023, %v7929, 0
    %v8199 = vsel %vm8023, %v7930, 0
    %v8202 = vsel %vm8023, %v7931, 0
    %v8205 = vsel %vm8023, %v7932, 0
    %v8208 = vsel %vm8023, %v7933, 0
    %v8211 = vsel %vm8023, %v7934, 0
    %v8214 = vsel %vm8023, %v7935, 0
    %v8217 = vsel %vm8023, %v7936, 0
    %v8220 = vsel %vm8023, %v7937, 0
    %v8223 = vsel %vm8023, %v7938, 0
    %v8226 = vsel %vm8023, %v7939, 0
    %v8229 = vsel %vm8023, %v7940, 0
    %v8232 = vsel %vm8023, %v7941, 0
    %v8235 = vsel %vm8023, %v7942, 0
    %v8238 = vsel %vm8023, %v7943, 0
    %v8241 = vsel %vm8023, %v7944, 0
    %v8244 = vsel %vm8023, %v7945, 0
    %v8247 = vsel %vm8023, %v7946, 0
    %v8250 = vsel %vm8023, %v7947, 0
    %v8253 = vsel %vm8023, %v7948, 0
    %v8256 = vsel %vm8023, %v7949, 0
    %v8259 = vsel %vm8023, %v7950, 0
    %v8262 = vsel %vm8023, %v7951, 0
    %v8265 = vsel %vm8023, %v7952, 0
    %v8268 = vsel %vm8023, %v7953, 0
    %v8271 = vsel %vm8023, %v7954, 0
    %v8274 = vsel %vm8023, %v7955, 0
    %v8277 = vsel %vm8023, %v7956, 0
    %v8280 = vsel %vm8023, %v7957, 0
    %v8283 = vsel %vm8023, %v7958, 0
    %v8286 = vsel %vm8023, %v7959, 0
    %v8289 = vsel %vm8023, %v7960, 0
    %v8292 = vsel %vm8023, %v7961, 0
    %v8295 = vsel %vm8023, %v7962, 0
    %v8298 = vsel %vm8023, %v7963, 0
    %v8301 = vsel %vm8023, %v7964, 0
    %v8304 = vsel %vm8023, %v7965, 0
    %v8307 = vsel %vm8023, %v7966, 0
    %v8310 = vsel %vm8023, %v7967, 0
    %v8313 = vsel %vm8023, %v7968, 0
    %v8316 = vsel %vm8023, %v7969, 0
    %v8319 = vsel %vm8023, %v7970, 0
    %v8322 = vsel %vm8023, %v7971, 0
    %v8325 = vsel %vm8023, %v7972, 0
    %v8328 = vsel %vm8023, %v7973, 0
    %v8331 = vsel %vm8023, %v7974, 0
    %v8334 = vsel %vm8023, %v7975, 0
    %v8337 = vsel %vm8023, %v7976, 0
    %v8340 = vsel %vm8023, %v7977, 0
    %v8343 = vsel %vm8023, %v7978, 0
    %v8346 = vsel %vm8023, %v7979, 0
    %v8349 = vsel %vm8023, %v7980, 0
    %v8352 = vsel %vm8023, %v7981, 0
    %v8355 = vsel %vm8023, %v7982, 0
    %v8358 = vsel %vm8023, %v7983, 0
    %v8361 = vsel %vm8023, %v7984, 0
    %v8364 = vsel %vm8023, %v7985, 0
    %v8367 = vsel %vm8023, %v7986, 0
    %v8370 = vsel %vm8023, %v7987, 0
    %v8373 = vsel %vm8023, %v7988, 0
    %v8376 = vsel %vm8023, %v7989, 0
    %v8379 = vsel %vm8023, %v7990, 0
    %v8382 = vsel %vm8023, %v7991, 0
    %v8385 = vsel %vm8023, %v7992, 0
    %v8388 = vsel %vm8023, %v7993, 0
    %v8391 = vsel %vm8023, %v7994, 0
    %v8394 = vsel %vm8023, %v7995, 0
    %v8397 = vsel %vm8023, %v7996, 0
    %v8400 = vsel %vm8023, %v7997, 0
    %v8403 = vsel %vm8023, %v7998, 0
    %v8406 = vsel %vm8023, %v7999, 0
    %8408 = vmatprep.subr.bf16.mxu0 0
    %8409 = vmatpush1.bf16.msra.mxu0 %v8019
    %8410 = vmatprep.subr.bf16.mxu0 0
    %8411 = vmatpush1.bf16.msra.mxu0 %v8020
    %8412 = vmatprep.subr.bf16.mxu0 0
    %8413 = vmatpush1.bf16.msra.mxu0 0
    %8414 = vmatprep.subr.bf16.mxu0 0
    %8415 = vmatpush1.bf16.msra.mxu0 0
    %8416 = vmatprep.subr.bf16.mxu0 0
    %8417 = vmatpush1.bf16.msra.mxu0 0
    %8418 = vmatprep.subr.bf16.mxu0 0
    %8419 = vmatpush1.bf16.msra.mxu0 0
    %8420 = vmatprep.subr.bf16.mxu0 0
    %8421 = vmatpush1.bf16.msra.mxu0 0
    %8422 = vmatprep.subr.bf16.mxu0 0
    %8423 = vmatpush1.bf16.msra.mxu0 0
    %8424 = vmatprep.subr.bf16.mxu0 0
    %8425 = vmatpush1.bf16.msra.mxu0 0
    %8426 = vmatprep.subr.bf16.mxu0 0
    %8427 = vmatpush1.bf16.msra.mxu0 0
    %8428 = vmatprep.subr.bf16.mxu0 0
    %8429 = vmatpush1.bf16.msra.mxu0 0
    %8430 = vmatprep.subr.bf16.mxu0 0
    %8431 = vmatpush1.bf16.msra.mxu0 0
    %8432 = vmatprep.subr.bf16.mxu0 0
    %8433 = vmatpush1.bf16.msra.mxu0 0
    %8434 = vmatprep.subr.bf16.mxu0 0
    %8435 = vmatpush1.bf16.msra.mxu0 0
    %8436 = vmatprep.subr.bf16.mxu0 0
    %8437 = vmatpush1.bf16.msra.mxu0 0
    %8438 = vmatprep.subr.bf16.mxu0 0
    %8439 = vmatpush1.bf16.msra.mxu0 0
    %8440 = vmatprep.mubr.bf16.mxu0 0
    %8441 = vmatmul.mubr.bf16.gmra.mrb[0].mxu0 %v8025
    %v8442 = vpop.f32.mrb[0].mxu0
    %v8443 = vadd.f32 %v8009, %v8442
    %v8444 = vpop.f32.mrb[0].mxu0
    %v8445 = vpop.f32.mrb[0].mxu0
    %v8446 = vadd.f32 %v8009, %v8445
    %v8447 = vpop.f32.mrb[0].mxu0
    %8448 = vmatprep.mubr.bf16.mxu0 0
    %8449 = vmatmul.mubr.bf16.gmra.mrb[0].mxu0 %v8028
    %v8450 = vpop.f32.mrb[0].mxu0
    %v8451 = vadd.f32 %v8009, %v8450
    %v8452 = vpop.f32.mrb[0].mxu0
    %v8453 = vpop.f32.mrb[0].mxu0
    %v8454 = vadd.f32 %v8009, %v8453
    %v8455 = vpop.f32.mrb[0].mxu0
    %8456 = vmatprep.mubr.bf16.mxu0 0
    %8457 = vmatmul.mubr.bf16.gmra.mrb[0].mxu0 %v8031
    %v8458 = vpop.f32.mrb[0].mxu0
    %v8459 = vadd.f32 %v8009, %v8458
    %v8460 = vpop.f32.mrb[0].mxu0
    %v8461 = vpop.f32.mrb[0].mxu0
    %v8462 = vadd.f32 %v8009, %v8461
    %v8463 = vpop.f32.mrb[0].mxu0
    %8464 = vmatprep.mubr.bf16.mxu0 0
    %8465 = vmatmul.mubr.bf16.gmra.mrb[0].mxu0 %v8034
    %v8466 = vpop.f32.mrb[0].mxu0
    %v8467 = vadd.f32 %v8009, %v8466
    %v8468 = vpop.f32.mrb[0].mxu0
    %v8469 = vpop.f32.mrb[0].mxu0
    %v8470 = vadd.f32 %v8009, %v8469
    %v8471 = vpop.f32.mrb[0].mxu0
    %8472 = vmatprep.mubr.bf16.mxu0 0
    %8473 = vmatmul.mubr.bf16.gmra.mrb[0].mxu0 %v8037
    %v8474 = vpop.f32.mrb[0].mxu0
    %v8475 = vadd.f32 %v8009, %v8474
    %v8476 = vpop.f32.mrb[0].mxu0
    %v8477 = vpop.f32.mrb[0].mxu0
    %v8478 = vadd.f32 %v8009, %v8477
    %v8479 = vpop.f32.mrb[0].mxu0
    %8480 = vmatprep.mubr.bf16.mxu0 0
    %8481 = vmatmul.mubr.bf16.gmra.mrb[0].mxu0 %v8040
    %v8482 = vpop.f32.mrb[0].mxu0
    %v8483 = vadd.f32 %v8009, %v8482
    %v8484 = vpop.f32.mrb[0].mxu0
    %v8485 = vpop.f32.mrb[0].mxu0
    %v8486 = vadd.f32 %v8009, %v8485
    %v8487 = vpop.f32.mrb[0].mxu0
    %8488 = vmatprep.mubr.bf16.mxu0 0
    %8489 = vmatmul.mubr.bf16.gmra.mrb[0].mxu0 %v8043
    %v8490 = vpop.f32.mrb[0].mxu0
    %v8491 = vadd.f32 %v8009, %v8490
    %v8492 = vpop.f32.mrb[0].mxu0
    %v8493 = vpop.f32.mrb[0].mxu0
    %v8494 = vadd.f32 %v8009, %v8493
    %v8495 = vpop.f32.mrb[0].mxu0
    %8496 = vmatprep.mubr.bf16.mxu0 0
    %8497 = vmatmul.mubr.bf16.gmra.mrb[0].mxu0 %v8046
    %v8498 = vpop.f32.mrb[0].mxu0
    %v8499 = vadd.f32 %v8009, %v8498
    %v8500 = vpop.f32.mrb[0].mxu0
    %v8501 = vpop.f32.mrb[0].mxu0
    %v8502 = vadd.f32 %v8009, %v8501
    %v8503 = vpop.f32.mrb[0].mxu0
    %8504 = vmatprep.mubr.bf16.mxu0 0
    %8505 = vmatmul.mubr.bf16.gmra.mrb[0].mxu0 %v8049
    %v8506 = vpop.f32.mrb[0].mxu0
    %v8507 = vadd.f32 %v8009, %v8506
    %v8508 = vpop.f32.mrb[0].mxu0
    %v8509 = vpop.f32.mrb[0].mxu0
    %v8510 = vadd.f32 %v8009, %v8509
    %v8511 = vpop.f32.mrb[0].mxu0
    %8512 = vmatprep.mubr.bf16.mxu0 0
    %8513 = vmatmul.mubr.bf16.gmra.mrb[0].mxu0 %v8052
    %v8514 = vpop.f32.mrb[0].mxu0
    %v8515 = vadd.f32 %v8009, %v8514
    %v8516 = vpop.f32.mrb[0].mxu0
    %v8517 = vpop.f32.mrb[0].mxu0
    %v8518 = vadd.f32 %v8009, %v8517
    %v8519 = vpop.f32.mrb[0].mxu0
    %8520 = vmatprep.mubr.bf16.mxu0 0
    %8521 = vmatmul.mubr.bf16.gmra.mrb[0].mxu0 %v8055
    %v8522 = vpop.f32.mrb[0].mxu0
    %v8523 = vadd.f32 %v8009, %v8522
    %v8524 = vpop.f32.mrb[0].mxu0
    %v8525 = vpop.f32.mrb[0].mxu0
    %v8526 = vadd.f32 %v8009, %v8525
    %v8527 = vpop.f32.mrb[0].mxu0
    %8528 = vmatprep.mubr.bf16.mxu0 0
    %8529 = vmatmul.mubr.bf16.gmra.mrb[0].mxu0 %v8058
    %v8530 = vpop.f32.mrb[0].mxu0
    %v8531 = vadd.f32 %v8009, %v8530
    %v8532 = vpop.f32.mrb[0].mxu0
    %v8533 = vpop.f32.mrb[0].mxu0
    %v8534 = vadd.f32 %v8009, %v8533
    %v8535 = vpop.f32.mrb[0].mxu0
    %8536 = vmatprep.mubr.bf16.mxu0 0
    %8537 = vmatmul.mubr.bf16.gmra.mrb[0].mxu0 %v8061
    %v8538 = vpop.f32.mrb[0].mxu0
    %v8539 = vadd.f32 %v8009, %v8538
    %v8540 = vpop.f32.mrb[0].mxu0
    %v8541 = vpop.f32.mrb[0].mxu0
    %v8542 = vadd.f32 %v8009, %v8541
    %v8543 = vpop.f32.mrb[0].mxu0
    %8544 = vmatprep.mubr.bf16.mxu0 0
    %8545 = vmatmul.mubr.bf16.gmra.mrb[0].mxu0 %v8064
    %v8546 = vpop.f32.mrb[0].mxu0
    %v8547 = vadd.f32 %v8009, %v8546
    %v8548 = vpop.f32.mrb[0].mxu0
    %v8549 = vpop.f32.mrb[0].mxu0
    %v8550 = vadd.f32 %v8009, %v8549
    %v8551 = vpop.f32.mrb[0].mxu0
    %8552 = vmatprep.mubr.bf16.mxu0 0
    %8553 = vmatmul.mubr.bf16.gmra.mrb[0].mxu0 %v8067
    %v8554 = vpop.f32.mrb[0].mxu0
    %v8555 = vadd.f32 %v8009, %v8554
    %v8556 = vpop.f32.mrb[0].mxu0
    %v8557 = vpop.f32.mrb[0].mxu0
    %v8558 = vadd.f32 %v8009, %v8557
    %v8559 = vpop.f32.mrb[0].mxu0
    %8560 = vmatprep.mubr.bf16.mxu0 0
    %8561 = vmatmul.mubr.bf16.gmra.mrb[0].mxu0 %v8070
    %v8562 = vpop.f32.mrb[0].mxu0
    %v8563 = vadd.f32 %v8009, %v8562
    %v8564 = vpop.f32.mrb[0].mxu0
    %v8565 = vpop.f32.mrb[0].mxu0
    %v8566 = vadd.f32 %v8009, %v8565
    %v8567 = vpop.f32.mrb[0].mxu0
    %8568 = vmatprep.mubr.bf16.mxu0 0
    %8569 = vmatmul.mubr.bf16.gmra.mrb[0].mxu0 %v8073
    %v8570 = vpop.f32.mrb[0].mxu0
    %v8571 = vadd.f32 %v8009, %v8570
    %v8572 = vpop.f32.mrb[0].mxu0
    %v8573 = vpop.f32.mrb[0].mxu0
    %v8574 = vadd.f32 %v8009, %v8573
    %v8575 = vpop.f32.mrb[0].mxu0
    %8576 = vmatprep.mubr.bf16.mxu0 0
    %8577 = vmatmul.mubr.bf16.gmra.mrb[0].mxu0 %v8076
    %v8578 = vpop.f32.mrb[0].mxu0
    %v8579 = vadd.f32 %v8009, %v8578
    %v8580 = vpop.f32.mrb[0].mxu0
    %v8581 = vpop.f32.mrb[0].mxu0
    %v8582 = vadd.f32 %v8009, %v8581
    %v8583 = vpop.f32.mrb[0].mxu0
    %8584 = vmatprep.mubr.bf16.mxu0 0
    %8585 = vmatmul.mubr.bf16.gmra.mrb[0].mxu0 %v8079
    %v8586 = vpop.f32.mrb[0].mxu0
    %v8587 = vadd.f32 %v8009, %v8586
    %v8588 = vpop.f32.mrb[0].mxu0
    %v8589 = vpop.f32.mrb[0].mxu0
    %v8590 = vadd.f32 %v8009, %v8589
    %v8591 = vpop.f32.mrb[0].mxu0
    %8592 = vmatprep.mubr.bf16.mxu0 0
    %8593 = vmatmul.mubr.bf16.gmra.mrb[0].mxu0 %v8082
    %v8594 = vpop.f32.mrb[0].mxu0
    %v8595 = vadd.f32 %v8009, %v8594
    %v8596 = vpop.f32.mrb[0].mxu0
    %v8597 = vpop.f32.mrb[0].mxu0
    %v8598 = vadd.f32 %v8009, %v8597
    %v8599 = vpop.f32.mrb[0].mxu0
    %8600 = vmatprep.mubr.bf16.mxu0 0
    %8601 = vmatmul.mubr.bf16.gmra.mrb[0].mxu0 %v8085
    %v8602 = vpop.f32.mrb[0].mxu0
    %v8603 = vadd.f32 %v8009, %v8602
    %v8604 = vpop.f32.mrb[0].mxu0
    %v8605 = vpop.f32.mrb[0].mxu0
    %v8606 = vadd.f32 %v8009, %v8605
    %v8607 = vpop.f32.mrb[0].mxu0
    %8608 = vmatprep.mubr.bf16.mxu0 0
    %8609 = vmatmul.mubr.bf16.gmra.mrb[0].mxu0 %v8088
    %v8610 = vpop.f32.mrb[0].mxu0
    %v8611 = vadd.f32 %v8009, %v8610
    %v8612 = vpop.f32.mrb[0].mxu0
    %v8613 = vpop.f32.mrb[0].mxu0
    %v8614 = vadd.f32 %v8009, %v8613
    %v8615 = vpop.f32.mrb[0].mxu0
    %8616 = vmatprep.mubr.bf16.mxu0 0
    %8617 = vmatmul.mubr.bf16.gmra.mrb[0].mxu0 %v8091
    %v8618 = vpop.f32.mrb[0].mxu0
    %v8619 = vadd.f32 %v8009, %v8618
    %v8620 = vpop.f32.mrb[0].mxu0
    %v8621 = vpop.f32.mrb[0].mxu0
    %v8622 = vadd.f32 %v8009, %v8621
    %v8623 = vpop.f32.mrb[0].mxu0
    %8624 = vmatprep.mubr.bf16.mxu0 0
    %8625 = vmatmul.mubr.bf16.gmra.mrb[0].mxu0 %v8094
    %v8626 = vpop.f32.mrb[0].mxu0
    %v8627 = vadd.f32 %v8009, %v8626
    %v8628 = vpop.f32.mrb[0].mxu0
    %v8629 = vpop.f32.mrb[0].mxu0
    %v8630 = vadd.f32 %v8009, %v8629
    %v8631 = vpop.f32.mrb[0].mxu0
    %8632 = vmatprep.mubr.bf16.mxu0 0
    %8633 = vmatmul.mubr.bf16.gmra.mrb[0].mxu0 %v8097
    %v8634 = vpop.f32.mrb[0].mxu0
    %v8635 = vadd.f32 %v8009, %v8634
    %v8636 = vpop.f32.mrb[0].mxu0
    %v8637 = vpop.f32.mrb[0].mxu0
    %v8638 = vadd.f32 %v8009, %v8637
    %v8639 = vpop.f32.mrb[0].mxu0
    %8640 = vmatprep.mubr.bf16.mxu0 0
    %8641 = vmatmul.mubr.bf16.gmra.mrb[0].mxu0 %v8100
    %v8642 = vpop.f32.mrb[0].mxu0
    %v8643 = vadd.f32 %v8009, %v8642
    %v8644 = vpop.f32.mrb[0].mxu0
    %v8645 = vpop.f32.mrb[0].mxu0
    %v8646 = vadd.f32 %v8009, %v8645
    %v8647 = vpop.f32.mrb[0].mxu0
    %8648 = vmatprep.mubr.bf16.mxu0 0
    %8649 = vmatmul.mubr.bf16.gmra.mrb[0].mxu0 %v8103
    %v8650 = vpop.f32.mrb[0].mxu0
    %v8651 = vadd.f32 %v8009, %v8650
    %v8652 = vpop.f32.mrb[0].mxu0
    %v8653 = vpop.f32.mrb[0].mxu0
    %v8654 = vadd.f32 %v8009, %v8653
    %v8655 = vpop.f32.mrb[0].mxu0
    %8656 = vmatprep.mubr.bf16.mxu0 0
    %8657 = vmatmul.mubr.bf16.gmra.mrb[0].mxu0 %v8106
    %v8658 = vpop.f32.mrb[0].mxu0
    %v8659 = vadd.f32 %v8009, %v8658
    %v8660 = vpop.f32.mrb[0].mxu0
    %v8661 = vpop.f32.mrb[0].mxu0
    %v8662 = vadd.f32 %v8009, %v8661
    %v8663 = vpop.f32.mrb[0].mxu0
    %8664 = vmatprep.mubr.bf16.mxu0 0
    %8665 = vmatmul.mubr.bf16.gmra.mrb[0].mxu0 %v8109
    %v8666 = vpop.f32.mrb[0].mxu0
    %v8667 = vadd.f32 %v8009, %v8666
    %v8668 = vpop.f32.mrb[0].mxu0
    %v8669 = vpop.f32.mrb[0].mxu0
    %v8670 = vadd.f32 %v8009, %v8669
    %v8671 = vpop.f32.mrb[0].mxu0
    %8672 = vmatprep.mubr.bf16.mxu0 0
    %8673 = vmatmul.mubr.bf16.gmra.mrb[0].mxu0 %v8112
    %v8674 = vpop.f32.mrb[0].mxu0
    %v8675 = vadd.f32 %v8009, %v8674
    %v8676 = vpop.f32.mrb[0].mxu0
    %v8677 = vpop.f32.mrb[0].mxu0
    %v8678 = vadd.f32 %v8009, %v8677
    %v8679 = vpop.f32.mrb[0].mxu0
    %8680 = vmatprep.mubr.bf16.mxu0 0
    %8681 = vmatmul.mubr.bf16.gmra.mrb[0].mxu0 %v8115
    %v8682 = vpop.f32.mrb[0].mxu0
    %v8683 = vadd.f32 %v8009, %v8682
    %v8684 = vpop.f32.mrb[0].mxu0
    %v8685 = vpop.f32.mrb[0].mxu0
    %v8686 = vadd.f32 %v8009, %v8685
    %v8687 = vpop.f32.mrb[0].mxu0
    %8688 = vmatprep.mubr.bf16.mxu0 0
    %8689 = vmatmul.mubr.bf16.gmra.mrb[0].mxu0 %v8118
    %v8690 = vpop.f32.mrb[0].mxu0
    %v8691 = vadd.f32 %v8009, %v8690
    %v8692 = vpop.f32.mrb[0].mxu0
    %v8693 = vpop.f32.mrb[0].mxu0
    %v8694 = vadd.f32 %v8009, %v8693
    %v8695 = vpop.f32.mrb[0].mxu0
    %8696 = vmatprep.mubr.bf16.mxu0 0
    %8697 = vmatmul.mubr.bf16.gmra.mrb[0].mxu0 %v8121
    %v8698 = vpop.f32.mrb[0].mxu0
    %v8699 = vadd.f32 %v8009, %v8698
    %v8700 = vpop.f32.mrb[0].mxu0
    %v8701 = vpop.f32.mrb[0].mxu0
    %v8702 = vadd.f32 %v8009, %v8701
    %v8703 = vpop.f32.mrb[0].mxu0
    %8704 = vmatprep.mubr.bf16.mxu0 0
    %8705 = vmatmul.mubr.bf16.gmra.mrb[0].mxu0 %v8124
    %v8706 = vpop.f32.mrb[0].mxu0
    %v8707 = vadd.f32 %v8009, %v8706
    %v8708 = vpop.f32.mrb[0].mxu0
    %v8709 = vpop.f32.mrb[0].mxu0
    %v8710 = vadd.f32 %v8009, %v8709
    %v8711 = vpop.f32.mrb[0].mxu0
    %8712 = vmatprep.mubr.bf16.mxu0 0
    %8713 = vmatmul.mubr.bf16.gmra.mrb[0].mxu0 %v8127
    %v8714 = vpop.f32.mrb[0].mxu0
    %v8715 = vadd.f32 %v8009, %v8714
    %v8716 = vpop.f32.mrb[0].mxu0
    %v8717 = vpop.f32.mrb[0].mxu0
    %v8718 = vadd.f32 %v8009, %v8717
    %v8719 = vpop.f32.mrb[0].mxu0
    %8720 = vmatprep.mubr.bf16.mxu0 0
    %8721 = vmatmul.mubr.bf16.gmra.mrb[0].mxu0 %v8130
    %v8722 = vpop.f32.mrb[0].mxu0
    %v8723 = vadd.f32 %v8009, %v8722
    %v8724 = vpop.f32.mrb[0].mxu0
    %v8725 = vpop.f32.mrb[0].mxu0
    %v8726 = vadd.f32 %v8009, %v8725
    %v8727 = vpop.f32.mrb[0].mxu0
    %8728 = vmatprep.mubr.bf16.mxu0 0
    %8729 = vmatmul.mubr.bf16.gmra.mrb[0].mxu0 %v8133
    %v8730 = vpop.f32.mrb[0].mxu0
    %v8731 = vadd.f32 %v8009, %v8730
    %v8732 = vpop.f32.mrb[0].mxu0
    %v8733 = vpop.f32.mrb[0].mxu0
    %v8734 = vadd.f32 %v8009, %v8733
    %v8735 = vpop.f32.mrb[0].mxu0
    %8736 = vmatprep.mubr.bf16.mxu0 0
    %8737 = vmatmul.mubr.bf16.gmra.mrb[0].mxu0 %v8136
    %v8738 = vpop.f32.mrb[0].mxu0
    %v8739 = vadd.f32 %v8009, %v8738
    %v8740 = vpop.f32.mrb[0].mxu0
    %v8741 = vpop.f32.mrb[0].mxu0
    %v8742 = vadd.f32 %v8009, %v8741
    %v8743 = vpop.f32.mrb[0].mxu0
    %8744 = vmatprep.mubr.bf16.mxu0 0
    %8745 = vmatmul.mubr.bf16.gmra.mrb[0].mxu0 %v8139
    %v8746 = vpop.f32.mrb[0].mxu0
    %v8747 = vadd.f32 %v8009, %v8746
    %v8748 = vpop.f32.mrb[0].mxu0
    %v8749 = vpop.f32.mrb[0].mxu0
    %v8750 = vadd.f32 %v8009, %v8749
    %v8751 = vpop.f32.mrb[0].mxu0
    %8752 = vmatprep.mubr.bf16.mxu0 0
    %8753 = vmatmul.mubr.bf16.gmra.mrb[0].mxu0 %v8142
    %v8754 = vpop.f32.mrb[0].mxu0
    %v8755 = vadd.f32 %v8009, %v8754
    %v8756 = vpop.f32.mrb[0].mxu0
    %v8757 = vpop.f32.mrb[0].mxu0
    %v8758 = vadd.f32 %v8009, %v8757
    %v8759 = vpop.f32.mrb[0].mxu0
    %8760 = vmatprep.mubr.bf16.mxu0 0
    %8761 = vmatmul.mubr.bf16.gmra.mrb[0].mxu0 %v8145
    %v8762 = vpop.f32.mrb[0].mxu0
    %v8763 = vadd.f32 %v8009, %v8762
    %v8764 = vpop.f32.mrb[0].mxu0
    %v8765 = vpop.f32.mrb[0].mxu0
    %v8766 = vadd.f32 %v8009, %v8765
    %v8767 = vpop.f32.mrb[0].mxu0
    %8768 = vmatprep.mubr.bf16.mxu0 0
    %8769 = vmatmul.mubr.bf16.gmra.mrb[0].mxu0 %v8148
    %v8770 = vpop.f32.mrb[0].mxu0
    %v8771 = vadd.f32 %v8009, %v8770
    %v8772 = vpop.f32.mrb[0].mxu0
    %v8773 = vpop.f32.mrb[0].mxu0
    %v8774 = vadd.f32 %v8009, %v8773
    %v8775 = vpop.f32.mrb[0].mxu0
    %8776 = vmatprep.mubr.bf16.mxu0 0
    %8777 = vmatmul.mubr.bf16.gmra.mrb[0].mxu0 %v8151
    %v8778 = vpop.f32.mrb[0].mxu0
    %v8779 = vadd.f32 %v8009, %v8778
    %v8780 = vpop.f32.mrb[0].mxu0
    %v8781 = vpop.f32.mrb[0].mxu0
    %v8782 = vadd.f32 %v8009, %v8781
    %v8783 = vpop.f32.mrb[0].mxu0
    %8784 = vmatprep.mubr.bf16.mxu0 0
    %8785 = vmatmul.mubr.bf16.gmra.mrb[0].mxu0 %v8154
    %v8786 = vpop.f32.mrb[0].mxu0
    %v8787 = vadd.f32 %v8009, %v8786
    %v8788 = vpop.f32.mrb[0].mxu0
    %v8789 = vpop.f32.mrb[0].mxu0
    %v8790 = vadd.f32 %v8009, %v8789
    %v8791 = vpop.f32.mrb[0].mxu0
    %8792 = vmatprep.mubr.bf16.mxu0 0
    %8793 = vmatmul.mubr.bf16.gmra.mrb[0].mxu0 %v8157
    %v8794 = vpop.f32.mrb[0].mxu0
    %v8795 = vadd.f32 %v8009, %v8794
    %v8796 = vpop.f32.mrb[0].mxu0
    %v8797 = vpop.f32.mrb[0].mxu0
    %v8798 = vadd.f32 %v8009, %v8797
    %v8799 = vpop.f32.mrb[0].mxu0
    %8800 = vmatprep.mubr.bf16.mxu0 0
    %8801 = vmatmul.mubr.bf16.gmra.mrb[0].mxu0 %v8160
    %v8802 = vpop.f32.mrb[0].mxu0
    %v8803 = vadd.f32 %v8009, %v8802
    %v8804 = vpop.f32.mrb[0].mxu0
    %v8805 = vpop.f32.mrb[0].mxu0
    %v8806 = vadd.f32 %v8009, %v8805
    %v8807 = vpop.f32.mrb[0].mxu0
    %8808 = vmatprep.mubr.bf16.mxu0 0
    %8809 = vmatmul.mubr.bf16.gmra.mrb[0].mxu0 %v8163
    %v8810 = vpop.f32.mrb[0].mxu0
    %v8811 = vadd.f32 %v8009, %v8810
    %v8812 = vpop.f32.mrb[0].mxu0
    %v8813 = vpop.f32.mrb[0].mxu0
    %v8814 = vadd.f32 %v8009, %v8813
    %v8815 = vpop.f32.mrb[0].mxu0
    %8816 = vmatprep.mubr.bf16.mxu0 0
    %8817 = vmatmul.mubr.bf16.gmra.mrb[0].mxu0 %v8166
    %v8818 = vpop.f32.mrb[0].mxu0
    %v8819 = vadd.f32 %v8009, %v8818
    %v8820 = vpop.f32.mrb[0].mxu0
    %v8821 = vpop.f32.mrb[0].mxu0
    %v8822 = vadd.f32 %v8009, %v8821
    %v8823 = vpop.f32.mrb[0].mxu0
    %8824 = vmatprep.mubr.bf16.mxu0 0
    %8825 = vmatmul.mubr.bf16.gmra.mrb[0].mxu0 %v8169
    %v8826 = vpop.f32.mrb[0].mxu0
    %v8827 = vadd.f32 %v8009, %v8826
    %v8828 = vpop.f32.mrb[0].mxu0
    %v8829 = vpop.f32.mrb[0].mxu0
    %v8830 = vadd.f32 %v8009, %v8829
    %v8831 = vpop.f32.mrb[0].mxu0
    %8832 = vmatprep.mubr.bf16.mxu0 0
    %8833 = vmatmul.mubr.bf16.gmra.mrb[0].mxu0 %v8172
    %v8834 = vpop.f32.mrb[0].mxu0
    %v8835 = vadd.f32 %v8009, %v8834
    %v8836 = vpop.f32.mrb[0].mxu0
    %v8837 = vpop.f32.mrb[0].mxu0
    %v8838 = vadd.f32 %v8009, %v8837
    %v8839 = vpop.f32.mrb[0].mxu0
    %8840 = vmatprep.mubr.bf16.mxu0 0
    %8841 = vmatmul.mubr.bf16.gmra.mrb[0].mxu0 %v8175
    %v8842 = vpop.f32.mrb[0].mxu0
    %v8843 = vadd.f32 %v8009, %v8842
    %v8844 = vpop.f32.mrb[0].mxu0
    %v8845 = vpop.f32.mrb[0].mxu0
    %v8846 = vadd.f32 %v8009, %v8845
    %v8847 = vpop.f32.mrb[0].mxu0
    %8848 = vmatprep.mubr.bf16.mxu0 0
    %8849 = vmatmul.mubr.bf16.gmra.mrb[0].mxu0 %v8178
    %v8850 = vpop.f32.mrb[0].mxu0
    %v8851 = vadd.f32 %v8009, %v8850
    %v8852 = vpop.f32.mrb[0].mxu0
    %v8853 = vpop.f32.mrb[0].mxu0
    %v8854 = vadd.f32 %v8009, %v8853
    %v8855 = vpop.f32.mrb[0].mxu0
    %8856 = vmatprep.mubr.bf16.mxu0 0
    %8857 = vmatmul.mubr.bf16.gmra.mrb[0].mxu0 %v8181
    %v8858 = vpop.f32.mrb[0].mxu0
    %v8859 = vadd.f32 %v8009, %v8858
    %v8860 = vpop.f32.mrb[0].mxu0
    %v8861 = vpop.f32.mrb[0].mxu0
    %v8862 = vadd.f32 %v8009, %v8861
    %v8863 = vpop.f32.mrb[0].mxu0
    %8864 = vmatprep.mubr.bf16.mxu0 0
    %8865 = vmatmul.mubr.bf16.gmra.mrb[0].mxu0 %v8184
    %v8866 = vpop.f32.mrb[0].mxu0
    %v8867 = vadd.f32 %v8009, %v8866
    %v8868 = vpop.f32.mrb[0].mxu0
    %v8869 = vpop.f32.mrb[0].mxu0
    %v8870 = vadd.f32 %v8009, %v8869
    %v8871 = vpop.f32.mrb[0].mxu0
    %8872 = vmatprep.mubr.bf16.mxu0 0
    %8873 = vmatmul.mubr.bf16.gmra.mrb[0].mxu0 %v8187
    %v8874 = vpop.f32.mrb[0].mxu0
    %v8875 = vadd.f32 %v8009, %v8874
    %v8876 = vpop.f32.mrb[0].mxu0
    %v8877 = vpop.f32.mrb[0].mxu0
    %v8878 = vadd.f32 %v8009, %v8877
    %v8879 = vpop.f32.mrb[0].mxu0
    %8880 = vmatprep.mubr.bf16.mxu0 0
    %8881 = vmatmul.mubr.bf16.gmra.mrb[0].mxu0 %v8190
    %v8882 = vpop.f32.mrb[0].mxu0
    %v8883 = vadd.f32 %v8009, %v8882
    %v8884 = vpop.f32.mrb[0].mxu0
    %v8885 = vpop.f32.mrb[0].mxu0
    %v8886 = vadd.f32 %v8009, %v8885
    %v8887 = vpop.f32.mrb[0].mxu0
    %8888 = vmatprep.mubr.bf16.mxu0 0
    %8889 = vmatmul.mubr.bf16.gmra.mrb[0].mxu0 %v8193
    %v8890 = vpop.f32.mrb[0].mxu0
    %v8891 = vadd.f32 %v8009, %v8890
    %v8892 = vpop.f32.mrb[0].mxu0
    %v8893 = vpop.f32.mrb[0].mxu0
    %v8894 = vadd.f32 %v8009, %v8893
    %v8895 = vpop.f32.mrb[0].mxu0
    %8896 = vmatprep.mubr.bf16.mxu0 0
    %8897 = vmatmul.mubr.bf16.gmra.mrb[0].mxu0 %v8196
    %v8898 = vpop.f32.mrb[0].mxu0
    %v8899 = vadd.f32 %v8009, %v8898
    %v8900 = vpop.f32.mrb[0].mxu0
    %v8901 = vpop.f32.mrb[0].mxu0
    %v8902 = vadd.f32 %v8009, %v8901
    %v8903 = vpop.f32.mrb[0].mxu0
    %8904 = vmatprep.mubr.bf16.mxu0 0
    %8905 = vmatmul.mubr.bf16.gmra.mrb[0].mxu0 %v8199
    %v8906 = vpop.f32.mrb[0].mxu0
    %v8907 = vadd.f32 %v8009, %v8906
    %v8908 = vpop.f32.mrb[0].mxu0
    %v8909 = vpop.f32.mrb[0].mxu0
    %v8910 = vadd.f32 %v8009, %v8909
    %v8911 = vpop.f32.mrb[0].mxu0
    %8912 = vmatprep.mubr.bf16.mxu0 0
    %8913 = vmatmul.mubr.bf16.gmra.mrb[0].mxu0 %v8202
    %v8914 = vpop.f32.mrb[0].mxu0
    %v8915 = vadd.f32 %v8009, %v8914
    %v8916 = vpop.f32.mrb[0].mxu0
    %v8917 = vpop.f32.mrb[0].mxu0
    %v8918 = vadd.f32 %v8009, %v8917
    %v8919 = vpop.f32.mrb[0].mxu0
    %8920 = vmatprep.mubr.bf16.mxu0 0
    %8921 = vmatmul.mubr.bf16.gmra.mrb[0].mxu0 %v8205
    %v8922 = vpop.f32.mrb[0].mxu0
    %v8923 = vadd.f32 %v8009, %v8922
    %v8924 = vpop.f32.mrb[0].mxu0
    %v8925 = vpop.f32.mrb[0].mxu0
    %v8926 = vadd.f32 %v8009, %v8925
    %v8927 = vpop.f32.mrb[0].mxu0
    %8928 = vmatprep.mubr.bf16.mxu0 0
    %8929 = vmatmul.mubr.bf16.gmra.mrb[0].mxu0 %v8208
    %v8930 = vpop.f32.mrb[0].mxu0
    %v8931 = vadd.f32 %v8009, %v8930
    %v8932 = vpop.f32.mrb[0].mxu0
    %v8933 = vpop.f32.mrb[0].mxu0
    %v8934 = vadd.f32 %v8009, %v8933
    %v8935 = vpop.f32.mrb[0].mxu0
    %8936 = vmatprep.mubr.bf16.mxu0 0
    %8937 = vmatmul.mubr.bf16.gmra.mrb[0].mxu0 %v8211
    %v8938 = vpop.f32.mrb[0].mxu0
    %v8939 = vadd.f32 %v8009, %v8938
    %v8940 = vpop.f32.mrb[0].mxu0
    %v8941 = vpop.f32.mrb[0].mxu0
    %v8942 = vadd.f32 %v8009, %v8941
    %v8943 = vpop.f32.mrb[0].mxu0
    %8944 = vmatprep.mubr.bf16.mxu0 0
    %8945 = vmatmul.mubr.bf16.gmra.mrb[0].mxu0 %v8214
    %v8946 = vpop.f32.mrb[0].mxu0
    %v8947 = vadd.f32 %v8009, %v8946
    %v8948 = vpop.f32.mrb[0].mxu0
    %v8949 = vpop.f32.mrb[0].mxu0
    %v8950 = vadd.f32 %v8009, %v8949
    %v8951 = vpop.f32.mrb[0].mxu0
    %8952 = vmatprep.mubr.bf16.mxu0 0
    %8953 = vmatmul.mubr.bf16.gmra.mrb[0].mxu0 %v8217
    %v8954 = vpop.f32.mrb[0].mxu0
    %v8955 = vadd.f32 %v8009, %v8954
    %v8956 = vpop.f32.mrb[0].mxu0
    %v8957 = vpop.f32.mrb[0].mxu0
    %v8958 = vadd.f32 %v8009, %v8957
    %v8959 = vpop.f32.mrb[0].mxu0
    %8960 = vmatprep.mubr.bf16.mxu0 0
    %8961 = vmatmul.mubr.bf16.gmra.mrb[0].mxu0 %v8220
    %v8962 = vpop.f32.mrb[0].mxu0
    %v8963 = vadd.f32 %v8009, %v8962
    %v8964 = vpop.f32.mrb[0].mxu0
    %v8965 = vpop.f32.mrb[0].mxu0
    %v8966 = vadd.f32 %v8009, %v8965
    %v8967 = vpop.f32.mrb[0].mxu0
    %8968 = vmatprep.mubr.bf16.mxu0 0
    %8969 = vmatmul.mubr.bf16.gmra.mrb[0].mxu0 %v8223
    %v8970 = vpop.f32.mrb[0].mxu0
    %v8971 = vadd.f32 %v8009, %v8970
    %v8972 = vpop.f32.mrb[0].mxu0
    %v8973 = vpop.f32.mrb[0].mxu0
    %v8974 = vadd.f32 %v8009, %v8973
    %v8975 = vpop.f32.mrb[0].mxu0
    %8976 = vmatprep.mubr.bf16.mxu0 0
    %8977 = vmatmul.mubr.bf16.gmra.mrb[0].mxu0 %v8226
    %v8978 = vpop.f32.mrb[0].mxu0
    %v8979 = vadd.f32 %v8009, %v8978
    %v8980 = vpop.f32.mrb[0].mxu0
    %v8981 = vpop.f32.mrb[0].mxu0
    %v8982 = vadd.f32 %v8009, %v8981
    %v8983 = vpop.f32.mrb[0].mxu0
    %8984 = vmatprep.mubr.bf16.mxu0 0
    %8985 = vmatmul.mubr.bf16.gmra.mrb[0].mxu0 %v8229
    %v8986 = vpop.f32.mrb[0].mxu0
    %v8987 = vadd.f32 %v8009, %v8986
    %v8988 = vpop.f32.mrb[0].mxu0
    %v8989 = vpop.f32.mrb[0].mxu0
    %v8990 = vadd.f32 %v8009, %v8989
    %v8991 = vpop.f32.mrb[0].mxu0
    %8992 = vmatprep.mubr.bf16.mxu0 0
    %8993 = vmatmul.mubr.bf16.gmra.mrb[0].mxu0 %v8232
    %v8994 = vpop.f32.mrb[0].mxu0
    %v8995 = vadd.f32 %v8009, %v8994
    %v8996 = vpop.f32.mrb[0].mxu0
    %v8997 = vpop.f32.mrb[0].mxu0
    %v8998 = vadd.f32 %v8009, %v8997
    %v8999 = vpop.f32.mrb[0].mxu0
    %9000 = vmatprep.mubr.bf16.mxu0 0
    %9001 = vmatmul.mubr.bf16.gmra.mrb[0].mxu0 %v8235
    %v9002 = vpop.f32.mrb[0].mxu0
    %v9003 = vadd.f32 %v8009, %v9002
    %v9004 = vpop.f32.mrb[0].mxu0
    %v9005 = vpop.f32.mrb[0].mxu0
    %v9006 = vadd.f32 %v8009, %v9005
    %v9007 = vpop.f32.mrb[0].mxu0
    %9008 = vmatprep.mubr.bf16.mxu0 0
    %9009 = vmatmul.mubr.bf16.gmra.mrb[0].mxu0 %v8238
    %v9010 = vpop.f32.mrb[0].mxu0
    %v9011 = vadd.f32 %v8009, %v9010
    %v9012 = vpop.f32.mrb[0].mxu0
    %v9013 = vpop.f32.mrb[0].mxu0
    %v9014 = vadd.f32 %v8009, %v9013
    %v9015 = vpop.f32.mrb[0].mxu0
    %9016 = vmatprep.mubr.bf16.mxu0 0
    %9017 = vmatmul.mubr.bf16.gmra.mrb[0].mxu0 %v8241
    %v9018 = vpop.f32.mrb[0].mxu0
    %v9019 = vadd.f32 %v8009, %v9018
    %v9020 = vpop.f32.mrb[0].mxu0
    %v9021 = vpop.f32.mrb[0].mxu0
    %v9022 = vadd.f32 %v8009, %v9021
    %v9023 = vpop.f32.mrb[0].mxu0
    %9024 = vmatprep.mubr.bf16.mxu0 0
    %9025 = vmatmul.mubr.bf16.gmra.mrb[0].mxu0 %v8244
    %v9026 = vpop.f32.mrb[0].mxu0
    %v9027 = vadd.f32 %v8009, %v9026
    %v9028 = vpop.f32.mrb[0].mxu0
    %v9029 = vpop.f32.mrb[0].mxu0
    %v9030 = vadd.f32 %v8009, %v9029
    %v9031 = vpop.f32.mrb[0].mxu0
    %9032 = vmatprep.mubr.bf16.mxu0 0
    %9033 = vmatmul.mubr.bf16.gmra.mrb[0].mxu0 %v8247
    %v9034 = vpop.f32.mrb[0].mxu0
    %v9035 = vadd.f32 %v8009, %v9034
    %v9036 = vpop.f32.mrb[0].mxu0
    %v9037 = vpop.f32.mrb[0].mxu0
    %v9038 = vadd.f32 %v8009, %v9037
    %v9039 = vpop.f32.mrb[0].mxu0
    %9040 = vmatprep.mubr.bf16.mxu0 0
    %9041 = vmatmul.mubr.bf16.gmra.mrb[0].mxu0 %v8250
    %v9042 = vpop.f32.mrb[0].mxu0
    %v9043 = vadd.f32 %v8009, %v9042
    %v9044 = vpop.f32.mrb[0].mxu0
    %v9045 = vpop.f32.mrb[0].mxu0
    %v9046 = vadd.f32 %v8009, %v9045
    %v9047 = vpop.f32.mrb[0].mxu0
    %9048 = vmatprep.mubr.bf16.mxu0 0
    %9049 = vmatmul.mubr.bf16.gmra.mrb[0].mxu0 %v8253
    %v9050 = vpop.f32.mrb[0].mxu0
    %v9051 = vadd.f32 %v8009, %v9050
    %v9052 = vpop.f32.mrb[0].mxu0
    %v9053 = vpop.f32.mrb[0].mxu0
    %v9054 = vadd.f32 %v8009, %v9053
    %v9055 = vpop.f32.mrb[0].mxu0
    %9056 = vmatprep.mubr.bf16.mxu0 0
    %9057 = vmatmul.mubr.bf16.gmra.mrb[0].mxu0 %v8256
    %v9058 = vpop.f32.mrb[0].mxu0
    %v9059 = vadd.f32 %v8009, %v9058
    %v9060 = vpop.f32.mrb[0].mxu0
    %v9061 = vpop.f32.mrb[0].mxu0
    %v9062 = vadd.f32 %v8009, %v9061
    %v9063 = vpop.f32.mrb[0].mxu0
    %9064 = vmatprep.mubr.bf16.mxu0 0
    %9065 = vmatmul.mubr.bf16.gmra.mrb[0].mxu0 %v8259
    %v9066 = vpop.f32.mrb[0].mxu0
    %v9067 = vadd.f32 %v8009, %v9066
    %v9068 = vpop.f32.mrb[0].mxu0
    %v9069 = vpop.f32.mrb[0].mxu0
    %v9070 = vadd.f32 %v8009, %v9069
    %v9071 = vpop.f32.mrb[0].mxu0
    %9072 = vmatprep.mubr.bf16.mxu0 0
    %9073 = vmatmul.mubr.bf16.gmra.mrb[0].mxu0 %v8262
    %v9074 = vpop.f32.mrb[0].mxu0
    %v9075 = vadd.f32 %v8009, %v9074
    %v9076 = vpop.f32.mrb[0].mxu0
    %v9077 = vpop.f32.mrb[0].mxu0
    %v9078 = vadd.f32 %v8009, %v9077
    %v9079 = vpop.f32.mrb[0].mxu0
    %9080 = vmatprep.mubr.bf16.mxu0 0
    %9081 = vmatmul.mubr.bf16.gmra.mrb[0].mxu0 %v8265
    %v9082 = vpop.f32.mrb[0].mxu0
    %v9083 = vadd.f32 %v8009, %v9082
    %v9084 = vpop.f32.mrb[0].mxu0
    %v9085 = vpop.f32.mrb[0].mxu0
    %v9086 = vadd.f32 %v8009, %v9085
    %v9087 = vpop.f32.mrb[0].mxu0
    %9088 = vmatprep.mubr.bf16.mxu0 0
    %9089 = vmatmul.mubr.bf16.gmra.mrb[0].mxu0 %v8268
    %v9090 = vpop.f32.mrb[0].mxu0
    %v9091 = vadd.f32 %v8009, %v9090
    %v9092 = vpop.f32.mrb[0].mxu0
    %v9093 = vpop.f32.mrb[0].mxu0
    %v9094 = vadd.f32 %v8009, %v9093
    %v9095 = vpop.f32.mrb[0].mxu0
    %9096 = vmatprep.mubr.bf16.mxu0 0
    %9097 = vmatmul.mubr.bf16.gmra.mrb[0].mxu0 %v8271
    %v9098 = vpop.f32.mrb[0].mxu0
    %v9099 = vadd.f32 %v8009, %v9098
    %v9100 = vpop.f32.mrb[0].mxu0
    %v9101 = vpop.f32.mrb[0].mxu0
    %v9102 = vadd.f32 %v8009, %v9101
    %v9103 = vpop.f32.mrb[0].mxu0
    %9104 = vmatprep.mubr.bf16.mxu0 0
    %9105 = vmatmul.mubr.bf16.gmra.mrb[0].mxu0 %v8274
    %v9106 = vpop.f32.mrb[0].mxu0
    %v9107 = vadd.f32 %v8009, %v9106
    %v9108 = vpop.f32.mrb[0].mxu0
    %v9109 = vpop.f32.mrb[0].mxu0
    %v9110 = vadd.f32 %v8009, %v9109
    %v9111 = vpop.f32.mrb[0].mxu0
    %9112 = vmatprep.mubr.bf16.mxu0 0
    %9113 = vmatmul.mubr.bf16.gmra.mrb[0].mxu0 %v8277
    %v9114 = vpop.f32.mrb[0].mxu0
    %v9115 = vadd.f32 %v8009, %v9114
    %v9116 = vpop.f32.mrb[0].mxu0
    %v9117 = vpop.f32.mrb[0].mxu0
    %v9118 = vadd.f32 %v8009, %v9117
    %v9119 = vpop.f32.mrb[0].mxu0
    %9120 = vmatprep.mubr.bf16.mxu0 0
    %9121 = vmatmul.mubr.bf16.gmra.mrb[0].mxu0 %v8280
    %v9122 = vpop.f32.mrb[0].mxu0
    %v9123 = vadd.f32 %v8009, %v9122
    %v9124 = vpop.f32.mrb[0].mxu0
    %v9125 = vpop.f32.mrb[0].mxu0
    %v9126 = vadd.f32 %v8009, %v9125
    %v9127 = vpop.f32.mrb[0].mxu0
    %9128 = vmatprep.mubr.bf16.mxu0 0
    %9129 = vmatmul.mubr.bf16.gmra.mrb[0].mxu0 %v8283
    %v9130 = vpop.f32.mrb[0].mxu0
    %v9131 = vadd.f32 %v8009, %v9130
    %v9132 = vpop.f32.mrb[0].mxu0
    %v9133 = vpop.f32.mrb[0].mxu0
    %v9134 = vadd.f32 %v8009, %v9133
    %v9135 = vpop.f32.mrb[0].mxu0
    %9136 = vmatprep.mubr.bf16.mxu0 0
    %9137 = vmatmul.mubr.bf16.gmra.mrb[0].mxu0 %v8286
    %v9138 = vpop.f32.mrb[0].mxu0
    %v9139 = vadd.f32 %v8009, %v9138
    %v9140 = vpop.f32.mrb[0].mxu0
    %v9141 = vpop.f32.mrb[0].mxu0
    %v9142 = vadd.f32 %v8009, %v9141
    %v9143 = vpop.f32.mrb[0].mxu0
    %9144 = vmatprep.mubr.bf16.mxu0 0
    %9145 = vmatmul.mubr.bf16.gmra.mrb[0].mxu0 %v8289
    %v9146 = vpop.f32.mrb[0].mxu0
    %v9147 = vadd.f32 %v8009, %v9146
    %v9148 = vpop.f32.mrb[0].mxu0
    %v9149 = vpop.f32.mrb[0].mxu0
    %v9150 = vadd.f32 %v8009, %v9149
    %v9151 = vpop.f32.mrb[0].mxu0
    %9152 = vmatprep.mubr.bf16.mxu0 0
    %9153 = vmatmul.mubr.bf16.gmra.mrb[0].mxu0 %v8292
    %v9154 = vpop.f32.mrb[0].mxu0
    %v9155 = vadd.f32 %v8009, %v9154
    %v9156 = vpop.f32.mrb[0].mxu0
    %v9157 = vpop.f32.mrb[0].mxu0
    %v9158 = vadd.f32 %v8009, %v9157
    %v9159 = vpop.f32.mrb[0].mxu0
    %9160 = vmatprep.mubr.bf16.mxu0 0
    %9161 = vmatmul.mubr.bf16.gmra.mrb[0].mxu0 %v8295
    %v9162 = vpop.f32.mrb[0].mxu0
    %v9163 = vadd.f32 %v8009, %v9162
    %v9164 = vpop.f32.mrb[0].mxu0
    %v9165 = vpop.f32.mrb[0].mxu0
    %v9166 = vadd.f32 %v8009, %v9165
    %v9167 = vpop.f32.mrb[0].mxu0
    %9168 = vmatprep.mubr.bf16.mxu0 0
    %9169 = vmatmul.mubr.bf16.gmra.mrb[0].mxu0 %v8298
    %v9170 = vpop.f32.mrb[0].mxu0
    %v9171 = vadd.f32 %v8009, %v9170
    %v9172 = vpop.f32.mrb[0].mxu0
    %v9173 = vpop.f32.mrb[0].mxu0
    %v9174 = vadd.f32 %v8009, %v9173
    %v9175 = vpop.f32.mrb[0].mxu0
    %9176 = vmatprep.mubr.bf16.mxu0 0
    %9177 = vmatmul.mubr.bf16.gmra.mrb[0].mxu0 %v8301
    %v9178 = vpop.f32.mrb[0].mxu0
    %v9179 = vadd.f32 %v8009, %v9178
    %v9180 = vpop.f32.mrb[0].mxu0
    %v9181 = vpop.f32.mrb[0].mxu0
    %v9182 = vadd.f32 %v8009, %v9181
    %v9183 = vpop.f32.mrb[0].mxu0
    %9184 = vmatprep.mubr.bf16.mxu0 0
    %9185 = vmatmul.mubr.bf16.gmra.mrb[0].mxu0 %v8304
    %v9186 = vpop.f32.mrb[0].mxu0
    %v9187 = vadd.f32 %v8009, %v9186
    %v9188 = vpop.f32.mrb[0].mxu0
    %v9189 = vpop.f32.mrb[0].mxu0
    %v9190 = vadd.f32 %v8009, %v9189
    %v9191 = vpop.f32.mrb[0].mxu0
    %9192 = vmatprep.mubr.bf16.mxu0 0
    %9193 = vmatmul.mubr.bf16.gmra.mrb[0].mxu0 %v8307
    %v9194 = vpop.f32.mrb[0].mxu0
    %v9195 = vadd.f32 %v8009, %v9194
    %v9196 = vpop.f32.mrb[0].mxu0
    %v9197 = vpop.f32.mrb[0].mxu0
    %v9198 = vadd.f32 %v8009, %v9197
    %v9199 = vpop.f32.mrb[0].mxu0
    %9200 = vmatprep.mubr.bf16.mxu0 0
    %9201 = vmatmul.mubr.bf16.gmra.mrb[0].mxu0 %v8310
    %v9202 = vpop.f32.mrb[0].mxu0
    %v9203 = vadd.f32 %v8009, %v9202
    %v9204 = vpop.f32.mrb[0].mxu0
    %v9205 = vpop.f32.mrb[0].mxu0
    %v9206 = vadd.f32 %v8009, %v9205
    %v9207 = vpop.f32.mrb[0].mxu0
    %9208 = vmatprep.mubr.bf16.mxu0 0
    %9209 = vmatmul.mubr.bf16.gmra.mrb[0].mxu0 %v8313
    %v9210 = vpop.f32.mrb[0].mxu0
    %v9211 = vadd.f32 %v8009, %v9210
    %v9212 = vpop.f32.mrb[0].mxu0
    %v9213 = vpop.f32.mrb[0].mxu0
    %v9214 = vadd.f32 %v8009, %v9213
    %v9215 = vpop.f32.mrb[0].mxu0
    %9216 = vmatprep.mubr.bf16.mxu0 0
    %9217 = vmatmul.mubr.bf16.gmra.mrb[0].mxu0 %v8316
    %v9218 = vpop.f32.mrb[0].mxu0
    %v9219 = vadd.f32 %v8009, %v9218
    %v9220 = vpop.f32.mrb[0].mxu0
    %v9221 = vpop.f32.mrb[0].mxu0
    %v9222 = vadd.f32 %v8009, %v9221
    %v9223 = vpop.f32.mrb[0].mxu0
    %9224 = vmatprep.mubr.bf16.mxu0 0
    %9225 = vmatmul.mubr.bf16.gmra.mrb[0].mxu0 %v8319
    %v9226 = vpop.f32.mrb[0].mxu0
    %v9227 = vadd.f32 %v8009, %v9226
    %v9228 = vpop.f32.mrb[0].mxu0
    %v9229 = vpop.f32.mrb[0].mxu0
    %v9230 = vadd.f32 %v8009, %v9229
    %v9231 = vpop.f32.mrb[0].mxu0
    %9232 = vmatprep.mubr.bf16.mxu0 0
    %9233 = vmatmul.mubr.bf16.gmra.mrb[0].mxu0 %v8322
    %v9234 = vpop.f32.mrb[0].mxu0
    %v9235 = vadd.f32 %v8009, %v9234
    %v9236 = vpop.f32.mrb[0].mxu0
    %v9237 = vpop.f32.mrb[0].mxu0
    %v9238 = vadd.f32 %v8009, %v9237
    %v9239 = vpop.f32.mrb[0].mxu0
    %9240 = vmatprep.mubr.bf16.mxu0 0
    %9241 = vmatmul.mubr.bf16.gmra.mrb[0].mxu0 %v8325
    %v9242 = vpop.f32.mrb[0].mxu0
    %v9243 = vadd.f32 %v8009, %v9242
    %v9244 = vpop.f32.mrb[0].mxu0
    %v9245 = vpop.f32.mrb[0].mxu0
    %v9246 = vadd.f32 %v8009, %v9245
    %v9247 = vpop.f32.mrb[0].mxu0
    %9248 = vmatprep.mubr.bf16.mxu0 0
    %9249 = vmatmul.mubr.bf16.gmra.mrb[0].mxu0 %v8328
    %v9250 = vpop.f32.mrb[0].mxu0
    %v9251 = vadd.f32 %v8009, %v9250
    %v9252 = vpop.f32.mrb[0].mxu0
    %v9253 = vpop.f32.mrb[0].mxu0
    %v9254 = vadd.f32 %v8009, %v9253
    %v9255 = vpop.f32.mrb[0].mxu0
    %9256 = vmatprep.mubr.bf16.mxu0 0
    %9257 = vmatmul.mubr.bf16.gmra.mrb[0].mxu0 %v8331
    %v9258 = vpop.f32.mrb[0].mxu0
    %v9259 = vadd.f32 %v8009, %v9258
    %v9260 = vpop.f32.mrb[0].mxu0
    %v9261 = vpop.f32.mrb[0].mxu0
    %v9262 = vadd.f32 %v8009, %v9261
    %v9263 = vpop.f32.mrb[0].mxu0
    %9264 = vmatprep.mubr.bf16.mxu0 0
    %9265 = vmatmul.mubr.bf16.gmra.mrb[0].mxu0 %v8334
    %v9266 = vpop.f32.mrb[0].mxu0
    %v9267 = vadd.f32 %v8009, %v9266
    %v9268 = vpop.f32.mrb[0].mxu0
    %v9269 = vpop.f32.mrb[0].mxu0
    %v9270 = vadd.f32 %v8009, %v9269
    %v9271 = vpop.f32.mrb[0].mxu0
    %9272 = vmatprep.mubr.bf16.mxu0 0
    %9273 = vmatmul.mubr.bf16.gmra.mrb[0].mxu0 %v8337
    %v9274 = vpop.f32.mrb[0].mxu0
    %v9275 = vadd.f32 %v8009, %v9274
    %v9276 = vpop.f32.mrb[0].mxu0
    %v9277 = vpop.f32.mrb[0].mxu0
    %v9278 = vadd.f32 %v8009, %v9277
    %v9279 = vpop.f32.mrb[0].mxu0
    %9280 = vmatprep.mubr.bf16.mxu0 0
    %9281 = vmatmul.mubr.bf16.gmra.mrb[0].mxu0 %v8340
    %v9282 = vpop.f32.mrb[0].mxu0
    %v9283 = vadd.f32 %v8009, %v9282
    %v9284 = vpop.f32.mrb[0].mxu0
    %v9285 = vpop.f32.mrb[0].mxu0
    %v9286 = vadd.f32 %v8009, %v9285
    %v9287 = vpop.f32.mrb[0].mxu0
    %9288 = vmatprep.mubr.bf16.mxu0 0
    %9289 = vmatmul.mubr.bf16.gmra.mrb[0].mxu0 %v8343
    %v9290 = vpop.f32.mrb[0].mxu0
    %v9291 = vadd.f32 %v8009, %v9290
    %v9292 = vpop.f32.mrb[0].mxu0
    %v9293 = vpop.f32.mrb[0].mxu0
    %v9294 = vadd.f32 %v8009, %v9293
    %v9295 = vpop.f32.mrb[0].mxu0
    %9296 = vmatprep.mubr.bf16.mxu0 0
    %9297 = vmatmul.mubr.bf16.gmra.mrb[0].mxu0 %v8346
    %v9298 = vpop.f32.mrb[0].mxu0
    %v9299 = vadd.f32 %v8009, %v9298
    %v9300 = vpop.f32.mrb[0].mxu0
    %v9301 = vpop.f32.mrb[0].mxu0
    %v9302 = vadd.f32 %v8009, %v9301
    %v9303 = vpop.f32.mrb[0].mxu0
    %9304 = vmatprep.mubr.bf16.mxu0 0
    %9305 = vmatmul.mubr.bf16.gmra.mrb[0].mxu0 %v8349
    %v9306 = vpop.f32.mrb[0].mxu0
    %v9307 = vadd.f32 %v8009, %v9306
    %v9308 = vpop.f32.mrb[0].mxu0
    %v9309 = vpop.f32.mrb[0].mxu0
    %v9310 = vadd.f32 %v8009, %v9309
    %v9311 = vpop.f32.mrb[0].mxu0
    %9312 = vmatprep.mubr.bf16.mxu0 0
    %9313 = vmatmul.mubr.bf16.gmra.mrb[0].mxu0 %v8352
    %v9314 = vpop.f32.mrb[0].mxu0
    %v9315 = vadd.f32 %v8009, %v9314
    %v9316 = vpop.f32.mrb[0].mxu0
    %v9317 = vpop.f32.mrb[0].mxu0
    %v9318 = vadd.f32 %v8009, %v9317
    %v9319 = vpop.f32.mrb[0].mxu0
    %9320 = vmatprep.mubr.bf16.mxu0 0
    %9321 = vmatmul.mubr.bf16.gmra.mrb[0].mxu0 %v8355
    %v9322 = vpop.f32.mrb[0].mxu0
    %v9323 = vadd.f32 %v8009, %v9322
    %v9324 = vpop.f32.mrb[0].mxu0
    %v9325 = vpop.f32.mrb[0].mxu0
    %v9326 = vadd.f32 %v8009, %v9325
    %v9327 = vpop.f32.mrb[0].mxu0
    %9328 = vmatprep.mubr.bf16.mxu0 0
    %9329 = vmatmul.mubr.bf16.gmra.mrb[0].mxu0 %v8358
    %v9330 = vpop.f32.mrb[0].mxu0
    %v9331 = vadd.f32 %v8009, %v9330
    %v9332 = vpop.f32.mrb[0].mxu0
    %v9333 = vpop.f32.mrb[0].mxu0
    %v9334 = vadd.f32 %v8009, %v9333
    %v9335 = vpop.f32.mrb[0].mxu0
    %9336 = vmatprep.mubr.bf16.mxu0 0
    %9337 = vmatmul.mubr.bf16.gmra.mrb[0].mxu0 %v8361
    %v9338 = vpop.f32.mrb[0].mxu0
    %v9339 = vadd.f32 %v8009, %v9338
    %v9340 = vpop.f32.mrb[0].mxu0
    %v9341 = vpop.f32.mrb[0].mxu0
    %v9342 = vadd.f32 %v8009, %v9341
    %v9343 = vpop.f32.mrb[0].mxu0
    %9344 = vmatprep.mubr.bf16.mxu0 0
    %9345 = vmatmul.mubr.bf16.gmra.mrb[0].mxu0 %v8364
    %v9346 = vpop.f32.mrb[0].mxu0
    %v9347 = vadd.f32 %v8009, %v9346
    %v9348 = vpop.f32.mrb[0].mxu0
    %v9349 = vpop.f32.mrb[0].mxu0
    %v9350 = vadd.f32 %v8009, %v9349
    %v9351 = vpop.f32.mrb[0].mxu0
    %9352 = vmatprep.mubr.bf16.mxu0 0
    %9353 = vmatmul.mubr.bf16.gmra.mrb[0].mxu0 %v8367
    %v9354 = vpop.f32.mrb[0].mxu0
    %v9355 = vadd.f32 %v8009, %v9354
    %v9356 = vpop.f32.mrb[0].mxu0
    %v9357 = vpop.f32.mrb[0].mxu0
    %v9358 = vadd.f32 %v8009, %v9357
    %v9359 = vpop.f32.mrb[0].mxu0
    %9360 = vmatprep.mubr.bf16.mxu0 0
    %9361 = vmatmul.mubr.bf16.gmra.mrb[0].mxu0 %v8370
    %v9362 = vpop.f32.mrb[0].mxu0
    %v9363 = vadd.f32 %v8009, %v9362
    %v9364 = vpop.f32.mrb[0].mxu0
    %v9365 = vpop.f32.mrb[0].mxu0
    %v9366 = vadd.f32 %v8009, %v9365
    %v9367 = vpop.f32.mrb[0].mxu0
    %9368 = vmatprep.mubr.bf16.mxu0 0
    %9369 = vmatmul.mubr.bf16.gmra.mrb[0].mxu0 %v8373
    %v9370 = vpop.f32.mrb[0].mxu0
    %v9371 = vadd.f32 %v8009, %v9370
    %v9372 = vpop.f32.mrb[0].mxu0
    %v9373 = vpop.f32.mrb[0].mxu0
    %v9374 = vadd.f32 %v8009, %v9373
    %v9375 = vpop.f32.mrb[0].mxu0
    %9376 = vmatprep.mubr.bf16.mxu0 0
    %9377 = vmatmul.mubr.bf16.gmra.mrb[0].mxu0 %v8376
    %v9378 = vpop.f32.mrb[0].mxu0
    %v9379 = vadd.f32 %v8009, %v9378
    %v9380 = vpop.f32.mrb[0].mxu0
    %v9381 = vpop.f32.mrb[0].mxu0
    %v9382 = vadd.f32 %v8009, %v9381
    %v9383 = vpop.f32.mrb[0].mxu0
    %9384 = vmatprep.mubr.bf16.mxu0 0
    %9385 = vmatmul.mubr.bf16.gmra.mrb[0].mxu0 %v8379
    %v9386 = vpop.f32.mrb[0].mxu0
    %v9387 = vadd.f32 %v8009, %v9386
    %v9388 = vpop.f32.mrb[0].mxu0
    %v9389 = vpop.f32.mrb[0].mxu0
    %v9390 = vadd.f32 %v8009, %v9389
    %v9391 = vpop.f32.mrb[0].mxu0
    %9392 = vmatprep.mubr.bf16.mxu0 0
    %9393 = vmatmul.mubr.bf16.gmra.mrb[0].mxu0 %v8382
    %v9394 = vpop.f32.mrb[0].mxu0
    %v9395 = vadd.f32 %v8009, %v9394
    %v9396 = vpop.f32.mrb[0].mxu0
    %v9397 = vpop.f32.mrb[0].mxu0
    %v9398 = vadd.f32 %v8009, %v9397
    %v9399 = vpop.f32.mrb[0].mxu0
    %9400 = vmatprep.mubr.bf16.mxu0 0
    %9401 = vmatmul.mubr.bf16.gmra.mrb[0].mxu0 %v8385
    %v9402 = vpop.f32.mrb[0].mxu0
    %v9403 = vadd.f32 %v8009, %v9402
    %v9404 = vpop.f32.mrb[0].mxu0
    %v9405 = vpop.f32.mrb[0].mxu0
    %v9406 = vadd.f32 %v8009, %v9405
    %v9407 = vpop.f32.mrb[0].mxu0
    %9408 = vmatprep.mubr.bf16.mxu0 0
    %9409 = vmatmul.mubr.bf16.gmra.mrb[0].mxu0 %v8388
    %v9410 = vpop.f32.mrb[0].mxu0
    %v9411 = vadd.f32 %v8009, %v9410
    %v9412 = vpop.f32.mrb[0].mxu0
    %v9413 = vpop.f32.mrb[0].mxu0
    %v9414 = vadd.f32 %v8009, %v9413
    %v9415 = vpop.f32.mrb[0].mxu0
    %9416 = vmatprep.mubr.bf16.mxu0 0
    %9417 = vmatmul.mubr.bf16.gmra.mrb[0].mxu0 %v8391
    %v9418 = vpop.f32.mrb[0].mxu0
    %v9419 = vadd.f32 %v8009, %v9418
    %v9420 = vpop.f32.mrb[0].mxu0
    %v9421 = vpop.f32.mrb[0].mxu0
    %v9422 = vadd.f32 %v8009, %v9421
    %v9423 = vpop.f32.mrb[0].mxu0
    %9424 = vmatprep.mubr.bf16.mxu0 0
    %9425 = vmatmul.mubr.bf16.gmra.mrb[0].mxu0 %v8394
    %v9426 = vpop.f32.mrb[0].mxu0
    %v9427 = vadd.f32 %v8009, %v9426
    %v9428 = vpop.f32.mrb[0].mxu0
    %v9429 = vpop.f32.mrb[0].mxu0
    %v9430 = vadd.f32 %v8009, %v9429
    %v9431 = vpop.f32.mrb[0].mxu0
    %9432 = vmatprep.mubr.bf16.mxu0 0
    %9433 = vmatmul.mubr.bf16.gmra.mrb[0].mxu0 %v8397
    %v9434 = vpop.f32.mrb[0].mxu0
    %v9435 = vadd.f32 %v8009, %v9434
    %v9436 = vpop.f32.mrb[0].mxu0
    %v9437 = vpop.f32.mrb[0].mxu0
    %v9438 = vadd.f32 %v8009, %v9437
    %v9439 = vpop.f32.mrb[0].mxu0
    %9440 = vmatprep.mubr.bf16.mxu0 0
    %9441 = vmatmul.mubr.bf16.gmra.mrb[0].mxu0 %v8400
    %v9442 = vpop.f32.mrb[0].mxu0
    %v9443 = vadd.f32 %v8009, %v9442
    %v9444 = vpop.f32.mrb[0].mxu0
    %v9445 = vpop.f32.mrb[0].mxu0
    %v9446 = vadd.f32 %v8009, %v9445
    %v9447 = vpop.f32.mrb[0].mxu0
    %9448 = vmatprep.mubr.bf16.mxu0 0
    %9449 = vmatmul.mubr.bf16.gmra.mrb[0].mxu0 %v8403
    %v9450 = vpop.f32.mrb[0].mxu0
    %v9451 = vadd.f32 %v8009, %v9450
    %v9452 = vpop.f32.mrb[0].mxu0
    %v9453 = vpop.f32.mrb[0].mxu0
    %v9454 = vadd.f32 %v8009, %v9453
    %v9455 = vpop.f32.mrb[0].mxu0
    %9456 = vmatprep.mubr.bf16.mxu0 0
    %9457 = vmatmul.mubr.bf16.gmra.mrb[0].mxu0 %v8406
    %v9458 = vpop.f32.mrb[0].mxu0
    %v9459 = vadd.f32 %v8009, %v9458
    %v9460 = vpop.f32.mrb[0].mxu0
    %v9461 = vpop.f32.mrb[0].mxu0
    %v9462 = vadd.f32 %v8009, %v9461
    %v9463 = vpop.f32.mrb[0].mxu0
    %9464 = vdwg.mxu0
    %v9465 = vmax.f32 %v8443, 0.0
    %v9466 = vmax.f32 %v8446, 0.0
    %v9467 = vmax.f32 %v8451, 0.0
    %v9468 = vmax.f32 %v8454, 0.0
    %v9469 = vmax.f32 %v8459, 0.0
    %v9470 = vmax.f32 %v8462, 0.0
    %v9471 = vmax.f32 %v8467, 0.0
    %v9472 = vmax.f32 %v8470, 0.0
    %v9473 = vmax.f32 %v8475, 0.0
    %v9474 = vmax.f32 %v8478, 0.0
    %v9475 = vmax.f32 %v8483, 0.0
    %v9476 = vmax.f32 %v8486, 0.0
    %v9477 = vmax.f32 %v8491, 0.0
    %v9478 = vmax.f32 %v8494, 0.0
    %v9479 = vmax.f32 %v8499, 0.0
    %v9480 = vmax.f32 %v8502, 0.0
    %v9481 = vmax.f32 %v8507, 0.0
    %v9482 = vmax.f32 %v8510, 0.0
    %v9483 = vmax.f32 %v8515, 0.0
    %v9484 = vmax.f32 %v8518, 0.0
    %v9485 = vmax.f32 %v8523, 0.0
    %v9486 = vmax.f32 %v8526, 0.0
    %v9487 = vmax.f32 %v8531, 0.0
    %v9488 = vmax.f32 %v8534, 0.0
    %v9489 = vmax.f32 %v8539, 0.0
    %v9490 = vmax.f32 %v8542, 0.0
    %v9491 = vmax.f32 %v8547, 0.0
    %v9492 = vmax.f32 %v8550, 0.0
    %v9493 = vmax.f32 %v8555, 0.0
    %v9494 = vmax.f32 %v8558, 0.0
    %v9495 = vmax.f32 %v8563, 0.0
    %v9496 = vmax.f32 %v8566, 0.0
    %v9497 = vmax.f32 %v8571, 0.0
    %v9498 = vmax.f32 %v8574, 0.0
    %v9499 = vmax.f32 %v8579, 0.0
    %v9500 = vmax.f32 %v8582, 0.0
    %v9501 = vmax.f32 %v8587, 0.0
    %v9502 = vmax.f32 %v8590, 0.0
    %v9503 = vmax.f32 %v8595, 0.0
    %v9504 = vmax.f32 %v8598, 0.0
    %v9505 = vmax.f32 %v8603, 0.0
    %v9506 = vmax.f32 %v8606, 0.0
    %v9507 = vmax.f32 %v8611, 0.0
    %v9508 = vmax.f32 %v8614, 0.0
    %v9509 = vmax.f32 %v8619, 0.0
    %v9510 = vmax.f32 %v8622, 0.0
    %v9511 = vmax.f32 %v8627, 0.0
    %v9512 = vmax.f32 %v8630, 0.0
    %v9513 = vmax.f32 %v8635, 0.0
    %v9514 = vmax.f32 %v8638, 0.0
    %v9515 = vmax.f32 %v8643, 0.0
    %v9516 = vmax.f32 %v8646, 0.0
    %v9517 = vmax.f32 %v8651, 0.0
    %v9518 = vmax.f32 %v8654, 0.0
    %v9519 = vmax.f32 %v8659, 0.0
    %v9520 = vmax.f32 %v8662, 0.0
    %v9521 = vmax.f32 %v8667, 0.0
    %v9522 = vmax.f32 %v8670, 0.0
    %v9523 = vmax.f32 %v8675, 0.0
    %v9524 = vmax.f32 %v8678, 0.0
    %v9525 = vmax.f32 %v8683, 0.0
    %v9526 = vmax.f32 %v8686, 0.0
    %v9527 = vmax.f32 %v8691, 0.0
    %v9528 = vmax.f32 %v8694, 0.0
    %v9529 = vmax.f32 %v8699, 0.0
    %v9530 = vmax.f32 %v8702, 0.0
    %v9531 = vmax.f32 %v8707, 0.0
    %v9532 = vmax.f32 %v8710, 0.0
    %v9533 = vmax.f32 %v8715, 0.0
    %v9534 = vmax.f32 %v8718, 0.0
    %v9535 = vmax.f32 %v8723, 0.0
    %v9536 = vmax.f32 %v8726, 0.0
    %v9537 = vmax.f32 %v8731, 0.0
    %v9538 = vmax.f32 %v8734, 0.0
    %v9539 = vmax.f32 %v8739, 0.0
    %v9540 = vmax.f32 %v8742, 0.0
    %v9541 = vmax.f32 %v8747, 0.0
    %v9542 = vmax.f32 %v8750, 0.0
    %v9543 = vmax.f32 %v8755, 0.0
    %v9544 = vmax.f32 %v8758, 0.0
    %v9545 = vmax.f32 %v8763, 0.0
    %v9546 = vmax.f32 %v8766, 0.0
    %v9547 = vmax.f32 %v8771, 0.0
    %v9548 = vmax.f32 %v8774, 0.0
    %v9549 = vmax.f32 %v8779, 0.0
    %v9550 = vmax.f32 %v8782, 0.0
    %v9551 = vmax.f32 %v8787, 0.0
    %v9552 = vmax.f32 %v8790, 0.0
    %v9553 = vmax.f32 %v8795, 0.0
    %v9554 = vmax.f32 %v8798, 0.0
    %v9555 = vmax.f32 %v8803, 0.0
    %v9556 = vmax.f32 %v8806, 0.0
    %v9557 = vmax.f32 %v8811, 0.0
    %v9558 = vmax.f32 %v8814, 0.0
    %v9559 = vmax.f32 %v8819, 0.0
    %v9560 = vmax.f32 %v8822, 0.0
    %v9561 = vmax.f32 %v8827, 0.0
    %v9562 = vmax.f32 %v8830, 0.0
    %v9563 = vmax.f32 %v8835, 0.0
    %v9564 = vmax.f32 %v8838, 0.0
    %v9565 = vmax.f32 %v8843, 0.0
    %v9566 = vmax.f32 %v8846, 0.0
    %v9567 = vmax.f32 %v8851, 0.0
    %v9568 = vmax.f32 %v8854, 0.0
    %v9569 = vmax.f32 %v8859, 0.0
    %v9570 = vmax.f32 %v8862, 0.0
    %v9571 = vmax.f32 %v8867, 0.0
    %v9572 = vmax.f32 %v8870, 0.0
    %v9573 = vmax.f32 %v8875, 0.0
    %v9574 = vmax.f32 %v8878, 0.0
    %v9575 = vmax.f32 %v8883, 0.0
    %v9576 = vmax.f32 %v8886, 0.0
    %v9577 = vmax.f32 %v8891, 0.0
    %v9578 = vmax.f32 %v8894, 0.0
    %v9579 = vmax.f32 %v8899, 0.0
    %v9580 = vmax.f32 %v8902, 0.0
    %v9581 = vmax.f32 %v8907, 0.0
    %v9582 = vmax.f32 %v8910, 0.0
    %v9583 = vmax.f32 %v8915, 0.0
    %v9584 = vmax.f32 %v8918, 0.0
    %v9585 = vmax.f32 %v8923, 0.0
    %v9586 = vmax.f32 %v8926, 0.0
    %v9587 = vmax.f32 %v8931, 0.0
    %v9588 = vmax.f32 %v8934, 0.0
    %v9589 = vmax.f32 %v8939, 0.0
    %v9590 = vmax.f32 %v8942, 0.0
    %v9591 = vmax.f32 %v8947, 0.0
    %v9592 = vmax.f32 %v8950, 0.0
    %v9593 = vmax.f32 %v8955, 0.0
    %v9594 = vmax.f32 %v8958, 0.0
    %v9595 = vmax.f32 %v8963, 0.0
    %v9596 = vmax.f32 %v8966, 0.0
    %v9597 = vmax.f32 %v8971, 0.0
    %v9598 = vmax.f32 %v8974, 0.0
    %v9599 = vmax.f32 %v8979, 0.0
    %v9600 = vmax.f32 %v8982, 0.0
    %v9601 = vmax.f32 %v8987, 0.0
    %v9602 = vmax.f32 %v8990, 0.0
    %v9603 = vmax.f32 %v8995, 0.0
    %v9604 = vmax.f32 %v8998, 0.0
    %v9605 = vmax.f32 %v9003, 0.0
    %v9606 = vmax.f32 %v9006, 0.0
    %v9607 = vmax.f32 %v9011, 0.0
    %v9608 = vmax.f32 %v9014, 0.0
    %v9609 = vmax.f32 %v9019, 0.0
    %v9610 = vmax.f32 %v9022, 0.0
    %v9611 = vmax.f32 %v9027, 0.0
    %v9612 = vmax.f32 %v9030, 0.0
    %v9613 = vmax.f32 %v9035, 0.0
    %v9614 = vmax.f32 %v9038, 0.0
    %v9615 = vmax.f32 %v9043, 0.0
    %v9616 = vmax.f32 %v9046, 0.0
    %v9617 = vmax.f32 %v9051, 0.0
    %v9618 = vmax.f32 %v9054, 0.0
    %v9619 = vmax.f32 %v9059, 0.0
    %v9620 = vmax.f32 %v9062, 0.0
    %v9621 = vmax.f32 %v9067, 0.0
    %v9622 = vmax.f32 %v9070, 0.0
    %v9623 = vmax.f32 %v9075, 0.0
    %v9624 = vmax.f32 %v9078, 0.0
    %v9625 = vmax.f32 %v9083, 0.0
    %v9626 = vmax.f32 %v9086, 0.0
    %v9627 = vmax.f32 %v9091, 0.0
    %v9628 = vmax.f32 %v9094, 0.0
    %v9629 = vmax.f32 %v9099, 0.0
    %v9630 = vmax.f32 %v9102, 0.0
    %v9631 = vmax.f32 %v9107, 0.0
    %v9632 = vmax.f32 %v9110, 0.0
    %v9633 = vmax.f32 %v9115, 0.0
    %v9634 = vmax.f32 %v9118, 0.0
    %v9635 = vmax.f32 %v9123, 0.0
    %v9636 = vmax.f32 %v9126, 0.0
    %v9637 = vmax.f32 %v9131, 0.0
    %v9638 = vmax.f32 %v9134, 0.0
    %v9639 = vmax.f32 %v9139, 0.0
    %v9640 = vmax.f32 %v9142, 0.0
    %v9641 = vmax.f32 %v9147, 0.0
    %v9642 = vmax.f32 %v9150, 0.0
    %v9643 = vmax.f32 %v9155, 0.0
    %v9644 = vmax.f32 %v9158, 0.0
    %v9645 = vmax.f32 %v9163, 0.0
    %v9646 = vmax.f32 %v9166, 0.0
    %v9647 = vmax.f32 %v9171, 0.0
    %v9648 = vmax.f32 %v9174, 0.0
    %v9649 = vmax.f32 %v9179, 0.0
    %v9650 = vmax.f32 %v9182, 0.0
    %v9651 = vmax.f32 %v9187, 0.0
    %v9652 = vmax.f32 %v9190, 0.0
    %v9653 = vmax.f32 %v9195, 0.0
    %v9654 = vmax.f32 %v9198, 0.0
    %v9655 = vmax.f32 %v9203, 0.0
    %v9656 = vmax.f32 %v9206, 0.0
    %v9657 = vmax.f32 %v9211, 0.0
    %v9658 = vmax.f32 %v9214, 0.0
    %v9659 = vmax.f32 %v9219, 0.0
    %v9660 = vmax.f32 %v9222, 0.0
    %v9661 = vmax.f32 %v9227, 0.0
    %v9662 = vmax.f32 %v9230, 0.0
    %v9663 = vmax.f32 %v9235, 0.0
    %v9664 = vmax.f32 %v9238, 0.0
    %v9665 = vmax.f32 %v9243, 0.0
    %v9666 = vmax.f32 %v9246, 0.0
    %v9667 = vmax.f32 %v9251, 0.0
    %v9668 = vmax.f32 %v9254, 0.0
    %v9669 = vmax.f32 %v9259, 0.0
    %v9670 = vmax.f32 %v9262, 0.0
    %v9671 = vmax.f32 %v9267, 0.0
    %v9672 = vmax.f32 %v9270, 0.0
    %v9673 = vmax.f32 %v9275, 0.0
    %v9674 = vmax.f32 %v9278, 0.0
    %v9675 = vmax.f32 %v9283, 0.0
    %v9676 = vmax.f32 %v9286, 0.0
    %v9677 = vmax.f32 %v9291, 0.0
    %v9678 = vmax.f32 %v9294, 0.0
    %v9679 = vmax.f32 %v9299, 0.0
    %v9680 = vmax.f32 %v9302, 0.0
    %v9681 = vmax.f32 %v9307, 0.0
    %v9682 = vmax.f32 %v9310, 0.0
    %v9683 = vmax.f32 %v9315, 0.0
    %v9684 = vmax.f32 %v9318, 0.0
    %v9685 = vmax.f32 %v9323, 0.0
    %v9686 = vmax.f32 %v9326, 0.0
    %v9687 = vmax.f32 %v9331, 0.0
    %v9688 = vmax.f32 %v9334, 0.0
    %v9689 = vmax.f32 %v9339, 0.0
    %v9690 = vmax.f32 %v9342, 0.0
    %v9691 = vmax.f32 %v9347, 0.0
    %v9692 = vmax.f32 %v9350, 0.0
    %v9693 = vmax.f32 %v9355, 0.0
    %v9694 = vmax.f32 %v9358, 0.0
    %v9695 = vmax.f32 %v9363, 0.0
    %v9696 = vmax.f32 %v9366, 0.0
    %v9697 = vmax.f32 %v9371, 0.0
    %v9698 = vmax.f32 %v9374, 0.0
    %v9699 = vmax.f32 %v9379, 0.0
    %v9700 = vmax.f32 %v9382, 0.0
    %v9701 = vmax.f32 %v9387, 0.0
    %v9702 = vmax.f32 %v9390, 0.0
    %v9703 = vmax.f32 %v9395, 0.0
    %v9704 = vmax.f32 %v9398, 0.0
    %v9705 = vmax.f32 %v9403, 0.0
    %v9706 = vmax.f32 %v9406, 0.0
    %v9707 = vmax.f32 %v9411, 0.0
    %v9708 = vmax.f32 %v9414, 0.0
    %v9709 = vmax.f32 %v9419, 0.0
    %v9710 = vmax.f32 %v9422, 0.0
    %v9711 = vmax.f32 %v9427, 0.0
    %v9712 = vmax.f32 %v9430, 0.0
    %v9713 = vmax.f32 %v9435, 0.0
    %v9714 = vmax.f32 %v9438, 0.0
    %v9715 = vmax.f32 %v9443, 0.0
    %v9716 = vmax.f32 %v9446, 0.0
    %v9717 = vmax.f32 %v9451, 0.0
    %v9718 = vmax.f32 %v9454, 0.0
    %v9719 = vmax.f32 %v9459, 0.0
    %v9720 = vmax.f32 %v9462, 0.0
    %v9721 = vld [vmem:[%s6] sm:$0x1]
    %v9723 = vlaneseq
    %v9724 = vshrl.u32 %v9723, 7
    %v9725 = vsub.s32 0, %v9724
    %v9726 = vrot.slane %v9721, %v9725
    %v9728 = vmul.f32 %v9465, %v9726
    %v9729 = vmul.f32 %v9466, %v9726
    %v9730 = vmul.f32 %v9467, %v9726
    %v9731 = vmul.f32 %v9468, %v9726
    %v9732 = vmul.f32 %v9469, %v9726
    %v9733 = vmul.f32 %v9470, %v9726
    %v9734 = vmul.f32 %v9471, %v9726
    %v9735 = vmul.f32 %v9472, %v9726
    %v9736 = vmul.f32 %v9473, %v9726
    %v9737 = vmul.f32 %v9474, %v9726
    %v9738 = vmul.f32 %v9475, %v9726
    %v9739 = vmul.f32 %v9476, %v9726
    %v9740 = vmul.f32 %v9477, %v9726
    %v9741 = vmul.f32 %v9478, %v9726
    %v9742 = vmul.f32 %v9479, %v9726
    %v9743 = vmul.f32 %v9480, %v9726
    %v9744 = vmul.f32 %v9481, %v9726
    %v9745 = vmul.f32 %v9482, %v9726
    %v9746 = vmul.f32 %v9483, %v9726
    %v9747 = vmul.f32 %v9484, %v9726
    %v9748 = vmul.f32 %v9485, %v9726
    %v9749 = vmul.f32 %v9486, %v9726
    %v9750 = vmul.f32 %v9487, %v9726
    %v9751 = vmul.f32 %v9488, %v9726
    %v9752 = vmul.f32 %v9489, %v9726
    %v9753 = vmul.f32 %v9490, %v9726
    %v9754 = vmul.f32 %v9491, %v9726
    %v9755 = vmul.f32 %v9492, %v9726
    %v9756 = vmul.f32 %v9493, %v9726
    %v9757 = vmul.f32 %v9494, %v9726
    %v9758 = vmul.f32 %v9495, %v9726
    %v9759 = vmul.f32 %v9496, %v9726
    %v9760 = vmul.f32 %v9497, %v9726
    %v9761 = vmul.f32 %v9498, %v9726
    %v9762 = vmul.f32 %v9499, %v9726
    %v9763 = vmul.f32 %v9500, %v9726
    %v9764 = vmul.f32 %v9501, %v9726
    %v9765 = vmul.f32 %v9502, %v9726
    %v9766 = vmul.f32 %v9503, %v9726
    %v9767 = vmul.f32 %v9504, %v9726
    %v9768 = vmul.f32 %v9505, %v9726
    %v9769 = vmul.f32 %v9506, %v9726
    %v9770 = vmul.f32 %v9507, %v9726
    %v9771 = vmul.f32 %v9508, %v9726
    %v9772 = vmul.f32 %v9509, %v9726
    %v9773 = vmul.f32 %v9510, %v9726
    %v9774 = vmul.f32 %v9511, %v9726
    %v9775 = vmul.f32 %v9512, %v9726
    %v9776 = vmul.f32 %v9513, %v9726
    %v9777 = vmul.f32 %v9514, %v9726
    %v9778 = vmul.f32 %v9515, %v9726
    %v9779 = vmul.f32 %v9516, %v9726
    %v9780 = vmul.f32 %v9517, %v9726
    %v9781 = vmul.f32 %v9518, %v9726
    %v9782 = vmul.f32 %v9519, %v9726
    %v9783 = vmul.f32 %v9520, %v9726
    %v9784 = vmul.f32 %v9521, %v9726
    %v9785 = vmul.f32 %v9522, %v9726
    %v9786 = vmul.f32 %v9523, %v9726
    %v9787 = vmul.f32 %v9524, %v9726
    %v9788 = vmul.f32 %v9525, %v9726
    %v9789 = vmul.f32 %v9526, %v9726
    %v9790 = vmul.f32 %v9527, %v9726
    %v9791 = vmul.f32 %v9528, %v9726
    %v9792 = vmul.f32 %v9529, %v9726
    %v9793 = vmul.f32 %v9530, %v9726
    %v9794 = vmul.f32 %v9531, %v9726
    %v9795 = vmul.f32 %v9532, %v9726
    %v9796 = vmul.f32 %v9533, %v9726
    %v9797 = vmul.f32 %v9534, %v9726
    %v9798 = vmul.f32 %v9535, %v9726
    %v9799 = vmul.f32 %v9536, %v9726
    %v9800 = vmul.f32 %v9537, %v9726
    %v9801 = vmul.f32 %v9538, %v9726
    %v9802 = vmul.f32 %v9539, %v9726
    %v9803 = vmul.f32 %v9540, %v9726
    %v9804 = vmul.f32 %v9541, %v9726
    %v9805 = vmul.f32 %v9542, %v9726
    %v9806 = vmul.f32 %v9543, %v9726
    %v9807 = vmul.f32 %v9544, %v9726
    %v9808 = vmul.f32 %v9545, %v9726
    %v9809 = vmul.f32 %v9546, %v9726
    %v9810 = vmul.f32 %v9547, %v9726
    %v9811 = vmul.f32 %v9548, %v9726
    %v9812 = vmul.f32 %v9549, %v9726
    %v9813 = vmul.f32 %v9550, %v9726
    %v9814 = vmul.f32 %v9551, %v9726
    %v9815 = vmul.f32 %v9552, %v9726
    %v9816 = vmul.f32 %v9553, %v9726
    %v9817 = vmul.f32 %v9554, %v9726
    %v9818 = vmul.f32 %v9555, %v9726
    %v9819 = vmul.f32 %v9556, %v9726
    %v9820 = vmul.f32 %v9557, %v9726
    %v9821 = vmul.f32 %v9558, %v9726
    %v9822 = vmul.f32 %v9559, %v9726
    %v9823 = vmul.f32 %v9560, %v9726
    %v9824 = vmul.f32 %v9561, %v9726
    %v9825 = vmul.f32 %v9562, %v9726
    %v9826 = vmul.f32 %v9563, %v9726
    %v9827 = vmul.f32 %v9564, %v9726
    %v9828 = vmul.f32 %v9565, %v9726
    %v9829 = vmul.f32 %v9566, %v9726
    %v9830 = vmul.f32 %v9567, %v9726
    %v9831 = vmul.f32 %v9568, %v9726
    %v9832 = vmul.f32 %v9569, %v9726
    %v9833 = vmul.f32 %v9570, %v9726
    %v9834 = vmul.f32 %v9571, %v9726
    %v9835 = vmul.f32 %v9572, %v9726
    %v9836 = vmul.f32 %v9573, %v9726
    %v9837 = vmul.f32 %v9574, %v9726
    %v9838 = vmul.f32 %v9575, %v9726
    %v9839 = vmul.f32 %v9576, %v9726
    %v9840 = vmul.f32 %v9577, %v9726
    %v9841 = vmul.f32 %v9578, %v9726
    %v9842 = vmul.f32 %v9579, %v9726
    %v9843 = vmul.f32 %v9580, %v9726
    %v9844 = vmul.f32 %v9581, %v9726
    %v9845 = vmul.f32 %v9582, %v9726
    %v9846 = vmul.f32 %v9583, %v9726
    %v9847 = vmul.f32 %v9584, %v9726
    %v9848 = vmul.f32 %v9585, %v9726
    %v9849 = vmul.f32 %v9586, %v9726
    %v9850 = vmul.f32 %v9587, %v9726
    %v9851 = vmul.f32 %v9588, %v9726
    %v9852 = vmul.f32 %v9589, %v9726
    %v9853 = vmul.f32 %v9590, %v9726
    %v9854 = vmul.f32 %v9591, %v9726
    %v9855 = vmul.f32 %v9592, %v9726
    %v9856 = vmul.f32 %v9593, %v9726
    %v9857 = vmul.f32 %v9594, %v9726
    %v9858 = vmul.f32 %v9595, %v9726
    %v9859 = vmul.f32 %v9596, %v9726
    %v9860 = vmul.f32 %v9597, %v9726
    %v9861 = vmul.f32 %v9598, %v9726
    %v9862 = vmul.f32 %v9599, %v9726
    %v9863 = vmul.f32 %v9600, %v9726
    %v9864 = vmul.f32 %v9601, %v9726
    %v9865 = vmul.f32 %v9602, %v9726
    %v9866 = vmul.f32 %v9603, %v9726
    %v9867 = vmul.f32 %v9604, %v9726
    %v9868 = vmul.f32 %v9605, %v9726
    %v9869 = vmul.f32 %v9606, %v9726
    %v9870 = vmul.f32 %v9607, %v9726
    %v9871 = vmul.f32 %v9608, %v9726
    %v9872 = vmul.f32 %v9609, %v9726
    %v9873 = vmul.f32 %v9610, %v9726
    %v9874 = vmul.f32 %v9611, %v9726
    %v9875 = vmul.f32 %v9612, %v9726
    %v9876 = vmul.f32 %v9613, %v9726
    %v9877 = vmul.f32 %v9614, %v9726
    %v9878 = vmul.f32 %v9615, %v9726
    %v9879 = vmul.f32 %v9616, %v9726
    %v9880 = vmul.f32 %v9617, %v9726
    %v9881 = vmul.f32 %v9618, %v9726
    %v9882 = vmul.f32 %v9619, %v9726
    %v9883 = vmul.f32 %v9620, %v9726
    %v9884 = vmul.f32 %v9621, %v9726
    %v9885 = vmul.f32 %v9622, %v9726
    %v9886 = vmul.f32 %v9623, %v9726
    %v9887 = vmul.f32 %v9624, %v9726
    %v9888 = vmul.f32 %v9625, %v9726
    %v9889 = vmul.f32 %v9626, %v9726
    %v9890 = vmul.f32 %v9627, %v9726
    %v9891 = vmul.f32 %v9628, %v9726
    %v9892 = vmul.f32 %v9629, %v9726
    %v9893 = vmul.f32 %v9630, %v9726
    %v9894 = vmul.f32 %v9631, %v9726
    %v9895 = vmul.f32 %v9632, %v9726
    %v9896 = vmul.f32 %v9633, %v9726
    %v9897 = vmul.f32 %v9634, %v9726
    %v9898 = vmul.f32 %v9635, %v9726
    %v9899 = vmul.f32 %v9636, %v9726
    %v9900 = vmul.f32 %v9637, %v9726
    %v9901 = vmul.f32 %v9638, %v9726
    %v9902 = vmul.f32 %v9639, %v9726
    %v9903 = vmul.f32 %v9640, %v9726
    %v9904 = vmul.f32 %v9641, %v9726
    %v9905 = vmul.f32 %v9642, %v9726
    %v9906 = vmul.f32 %v9643, %v9726
    %v9907 = vmul.f32 %v9644, %v9726
    %v9908 = vmul.f32 %v9645, %v9726
    %v9909 = vmul.f32 %v9646, %v9726
    %v9910 = vmul.f32 %v9647, %v9726
    %v9911 = vmul.f32 %v9648, %v9726
    %v9912 = vmul.f32 %v9649, %v9726
    %v9913 = vmul.f32 %v9650, %v9726
    %v9914 = vmul.f32 %v9651, %v9726
    %v9915 = vmul.f32 %v9652, %v9726
    %v9916 = vmul.f32 %v9653, %v9726
    %v9917 = vmul.f32 %v9654, %v9726
    %v9918 = vmul.f32 %v9655, %v9726
    %v9919 = vmul.f32 %v9656, %v9726
    %v9920 = vmul.f32 %v9657, %v9726
    %v9921 = vmul.f32 %v9658, %v9726
    %v9922 = vmul.f32 %v9659, %v9726
    %v9923 = vmul.f32 %v9660, %v9726
    %v9924 = vmul.f32 %v9661, %v9726
    %v9925 = vmul.f32 %v9662, %v9726
    %v9926 = vmul.f32 %v9663, %v9726
    %v9927 = vmul.f32 %v9664, %v9726
    %v9928 = vmul.f32 %v9665, %v9726
    %v9929 = vmul.f32 %v9666, %v9726
    %v9930 = vmul.f32 %v9667, %v9726
    %v9931 = vmul.f32 %v9668, %v9726
    %v9932 = vmul.f32 %v9669, %v9726
    %v9933 = vmul.f32 %v9670, %v9726
    %v9934 = vmul.f32 %v9671, %v9726
    %v9935 = vmul.f32 %v9672, %v9726
    %v9936 = vmul.f32 %v9673, %v9726
    %v9937 = vmul.f32 %v9674, %v9726
    %v9938 = vmul.f32 %v9675, %v9726
    %v9939 = vmul.f32 %v9676, %v9726
    %v9940 = vmul.f32 %v9677, %v9726
    %v9941 = vmul.f32 %v9678, %v9726
    %v9942 = vmul.f32 %v9679, %v9726
    %v9943 = vmul.f32 %v9680, %v9726
    %v9944 = vmul.f32 %v9681, %v9726
    %v9945 = vmul.f32 %v9682, %v9726
    %v9946 = vmul.f32 %v9683, %v9726
    %v9947 = vmul.f32 %v9684, %v9726
    %v9948 = vmul.f32 %v9685, %v9726
    %v9949 = vmul.f32 %v9686, %v9726
    %v9950 = vmul.f32 %v9687, %v9726
    %v9951 = vmul.f32 %v9688, %v9726
    %v9952 = vmul.f32 %v9689, %v9726
    %v9953 = vmul.f32 %v9690, %v9726
    %v9954 = vmul.f32 %v9691, %v9726
    %v9955 = vmul.f32 %v9692, %v9726
    %v9956 = vmul.f32 %v9693, %v9726
    %v9957 = vmul.f32 %v9694, %v9726
    %v9958 = vmul.f32 %v9695, %v9726
    %v9959 = vmul.f32 %v9696, %v9726
    %v9960 = vmul.f32 %v9697, %v9726
    %v9961 = vmul.f32 %v9698, %v9726
    %v9962 = vmul.f32 %v9699, %v9726
    %v9963 = vmul.f32 %v9700, %v9726
    %v9964 = vmul.f32 %v9701, %v9726
    %v9965 = vmul.f32 %v9702, %v9726
    %v9966 = vmul.f32 %v9703, %v9726
    %v9967 = vmul.f32 %v9704, %v9726
    %v9968 = vmul.f32 %v9705, %v9726
    %v9969 = vmul.f32 %v9706, %v9726
    %v9970 = vmul.f32 %v9707, %v9726
    %v9971 = vmul.f32 %v9708, %v9726
    %v9972 = vmul.f32 %v9709, %v9726
    %v9973 = vmul.f32 %v9710, %v9726
    %v9974 = vmul.f32 %v9711, %v9726
    %v9975 = vmul.f32 %v9712, %v9726
    %v9976 = vmul.f32 %v9713, %v9726
    %v9977 = vmul.f32 %v9714, %v9726
    %v9978 = vmul.f32 %v9715, %v9726
    %v9979 = vmul.f32 %v9716, %v9726
    %v9980 = vmul.f32 %v9717, %v9726
    %v9981 = vmul.f32 %v9718, %v9726
    %v9982 = vmul.f32 %v9719, %v9726
    %v9983 = vmul.f32 %v9720, %v9726
    %v9984 = vsel %vm5567, %v9728, 0.0
    %9985 = vadd.xlane.f32.xlu0 %v9984
    %v9986 = vpop.xlane.xlu0 %9985
    %v9987 = vsel %vm5567, %v9729, 0.0
    %9988 = vadd.xlane.f32.xlu0 %v9987
    %v9989 = vpop.xlane.xlu0 %9988
    %v9990 = vsel %vm5567, %v9730, 0.0
    %9991 = vadd.xlane.f32.xlu0 %v9990
    %v9992 = vpop.xlane.xlu0 %9991
    %v9993 = vsel %vm5567, %v9731, 0.0
    %9994 = vadd.xlane.f32.xlu0 %v9993
    %v9995 = vpop.xlane.xlu0 %9994
    %v9996 = vsel %vm5567, %v9732, 0.0
    %9997 = vadd.xlane.f32.xlu0 %v9996
    %v9998 = vpop.xlane.xlu0 %9997
    %v9999 = vsel %vm5567, %v9733, 0.0
    %10000 = vadd.xlane.f32.xlu0 %v9999
    %v10001 = vpop.xlane.xlu0 %10000
    %v10002 = vsel %vm5567, %v9734, 0.0
    %10003 = vadd.xlane.f32.xlu0 %v10002
    %v10004 = vpop.xlane.xlu0 %10003
    %v10005 = vsel %vm5567, %v9735, 0.0
    %10006 = vadd.xlane.f32.xlu0 %v10005
    %v10007 = vpop.xlane.xlu0 %10006
    %v10008 = vsel %vm5567, %v9736, 0.0
    %10009 = vadd.xlane.f32.xlu0 %v10008
    %v10010 = vpop.xlane.xlu0 %10009
    %v10011 = vsel %vm5567, %v9737, 0.0
    %10012 = vadd.xlane.f32.xlu0 %v10011
    %v10013 = vpop.xlane.xlu0 %10012
    %v10014 = vsel %vm5567, %v9738, 0.0
    %10015 = vadd.xlane.f32.xlu0 %v10014
    %v10016 = vpop.xlane.xlu0 %10015
    %v10017 = vsel %vm5567, %v9739, 0.0
    %10018 = vadd.xlane.f32.xlu0 %v10017
    %v10019 = vpop.xlane.xlu0 %10018
    %v10020 = vsel %vm5567, %v9740, 0.0
    %10021 = vadd.xlane.f32.xlu0 %v10020
    %v10022 = vpop.xlane.xlu0 %10021
    %v10023 = vsel %vm5567, %v9741, 0.0
    %10024 = vadd.xlane.f32.xlu0 %v10023
    %v10025 = vpop.xlane.xlu0 %10024
    %v10026 = vsel %vm5567, %v9742, 0.0
    %10027 = vadd.xlane.f32.xlu0 %v10026
    %v10028 = vpop.xlane.xlu0 %10027
    %v10029 = vsel %vm5567, %v9743, 0.0
    %10030 = vadd.xlane.f32.xlu0 %v10029
    %v10031 = vpop.xlane.xlu0 %10030
    %v10032 = vsel %vm5567, %v9744, 0.0
    %10033 = vadd.xlane.f32.xlu0 %v10032
    %v10034 = vpop.xlane.xlu0 %10033
    %v10035 = vsel %vm5567, %v9745, 0.0
    %10036 = vadd.xlane.f32.xlu0 %v10035
    %v10037 = vpop.xlane.xlu0 %10036
    %v10038 = vsel %vm5567, %v9746, 0.0
    %10039 = vadd.xlane.f32.xlu0 %v10038
    %v10040 = vpop.xlane.xlu0 %10039
    %v10041 = vsel %vm5567, %v9747, 0.0
    %10042 = vadd.xlane.f32.xlu0 %v10041
    %v10043 = vpop.xlane.xlu0 %10042
    %v10044 = vsel %vm5567, %v9748, 0.0
    %10045 = vadd.xlane.f32.xlu0 %v10044
    %v10046 = vpop.xlane.xlu0 %10045
    %v10047 = vsel %vm5567, %v9749, 0.0
    %10048 = vadd.xlane.f32.xlu0 %v10047
    %v10049 = vpop.xlane.xlu0 %10048
    %v10050 = vsel %vm5567, %v9750, 0.0
    %10051 = vadd.xlane.f32.xlu0 %v10050
    %v10052 = vpop.xlane.xlu0 %10051
    %v10053 = vsel %vm5567, %v9751, 0.0
    %10054 = vadd.xlane.f32.xlu0 %v10053
    %v10055 = vpop.xlane.xlu0 %10054
    %v10056 = vsel %vm5567, %v9752, 0.0
    %10057 = vadd.xlane.f32.xlu0 %v10056
    %v10058 = vpop.xlane.xlu0 %10057
    %v10059 = vsel %vm5567, %v9753, 0.0
    %10060 = vadd.xlane.f32.xlu0 %v10059
    %v10061 = vpop.xlane.xlu0 %10060
    %v10062 = vsel %vm5567, %v9754, 0.0
    %10063 = vadd.xlane.f32.xlu0 %v10062
    %v10064 = vpop.xlane.xlu0 %10063
    %v10065 = vsel %vm5567, %v9755, 0.0
    %10066 = vadd.xlane.f32.xlu0 %v10065
    %v10067 = vpop.xlane.xlu0 %10066
    %v10068 = vsel %vm5567, %v9756, 0.0
    %10069 = vadd.xlane.f32.xlu0 %v10068
    %v10070 = vpop.xlane.xlu0 %10069
    %v10071 = vsel %vm5567, %v9757, 0.0
    %10072 = vadd.xlane.f32.xlu0 %v10071
    %v10073 = vpop.xlane.xlu0 %10072
    %v10074 = vsel %vm5567, %v9758, 0.0
    %10075 = vadd.xlane.f32.xlu0 %v10074
    %v10076 = vpop.xlane.xlu0 %10075
    %v10077 = vsel %vm5567, %v9759, 0.0
    %10078 = vadd.xlane.f32.xlu0 %v10077
    %v10079 = vpop.xlane.xlu0 %10078
    %v10080 = vsel %vm5567, %v9760, 0.0
    %10081 = vadd.xlane.f32.xlu0 %v10080
    %v10082 = vpop.xlane.xlu0 %10081
    %v10083 = vsel %vm5567, %v9761, 0.0
    %10084 = vadd.xlane.f32.xlu0 %v10083
    %v10085 = vpop.xlane.xlu0 %10084
    %v10086 = vsel %vm5567, %v9762, 0.0
    %10087 = vadd.xlane.f32.xlu0 %v10086
    %v10088 = vpop.xlane.xlu0 %10087
    %v10089 = vsel %vm5567, %v9763, 0.0
    %10090 = vadd.xlane.f32.xlu0 %v10089
    %v10091 = vpop.xlane.xlu0 %10090
    %v10092 = vsel %vm5567, %v9764, 0.0
    %10093 = vadd.xlane.f32.xlu0 %v10092
    %v10094 = vpop.xlane.xlu0 %10093
    %v10095 = vsel %vm5567, %v9765, 0.0
    %10096 = vadd.xlane.f32.xlu0 %v10095
    %v10097 = vpop.xlane.xlu0 %10096
    %v10098 = vsel %vm5567, %v9766, 0.0
    %10099 = vadd.xlane.f32.xlu0 %v10098
    %v10100 = vpop.xlane.xlu0 %10099
    %v10101 = vsel %vm5567, %v9767, 0.0
    %10102 = vadd.xlane.f32.xlu0 %v10101
    %v10103 = vpop.xlane.xlu0 %10102
    %v10104 = vsel %vm5567, %v9768, 0.0
    %10105 = vadd.xlane.f32.xlu0 %v10104
    %v10106 = vpop.xlane.xlu0 %10105
    %v10107 = vsel %vm5567, %v9769, 0.0
    %10108 = vadd.xlane.f32.xlu0 %v10107
    %v10109 = vpop.xlane.xlu0 %10108
    %v10110 = vsel %vm5567, %v9770, 0.0
    %10111 = vadd.xlane.f32.xlu0 %v10110
    %v10112 = vpop.xlane.xlu0 %10111
    %v10113 = vsel %vm5567, %v9771, 0.0
    %10114 = vadd.xlane.f32.xlu0 %v10113
    %v10115 = vpop.xlane.xlu0 %10114
    %v10116 = vsel %vm5567, %v9772, 0.0
    %10117 = vadd.xlane.f32.xlu0 %v10116
    %v10118 = vpop.xlane.xlu0 %10117
    %v10119 = vsel %vm5567, %v9773, 0.0
    %10120 = vadd.xlane.f32.xlu0 %v10119
    %v10121 = vpop.xlane.xlu0 %10120
    %v10122 = vsel %vm5567, %v9774, 0.0
    %10123 = vadd.xlane.f32.xlu0 %v10122
    %v10124 = vpop.xlane.xlu0 %10123
    %v10125 = vsel %vm5567, %v9775, 0.0
    %10126 = vadd.xlane.f32.xlu0 %v10125
    %v10127 = vpop.xlane.xlu0 %10126
    %v10128 = vsel %vm5567, %v9776, 0.0
    %10129 = vadd.xlane.f32.xlu0 %v10128
    %v10130 = vpop.xlane.xlu0 %10129
    %v10131 = vsel %vm5567, %v9777, 0.0
    %10132 = vadd.xlane.f32.xlu0 %v10131
    %v10133 = vpop.xlane.xlu0 %10132
    %v10134 = vsel %vm5567, %v9778, 0.0
    %10135 = vadd.xlane.f32.xlu0 %v10134
    %v10136 = vpop.xlane.xlu0 %10135
    %v10137 = vsel %vm5567, %v9779, 0.0
    %10138 = vadd.xlane.f32.xlu0 %v10137
    %v10139 = vpop.xlane.xlu0 %10138
    %v10140 = vsel %vm5567, %v9780, 0.0
    %10141 = vadd.xlane.f32.xlu0 %v10140
    %v10142 = vpop.xlane.xlu0 %10141
    %v10143 = vsel %vm5567, %v9781, 0.0
    %10144 = vadd.xlane.f32.xlu0 %v10143
    %v10145 = vpop.xlane.xlu0 %10144
    %v10146 = vsel %vm5567, %v9782, 0.0
    %10147 = vadd.xlane.f32.xlu0 %v10146
    %v10148 = vpop.xlane.xlu0 %10147
    %v10149 = vsel %vm5567, %v9783, 0.0
    %10150 = vadd.xlane.f32.xlu0 %v10149
    %v10151 = vpop.xlane.xlu0 %10150
    %v10152 = vsel %vm5567, %v9784, 0.0
    %10153 = vadd.xlane.f32.xlu0 %v10152
    %v10154 = vpop.xlane.xlu0 %10153
    %v10155 = vsel %vm5567, %v9785, 0.0
    %10156 = vadd.xlane.f32.xlu0 %v10155
    %v10157 = vpop.xlane.xlu0 %10156
    %v10158 = vsel %vm5567, %v9786, 0.0
    %10159 = vadd.xlane.f32.xlu0 %v10158
    %v10160 = vpop.xlane.xlu0 %10159
    %v10161 = vsel %vm5567, %v9787, 0.0
    %10162 = vadd.xlane.f32.xlu0 %v10161
    %v10163 = vpop.xlane.xlu0 %10162
    %v10164 = vsel %vm5567, %v9788, 0.0
    %10165 = vadd.xlane.f32.xlu0 %v10164
    %v10166 = vpop.xlane.xlu0 %10165
    %v10167 = vsel %vm5567, %v9789, 0.0
    %10168 = vadd.xlane.f32.xlu0 %v10167
    %v10169 = vpop.xlane.xlu0 %10168
    %v10170 = vsel %vm5567, %v9790, 0.0
    %10171 = vadd.xlane.f32.xlu0 %v10170
    %v10172 = vpop.xlane.xlu0 %10171
    %v10173 = vsel %vm5567, %v9791, 0.0
    %10174 = vadd.xlane.f32.xlu0 %v10173
    %v10175 = vpop.xlane.xlu0 %10174
    %v10176 = vsel %vm5567, %v9792, 0.0
    %10177 = vadd.xlane.f32.xlu0 %v10176
    %v10178 = vpop.xlane.xlu0 %10177
    %v10179 = vsel %vm5567, %v9793, 0.0
    %10180 = vadd.xlane.f32.xlu0 %v10179
    %v10181 = vpop.xlane.xlu0 %10180
    %v10182 = vsel %vm5567, %v9794, 0.0
    %10183 = vadd.xlane.f32.xlu0 %v10182
    %v10184 = vpop.xlane.xlu0 %10183
    %v10185 = vsel %vm5567, %v9795, 0.0
    %10186 = vadd.xlane.f32.xlu0 %v10185
    %v10187 = vpop.xlane.xlu0 %10186
    %v10188 = vsel %vm5567, %v9796, 0.0
    %10189 = vadd.xlane.f32.xlu0 %v10188
    %v10190 = vpop.xlane.xlu0 %10189
    %v10191 = vsel %vm5567, %v9797, 0.0
    %10192 = vadd.xlane.f32.xlu0 %v10191
    %v10193 = vpop.xlane.xlu0 %10192
    %v10194 = vsel %vm5567, %v9798, 0.0
    %10195 = vadd.xlane.f32.xlu0 %v10194
    %v10196 = vpop.xlane.xlu0 %10195
    %v10197 = vsel %vm5567, %v9799, 0.0
    %10198 = vadd.xlane.f32.xlu0 %v10197
    %v10199 = vpop.xlane.xlu0 %10198
    %v10200 = vsel %vm5567, %v9800, 0.0
    %10201 = vadd.xlane.f32.xlu0 %v10200
    %v10202 = vpop.xlane.xlu0 %10201
    %v10203 = vsel %vm5567, %v9801, 0.0
    %10204 = vadd.xlane.f32.xlu0 %v10203
    %v10205 = vpop.xlane.xlu0 %10204
    %v10206 = vsel %vm5567, %v9802, 0.0
    %10207 = vadd.xlane.f32.xlu0 %v10206
    %v10208 = vpop.xlane.xlu0 %10207
    %v10209 = vsel %vm5567, %v9803, 0.0
    %10210 = vadd.xlane.f32.xlu0 %v10209
    %v10211 = vpop.xlane.xlu0 %10210
    %v10212 = vsel %vm5567, %v9804, 0.0
    %10213 = vadd.xlane.f32.xlu0 %v10212
    %v10214 = vpop.xlane.xlu0 %10213
    %v10215 = vsel %vm5567, %v9805, 0.0
    %10216 = vadd.xlane.f32.xlu0 %v10215
    %v10217 = vpop.xlane.xlu0 %10216
    %v10218 = vsel %vm5567, %v9806, 0.0
    %10219 = vadd.xlane.f32.xlu0 %v10218
    %v10220 = vpop.xlane.xlu0 %10219
    %v10221 = vsel %vm5567, %v9807, 0.0
    %10222 = vadd.xlane.f32.xlu0 %v10221
    %v10223 = vpop.xlane.xlu0 %10222
    %v10224 = vsel %vm5567, %v9808, 0.0
    %10225 = vadd.xlane.f32.xlu0 %v10224
    %v10226 = vpop.xlane.xlu0 %10225
    %v10227 = vsel %vm5567, %v9809, 0.0
    %10228 = vadd.xlane.f32.xlu0 %v10227
    %v10229 = vpop.xlane.xlu0 %10228
    %v10230 = vsel %vm5567, %v9810, 0.0
    %10231 = vadd.xlane.f32.xlu0 %v10230
    %v10232 = vpop.xlane.xlu0 %10231
    %v10233 = vsel %vm5567, %v9811, 0.0
    %10234 = vadd.xlane.f32.xlu0 %v10233
    %v10235 = vpop.xlane.xlu0 %10234
    %v10236 = vsel %vm5567, %v9812, 0.0
    %10237 = vadd.xlane.f32.xlu0 %v10236
    %v10238 = vpop.xlane.xlu0 %10237
    %v10239 = vsel %vm5567, %v9813, 0.0
    %10240 = vadd.xlane.f32.xlu0 %v10239
    %v10241 = vpop.xlane.xlu0 %10240
    %v10242 = vsel %vm5567, %v9814, 0.0
    %10243 = vadd.xlane.f32.xlu0 %v10242
    %v10244 = vpop.xlane.xlu0 %10243
    %v10245 = vsel %vm5567, %v9815, 0.0
    %10246 = vadd.xlane.f32.xlu0 %v10245
    %v10247 = vpop.xlane.xlu0 %10246
    %v10248 = vsel %vm5567, %v9816, 0.0
    %10249 = vadd.xlane.f32.xlu0 %v10248
    %v10250 = vpop.xlane.xlu0 %10249
    %v10251 = vsel %vm5567, %v9817, 0.0
    %10252 = vadd.xlane.f32.xlu0 %v10251
    %v10253 = vpop.xlane.xlu0 %10252
    %v10254 = vsel %vm5567, %v9818, 0.0
    %10255 = vadd.xlane.f32.xlu0 %v10254
    %v10256 = vpop.xlane.xlu0 %10255
    %v10257 = vsel %vm5567, %v9819, 0.0
    %10258 = vadd.xlane.f32.xlu0 %v10257
    %v10259 = vpop.xlane.xlu0 %10258
    %v10260 = vsel %vm5567, %v9820, 0.0
    %10261 = vadd.xlane.f32.xlu0 %v10260
    %v10262 = vpop.xlane.xlu0 %10261
    %v10263 = vsel %vm5567, %v9821, 0.0
    %10264 = vadd.xlane.f32.xlu0 %v10263
    %v10265 = vpop.xlane.xlu0 %10264
    %v10266 = vsel %vm5567, %v9822, 0.0
    %10267 = vadd.xlane.f32.xlu0 %v10266
    %v10268 = vpop.xlane.xlu0 %10267
    %v10269 = vsel %vm5567, %v9823, 0.0
    %10270 = vadd.xlane.f32.xlu0 %v10269
    %v10271 = vpop.xlane.xlu0 %10270
    %v10272 = vsel %vm5567, %v9824, 0.0
    %10273 = vadd.xlane.f32.xlu0 %v10272
    %v10274 = vpop.xlane.xlu0 %10273
    %v10275 = vsel %vm5567, %v9825, 0.0
    %10276 = vadd.xlane.f32.xlu0 %v10275
    %v10277 = vpop.xlane.xlu0 %10276
    %v10278 = vsel %vm5567, %v9826, 0.0
    %10279 = vadd.xlane.f32.xlu0 %v10278
    %v10280 = vpop.xlane.xlu0 %10279
    %v10281 = vsel %vm5567, %v9827, 0.0
    %10282 = vadd.xlane.f32.xlu0 %v10281
    %v10283 = vpop.xlane.xlu0 %10282
    %v10284 = vsel %vm5567, %v9828, 0.0
    %10285 = vadd.xlane.f32.xlu0 %v10284
    %v10286 = vpop.xlane.xlu0 %10285
    %v10287 = vsel %vm5567, %v9829, 0.0
    %10288 = vadd.xlane.f32.xlu0 %v10287
    %v10289 = vpop.xlane.xlu0 %10288
    %v10290 = vsel %vm5567, %v9830, 0.0
    %10291 = vadd.xlane.f32.xlu0 %v10290
    %v10292 = vpop.xlane.xlu0 %10291
    %v10293 = vsel %vm5567, %v9831, 0.0
    %10294 = vadd.xlane.f32.xlu0 %v10293
    %v10295 = vpop.xlane.xlu0 %10294
    %v10296 = vsel %vm5567, %v9832, 0.0
    %10297 = vadd.xlane.f32.xlu0 %v10296
    %v10298 = vpop.xlane.xlu0 %10297
    %v10299 = vsel %vm5567, %v9833, 0.0
    %10300 = vadd.xlane.f32.xlu0 %v10299
    %v10301 = vpop.xlane.xlu0 %10300
    %v10302 = vsel %vm5567, %v9834, 0.0
    %10303 = vadd.xlane.f32.xlu0 %v10302
    %v10304 = vpop.xlane.xlu0 %10303
    %v10305 = vsel %vm5567, %v9835, 0.0
    %10306 = vadd.xlane.f32.xlu0 %v10305
    %v10307 = vpop.xlane.xlu0 %10306
    %v10308 = vsel %vm5567, %v9836, 0.0
    %10309 = vadd.xlane.f32.xlu0 %v10308
    %v10310 = vpop.xlane.xlu0 %10309
    %v10311 = vsel %vm5567, %v9837, 0.0
    %10312 = vadd.xlane.f32.xlu0 %v10311
    %v10313 = vpop.xlane.xlu0 %10312
    %v10314 = vsel %vm5567, %v9838, 0.0
    %10315 = vadd.xlane.f32.xlu0 %v10314
    %v10316 = vpop.xlane.xlu0 %10315
    %v10317 = vsel %vm5567, %v9839, 0.0
    %10318 = vadd.xlane.f32.xlu0 %v10317
    %v10319 = vpop.xlane.xlu0 %10318
    %v10320 = vsel %vm5567, %v9840, 0.0
    %10321 = vadd.xlane.f32.xlu0 %v10320
    %v10322 = vpop.xlane.xlu0 %10321
    %v10323 = vsel %vm5567, %v9841, 0.0
    %10324 = vadd.xlane.f32.xlu0 %v10323
    %v10325 = vpop.xlane.xlu0 %10324
    %v10326 = vsel %vm5567, %v9842, 0.0
    %10327 = vadd.xlane.f32.xlu0 %v10326
    %v10328 = vpop.xlane.xlu0 %10327
    %v10329 = vsel %vm5567, %v9843, 0.0
    %10330 = vadd.xlane.f32.xlu0 %v10329
    %v10331 = vpop.xlane.xlu0 %10330
    %v10332 = vsel %vm5567, %v9844, 0.0
    %10333 = vadd.xlane.f32.xlu0 %v10332
    %v10334 = vpop.xlane.xlu0 %10333
    %v10335 = vsel %vm5567, %v9845, 0.0
    %10336 = vadd.xlane.f32.xlu0 %v10335
    %v10337 = vpop.xlane.xlu0 %10336
    %v10338 = vsel %vm5567, %v9846, 0.0
    %10339 = vadd.xlane.f32.xlu0 %v10338
    %v10340 = vpop.xlane.xlu0 %10339
    %v10341 = vsel %vm5567, %v9847, 0.0
    %10342 = vadd.xlane.f32.xlu0 %v10341
    %v10343 = vpop.xlane.xlu0 %10342
    %v10344 = vsel %vm5567, %v9848, 0.0
    %10345 = vadd.xlane.f32.xlu0 %v10344
    %v10346 = vpop.xlane.xlu0 %10345
    %v10347 = vsel %vm5567, %v9849, 0.0
    %10348 = vadd.xlane.f32.xlu0 %v10347
    %v10349 = vpop.xlane.xlu0 %10348
    %v10350 = vsel %vm5567, %v9850, 0.0
    %10351 = vadd.xlane.f32.xlu0 %v10350
    %v10352 = vpop.xlane.xlu0 %10351
    %v10353 = vsel %vm5567, %v9851, 0.0
    %10354 = vadd.xlane.f32.xlu0 %v10353
    %v10355 = vpop.xlane.xlu0 %10354
    %v10356 = vsel %vm5567, %v9852, 0.0
    %10357 = vadd.xlane.f32.xlu0 %v10356
    %v10358 = vpop.xlane.xlu0 %10357
    %v10359 = vsel %vm5567, %v9853, 0.0
    %10360 = vadd.xlane.f32.xlu0 %v10359
    %v10361 = vpop.xlane.xlu0 %10360
    %v10362 = vsel %vm5567, %v9854, 0.0
    %10363 = vadd.xlane.f32.xlu0 %v10362
    %v10364 = vpop.xlane.xlu0 %10363
    %v10365 = vsel %vm5567, %v9855, 0.0
    %10366 = vadd.xlane.f32.xlu0 %v10365
    %v10367 = vpop.xlane.xlu0 %10366
    %v10368 = vsel %vm5567, %v9856, 0.0
    %10369 = vadd.xlane.f32.xlu0 %v10368
    %v10370 = vpop.xlane.xlu0 %10369
    %v10371 = vsel %vm5567, %v9857, 0.0
    %10372 = vadd.xlane.f32.xlu0 %v10371
    %v10373 = vpop.xlane.xlu0 %10372
    %v10374 = vsel %vm5567, %v9858, 0.0
    %10375 = vadd.xlane.f32.xlu0 %v10374
    %v10376 = vpop.xlane.xlu0 %10375
    %v10377 = vsel %vm5567, %v9859, 0.0
    %10378 = vadd.xlane.f32.xlu0 %v10377
    %v10379 = vpop.xlane.xlu0 %10378
    %v10380 = vsel %vm5567, %v9860, 0.0
    %10381 = vadd.xlane.f32.xlu0 %v10380
    %v10382 = vpop.xlane.xlu0 %10381
    %v10383 = vsel %vm5567, %v9861, 0.0
    %10384 = vadd.xlane.f32.xlu0 %v10383
    %v10385 = vpop.xlane.xlu0 %10384
    %v10386 = vsel %vm5567, %v9862, 0.0
    %10387 = vadd.xlane.f32.xlu0 %v10386
    %v10388 = vpop.xlane.xlu0 %10387
    %v10389 = vsel %vm5567, %v9863, 0.0
    %10390 = vadd.xlane.f32.xlu0 %v10389
    %v10391 = vpop.xlane.xlu0 %10390
    %v10392 = vsel %vm5567, %v9864, 0.0
    %10393 = vadd.xlane.f32.xlu0 %v10392
    %v10394 = vpop.xlane.xlu0 %10393
    %v10395 = vsel %vm5567, %v9865, 0.0
    %10396 = vadd.xlane.f32.xlu0 %v10395
    %v10397 = vpop.xlane.xlu0 %10396
    %v10398 = vsel %vm5567, %v9866, 0.0
    %10399 = vadd.xlane.f32.xlu0 %v10398
    %v10400 = vpop.xlane.xlu0 %10399
    %v10401 = vsel %vm5567, %v9867, 0.0
    %10402 = vadd.xlane.f32.xlu0 %v10401
    %v10403 = vpop.xlane.xlu0 %10402
    %v10404 = vsel %vm5567, %v9868, 0.0
    %10405 = vadd.xlane.f32.xlu0 %v10404
    %v10406 = vpop.xlane.xlu0 %10405
    %v10407 = vsel %vm5567, %v9869, 0.0
    %10408 = vadd.xlane.f32.xlu0 %v10407
    %v10409 = vpop.xlane.xlu0 %10408
    %v10410 = vsel %vm5567, %v9870, 0.0
    %10411 = vadd.xlane.f32.xlu0 %v10410
    %v10412 = vpop.xlane.xlu0 %10411
    %v10413 = vsel %vm5567, %v9871, 0.0
    %10414 = vadd.xlane.f32.xlu0 %v10413
    %v10415 = vpop.xlane.xlu0 %10414
    %v10416 = vsel %vm5567, %v9872, 0.0
    %10417 = vadd.xlane.f32.xlu0 %v10416
    %v10418 = vpop.xlane.xlu0 %10417
    %v10419 = vsel %vm5567, %v9873, 0.0
    %10420 = vadd.xlane.f32.xlu0 %v10419
    %v10421 = vpop.xlane.xlu0 %10420
    %v10422 = vsel %vm5567, %v9874, 0.0
    %10423 = vadd.xlane.f32.xlu0 %v10422
    %v10424 = vpop.xlane.xlu0 %10423
    %v10425 = vsel %vm5567, %v9875, 0.0
    %10426 = vadd.xlane.f32.xlu0 %v10425
    %v10427 = vpop.xlane.xlu0 %10426
    %v10428 = vsel %vm5567, %v9876, 0.0
    %10429 = vadd.xlane.f32.xlu0 %v10428
    %v10430 = vpop.xlane.xlu0 %10429
    %v10431 = vsel %vm5567, %v9877, 0.0
    %10432 = vadd.xlane.f32.xlu0 %v10431
    %v10433 = vpop.xlane.xlu0 %10432
    %v10434 = vsel %vm5567, %v9878, 0.0
    %10435 = vadd.xlane.f32.xlu0 %v10434
    %v10436 = vpop.xlane.xlu0 %10435
    %v10437 = vsel %vm5567, %v9879, 0.0
    %10438 = vadd.xlane.f32.xlu0 %v10437
    %v10439 = vpop.xlane.xlu0 %10438
    %v10440 = vsel %vm5567, %v9880, 0.0
    %10441 = vadd.xlane.f32.xlu0 %v10440
    %v10442 = vpop.xlane.xlu0 %10441
    %v10443 = vsel %vm5567, %v9881, 0.0
    %10444 = vadd.xlane.f32.xlu0 %v10443
    %v10445 = vpop.xlane.xlu0 %10444
    %v10446 = vsel %vm5567, %v9882, 0.0
    %10447 = vadd.xlane.f32.xlu0 %v10446
    %v10448 = vpop.xlane.xlu0 %10447
    %v10449 = vsel %vm5567, %v9883, 0.0
    %10450 = vadd.xlane.f32.xlu0 %v10449
    %v10451 = vpop.xlane.xlu0 %10450
    %v10452 = vsel %vm5567, %v9884, 0.0
    %10453 = vadd.xlane.f32.xlu0 %v10452
    %v10454 = vpop.xlane.xlu0 %10453
    %v10455 = vsel %vm5567, %v9885, 0.0
    %10456 = vadd.xlane.f32.xlu0 %v10455
    %v10457 = vpop.xlane.xlu0 %10456
    %v10458 = vsel %vm5567, %v9886, 0.0
    %10459 = vadd.xlane.f32.xlu0 %v10458
    %v10460 = vpop.xlane.xlu0 %10459
    %v10461 = vsel %vm5567, %v9887, 0.0
    %10462 = vadd.xlane.f32.xlu0 %v10461
    %v10463 = vpop.xlane.xlu0 %10462
    %v10464 = vsel %vm5567, %v9888, 0.0
    %10465 = vadd.xlane.f32.xlu0 %v10464
    %v10466 = vpop.xlane.xlu0 %10465
    %v10467 = vsel %vm5567, %v9889, 0.0
    %10468 = vadd.xlane.f32.xlu0 %v10467
    %v10469 = vpop.xlane.xlu0 %10468
    %v10470 = vsel %vm5567, %v9890, 0.0
    %10471 = vadd.xlane.f32.xlu0 %v10470
    %v10472 = vpop.xlane.xlu0 %10471
    %v10473 = vsel %vm5567, %v9891, 0.0
    %10474 = vadd.xlane.f32.xlu0 %v10473
    %v10475 = vpop.xlane.xlu0 %10474
    %v10476 = vsel %vm5567, %v9892, 0.0
    %10477 = vadd.xlane.f32.xlu0 %v10476
    %v10478 = vpop.xlane.xlu0 %10477
    %v10479 = vsel %vm5567, %v9893, 0.0
    %10480 = vadd.xlane.f32.xlu0 %v10479
    %v10481 = vpop.xlane.xlu0 %10480
    %v10482 = vsel %vm5567, %v9894, 0.0
    %10483 = vadd.xlane.f32.xlu0 %v10482
    %v10484 = vpop.xlane.xlu0 %10483
    %v10485 = vsel %vm5567, %v9895, 0.0
    %10486 = vadd.xlane.f32.xlu0 %v10485
    %v10487 = vpop.xlane.xlu0 %10486
    %v10488 = vsel %vm5567, %v9896, 0.0
    %10489 = vadd.xlane.f32.xlu0 %v10488
    %v10490 = vpop.xlane.xlu0 %10489
    %v10491 = vsel %vm5567, %v9897, 0.0
    %10492 = vadd.xlane.f32.xlu0 %v10491
    %v10493 = vpop.xlane.xlu0 %10492
    %v10494 = vsel %vm5567, %v9898, 0.0
    %10495 = vadd.xlane.f32.xlu0 %v10494
    %v10496 = vpop.xlane.xlu0 %10495
    %v10497 = vsel %vm5567, %v9899, 0.0
    %10498 = vadd.xlane.f32.xlu0 %v10497
    %v10499 = vpop.xlane.xlu0 %10498
    %v10500 = vsel %vm5567, %v9900, 0.0
    %10501 = vadd.xlane.f32.xlu0 %v10500
    %v10502 = vpop.xlane.xlu0 %10501
    %v10503 = vsel %vm5567, %v9901, 0.0
    %10504 = vadd.xlane.f32.xlu0 %v10503
    %v10505 = vpop.xlane.xlu0 %10504
    %v10506 = vsel %vm5567, %v9902, 0.0
    %10507 = vadd.xlane.f32.xlu0 %v10506
    %v10508 = vpop.xlane.xlu0 %10507
    %v10509 = vsel %vm5567, %v9903, 0.0
    %10510 = vadd.xlane.f32.xlu0 %v10509
    %v10511 = vpop.xlane.xlu0 %10510
    %v10512 = vsel %vm5567, %v9904, 0.0
    %10513 = vadd.xlane.f32.xlu0 %v10512
    %v10514 = vpop.xlane.xlu0 %10513
    %v10515 = vsel %vm5567, %v9905, 0.0
    %10516 = vadd.xlane.f32.xlu0 %v10515
    %v10517 = vpop.xlane.xlu0 %10516
    %v10518 = vsel %vm5567, %v9906, 0.0
    %10519 = vadd.xlane.f32.xlu0 %v10518
    %v10520 = vpop.xlane.xlu0 %10519
    %v10521 = vsel %vm5567, %v9907, 0.0
    %10522 = vadd.xlane.f32.xlu0 %v10521
    %v10523 = vpop.xlane.xlu0 %10522
    %v10524 = vsel %vm5567, %v9908, 0.0
    %10525 = vadd.xlane.f32.xlu0 %v10524
    %v10526 = vpop.xlane.xlu0 %10525
    %v10527 = vsel %vm5567, %v9909, 0.0
    %10528 = vadd.xlane.f32.xlu0 %v10527
    %v10529 = vpop.xlane.xlu0 %10528
    %v10530 = vsel %vm5567, %v9910, 0.0
    %10531 = vadd.xlane.f32.xlu0 %v10530
    %v10532 = vpop.xlane.xlu0 %10531
    %v10533 = vsel %vm5567, %v9911, 0.0
    %10534 = vadd.xlane.f32.xlu0 %v10533
    %v10535 = vpop.xlane.xlu0 %10534
    %v10536 = vsel %vm5567, %v9912, 0.0
    %10537 = vadd.xlane.f32.xlu0 %v10536
    %v10538 = vpop.xlane.xlu0 %10537
    %v10539 = vsel %vm5567, %v9913, 0.0
    %10540 = vadd.xlane.f32.xlu0 %v10539
    %v10541 = vpop.xlane.xlu0 %10540
    %v10542 = vsel %vm5567, %v9914, 0.0
    %10543 = vadd.xlane.f32.xlu0 %v10542
    %v10544 = vpop.xlane.xlu0 %10543
    %v10545 = vsel %vm5567, %v9915, 0.0
    %10546 = vadd.xlane.f32.xlu0 %v10545
    %v10547 = vpop.xlane.xlu0 %10546
    %v10548 = vsel %vm5567, %v9916, 0.0
    %10549 = vadd.xlane.f32.xlu0 %v10548
    %v10550 = vpop.xlane.xlu0 %10549
    %v10551 = vsel %vm5567, %v9917, 0.0
    %10552 = vadd.xlane.f32.xlu0 %v10551
    %v10553 = vpop.xlane.xlu0 %10552
    %v10554 = vsel %vm5567, %v9918, 0.0
    %10555 = vadd.xlane.f32.xlu0 %v10554
    %v10556 = vpop.xlane.xlu0 %10555
    %v10557 = vsel %vm5567, %v9919, 0.0
    %10558 = vadd.xlane.f32.xlu0 %v10557
    %v10559 = vpop.xlane.xlu0 %10558
    %v10560 = vsel %vm5567, %v9920, 0.0
    %10561 = vadd.xlane.f32.xlu0 %v10560
    %v10562 = vpop.xlane.xlu0 %10561
    %v10563 = vsel %vm5567, %v9921, 0.0
    %10564 = vadd.xlane.f32.xlu0 %v10563
    %v10565 = vpop.xlane.xlu0 %10564
    %v10566 = vsel %vm5567, %v9922, 0.0
    %10567 = vadd.xlane.f32.xlu0 %v10566
    %v10568 = vpop.xlane.xlu0 %10567
    %v10569 = vsel %vm5567, %v9923, 0.0
    %10570 = vadd.xlane.f32.xlu0 %v10569
    %v10571 = vpop.xlane.xlu0 %10570
    %v10572 = vsel %vm5567, %v9924, 0.0
    %10573 = vadd.xlane.f32.xlu0 %v10572
    %v10574 = vpop.xlane.xlu0 %10573
    %v10575 = vsel %vm5567, %v9925, 0.0
    %10576 = vadd.xlane.f32.xlu0 %v10575
    %v10577 = vpop.xlane.xlu0 %10576
    %v10578 = vsel %vm5567, %v9926, 0.0
    %10579 = vadd.xlane.f32.xlu0 %v10578
    %v10580 = vpop.xlane.xlu0 %10579
    %v10581 = vsel %vm5567, %v9927, 0.0
    %10582 = vadd.xlane.f32.xlu0 %v10581
    %v10583 = vpop.xlane.xlu0 %10582
    %v10584 = vsel %vm5567, %v9928, 0.0
    %10585 = vadd.xlane.f32.xlu0 %v10584
    %v10586 = vpop.xlane.xlu0 %10585
    %v10587 = vsel %vm5567, %v9929, 0.0
    %10588 = vadd.xlane.f32.xlu0 %v10587
    %v10589 = vpop.xlane.xlu0 %10588
    %v10590 = vsel %vm5567, %v9930, 0.0
    %10591 = vadd.xlane.f32.xlu0 %v10590
    %v10592 = vpop.xlane.xlu0 %10591
    %v10593 = vsel %vm5567, %v9931, 0.0
    %10594 = vadd.xlane.f32.xlu0 %v10593
    %v10595 = vpop.xlane.xlu0 %10594
    %v10596 = vsel %vm5567, %v9932, 0.0
    %10597 = vadd.xlane.f32.xlu0 %v10596
    %v10598 = vpop.xlane.xlu0 %10597
    %v10599 = vsel %vm5567, %v9933, 0.0
    %10600 = vadd.xlane.f32.xlu0 %v10599
    %v10601 = vpop.xlane.xlu0 %10600
    %v10602 = vsel %vm5567, %v9934, 0.0
    %10603 = vadd.xlane.f32.xlu0 %v10602
    %v10604 = vpop.xlane.xlu0 %10603
    %v10605 = vsel %vm5567, %v9935, 0.0
    %10606 = vadd.xlane.f32.xlu0 %v10605
    %v10607 = vpop.xlane.xlu0 %10606
    %v10608 = vsel %vm5567, %v9936, 0.0
    %10609 = vadd.xlane.f32.xlu0 %v10608
    %v10610 = vpop.xlane.xlu0 %10609
    %v10611 = vsel %vm5567, %v9937, 0.0
    %10612 = vadd.xlane.f32.xlu0 %v10611
    %v10613 = vpop.xlane.xlu0 %10612
    %v10614 = vsel %vm5567, %v9938, 0.0
    %10615 = vadd.xlane.f32.xlu0 %v10614
    %v10616 = vpop.xlane.xlu0 %10615
    %v10617 = vsel %vm5567, %v9939, 0.0
    %10618 = vadd.xlane.f32.xlu0 %v10617
    %v10619 = vpop.xlane.xlu0 %10618
    %v10620 = vsel %vm5567, %v9940, 0.0
    %10621 = vadd.xlane.f32.xlu0 %v10620
    %v10622 = vpop.xlane.xlu0 %10621
    %v10623 = vsel %vm5567, %v9941, 0.0
    %10624 = vadd.xlane.f32.xlu0 %v10623
    %v10625 = vpop.xlane.xlu0 %10624
    %v10626 = vsel %vm5567, %v9942, 0.0
    %10627 = vadd.xlane.f32.xlu0 %v10626
    %v10628 = vpop.xlane.xlu0 %10627
    %v10629 = vsel %vm5567, %v9943, 0.0
    %10630 = vadd.xlane.f32.xlu0 %v10629
    %v10631 = vpop.xlane.xlu0 %10630
    %v10632 = vsel %vm5567, %v9944, 0.0
    %10633 = vadd.xlane.f32.xlu0 %v10632
    %v10634 = vpop.xlane.xlu0 %10633
    %v10635 = vsel %vm5567, %v9945, 0.0
    %10636 = vadd.xlane.f32.xlu0 %v10635
    %v10637 = vpop.xlane.xlu0 %10636
    %v10638 = vsel %vm5567, %v9946, 0.0
    %10639 = vadd.xlane.f32.xlu0 %v10638
    %v10640 = vpop.xlane.xlu0 %10639
    %v10641 = vsel %vm5567, %v9947, 0.0
    %10642 = vadd.xlane.f32.xlu0 %v10641
    %v10643 = vpop.xlane.xlu0 %10642
    %v10644 = vsel %vm5567, %v9948, 0.0
    %10645 = vadd.xlane.f32.xlu0 %v10644
    %v10646 = vpop.xlane.xlu0 %10645
    %v10647 = vsel %vm5567, %v9949, 0.0
    %10648 = vadd.xlane.f32.xlu0 %v10647
    %v10649 = vpop.xlane.xlu0 %10648
    %v10650 = vsel %vm5567, %v9950, 0.0
    %10651 = vadd.xlane.f32.xlu0 %v10650
    %v10652 = vpop.xlane.xlu0 %10651
    %v10653 = vsel %vm5567, %v9951, 0.0
    %10654 = vadd.xlane.f32.xlu0 %v10653
    %v10655 = vpop.xlane.xlu0 %10654
    %v10656 = vsel %vm5567, %v9952, 0.0
    %10657 = vadd.xlane.f32.xlu0 %v10656
    %v10658 = vpop.xlane.xlu0 %10657
    %v10659 = vsel %vm5567, %v9953, 0.0
    %10660 = vadd.xlane.f32.xlu0 %v10659
    %v10661 = vpop.xlane.xlu0 %10660
    %v10662 = vsel %vm5567, %v9954, 0.0
    %10663 = vadd.xlane.f32.xlu0 %v10662
    %v10664 = vpop.xlane.xlu0 %10663
    %v10665 = vsel %vm5567, %v9955, 0.0
    %10666 = vadd.xlane.f32.xlu0 %v10665
    %v10667 = vpop.xlane.xlu0 %10666
    %v10668 = vsel %vm5567, %v9956, 0.0
    %10669 = vadd.xlane.f32.xlu0 %v10668
    %v10670 = vpop.xlane.xlu0 %10669
    %v10671 = vsel %vm5567, %v9957, 0.0
    %10672 = vadd.xlane.f32.xlu0 %v10671
    %v10673 = vpop.xlane.xlu0 %10672
    %v10674 = vsel %vm5567, %v9958, 0.0
    %10675 = vadd.xlane.f32.xlu0 %v10674
    %v10676 = vpop.xlane.xlu0 %10675
    %v10677 = vsel %vm5567, %v9959, 0.0
    %10678 = vadd.xlane.f32.xlu0 %v10677
    %v10679 = vpop.xlane.xlu0 %10678
    %v10680 = vsel %vm5567, %v9960, 0.0
    %10681 = vadd.xlane.f32.xlu0 %v10680
    %v10682 = vpop.xlane.xlu0 %10681
    %v10683 = vsel %vm5567, %v9961, 0.0
    %10684 = vadd.xlane.f32.xlu0 %v10683
    %v10685 = vpop.xlane.xlu0 %10684
    %v10686 = vsel %vm5567, %v9962, 0.0
    %10687 = vadd.xlane.f32.xlu0 %v10686
    %v10688 = vpop.xlane.xlu0 %10687
    %v10689 = vsel %vm5567, %v9963, 0.0
    %10690 = vadd.xlane.f32.xlu0 %v10689
    %v10691 = vpop.xlane.xlu0 %10690
    %v10692 = vsel %vm5567, %v9964, 0.0
    %10693 = vadd.xlane.f32.xlu0 %v10692
    %v10694 = vpop.xlane.xlu0 %10693
    %v10695 = vsel %vm5567, %v9965, 0.0
    %10696 = vadd.xlane.f32.xlu0 %v10695
    %v10697 = vpop.xlane.xlu0 %10696
    %v10698 = vsel %vm5567, %v9966, 0.0
    %10699 = vadd.xlane.f32.xlu0 %v10698
    %v10700 = vpop.xlane.xlu0 %10699
    %v10701 = vsel %vm5567, %v9967, 0.0
    %10702 = vadd.xlane.f32.xlu0 %v10701
    %v10703 = vpop.xlane.xlu0 %10702
    %v10704 = vsel %vm5567, %v9968, 0.0
    %10705 = vadd.xlane.f32.xlu0 %v10704
    %v10706 = vpop.xlane.xlu0 %10705
    %v10707 = vsel %vm5567, %v9969, 0.0
    %10708 = vadd.xlane.f32.xlu0 %v10707
    %v10709 = vpop.xlane.xlu0 %10708
    %v10710 = vsel %vm5567, %v9970, 0.0
    %10711 = vadd.xlane.f32.xlu0 %v10710
    %v10712 = vpop.xlane.xlu0 %10711
    %v10713 = vsel %vm5567, %v9971, 0.0
    %10714 = vadd.xlane.f32.xlu0 %v10713
    %v10715 = vpop.xlane.xlu0 %10714
    %v10716 = vsel %vm5567, %v9972, 0.0
    %10717 = vadd.xlane.f32.xlu0 %v10716
    %v10718 = vpop.xlane.xlu0 %10717
    %v10719 = vsel %vm5567, %v9973, 0.0
    %10720 = vadd.xlane.f32.xlu0 %v10719
    %v10721 = vpop.xlane.xlu0 %10720
    %v10722 = vsel %vm5567, %v9974, 0.0
    %10723 = vadd.xlane.f32.xlu0 %v10722
    %v10724 = vpop.xlane.xlu0 %10723
    %v10725 = vsel %vm5567, %v9975, 0.0
    %10726 = vadd.xlane.f32.xlu0 %v10725
    %v10727 = vpop.xlane.xlu0 %10726
    %v10728 = vsel %vm5567, %v9976, 0.0
    %10729 = vadd.xlane.f32.xlu0 %v10728
    %v10730 = vpop.xlane.xlu0 %10729
    %v10731 = vsel %vm5567, %v9977, 0.0
    %10732 = vadd.xlane.f32.xlu0 %v10731
    %v10733 = vpop.xlane.xlu0 %10732
    %v10734 = vsel %vm5567, %v9978, 0.0
    %10735 = vadd.xlane.f32.xlu0 %v10734
    %v10736 = vpop.xlane.xlu0 %10735
    %v10737 = vsel %vm5567, %v9979, 0.0
    %10738 = vadd.xlane.f32.xlu0 %v10737
    %v10739 = vpop.xlane.xlu0 %10738
    %v10740 = vsel %vm5567, %v9980, 0.0
    %10741 = vadd.xlane.f32.xlu0 %v10740
    %v10742 = vpop.xlane.xlu0 %10741
    %v10743 = vsel %vm5567, %v9981, 0.0
    %10744 = vadd.xlane.f32.xlu0 %v10743
    %v10745 = vpop.xlane.xlu0 %10744
    %v10746 = vsel %vm5567, %v9982, 0.0
    %10747 = vadd.xlane.f32.xlu0 %v10746
    %v10748 = vpop.xlane.xlu0 %10747
    %v10749 = vsel %vm5567, %v9983, 0.0
    %10750 = vadd.xlane.f32.xlu0 %v10749
    %v10751 = vpop.xlane.xlu0 %10750
    %v10752 = vld [vmem:[#allocation2] sm:$0x1]
    %v10754 = vlaneseq
    %v10755 = vshrl.u32 %v10754, 7
    %v10756 = vsub.s32 0, %v10755
    %v10757 = vrot.slane %v10752, %v10756
    %v10759 = vadd.f32 %v9986, %v10757
    %v10760 = vadd.f32 %v9989, %v10757
    %v10761 = vadd.f32 %v9992, %v10757
    %v10762 = vadd.f32 %v9995, %v10757
    %v10763 = vadd.f32 %v9998, %v10757
    %v10764 = vadd.f32 %v10001, %v10757
    %v10765 = vadd.f32 %v10004, %v10757
    %v10766 = vadd.f32 %v10007, %v10757
    %v10767 = vadd.f32 %v10010, %v10757
    %v10768 = vadd.f32 %v10013, %v10757
    %v10769 = vadd.f32 %v10016, %v10757
    %v10770 = vadd.f32 %v10019, %v10757
    %v10771 = vadd.f32 %v10022, %v10757
    %v10772 = vadd.f32 %v10025, %v10757
    %v10773 = vadd.f32 %v10028, %v10757
    %v10774 = vadd.f32 %v10031, %v10757
    %v10775 = vadd.f32 %v10034, %v10757
    %v10776 = vadd.f32 %v10037, %v10757
    %v10777 = vadd.f32 %v10040, %v10757
    %v10778 = vadd.f32 %v10043, %v10757
    %v10779 = vadd.f32 %v10046, %v10757
    %v10780 = vadd.f32 %v10049, %v10757
    %v10781 = vadd.f32 %v10052, %v10757
    %v10782 = vadd.f32 %v10055, %v10757
    %v10783 = vadd.f32 %v10058, %v10757
    %v10784 = vadd.f32 %v10061, %v10757
    %v10785 = vadd.f32 %v10064, %v10757
    %v10786 = vadd.f32 %v10067, %v10757
    %v10787 = vadd.f32 %v10070, %v10757
    %v10788 = vadd.f32 %v10073, %v10757
    %v10789 = vadd.f32 %v10076, %v10757
    %v10790 = vadd.f32 %v10079, %v10757
    %v10791 = vadd.f32 %v10082, %v10757
    %v10792 = vadd.f32 %v10085, %v10757
    %v10793 = vadd.f32 %v10088, %v10757
    %v10794 = vadd.f32 %v10091, %v10757
    %v10795 = vadd.f32 %v10094, %v10757
    %v10796 = vadd.f32 %v10097, %v10757
    %v10797 = vadd.f32 %v10100, %v10757
    %v10798 = vadd.f32 %v10103, %v10757
    %v10799 = vadd.f32 %v10106, %v10757
    %v10800 = vadd.f32 %v10109, %v10757
    %v10801 = vadd.f32 %v10112, %v10757
    %v10802 = vadd.f32 %v10115, %v10757
    %v10803 = vadd.f32 %v10118, %v10757
    %v10804 = vadd.f32 %v10121, %v10757
    %v10805 = vadd.f32 %v10124, %v10757
    %v10806 = vadd.f32 %v10127, %v10757
    %v10807 = vadd.f32 %v10130, %v10757
    %v10808 = vadd.f32 %v10133, %v10757
    %v10809 = vadd.f32 %v10136, %v10757
    %v10810 = vadd.f32 %v10139, %v10757
    %v10811 = vadd.f32 %v10142, %v10757
    %v10812 = vadd.f32 %v10145, %v10757
    %v10813 = vadd.f32 %v10148, %v10757
    %v10814 = vadd.f32 %v10151, %v10757
    %v10815 = vadd.f32 %v10154, %v10757
    %v10816 = vadd.f32 %v10157, %v10757
    %v10817 = vadd.f32 %v10160, %v10757
    %v10818 = vadd.f32 %v10163, %v10757
    %v10819 = vadd.f32 %v10166, %v10757
    %v10820 = vadd.f32 %v10169, %v10757
    %v10821 = vadd.f32 %v10172, %v10757
    %v10822 = vadd.f32 %v10175, %v10757
    %v10823 = vadd.f32 %v10178, %v10757
    %v10824 = vadd.f32 %v10181, %v10757
    %v10825 = vadd.f32 %v10184, %v10757
    %v10826 = vadd.f32 %v10187, %v10757
    %v10827 = vadd.f32 %v10190, %v10757
    %v10828 = vadd.f32 %v10193, %v10757
    %v10829 = vadd.f32 %v10196, %v10757
    %v10830 = vadd.f32 %v10199, %v10757
    %v10831 = vadd.f32 %v10202, %v10757
    %v10832 = vadd.f32 %v10205, %v10757
    %v10833 = vadd.f32 %v10208, %v10757
    %v10834 = vadd.f32 %v10211, %v10757
    %v10835 = vadd.f32 %v10214, %v10757
    %v10836 = vadd.f32 %v10217, %v10757
    %v10837 = vadd.f32 %v10220, %v10757
    %v10838 = vadd.f32 %v10223, %v10757
    %v10839 = vadd.f32 %v10226, %v10757
    %v10840 = vadd.f32 %v10229, %v10757
    %v10841 = vadd.f32 %v10232, %v10757
    %v10842 = vadd.f32 %v10235, %v10757
    %v10843 = vadd.f32 %v10238, %v10757
    %v10844 = vadd.f32 %v10241, %v10757
    %v10845 = vadd.f32 %v10244, %v10757
    %v10846 = vadd.f32 %v10247, %v10757
    %v10847 = vadd.f32 %v10250, %v10757
    %v10848 = vadd.f32 %v10253, %v10757
    %v10849 = vadd.f32 %v10256, %v10757
    %v10850 = vadd.f32 %v10259, %v10757
    %v10851 = vadd.f32 %v10262, %v10757
    %v10852 = vadd.f32 %v10265, %v10757
    %v10853 = vadd.f32 %v10268, %v10757
    %v10854 = vadd.f32 %v10271, %v10757
    %v10855 = vadd.f32 %v10274, %v10757
    %v10856 = vadd.f32 %v10277, %v10757
    %v10857 = vadd.f32 %v10280, %v10757
    %v10858 = vadd.f32 %v10283, %v10757
    %v10859 = vadd.f32 %v10286, %v10757
    %v10860 = vadd.f32 %v10289, %v10757
    %v10861 = vadd.f32 %v10292, %v10757
    %v10862 = vadd.f32 %v10295, %v10757
    %v10863 = vadd.f32 %v10298, %v10757
    %v10864 = vadd.f32 %v10301, %v10757
    %v10865 = vadd.f32 %v10304, %v10757
    %v10866 = vadd.f32 %v10307, %v10757
    %v10867 = vadd.f32 %v10310, %v10757
    %v10868 = vadd.f32 %v10313, %v10757
    %v10869 = vadd.f32 %v10316, %v10757
    %v10870 = vadd.f32 %v10319, %v10757
    %v10871 = vadd.f32 %v10322, %v10757
    %v10872 = vadd.f32 %v10325, %v10757
    %v10873 = vadd.f32 %v10328, %v10757
    %v10874 = vadd.f32 %v10331, %v10757
    %v10875 = vadd.f32 %v10334, %v10757
    %v10876 = vadd.f32 %v10337, %v10757
    %v10877 = vadd.f32 %v10340, %v10757
    %v10878 = vadd.f32 %v10343, %v10757
    %v10879 = vadd.f32 %v10346, %v10757
    %v10880 = vadd.f32 %v10349, %v10757
    %v10881 = vadd.f32 %v10352, %v10757
    %v10882 = vadd.f32 %v10355, %v10757
    %v10883 = vadd.f32 %v10358, %v10757
    %v10884 = vadd.f32 %v10361, %v10757
    %v10885 = vadd.f32 %v10364, %v10757
    %v10886 = vadd.f32 %v10367, %v10757
    %v10887 = vadd.f32 %v10370, %v10757
    %v10888 = vadd.f32 %v10373, %v10757
    %v10889 = vadd.f32 %v10376, %v10757
    %v10890 = vadd.f32 %v10379, %v10757
    %v10891 = vadd.f32 %v10382, %v10757
    %v10892 = vadd.f32 %v10385, %v10757
    %v10893 = vadd.f32 %v10388, %v10757
    %v10894 = vadd.f32 %v10391, %v10757
    %v10895 = vadd.f32 %v10394, %v10757
    %v10896 = vadd.f32 %v10397, %v10757
    %v10897 = vadd.f32 %v10400, %v10757
    %v10898 = vadd.f32 %v10403, %v10757
    %v10899 = vadd.f32 %v10406, %v10757
    %v10900 = vadd.f32 %v10409, %v10757
    %v10901 = vadd.f32 %v10412, %v10757
    %v10902 = vadd.f32 %v10415, %v10757
    %v10903 = vadd.f32 %v10418, %v10757
    %v10904 = vadd.f32 %v10421, %v10757
    %v10905 = vadd.f32 %v10424, %v10757
    %v10906 = vadd.f32 %v10427, %v10757
    %v10907 = vadd.f32 %v10430, %v10757
    %v10908 = vadd.f32 %v10433, %v10757
    %v10909 = vadd.f32 %v10436, %v10757
    %v10910 = vadd.f32 %v10439, %v10757
    %v10911 = vadd.f32 %v10442, %v10757
    %v10912 = vadd.f32 %v10445, %v10757
    %v10913 = vadd.f32 %v10448, %v10757
    %v10914 = vadd.f32 %v10451, %v10757
    %v10915 = vadd.f32 %v10454, %v10757
    %v10916 = vadd.f32 %v10457, %v10757
    %v10917 = vadd.f32 %v10460, %v10757
    %v10918 = vadd.f32 %v10463, %v10757
    %v10919 = vadd.f32 %v10466, %v10757
    %v10920 = vadd.f32 %v10469, %v10757
    %v10921 = vadd.f32 %v10472, %v10757
    %v10922 = vadd.f32 %v10475, %v10757
    %v10923 = vadd.f32 %v10478, %v10757
    %v10924 = vadd.f32 %v10481, %v10757
    %v10925 = vadd.f32 %v10484, %v10757
    %v10926 = vadd.f32 %v10487, %v10757
    %v10927 = vadd.f32 %v10490, %v10757
    %v10928 = vadd.f32 %v10493, %v10757
    %v10929 = vadd.f32 %v10496, %v10757
    %v10930 = vadd.f32 %v10499, %v10757
    %v10931 = vadd.f32 %v10502, %v10757
    %v10932 = vadd.f32 %v10505, %v10757
    %v10933 = vadd.f32 %v10508, %v10757
    %v10934 = vadd.f32 %v10511, %v10757
    %v10935 = vadd.f32 %v10514, %v10757
    %v10936 = vadd.f32 %v10517, %v10757
    %v10937 = vadd.f32 %v10520, %v10757
    %v10938 = vadd.f32 %v10523, %v10757
    %v10939 = vadd.f32 %v10526, %v10757
    %v10940 = vadd.f32 %v10529, %v10757
    %v10941 = vadd.f32 %v10532, %v10757
    %v10942 = vadd.f32 %v10535, %v10757
    %v10943 = vadd.f32 %v10538, %v10757
    %v10944 = vadd.f32 %v10541, %v10757
    %v10945 = vadd.f32 %v10544, %v10757
    %v10946 = vadd.f32 %v10547, %v10757
    %v10947 = vadd.f32 %v10550, %v10757
    %v10948 = vadd.f32 %v10553, %v10757
    %v10949 = vadd.f32 %v10556, %v10757
    %v10950 = vadd.f32 %v10559, %v10757
    %v10951 = vadd.f32 %v10562, %v10757
    %v10952 = vadd.f32 %v10565, %v10757
    %v10953 = vadd.f32 %v10568, %v10757
    %v10954 = vadd.f32 %v10571, %v10757
    %v10955 = vadd.f32 %v10574, %v10757
    %v10956 = vadd.f32 %v10577, %v10757
    %v10957 = vadd.f32 %v10580, %v10757
    %v10958 = vadd.f32 %v10583, %v10757
    %v10959 = vadd.f32 %v10586, %v10757
    %v10960 = vadd.f32 %v10589, %v10757
    %v10961 = vadd.f32 %v10592, %v10757
    %v10962 = vadd.f32 %v10595, %v10757
    %v10963 = vadd.f32 %v10598, %v10757
    %v10964 = vadd.f32 %v10601, %v10757
    %v10965 = vadd.f32 %v10604, %v10757
    %v10966 = vadd.f32 %v10607, %v10757
    %v10967 = vadd.f32 %v10610, %v10757
    %v10968 = vadd.f32 %v10613, %v10757
    %v10969 = vadd.f32 %v10616, %v10757
    %v10970 = vadd.f32 %v10619, %v10757
    %v10971 = vadd.f32 %v10622, %v10757
    %v10972 = vadd.f32 %v10625, %v10757
    %v10973 = vadd.f32 %v10628, %v10757
    %v10974 = vadd.f32 %v10631, %v10757
    %v10975 = vadd.f32 %v10634, %v10757
    %v10976 = vadd.f32 %v10637, %v10757
    %v10977 = vadd.f32 %v10640, %v10757
    %v10978 = vadd.f32 %v10643, %v10757
    %v10979 = vadd.f32 %v10646, %v10757
    %v10980 = vadd.f32 %v10649, %v10757
    %v10981 = vadd.f32 %v10652, %v10757
    %v10982 = vadd.f32 %v10655, %v10757
    %v10983 = vadd.f32 %v10658, %v10757
    %v10984 = vadd.f32 %v10661, %v10757
    %v10985 = vadd.f32 %v10664, %v10757
    %v10986 = vadd.f32 %v10667, %v10757
    %v10987 = vadd.f32 %v10670, %v10757
    %v10988 = vadd.f32 %v10673, %v10757
    %v10989 = vadd.f32 %v10676, %v10757
    %v10990 = vadd.f32 %v10679, %v10757
    %v10991 = vadd.f32 %v10682, %v10757
    %v10992 = vadd.f32 %v10685, %v10757
    %v10993 = vadd.f32 %v10688, %v10757
    %v10994 = vadd.f32 %v10691, %v10757
    %v10995 = vadd.f32 %v10694, %v10757
    %v10996 = vadd.f32 %v10697, %v10757
    %v10997 = vadd.f32 %v10700, %v10757
    %v10998 = vadd.f32 %v10703, %v10757
    %v10999 = vadd.f32 %v10706, %v10757
    %v11000 = vadd.f32 %v10709, %v10757
    %v11001 = vadd.f32 %v10712, %v10757
    %v11002 = vadd.f32 %v10715, %v10757
    %v11003 = vadd.f32 %v10718, %v10757
    %v11004 = vadd.f32 %v10721, %v10757
    %v11005 = vadd.f32 %v10724, %v10757
    %v11006 = vadd.f32 %v10727, %v10757
    %v11007 = vadd.f32 %v10730, %v10757
    %v11008 = vadd.f32 %v10733, %v10757
    %v11009 = vadd.f32 %v10736, %v10757
    %v11010 = vadd.f32 %v10739, %v10757
    %v11011 = vadd.f32 %v10742, %v10757
    %v11012 = vadd.f32 %v10745, %v10757
    %v11013 = vadd.f32 %v10748, %v10757
    %v11014 = vadd.f32 %v10751, %v10757
    %v11015 = vadd.f32 %v7616, %v10759
    %v11016 = vadd.f32 %v7617, %v10760
    %v11017 = vadd.f32 %v7618, %v10761
    %v11018 = vadd.f32 %v7619, %v10762
    %v11019 = vadd.f32 %v7620, %v10763
    %v11020 = vadd.f32 %v7621, %v10764
    %v11021 = vadd.f32 %v7622, %v10765
    %v11022 = vadd.f32 %v7623, %v10766
    %v11023 = vadd.f32 %v7624, %v10767
    %v11024 = vadd.f32 %v7625, %v10768
    %v11025 = vadd.f32 %v7626, %v10769
    %v11026 = vadd.f32 %v7627, %v10770
    %v11027 = vadd.f32 %v7628, %v10771
    %v11028 = vadd.f32 %v7629, %v10772
    %v11029 = vadd.f32 %v7630, %v10773
    %v11030 = vadd.f32 %v7631, %v10774
    %v11031 = vadd.f32 %v7632, %v10775
    %v11032 = vadd.f32 %v7633, %v10776
    %v11033 = vadd.f32 %v7634, %v10777
    %v11034 = vadd.f32 %v7635, %v10778
    %v11035 = vadd.f32 %v7636, %v10779
    %v11036 = vadd.f32 %v7637, %v10780
    %v11037 = vadd.f32 %v7638, %v10781
    %v11038 = vadd.f32 %v7639, %v10782
    %v11039 = vadd.f32 %v7640, %v10783
    %v11040 = vadd.f32 %v7641, %v10784
    %v11041 = vadd.f32 %v7642, %v10785
    %v11042 = vadd.f32 %v7643, %v10786
    %v11043 = vadd.f32 %v7644, %v10787
    %v11044 = vadd.f32 %v7645, %v10788
    %v11045 = vadd.f32 %v7646, %v10789
    %v11046 = vadd.f32 %v7647, %v10790
    %v11047 = vadd.f32 %v7648, %v10791
    %v11048 = vadd.f32 %v7649, %v10792
    %v11049 = vadd.f32 %v7650, %v10793
    %v11050 = vadd.f32 %v7651, %v10794
    %v11051 = vadd.f32 %v7652, %v10795
    %v11052 = vadd.f32 %v7653, %v10796
    %v11053 = vadd.f32 %v7654, %v10797
    %v11054 = vadd.f32 %v7655, %v10798
    %v11055 = vadd.f32 %v7656, %v10799
    %v11056 = vadd.f32 %v7657, %v10800
    %v11057 = vadd.f32 %v7658, %v10801
    %v11058 = vadd.f32 %v7659, %v10802
    %v11059 = vadd.f32 %v7660, %v10803
    %v11060 = vadd.f32 %v7661, %v10804
    %v11061 = vadd.f32 %v7662, %v10805
    %v11062 = vadd.f32 %v7663, %v10806
    %v11063 = vadd.f32 %v7664, %v10807
    %v11064 = vadd.f32 %v7665, %v10808
    %v11065 = vadd.f32 %v7666, %v10809
    %v11066 = vadd.f32 %v7667, %v10810
    %v11067 = vadd.f32 %v7668, %v10811
    %v11068 = vadd.f32 %v7669, %v10812
    %v11069 = vadd.f32 %v7670, %v10813
    %v11070 = vadd.f32 %v7671, %v10814
    %v11071 = vadd.f32 %v7672, %v10815
    %v11072 = vadd.f32 %v7673, %v10816
    %v11073 = vadd.f32 %v7674, %v10817
    %v11074 = vadd.f32 %v7675, %v10818
    %v11075 = vadd.f32 %v7676, %v10819
    %v11076 = vadd.f32 %v7677, %v10820
    %v11077 = vadd.f32 %v7678, %v10821
    %v11078 = vadd.f32 %v7679, %v10822
    %v11079 = vadd.f32 %v7680, %v10823
    %v11080 = vadd.f32 %v7681, %v10824
    %v11081 = vadd.f32 %v7682, %v10825
    %v11082 = vadd.f32 %v7683, %v10826
    %v11083 = vadd.f32 %v7684, %v10827
    %v11084 = vadd.f32 %v7685, %v10828
    %v11085 = vadd.f32 %v7686, %v10829
    %v11086 = vadd.f32 %v7687, %v10830
    %v11087 = vadd.f32 %v7688, %v10831
    %v11088 = vadd.f32 %v7689, %v10832
    %v11089 = vadd.f32 %v7690, %v10833
    %v11090 = vadd.f32 %v7691, %v10834
    %v11091 = vadd.f32 %v7692, %v10835
    %v11092 = vadd.f32 %v7693, %v10836
    %v11093 = vadd.f32 %v7694, %v10837
    %v11094 = vadd.f32 %v7695, %v10838
    %v11095 = vadd.f32 %v7696, %v10839
    %v11096 = vadd.f32 %v7697, %v10840
    %v11097 = vadd.f32 %v7698, %v10841
    %v11098 = vadd.f32 %v7699, %v10842
    %v11099 = vadd.f32 %v7700, %v10843
    %v11100 = vadd.f32 %v7701, %v10844
    %v11101 = vadd.f32 %v7702, %v10845
    %v11102 = vadd.f32 %v7703, %v10846
    %v11103 = vadd.f32 %v7704, %v10847
    %v11104 = vadd.f32 %v7705, %v10848
    %v11105 = vadd.f32 %v7706, %v10849
    %v11106 = vadd.f32 %v7707, %v10850
    %v11107 = vadd.f32 %v7708, %v10851
    %v11108 = vadd.f32 %v7709, %v10852
    %v11109 = vadd.f32 %v7710, %v10853
    %v11110 = vadd.f32 %v7711, %v10854
    %v11111 = vadd.f32 %v7712, %v10855
    %v11112 = vadd.f32 %v7713, %v10856
    %v11113 = vadd.f32 %v7714, %v10857
    %v11114 = vadd.f32 %v7715, %v10858
    %v11115 = vadd.f32 %v7716, %v10859
    %v11116 = vadd.f32 %v7717, %v10860
    %v11117 = vadd.f32 %v7718, %v10861
    %v11118 = vadd.f32 %v7719, %v10862
    %v11119 = vadd.f32 %v7720, %v10863
    %v11120 = vadd.f32 %v7721, %v10864
    %v11121 = vadd.f32 %v7722, %v10865
    %v11122 = vadd.f32 %v7723, %v10866
    %v11123 = vadd.f32 %v7724, %v10867
    %v11124 = vadd.f32 %v7725, %v10868
    %v11125 = vadd.f32 %v7726, %v10869
    %v11126 = vadd.f32 %v7727, %v10870
    %v11127 = vadd.f32 %v7728, %v10871
    %v11128 = vadd.f32 %v7729, %v10872
    %v11129 = vadd.f32 %v7730, %v10873
    %v11130 = vadd.f32 %v7731, %v10874
    %v11131 = vadd.f32 %v7732, %v10875
    %v11132 = vadd.f32 %v7733, %v10876
    %v11133 = vadd.f32 %v7734, %v10877
    %v11134 = vadd.f32 %v7735, %v10878
    %v11135 = vadd.f32 %v7736, %v10879
    %v11136 = vadd.f32 %v7737, %v10880
    %v11137 = vadd.f32 %v7738, %v10881
    %v11138 = vadd.f32 %v7739, %v10882
    %v11139 = vadd.f32 %v7740, %v10883
    %v11140 = vadd.f32 %v7741, %v10884
    %v11141 = vadd.f32 %v7742, %v10885
    %v11142 = vadd.f32 %v7743, %v10886
    %v11143 = vadd.f32 %v7744, %v10887
    %v11144 = vadd.f32 %v7745, %v10888
    %v11145 = vadd.f32 %v7746, %v10889
    %v11146 = vadd.f32 %v7747, %v10890
    %v11147 = vadd.f32 %v7748, %v10891
    %v11148 = vadd.f32 %v7749, %v10892
    %v11149 = vadd.f32 %v7750, %v10893
    %v11150 = vadd.f32 %v7751, %v10894
    %v11151 = vadd.f32 %v7752, %v10895
    %v11152 = vadd.f32 %v7753, %v10896
    %v11153 = vadd.f32 %v7754, %v10897
    %v11154 = vadd.f32 %v7755, %v10898
    %v11155 = vadd.f32 %v7756, %v10899
    %v11156 = vadd.f32 %v7757, %v10900
    %v11157 = vadd.f32 %v7758, %v10901
    %v11158 = vadd.f32 %v7759, %v10902
    %v11159 = vadd.f32 %v7760, %v10903
    %v11160 = vadd.f32 %v7761, %v10904
    %v11161 = vadd.f32 %v7762, %v10905
    %v11162 = vadd.f32 %v7763, %v10906
    %v11163 = vadd.f32 %v7764, %v10907
    %v11164 = vadd.f32 %v7765, %v10908
    %v11165 = vadd.f32 %v7766, %v10909
    %v11166 = vadd.f32 %v7767, %v10910
    %v11167 = vadd.f32 %v7768, %v10911
    %v11168 = vadd.f32 %v7769, %v10912
    %v11169 = vadd.f32 %v7770, %v10913
    %v11170 = vadd.f32 %v7771, %v10914
    %v11171 = vadd.f32 %v7772, %v10915
    %v11172 = vadd.f32 %v7773, %v10916
    %v11173 = vadd.f32 %v7774, %v10917
    %v11174 = vadd.f32 %v7775, %v10918
    %v11175 = vadd.f32 %v7776, %v10919
    %v11176 = vadd.f32 %v7777, %v10920
    %v11177 = vadd.f32 %v7778, %v10921
    %v11178 = vadd.f32 %v7779, %v10922
    %v11179 = vadd.f32 %v7780, %v10923
    %v11180 = vadd.f32 %v7781, %v10924
    %v11181 = vadd.f32 %v7782, %v10925
    %v11182 = vadd.f32 %v7783, %v10926
    %v11183 = vadd.f32 %v7784, %v10927
    %v11184 = vadd.f32 %v7785, %v10928
    %v11185 = vadd.f32 %v7786, %v10929
    %v11186 = vadd.f32 %v7787, %v10930
    %v11187 = vadd.f32 %v7788, %v10931
    %v11188 = vadd.f32 %v7789, %v10932
    %v11189 = vadd.f32 %v7790, %v10933
    %v11190 = vadd.f32 %v7791, %v10934
    %v11191 = vadd.f32 %v7792, %v10935
    %v11192 = vadd.f32 %v7793, %v10936
    %v11193 = vadd.f32 %v7794, %v10937
    %v11194 = vadd.f32 %v7795, %v10938
    %v11195 = vadd.f32 %v7796, %v10939
    %v11196 = vadd.f32 %v7797, %v10940
    %v11197 = vadd.f32 %v7798, %v10941
    %v11198 = vadd.f32 %v7799, %v10942
    %v11199 = vadd.f32 %v7800, %v10943
    %v11200 = vadd.f32 %v7801, %v10944
    %v11201 = vadd.f32 %v7802, %v10945
    %v11202 = vadd.f32 %v7803, %v10946
    %v11203 = vadd.f32 %v7804, %v10947
    %v11204 = vadd.f32 %v7805, %v10948
    %v11205 = vadd.f32 %v7806, %v10949
    %v11206 = vadd.f32 %v7807, %v10950
    %v11207 = vadd.f32 %v7808, %v10951
    %v11208 = vadd.f32 %v7809, %v10952
    %v11209 = vadd.f32 %v7810, %v10953
    %v11210 = vadd.f32 %v7811, %v10954
    %v11211 = vadd.f32 %v7812, %v10955
    %v11212 = vadd.f32 %v7813, %v10956
    %v11213 = vadd.f32 %v7814, %v10957
    %v11214 = vadd.f32 %v7815, %v10958
    %v11215 = vadd.f32 %v7816, %v10959
    %v11216 = vadd.f32 %v7817, %v10960
    %v11217 = vadd.f32 %v7818, %v10961
    %v11218 = vadd.f32 %v7819, %v10962
    %v11219 = vadd.f32 %v7820, %v10963
    %v11220 = vadd.f32 %v7821, %v10964
    %v11221 = vadd.f32 %v7822, %v10965
    %v11222 = vadd.f32 %v7823, %v10966
    %v11223 = vadd.f32 %v7824, %v10967
    %v11224 = vadd.f32 %v7825, %v10968
    %v11225 = vadd.f32 %v7826, %v10969
    %v11226 = vadd.f32 %v7827, %v10970
    %v11227 = vadd.f32 %v7828, %v10971
    %v11228 = vadd.f32 %v7829, %v10972
    %v11229 = vadd.f32 %v7830, %v10973
    %v11230 = vadd.f32 %v7831, %v10974
    %v11231 = vadd.f32 %v7832, %v10975
    %v11232 = vadd.f32 %v7833, %v10976
    %v11233 = vadd.f32 %v7834, %v10977
    %v11234 = vadd.f32 %v7835, %v10978
    %v11235 = vadd.f32 %v7836, %v10979
    %v11236 = vadd.f32 %v7837, %v10980
    %v11237 = vadd.f32 %v7838, %v10981
    %v11238 = vadd.f32 %v7839, %v10982
    %v11239 = vadd.f32 %v7840, %v10983
    %v11240 = vadd.f32 %v7841, %v10984
    %v11241 = vadd.f32 %v7842, %v10985
    %v11242 = vadd.f32 %v7843, %v10986
    %v11243 = vadd.f32 %v7844, %v10987
    %v11244 = vadd.f32 %v7845, %v10988
    %v11245 = vadd.f32 %v7846, %v10989
    %v11246 = vadd.f32 %v7847, %v10990
    %v11247 = vadd.f32 %v7848, %v10991
    %v11248 = vadd.f32 %v7849, %v10992
    %v11249 = vadd.f32 %v7850, %v10993
    %v11250 = vadd.f32 %v7851, %v10994
    %v11251 = vadd.f32 %v7852, %v10995
    %v11252 = vadd.f32 %v7853, %v10996
    %v11253 = vadd.f32 %v7854, %v10997
    %v11254 = vadd.f32 %v7855, %v10998
    %v11255 = vadd.f32 %v7856, %v10999
    %v11256 = vadd.f32 %v7857, %v11000
    %v11257 = vadd.f32 %v7858, %v11001
    %v11258 = vadd.f32 %v7859, %v11002
    %v11259 = vadd.f32 %v7860, %v11003
    %v11260 = vadd.f32 %v7861, %v11004
    %v11261 = vadd.f32 %v7862, %v11005
    %v11262 = vadd.f32 %v7863, %v11006
    %v11263 = vadd.f32 %v7864, %v11007
    %v11264 = vadd.f32 %v7865, %v11008
    %v11265 = vadd.f32 %v7866, %v11009
    %v11266 = vadd.f32 %v7867, %v11010
    %v11267 = vadd.f32 %v7868, %v11011
    %v11268 = vadd.f32 %v7869, %v11012
    %v11269 = vadd.f32 %v7870, %v11013
    %v11270 = vadd.f32 %v7871, %v11014
    %vm11271 = vcmask 7168
    %11272 = vst.msk [vmem:[%s9] sm:$0xff] %vm11271, %v11015
    %11273 = vst.msk [vmem:[%s9 + $0x8] sm:$0xff] %vm11271, %v11016
    %11274 = vst.msk [vmem:[%s9 + $0x10] sm:$0xff] %vm11271, %v11017
    %11275 = vst.msk [vmem:[%s9 + $0x18] sm:$0xff] %vm11271, %v11018
    %11276 = vst.msk [vmem:[%s9 + $0x20] sm:$0xff] %vm11271, %v11019
    %11277 = vst.msk [vmem:[%s9 + $0x28] sm:$0xff] %vm11271, %v11020
    %11278 = vst.msk [vmem:[%s9 + $0x30] sm:$0xff] %vm11271, %v11021
    %11279 = vst.msk [vmem:[%s9 + $0x38] sm:$0xff] %vm11271, %v11022
    %11280 = vst.msk [vmem:[%s9 + $0x40] sm:$0xff] %vm11271, %v11023
    %11281 = vst.msk [vmem:[%s9 + $0x48] sm:$0xff] %vm11271, %v11024
    %11282 = vst.msk [vmem:[%s9 + $0x50] sm:$0xff] %vm11271, %v11025
    %11283 = vst.msk [vmem:[%s9 + $0x58] sm:$0xff] %vm11271, %v11026
    %11284 = vst.msk [vmem:[%s9 + $0x60] sm:$0xff] %vm11271, %v11027
    %11285 = vst.msk [vmem:[%s9 + $0x68] sm:$0xff] %vm11271, %v11028
    %11286 = vst.msk [vmem:[%s9 + $0x70] sm:$0xff] %vm11271, %v11029
    %11287 = vst.msk [vmem:[%s9 + $0x78] sm:$0xff] %vm11271, %v11030
    %11288 = vst.msk [vmem:[%s9 + $0x80] sm:$0xff] %vm11271, %v11031
    %11289 = vst.msk [vmem:[%s9 + $0x88] sm:$0xff] %vm11271, %v11032
    %11290 = vst.msk [vmem:[%s9 + $0x90] sm:$0xff] %vm11271, %v11033
    %11291 = vst.msk [vmem:[%s9 + $0x98] sm:$0xff] %vm11271, %v11034
    %11292 = vst.msk [vmem:[%s9 + $0xa0] sm:$0xff] %vm11271, %v11035
    %11293 = vst.msk [vmem:[%s9 + $0xa8] sm:$0xff] %vm11271, %v11036
    %11294 = vst.msk [vmem:[%s9 + $0xb0] sm:$0xff] %vm11271, %v11037
    %11295 = vst.msk [vmem:[%s9 + $0xb8] sm:$0xff] %vm11271, %v11038
    %11296 = vst.msk [vmem:[%s9 + $0xc0] sm:$0xff] %vm11271, %v11039
    %11297 = vst.msk [vmem:[%s9 + $0xc8] sm:$0xff] %vm11271, %v11040
    %11298 = vst.msk [vmem:[%s9 + $0xd0] sm:$0xff] %vm11271, %v11041
    %11299 = vst.msk [vmem:[%s9 + $0xd8] sm:$0xff] %vm11271, %v11042
    %11300 = vst.msk [vmem:[%s9 + $0xe0] sm:$0xff] %vm11271, %v11043
    %11301 = vst.msk [vmem:[%s9 + $0xe8] sm:$0xff] %vm11271, %v11044
    %11302 = vst.msk [vmem:[%s9 + $0xf0] sm:$0xff] %vm11271, %v11045
    %11303 = vst.msk [vmem:[%s9 + $0xf8] sm:$0xff] %vm11271, %v11046
    %11304 = vst.msk [vmem:[%s9 + $0x100] sm:$0xff] %vm11271, %v11047
    %11305 = vst.msk [vmem:[%s9 + $0x108] sm:$0xff] %vm11271, %v11048
    %11306 = vst.msk [vmem:[%s9 + $0x110] sm:$0xff] %vm11271, %v11049
    %11307 = vst.msk [vmem:[%s9 + $0x118] sm:$0xff] %vm11271, %v11050
    %11308 = vst.msk [vmem:[%s9 + $0x120] sm:$0xff] %vm11271, %v11051
    %11309 = vst.msk [vmem:[%s9 + $0x128] sm:$0xff] %vm11271, %v11052
    %11310 = vst.msk [vmem:[%s9 + $0x130] sm:$0xff] %vm11271, %v11053
    %11311 = vst.msk [vmem:[%s9 + $0x138] sm:$0xff] %vm11271, %v11054
    %11312 = vst.msk [vmem:[%s9 + $0x140] sm:$0xff] %vm11271, %v11055
    %11313 = vst.msk [vmem:[%s9 + $0x148] sm:$0xff] %vm11271, %v11056
    %11314 = vst.msk [vmem:[%s9 + $0x150] sm:$0xff] %vm11271, %v11057
    %11315 = vst.msk [vmem:[%s9 + $0x158] sm:$0xff] %vm11271, %v11058
    %11316 = vst.msk [vmem:[%s9 + $0x160] sm:$0xff] %vm11271, %v11059
    %11317 = vst.msk [vmem:[%s9 + $0x168] sm:$0xff] %vm11271, %v11060
    %11318 = vst.msk [vmem:[%s9 + $0x170] sm:$0xff] %vm11271, %v11061
    %11319 = vst.msk [vmem:[%s9 + $0x178] sm:$0xff] %vm11271, %v11062
    %11320 = vst.msk [vmem:[%s9 + $0x180] sm:$0xff] %vm11271, %v11063
    %11321 = vst.msk [vmem:[%s9 + $0x188] sm:$0xff] %vm11271, %v11064
    %11322 = vst.msk [vmem:[%s9 + $0x190] sm:$0xff] %vm11271, %v11065
    %11323 = vst.msk [vmem:[%s9 + $0x198] sm:$0xff] %vm11271, %v11066
    %11324 = vst.msk [vmem:[%s9 + $0x1a0] sm:$0xff] %vm11271, %v11067
    %11325 = vst.msk [vmem:[%s9 + $0x1a8] sm:$0xff] %vm11271, %v11068
    %11326 = vst.msk [vmem:[%s9 + $0x1b0] sm:$0xff] %vm11271, %v11069
    %11327 = vst.msk [vmem:[%s9 + $0x1b8] sm:$0xff] %vm11271, %v11070
    %11328 = vst.msk [vmem:[%s9 + $0x1c0] sm:$0xff] %vm11271, %v11071
    %11329 = vst.msk [vmem:[%s9 + $0x1c8] sm:$0xff] %vm11271, %v11072
    %11330 = vst.msk [vmem:[%s9 + $0x1d0] sm:$0xff] %vm11271, %v11073
    %11331 = vst.msk [vmem:[%s9 + $0x1d8] sm:$0xff] %vm11271, %v11074
    %11332 = vst.msk [vmem:[%s9 + $0x1e0] sm:$0xff] %vm11271, %v11075
    %11333 = vst.msk [vmem:[%s9 + $0x1e8] sm:$0xff] %vm11271, %v11076
    %11334 = vst.msk [vmem:[%s9 + $0x1f0] sm:$0xff] %vm11271, %v11077
    %11335 = vst.msk [vmem:[%s9 + $0x1f8] sm:$0xff] %vm11271, %v11078
    %11336 = vst.msk [vmem:[%s9 + $0x200] sm:$0xff] %vm11271, %v11079
    %11337 = vst.msk [vmem:[%s9 + $0x208] sm:$0xff] %vm11271, %v11080
    %11338 = vst.msk [vmem:[%s9 + $0x210] sm:$0xff] %vm11271, %v11081
    %11339 = vst.msk [vmem:[%s9 + $0x218] sm:$0xff] %vm11271, %v11082
    %11340 = vst.msk [vmem:[%s9 + $0x220] sm:$0xff] %vm11271, %v11083
    %11341 = vst.msk [vmem:[%s9 + $0x228] sm:$0xff] %vm11271, %v11084
    %11342 = vst.msk [vmem:[%s9 + $0x230] sm:$0xff] %vm11271, %v11085
    %11343 = vst.msk [vmem:[%s9 + $0x238] sm:$0xff] %vm11271, %v11086
    %11344 = vst.msk [vmem:[%s9 + $0x240] sm:$0xff] %vm11271, %v11087
    %11345 = vst.msk [vmem:[%s9 + $0x248] sm:$0xff] %vm11271, %v11088
    %11346 = vst.msk [vmem:[%s9 + $0x250] sm:$0xff] %vm11271, %v11089
    %11347 = vst.msk [vmem:[%s9 + $0x258] sm:$0xff] %vm11271, %v11090
    %11348 = vst.msk [vmem:[%s9 + $0x260] sm:$0xff] %vm11271, %v11091
    %11349 = vst.msk [vmem:[%s9 + $0x268] sm:$0xff] %vm11271, %v11092
    %11350 = vst.msk [vmem:[%s9 + $0x270] sm:$0xff] %vm11271, %v11093
    %11351 = vst.msk [vmem:[%s9 + $0x278] sm:$0xff] %vm11271, %v11094
    %11352 = vst.msk [vmem:[%s9 + $0x280] sm:$0xff] %vm11271, %v11095
    %11353 = vst.msk [vmem:[%s9 + $0x288] sm:$0xff] %vm11271, %v11096
    %11354 = vst.msk [vmem:[%s9 + $0x290] sm:$0xff] %vm11271, %v11097
    %11355 = vst.msk [vmem:[%s9 + $0x298] sm:$0xff] %vm11271, %v11098
    %11356 = vst.msk [vmem:[%s9 + $0x2a0] sm:$0xff] %vm11271, %v11099
    %11357 = vst.msk [vmem:[%s9 + $0x2a8] sm:$0xff] %vm11271, %v11100
    %11358 = vst.msk [vmem:[%s9 + $0x2b0] sm:$0xff] %vm11271, %v11101
    %11359 = vst.msk [vmem:[%s9 + $0x2b8] sm:$0xff] %vm11271, %v11102
    %11360 = vst.msk [vmem:[%s9 + $0x2c0] sm:$0xff] %vm11271, %v11103
    %11361 = vst.msk [vmem:[%s9 + $0x2c8] sm:$0xff] %vm11271, %v11104
    %11362 = vst.msk [vmem:[%s9 + $0x2d0] sm:$0xff] %vm11271, %v11105
    %11363 = vst.msk [vmem:[%s9 + $0x2d8] sm:$0xff] %vm11271, %v11106
    %11364 = vst.msk [vmem:[%s9 + $0x2e0] sm:$0xff] %vm11271, %v11107
    %11365 = vst.msk [vmem:[%s9 + $0x2e8] sm:$0xff] %vm11271, %v11108
    %11366 = vst.msk [vmem:[%s9 + $0x2f0] sm:$0xff] %vm11271, %v11109
    %11367 = vst.msk [vmem:[%s9 + $0x2f8] sm:$0xff] %vm11271, %v11110
    %11368 = vst.msk [vmem:[%s9 + $0x300] sm:$0xff] %vm11271, %v11111
    %11369 = vst.msk [vmem:[%s9 + $0x308] sm:$0xff] %vm11271, %v11112
    %11370 = vst.msk [vmem:[%s9 + $0x310] sm:$0xff] %vm11271, %v11113
    %11371 = vst.msk [vmem:[%s9 + $0x318] sm:$0xff] %vm11271, %v11114
    %11372 = vst.msk [vmem:[%s9 + $0x320] sm:$0xff] %vm11271, %v11115
    %11373 = vst.msk [vmem:[%s9 + $0x328] sm:$0xff] %vm11271, %v11116
    %11374 = vst.msk [vmem:[%s9 + $0x330] sm:$0xff] %vm11271, %v11117
    %11375 = vst.msk [vmem:[%s9 + $0x338] sm:$0xff] %vm11271, %v11118
    %11376 = vst.msk [vmem:[%s9 + $0x340] sm:$0xff] %vm11271, %v11119
    %11377 = vst.msk [vmem:[%s9 + $0x348] sm:$0xff] %vm11271, %v11120
    %11378 = vst.msk [vmem:[%s9 + $0x350] sm:$0xff] %vm11271, %v11121
    %11379 = vst.msk [vmem:[%s9 + $0x358] sm:$0xff] %vm11271, %v11122
    %11380 = vst.msk [vmem:[%s9 + $0x360] sm:$0xff] %vm11271, %v11123
    %11381 = vst.msk [vmem:[%s9 + $0x368] sm:$0xff] %vm11271, %v11124
    %11382 = vst.msk [vmem:[%s9 + $0x370] sm:$0xff] %vm11271, %v11125
    %11383 = vst.msk [vmem:[%s9 + $0x378] sm:$0xff] %vm11271, %v11126
    %11384 = vst.msk [vmem:[%s9 + $0x380] sm:$0xff] %vm11271, %v11127
    %11385 = vst.msk [vmem:[%s9 + $0x388] sm:$0xff] %vm11271, %v11128
    %11386 = vst.msk [vmem:[%s9 + $0x390] sm:$0xff] %vm11271, %v11129
    %11387 = vst.msk [vmem:[%s9 + $0x398] sm:$0xff] %vm11271, %v11130
    %11388 = vst.msk [vmem:[%s9 + $0x3a0] sm:$0xff] %vm11271, %v11131
    %11389 = vst.msk [vmem:[%s9 + $0x3a8] sm:$0xff] %vm11271, %v11132
    %11390 = vst.msk [vmem:[%s9 + $0x3b0] sm:$0xff] %vm11271, %v11133
    %11391 = vst.msk [vmem:[%s9 + $0x3b8] sm:$0xff] %vm11271, %v11134
    %11392 = vst.msk [vmem:[%s9 + $0x3c0] sm:$0xff] %vm11271, %v11135
    %11393 = vst.msk [vmem:[%s9 + $0x3c8] sm:$0xff] %vm11271, %v11136
    %11394 = vst.msk [vmem:[%s9 + $0x3d0] sm:$0xff] %vm11271, %v11137
    %11395 = vst.msk [vmem:[%s9 + $0x3d8] sm:$0xff] %vm11271, %v11138
    %11396 = vst.msk [vmem:[%s9 + $0x3e0] sm:$0xff] %vm11271, %v11139
    %11397 = vst.msk [vmem:[%s9 + $0x3e8] sm:$0xff] %vm11271, %v11140
    %11398 = vst.msk [vmem:[%s9 + $0x3f0] sm:$0xff] %vm11271, %v11141
    %11399 = vst.msk [vmem:[%s9 + $0x3f8] sm:$0xff] %vm11271, %v11142
    %11400 = vst.msk [vmem:[%s9 + $0x400] sm:$0xff] %vm11271, %v11143
    %11401 = vst.msk [vmem:[%s9 + $0x408] sm:$0xff] %vm11271, %v11144
    %11402 = vst.msk [vmem:[%s9 + $0x410] sm:$0xff] %vm11271, %v11145
    %11403 = vst.msk [vmem:[%s9 + $0x418] sm:$0xff] %vm11271, %v11146
    %11404 = vst.msk [vmem:[%s9 + $0x420] sm:$0xff] %vm11271, %v11147
    %11405 = vst.msk [vmem:[%s9 + $0x428] sm:$0xff] %vm11271, %v11148
    %11406 = vst.msk [vmem:[%s9 + $0x430] sm:$0xff] %vm11271, %v11149
    %11407 = vst.msk [vmem:[%s9 + $0x438] sm:$0xff] %vm11271, %v11150
    %11408 = vst.msk [vmem:[%s9 + $0x440] sm:$0xff] %vm11271, %v11151
    %11409 = vst.msk [vmem:[%s9 + $0x448] sm:$0xff] %vm11271, %v11152
    %11410 = vst.msk [vmem:[%s9 + $0x450] sm:$0xff] %vm11271, %v11153
    %11411 = vst.msk [vmem:[%s9 + $0x458] sm:$0xff] %vm11271, %v11154
    %11412 = vst.msk [vmem:[%s9 + $0x460] sm:$0xff] %vm11271, %v11155
    %11413 = vst.msk [vmem:[%s9 + $0x468] sm:$0xff] %vm11271, %v11156
    %11414 = vst.msk [vmem:[%s9 + $0x470] sm:$0xff] %vm11271, %v11157
    %11415 = vst.msk [vmem:[%s9 + $0x478] sm:$0xff] %vm11271, %v11158
    %11416 = vst.msk [vmem:[%s9 + $0x480] sm:$0xff] %vm11271, %v11159
    %11417 = vst.msk [vmem:[%s9 + $0x488] sm:$0xff] %vm11271, %v11160
    %11418 = vst.msk [vmem:[%s9 + $0x490] sm:$0xff] %vm11271, %v11161
    %11419 = vst.msk [vmem:[%s9 + $0x498] sm:$0xff] %vm11271, %v11162
    %11420 = vst.msk [vmem:[%s9 + $0x4a0] sm:$0xff] %vm11271, %v11163
    %11421 = vst.msk [vmem:[%s9 + $0x4a8] sm:$0xff] %vm11271, %v11164
    %11422 = vst.msk [vmem:[%s9 + $0x4b0] sm:$0xff] %vm11271, %v11165
    %11423 = vst.msk [vmem:[%s9 + $0x4b8] sm:$0xff] %vm11271, %v11166
    %11424 = vst.msk [vmem:[%s9 + $0x4c0] sm:$0xff] %vm11271, %v11167
    %11425 = vst.msk [vmem:[%s9 + $0x4c8] sm:$0xff] %vm11271, %v11168
    %11426 = vst.msk [vmem:[%s9 + $0x4d0] sm:$0xff] %vm11271, %v11169
    %11427 = vst.msk [vmem:[%s9 + $0x4d8] sm:$0xff] %vm11271, %v11170
    %11428 = vst.msk [vmem:[%s9 + $0x4e0] sm:$0xff] %vm11271, %v11171
    %11429 = vst.msk [vmem:[%s9 + $0x4e8] sm:$0xff] %vm11271, %v11172
    %11430 = vst.msk [vmem:[%s9 + $0x4f0] sm:$0xff] %vm11271, %v11173
    %11431 = vst.msk [vmem:[%s9 + $0x4f8] sm:$0xff] %vm11271, %v11174
    %11432 = vst.msk [vmem:[%s9 + $0x500] sm:$0xff] %vm11271, %v11175
    %11433 = vst.msk [vmem:[%s9 + $0x508] sm:$0xff] %vm11271, %v11176
    %11434 = vst.msk [vmem:[%s9 + $0x510] sm:$0xff] %vm11271, %v11177
    %11435 = vst.msk [vmem:[%s9 + $0x518] sm:$0xff] %vm11271, %v11178
    %11436 = vst.msk [vmem:[%s9 + $0x520] sm:$0xff] %vm11271, %v11179
    %11437 = vst.msk [vmem:[%s9 + $0x528] sm:$0xff] %vm11271, %v11180
    %11438 = vst.msk [vmem:[%s9 + $0x530] sm:$0xff] %vm11271, %v11181
    %11439 = vst.msk [vmem:[%s9 + $0x538] sm:$0xff] %vm11271, %v11182
    %11440 = vst.msk [vmem:[%s9 + $0x540] sm:$0xff] %vm11271, %v11183
    %11441 = vst.msk [vmem:[%s9 + $0x548] sm:$0xff] %vm11271, %v11184
    %11442 = vst.msk [vmem:[%s9 + $0x550] sm:$0xff] %vm11271, %v11185
    %11443 = vst.msk [vmem:[%s9 + $0x558] sm:$0xff] %vm11271, %v11186
    %11444 = vst.msk [vmem:[%s9 + $0x560] sm:$0xff] %vm11271, %v11187
    %11445 = vst.msk [vmem:[%s9 + $0x568] sm:$0xff] %vm11271, %v11188
    %11446 = vst.msk [vmem:[%s9 + $0x570] sm:$0xff] %vm11271, %v11189
    %11447 = vst.msk [vmem:[%s9 + $0x578] sm:$0xff] %vm11271, %v11190
    %11448 = vst.msk [vmem:[%s9 + $0x580] sm:$0xff] %vm11271, %v11191
    %11449 = vst.msk [vmem:[%s9 + $0x588] sm:$0xff] %vm11271, %v11192
    %11450 = vst.msk [vmem:[%s9 + $0x590] sm:$0xff] %vm11271, %v11193
    %11451 = vst.msk [vmem:[%s9 + $0x598] sm:$0xff] %vm11271, %v11194
    %11452 = vst.msk [vmem:[%s9 + $0x5a0] sm:$0xff] %vm11271, %v11195
    %11453 = vst.msk [vmem:[%s9 + $0x5a8] sm:$0xff] %vm11271, %v11196
    %11454 = vst.msk [vmem:[%s9 + $0x5b0] sm:$0xff] %vm11271, %v11197
    %11455 = vst.msk [vmem:[%s9 + $0x5b8] sm:$0xff] %vm11271, %v11198
    %11456 = vst.msk [vmem:[%s9 + $0x5c0] sm:$0xff] %vm11271, %v11199
    %11457 = vst.msk [vmem:[%s9 + $0x5c8] sm:$0xff] %vm11271, %v11200
    %11458 = vst.msk [vmem:[%s9 + $0x5d0] sm:$0xff] %vm11271, %v11201
    %11459 = vst.msk [vmem:[%s9 + $0x5d8] sm:$0xff] %vm11271, %v11202
    %11460 = vst.msk [vmem:[%s9 + $0x5e0] sm:$0xff] %vm11271, %v11203
    %11461 = vst.msk [vmem:[%s9 + $0x5e8] sm:$0xff] %vm11271, %v11204
    %11462 = vst.msk [vmem:[%s9 + $0x5f0] sm:$0xff] %vm11271, %v11205
    %11463 = vst.msk [vmem:[%s9 + $0x5f8] sm:$0xff] %vm11271, %v11206
    %11464 = vst.msk [vmem:[%s9 + $0x600] sm:$0xff] %vm11271, %v11207
    %11465 = vst.msk [vmem:[%s9 + $0x608] sm:$0xff] %vm11271, %v11208
    %11466 = vst.msk [vmem:[%s9 + $0x610] sm:$0xff] %vm11271, %v11209
    %11467 = vst.msk [vmem:[%s9 + $0x618] sm:$0xff] %vm11271, %v11210
    %11468 = vst.msk [vmem:[%s9 + $0x620] sm:$0xff] %vm11271, %v11211
    %11469 = vst.msk [vmem:[%s9 + $0x628] sm:$0xff] %vm11271, %v11212
    %11470 = vst.msk [vmem:[%s9 + $0x630] sm:$0xff] %vm11271, %v11213
    %11471 = vst.msk [vmem:[%s9 + $0x638] sm:$0xff] %vm11271, %v11214
    %11472 = vst.msk [vmem:[%s9 + $0x640] sm:$0xff] %vm11271, %v11215
    %11473 = vst.msk [vmem:[%s9 + $0x648] sm:$0xff] %vm11271, %v11216
    %11474 = vst.msk [vmem:[%s9 + $0x650] sm:$0xff] %vm11271, %v11217
    %11475 = vst.msk [vmem:[%s9 + $0x658] sm:$0xff] %vm11271, %v11218
    %11476 = vst.msk [vmem:[%s9 + $0x660] sm:$0xff] %vm11271, %v11219
    %11477 = vst.msk [vmem:[%s9 + $0x668] sm:$0xff] %vm11271, %v11220
    %11478 = vst.msk [vmem:[%s9 + $0x670] sm:$0xff] %vm11271, %v11221
    %11479 = vst.msk [vmem:[%s9 + $0x678] sm:$0xff] %vm11271, %v11222
    %11480 = vst.msk [vmem:[%s9 + $0x680] sm:$0xff] %vm11271, %v11223
    %11481 = vst.msk [vmem:[%s9 + $0x688] sm:$0xff] %vm11271, %v11224
    %11482 = vst.msk [vmem:[%s9 + $0x690] sm:$0xff] %vm11271, %v11225
    %11483 = vst.msk [vmem:[%s9 + $0x698] sm:$0xff] %vm11271, %v11226
    %11484 = vst.msk [vmem:[%s9 + $0x6a0] sm:$0xff] %vm11271, %v11227
    %11485 = vst.msk [vmem:[%s9 + $0x6a8] sm:$0xff] %vm11271, %v11228
    %11486 = vst.msk [vmem:[%s9 + $0x6b0] sm:$0xff] %vm11271, %v11229
    %11487 = vst.msk [vmem:[%s9 + $0x6b8] sm:$0xff] %vm11271, %v11230
    %11488 = vst.msk [vmem:[%s9 + $0x6c0] sm:$0xff] %vm11271, %v11231
    %11489 = vst.msk [vmem:[%s9 + $0x6c8] sm:$0xff] %vm11271, %v11232
    %11490 = vst.msk [vmem:[%s9 + $0x6d0] sm:$0xff] %vm11271, %v11233
    %11491 = vst.msk [vmem:[%s9 + $0x6d8] sm:$0xff] %vm11271, %v11234
    %11492 = vst.msk [vmem:[%s9 + $0x6e0] sm:$0xff] %vm11271, %v11235
    %11493 = vst.msk [vmem:[%s9 + $0x6e8] sm:$0xff] %vm11271, %v11236
    %11494 = vst.msk [vmem:[%s9 + $0x6f0] sm:$0xff] %vm11271, %v11237
    %11495 = vst.msk [vmem:[%s9 + $0x6f8] sm:$0xff] %vm11271, %v11238
    %11496 = vst.msk [vmem:[%s9 + $0x700] sm:$0xff] %vm11271, %v11239
    %11497 = vst.msk [vmem:[%s9 + $0x708] sm:$0xff] %vm11271, %v11240
    %11498 = vst.msk [vmem:[%s9 + $0x710] sm:$0xff] %vm11271, %v11241
    %11499 = vst.msk [vmem:[%s9 + $0x718] sm:$0xff] %vm11271, %v11242
    %11500 = vst.msk [vmem:[%s9 + $0x720] sm:$0xff] %vm11271, %v11243
    %11501 = vst.msk [vmem:[%s9 + $0x728] sm:$0xff] %vm11271, %v11244
    %11502 = vst.msk [vmem:[%s9 + $0x730] sm:$0xff] %vm11271, %v11245
    %11503 = vst.msk [vmem:[%s9 + $0x738] sm:$0xff] %vm11271, %v11246
    %11504 = vst.msk [vmem:[%s9 + $0x740] sm:$0xff] %vm11271, %v11247
    %11505 = vst.msk [vmem:[%s9 + $0x748] sm:$0xff] %vm11271, %v11248
    %11506 = vst.msk [vmem:[%s9 + $0x750] sm:$0xff] %vm11271, %v11249
    %11507 = vst.msk [vmem:[%s9 + $0x758] sm:$0xff] %vm11271, %v11250
    %11508 = vst.msk [vmem:[%s9 + $0x760] sm:$0xff] %vm11271, %v11251
    %11509 = vst.msk [vmem:[%s9 + $0x768] sm:$0xff] %vm11271, %v11252
    %11510 = vst.msk [vmem:[%s9 + $0x770] sm:$0xff] %vm11271, %v11253
    %11511 = vst.msk [vmem:[%s9 + $0x778] sm:$0xff] %vm11271, %v11254
    %11512 = vst.msk [vmem:[%s9 + $0x780] sm:$0xff] %vm11271, %v11255
    %11513 = vst.msk [vmem:[%s9 + $0x788] sm:$0xff] %vm11271, %v11256
    %11514 = vst.msk [vmem:[%s9 + $0x790] sm:$0xff] %vm11271, %v11257
    %11515 = vst.msk [vmem:[%s9 + $0x798] sm:$0xff] %vm11271, %v11258
    %11516 = vst.msk [vmem:[%s9 + $0x7a0] sm:$0xff] %vm11271, %v11259
    %11517 = vst.msk [vmem:[%s9 + $0x7a8] sm:$0xff] %vm11271, %v11260
    %11518 = vst.msk [vmem:[%s9 + $0x7b0] sm:$0xff] %vm11271, %v11261
    %11519 = vst.msk [vmem:[%s9 + $0x7b8] sm:$0xff] %vm11271, %v11262
    %11520 = vst.msk [vmem:[%s9 + $0x7c0] sm:$0xff] %vm11271, %v11263
    %11521 = vst.msk [vmem:[%s9 + $0x7c8] sm:$0xff] %vm11271, %v11264
    %11522 = vst.msk [vmem:[%s9 + $0x7d0] sm:$0xff] %vm11271, %v11265
    %11523 = vst.msk [vmem:[%s9 + $0x7d8] sm:$0xff] %vm11271, %v11266
    %11524 = vst.msk [vmem:[%s9 + $0x7e0] sm:$0xff] %vm11271, %v11267
    %11525 = vst.msk [vmem:[%s9 + $0x7e8] sm:$0xff] %vm11271, %v11268
    %11526 = vst.msk [vmem:[%s9 + $0x7f0] sm:$0xff] %vm11271, %v11269
    %11527 = vst.msk [vmem:[%s9 + $0x7f8] sm:$0xff] %vm11271, %v11270
    %v11528 = vmul.f32 %v51, %v51
    %v11529 = vmul.f32 %v52, %v52
    %v11530 = vmul.f32 %v53, %v53
    %v11531 = vmul.f32 %v54, %v54
    %v11532 = vmul.f32 %v55, %v55
    %v11533 = vmul.f32 %v56, %v56
    %v11534 = vmul.f32 %v57, %v57
    %v11535 = vmul.f32 %v58, %v58
    %v11536 = vmul.f32 %v59, %v59
    %v11537 = vmul.f32 %v60, %v60
    %v11538 = vmul.f32 %v61, %v61
    %v11539 = vmul.f32 %v62, %v62
    %v11540 = vmul.f32 %v63, %v63
    %v11541 = vmul.f32 %v64, %v64
    %v11542 = vmul.f32 %v65, %v65
    %v11543 = vmul.f32 %v66, %v66
    %v11544 = vmul.f32 %v67, %v67
    %v11545 = vmul.f32 %v68, %v68
    %v11546 = vmul.f32 %v69, %v69
    %v11547 = vmul.f32 %v70, %v70
    %v11548 = vmul.f32 %v71, %v71
    %v11549 = vmul.f32 %v72, %v72
    %v11550 = vmul.f32 %v73, %v73
    %v11551 = vmul.f32 %v74, %v74
    %v11552 = vmul.f32 %v75, %v75
    %v11553 = vmul.f32 %v76, %v76
    %v11554 = vmul.f32 %v77, %v77
    %v11555 = vmul.f32 %v78, %v78
    %v11556 = vmul.f32 %v79, %v79
    %v11557 = vmul.f32 %v80, %v80
    %v11558 = vmul.f32 %v81, %v81
    %v11559 = vmul.f32 %v82, %v82
    %v11560 = vmul.f32 %v83, %v83
    %v11561 = vmul.f32 %v84, %v84
    %v11562 = vmul.f32 %v85, %v85
    %v11563 = vmul.f32 %v86, %v86
    %v11564 = vmul.f32 %v87, %v87
    %v11565 = vmul.f32 %v88, %v88
    %v11566 = vmul.f32 %v89, %v89
    %v11567 = vmul.f32 %v90, %v90
    %v11568 = vmul.f32 %v91, %v91
    %v11569 = vmul.f32 %v92, %v92
    %v11570 = vmul.f32 %v93, %v93
    %v11571 = vmul.f32 %v94, %v94
    %v11572 = vmul.f32 %v95, %v95
    %v11573 = vmul.f32 %v96, %v96
    %v11574 = vmul.f32 %v97, %v97
    %v11575 = vmul.f32 %v98, %v98
    %v11576 = vmul.f32 %v99, %v99
    %v11577 = vmul.f32 %v100, %v100
    %v11578 = vmul.f32 %v101, %v101
    %v11579 = vmul.f32 %v102, %v102
    %v11580 = vmul.f32 %v103, %v103
    %v11581 = vmul.f32 %v104, %v104
    %v11582 = vmul.f32 %v105, %v105
    %v11583 = vmul.f32 %v106, %v106
    %v11584 = vmul.f32 %v107, %v107
    %v11585 = vmul.f32 %v108, %v108
    %v11586 = vmul.f32 %v109, %v109
    %v11587 = vmul.f32 %v110, %v110
    %v11588 = vmul.f32 %v111, %v111
    %v11589 = vmul.f32 %v112, %v112
    %v11590 = vmul.f32 %v113, %v113
    %v11591 = vmul.f32 %v114, %v114
    %v11592 = vmul.f32 %v115, %v115
    %v11593 = vmul.f32 %v116, %v116
    %v11594 = vmul.f32 %v117, %v117
    %v11595 = vmul.f32 %v118, %v118
    %v11596 = vmul.f32 %v119, %v119
    %v11597 = vmul.f32 %v120, %v120
    %v11598 = vmul.f32 %v121, %v121
    %v11599 = vmul.f32 %v122, %v122
    %v11600 = vmul.f32 %v123, %v123
    %v11601 = vmul.f32 %v124, %v124
    %v11602 = vmul.f32 %v125, %v125
    %v11603 = vmul.f32 %v126, %v126
    %v11604 = vmul.f32 %v127, %v127
    %v11605 = vmul.f32 %v128, %v128
    %v11606 = vmul.f32 %v129, %v129
    %v11607 = vmul.f32 %v130, %v130
    %v11608 = vmul.f32 %v131, %v131
    %v11609 = vmul.f32 %v132, %v132
    %v11610 = vmul.f32 %v133, %v133
    %v11611 = vmul.f32 %v134, %v134
    %v11612 = vmul.f32 %v135, %v135
    %v11613 = vmul.f32 %v136, %v136
    %v11614 = vmul.f32 %v137, %v137
    %v11615 = vmul.f32 %v138, %v138
    %v11616 = vmul.f32 %v139, %v139
    %v11617 = vmul.f32 %v140, %v140
    %v11618 = vmul.f32 %v141, %v141
    %v11619 = vmul.f32 %v142, %v142
    %v11620 = vmul.f32 %v143, %v143
    %v11621 = vmul.f32 %v144, %v144
    %v11622 = vmul.f32 %v145, %v145
    %v11623 = vmul.f32 %v146, %v146
    %v11624 = vmul.f32 %v147, %v147
    %v11625 = vmul.f32 %v148, %v148
    %v11626 = vmul.f32 %v149, %v149
    %v11627 = vmul.f32 %v150, %v150
    %v11628 = vmul.f32 %v151, %v151
    %v11629 = vmul.f32 %v152, %v152
    %v11630 = vmul.f32 %v153, %v153
    %v11631 = vmul.f32 %v154, %v154
    %v11632 = vmul.f32 %v155, %v155
    %v11633 = vmul.f32 %v156, %v156
    %v11634 = vmul.f32 %v157, %v157
    %v11635 = vmul.f32 %v158, %v158
    %v11636 = vmul.f32 %v159, %v159
    %v11637 = vmul.f32 %v160, %v160
    %v11638 = vmul.f32 %v161, %v161
    %v11639 = vmul.f32 %v162, %v162
    %v11640 = vmul.f32 %v163, %v163
    %v11641 = vmul.f32 %v164, %v164
    %v11642 = vmul.f32 %v165, %v165
    %v11643 = vmul.f32 %v166, %v166
    %v11644 = vmul.f32 %v167, %v167
    %v11645 = vmul.f32 %v168, %v168
    %v11646 = vmul.f32 %v169, %v169
    %v11647 = vmul.f32 %v170, %v170
    %v11648 = vmul.f32 %v171, %v171
    %v11649 = vmul.f32 %v172, %v172
    %v11650 = vmul.f32 %v173, %v173
    %v11651 = vmul.f32 %v174, %v174
    %v11652 = vmul.f32 %v175, %v175
    %v11653 = vmul.f32 %v176, %v176
    %v11654 = vmul.f32 %v177, %v177
    %v11655 = vmul.f32 %v178, %v178
    %v11656 = vmul.f32 %v179, %v179
    %v11657 = vmul.f32 %v180, %v180
    %v11658 = vmul.f32 %v181, %v181
    %v11659 = vmul.f32 %v182, %v182
    %v11660 = vmul.f32 %v183, %v183
    %v11661 = vmul.f32 %v184, %v184
    %v11662 = vmul.f32 %v185, %v185
    %v11663 = vmul.f32 %v186, %v186
    %v11664 = vmul.f32 %v187, %v187
    %v11665 = vmul.f32 %v188, %v188
    %v11666 = vmul.f32 %v189, %v189
    %v11667 = vmul.f32 %v190, %v190
    %v11668 = vmul.f32 %v191, %v191
    %v11669 = vmul.f32 %v192, %v192
    %v11670 = vmul.f32 %v193, %v193
    %v11671 = vmul.f32 %v194, %v194
    %v11672 = vmul.f32 %v195, %v195
    %v11673 = vmul.f32 %v196, %v196
    %v11674 = vmul.f32 %v197, %v197
    %v11675 = vmul.f32 %v198, %v198
    %v11676 = vmul.f32 %v199, %v199
    %v11677 = vmul.f32 %v200, %v200
    %v11678 = vmul.f32 %v201, %v201
    %v11679 = vmul.f32 %v202, %v202
    %v11680 = vmul.f32 %v203, %v203
    %v11681 = vmul.f32 %v204, %v204
    %v11682 = vmul.f32 %v205, %v205
    %v11683 = vmul.f32 %v206, %v206
    %v11684 = vmul.f32 %v207, %v207
    %v11685 = vmul.f32 %v208, %v208
    %v11686 = vmul.f32 %v209, %v209
    %v11687 = vmul.f32 %v210, %v210
    %v11688 = vmul.f32 %v211, %v211
    %v11689 = vmul.f32 %v212, %v212
    %v11690 = vmul.f32 %v213, %v213
    %v11691 = vmul.f32 %v214, %v214
    %v11692 = vmul.f32 %v215, %v215
    %v11693 = vmul.f32 %v216, %v216
    %v11694 = vmul.f32 %v217, %v217
    %v11695 = vmul.f32 %v218, %v218
    %v11696 = vmul.f32 %v219, %v219
    %v11697 = vmul.f32 %v220, %v220
    %v11698 = vmul.f32 %v221, %v221
    %v11699 = vmul.f32 %v222, %v222
    %v11700 = vmul.f32 %v223, %v223
    %v11701 = vmul.f32 %v224, %v224
    %v11702 = vmul.f32 %v225, %v225
    %v11703 = vmul.f32 %v226, %v226
    %v11704 = vmul.f32 %v227, %v227
    %v11705 = vmul.f32 %v228, %v228
    %v11706 = vmul.f32 %v229, %v229
    %v11707 = vmul.f32 %v230, %v230
    %v11708 = vmul.f32 %v231, %v231
    %v11709 = vmul.f32 %v232, %v232
    %v11710 = vmul.f32 %v233, %v233
    %v11711 = vmul.f32 %v234, %v234
    %v11712 = vmul.f32 %v235, %v235
    %v11713 = vmul.f32 %v236, %v236
    %v11714 = vmul.f32 %v237, %v237
    %v11715 = vmul.f32 %v238, %v238
    %v11716 = vmul.f32 %v239, %v239
    %v11717 = vmul.f32 %v240, %v240
    %v11718 = vmul.f32 %v241, %v241
    %v11719 = vmul.f32 %v242, %v242
    %v11720 = vmul.f32 %v243, %v243
    %v11721 = vmul.f32 %v244, %v244
    %v11722 = vmul.f32 %v245, %v245
    %v11723 = vmul.f32 %v246, %v246
    %v11724 = vmul.f32 %v247, %v247
    %v11725 = vmul.f32 %v248, %v248
    %v11726 = vmul.f32 %v249, %v249
    %v11727 = vmul.f32 %v250, %v250
    %v11728 = vmul.f32 %v251, %v251
    %v11729 = vmul.f32 %v252, %v252
    %v11730 = vmul.f32 %v253, %v253
    %v11731 = vmul.f32 %v254, %v254
    %v11732 = vmul.f32 %v255, %v255
    %v11733 = vmul.f32 %v256, %v256
    %v11734 = vmul.f32 %v257, %v257
    %v11735 = vmul.f32 %v258, %v258
    %v11736 = vmul.f32 %v259, %v259
    %v11737 = vmul.f32 %v260, %v260
    %v11738 = vmul.f32 %v261, %v261
    %v11739 = vmul.f32 %v262, %v262
    %v11740 = vmul.f32 %v263, %v263
    %v11741 = vmul.f32 %v264, %v264
    %v11742 = vmul.f32 %v265, %v265
    %v11743 = vmul.f32 %v266, %v266
    %v11744 = vmul.f32 %v267, %v267
    %v11745 = vmul.f32 %v268, %v268
    %v11746 = vmul.f32 %v269, %v269
    %v11747 = vmul.f32 %v270, %v270
    %v11748 = vmul.f32 %v271, %v271
    %v11749 = vmul.f32 %v272, %v272
    %v11750 = vmul.f32 %v273, %v273
    %v11751 = vmul.f32 %v274, %v274
    %v11752 = vmul.f32 %v275, %v275
    %v11753 = vmul.f32 %v276, %v276
    %v11754 = vmul.f32 %v277, %v277
    %v11755 = vmul.f32 %v278, %v278
    %v11756 = vmul.f32 %v279, %v279
    %v11757 = vmul.f32 %v280, %v280
    %v11758 = vmul.f32 %v281, %v281
    %v11759 = vmul.f32 %v282, %v282
    %v11760 = vmul.f32 %v283, %v283
    %v11761 = vmul.f32 %v284, %v284
    %v11762 = vmul.f32 %v285, %v285
    %v11763 = vmul.f32 %v286, %v286
    %v11764 = vmul.f32 %v287, %v287
    %v11765 = vmul.f32 %v288, %v288
    %v11766 = vmul.f32 %v289, %v289
    %v11767 = vmul.f32 %v290, %v290
    %v11768 = vmul.f32 %v291, %v291
    %v11769 = vmul.f32 %v292, %v292
    %v11770 = vmul.f32 %v293, %v293
    %v11771 = vmul.f32 %v294, %v294
    %v11772 = vmul.f32 %v295, %v295
    %v11773 = vmul.f32 %v296, %v296
    %v11774 = vmul.f32 %v297, %v297
    %v11775 = vmul.f32 %v298, %v298
    %v11776 = vmul.f32 %v299, %v299
    %v11777 = vmul.f32 %v300, %v300
    %v11778 = vmul.f32 %v301, %v301
    %v11779 = vmul.f32 %v302, %v302
    %v11780 = vmul.f32 %v303, %v303
    %v11781 = vmul.f32 %v304, %v304
    %v11782 = vmul.f32 %v305, %v305
    %v11783 = vmul.f32 %v306, %v306
    %v11784 = vsel %vm3261, %v11528, 0.0
    %v11785 = vsel %vm3261, %v11529, 0.0
    %v11786 = vadd.f32 %v11784, %v11785
    %v11787 = vsel %vm3261, %v11530, 0.0
    %v11788 = vadd.f32 %v11786, %v11787
    %v11789 = vsel %vm3261, %v11531, 0.0
    %v11790 = vadd.f32 %v11788, %v11789
    %v11791 = vsel %vm3261, %v11532, 0.0
    %v11792 = vadd.f32 %v11790, %v11791
    %v11793 = vsel %vm3261, %v11533, 0.0
    %v11794 = vadd.f32 %v11792, %v11793
    %v11795 = vsel %vm3261, %v11534, 0.0
    %v11796 = vadd.f32 %v11794, %v11795
    %v11797 = vsel %vm3261, %v11535, 0.0
    %v11798 = vadd.f32 %v11796, %v11797
    %v11799 = vsel %vm3261, %v11536, 0.0
    %v11800 = vadd.f32 %v11798, %v11799
    %v11801 = vsel %vm3261, %v11537, 0.0
    %v11802 = vadd.f32 %v11800, %v11801
    %v11803 = vsel %vm3261, %v11538, 0.0
    %v11804 = vadd.f32 %v11802, %v11803
    %v11805 = vsel %vm3261, %v11539, 0.0
    %v11806 = vadd.f32 %v11804, %v11805
    %v11807 = vsel %vm3261, %v11540, 0.0
    %v11808 = vadd.f32 %v11806, %v11807
    %v11809 = vsel %vm3261, %v11541, 0.0
    %v11810 = vadd.f32 %v11808, %v11809
    %v11811 = vsel %vm3261, %v11542, 0.0
    %v11812 = vadd.f32 %v11810, %v11811
    %v11813 = vsel %vm3261, %v11543, 0.0
    %v11814 = vadd.f32 %v11812, %v11813
    %v11815 = vsel %vm3261, %v11544, 0.0
    %v11816 = vadd.f32 %v11814, %v11815
    %v11817 = vsel %vm3261, %v11545, 0.0
    %v11818 = vadd.f32 %v11816, %v11817
    %v11819 = vsel %vm3261, %v11546, 0.0
    %v11820 = vadd.f32 %v11818, %v11819
    %v11821 = vsel %vm3261, %v11547, 0.0
    %v11822 = vadd.f32 %v11820, %v11821
    %v11823 = vsel %vm3261, %v11548, 0.0
    %v11824 = vadd.f32 %v11822, %v11823
    %v11825 = vsel %vm3261, %v11549, 0.0
    %v11826 = vadd.f32 %v11824, %v11825
    %v11827 = vsel %vm3261, %v11550, 0.0
    %v11828 = vadd.f32 %v11826, %v11827
    %v11829 = vsel %vm3261, %v11551, 0.0
    %v11830 = vadd.f32 %v11828, %v11829
    %v11831 = vsel %vm3261, %v11552, 0.0
    %v11832 = vadd.f32 %v11830, %v11831
    %v11833 = vsel %vm3261, %v11553, 0.0
    %v11834 = vadd.f32 %v11832, %v11833
    %v11835 = vsel %vm3261, %v11554, 0.0
    %v11836 = vadd.f32 %v11834, %v11835
    %v11837 = vsel %vm3261, %v11555, 0.0
    %v11838 = vadd.f32 %v11836, %v11837
    %v11839 = vsel %vm3261, %v11556, 0.0
    %v11840 = vadd.f32 %v11838, %v11839
    %v11841 = vsel %vm3261, %v11557, 0.0
    %v11842 = vadd.f32 %v11840, %v11841
    %v11843 = vsel %vm3261, %v11558, 0.0
    %v11844 = vadd.f32 %v11842, %v11843
    %v11845 = vsel %vm3261, %v11559, 0.0
    %v11846 = vadd.f32 %v11844, %v11845
    %v11847 = vsel %vm3261, %v11560, 0.0
    %v11848 = vadd.f32 %v11846, %v11847
    %v11849 = vsel %vm3261, %v11561, 0.0
    %v11850 = vadd.f32 %v11848, %v11849
    %v11851 = vsel %vm3261, %v11562, 0.0
    %v11852 = vadd.f32 %v11850, %v11851
    %v11853 = vsel %vm3261, %v11563, 0.0
    %v11854 = vadd.f32 %v11852, %v11853
    %v11855 = vsel %vm3261, %v11564, 0.0
    %v11856 = vadd.f32 %v11854, %v11855
    %v11857 = vsel %vm3261, %v11565, 0.0
    %v11858 = vadd.f32 %v11856, %v11857
    %v11859 = vsel %vm3261, %v11566, 0.0
    %v11860 = vadd.f32 %v11858, %v11859
    %v11861 = vsel %vm3261, %v11567, 0.0
    %v11862 = vadd.f32 %v11860, %v11861
    %v11863 = vsel %vm3261, %v11568, 0.0
    %v11864 = vadd.f32 %v11862, %v11863
    %v11865 = vsel %vm3261, %v11569, 0.0
    %v11866 = vadd.f32 %v11864, %v11865
    %v11867 = vsel %vm3261, %v11570, 0.0
    %v11868 = vadd.f32 %v11866, %v11867
    %v11869 = vsel %vm3261, %v11571, 0.0
    %v11870 = vadd.f32 %v11868, %v11869
    %v11871 = vsel %vm3261, %v11572, 0.0
    %v11872 = vadd.f32 %v11870, %v11871
    %v11873 = vsel %vm3261, %v11573, 0.0
    %v11874 = vadd.f32 %v11872, %v11873
    %v11875 = vsel %vm3261, %v11574, 0.0
    %v11876 = vadd.f32 %v11874, %v11875
    %v11877 = vsel %vm3261, %v11575, 0.0
    %v11878 = vadd.f32 %v11876, %v11877
    %v11879 = vsel %vm3261, %v11576, 0.0
    %v11880 = vadd.f32 %v11878, %v11879
    %v11881 = vsel %vm3261, %v11577, 0.0
    %v11882 = vadd.f32 %v11880, %v11881
    %v11883 = vsel %vm3261, %v11578, 0.0
    %v11884 = vadd.f32 %v11882, %v11883
    %v11885 = vsel %vm3261, %v11579, 0.0
    %v11886 = vadd.f32 %v11884, %v11885
    %v11887 = vsel %vm3261, %v11580, 0.0
    %v11888 = vadd.f32 %v11886, %v11887
    %v11889 = vsel %vm3261, %v11581, 0.0
    %v11890 = vadd.f32 %v11888, %v11889
    %v11891 = vsel %vm3261, %v11582, 0.0
    %v11892 = vadd.f32 %v11890, %v11891
    %v11893 = vsel %vm3261, %v11583, 0.0
    %v11894 = vadd.f32 %v11892, %v11893
    %v11895 = vsel %vm3261, %v11584, 0.0
    %v11896 = vadd.f32 %v11894, %v11895
    %v11897 = vsel %vm3261, %v11585, 0.0
    %v11898 = vadd.f32 %v11896, %v11897
    %v11899 = vsel %vm3261, %v11586, 0.0
    %v11900 = vadd.f32 %v11898, %v11899
    %v11901 = vsel %vm3261, %v11587, 0.0
    %v11902 = vadd.f32 %v11900, %v11901
    %v11903 = vsel %vm3261, %v11588, 0.0
    %v11904 = vadd.f32 %v11902, %v11903
    %v11905 = vsel %vm3261, %v11589, 0.0
    %v11906 = vadd.f32 %v11904, %v11905
    %v11907 = vsel %vm3261, %v11590, 0.0
    %v11908 = vadd.f32 %v11906, %v11907
    %v11909 = vsel %vm3261, %v11591, 0.0
    %v11910 = vadd.f32 %v11908, %v11909
    %v11911 = vsel %vm3261, %v11592, 0.0
    %v11912 = vadd.f32 %v11910, %v11911
    %v11913 = vsel %vm3261, %v11593, 0.0
    %v11914 = vadd.f32 %v11912, %v11913
    %v11915 = vsel %vm3261, %v11594, 0.0
    %v11916 = vadd.f32 %v11914, %v11915
    %v11917 = vsel %vm3261, %v11595, 0.0
    %v11918 = vadd.f32 %v11916, %v11917
    %v11919 = vsel %vm3261, %v11596, 0.0
    %v11920 = vadd.f32 %v11918, %v11919
    %v11921 = vsel %vm3261, %v11597, 0.0
    %v11922 = vadd.f32 %v11920, %v11921
    %v11923 = vsel %vm3261, %v11598, 0.0
    %v11924 = vadd.f32 %v11922, %v11923
    %v11925 = vsel %vm3261, %v11599, 0.0
    %v11926 = vadd.f32 %v11924, %v11925
    %v11927 = vsel %vm3261, %v11600, 0.0
    %v11928 = vadd.f32 %v11926, %v11927
    %v11929 = vsel %vm3261, %v11601, 0.0
    %v11930 = vadd.f32 %v11928, %v11929
    %v11931 = vsel %vm3261, %v11602, 0.0
    %v11932 = vadd.f32 %v11930, %v11931
    %v11933 = vsel %vm3261, %v11603, 0.0
    %v11934 = vadd.f32 %v11932, %v11933
    %v11935 = vsel %vm3261, %v11604, 0.0
    %v11936 = vadd.f32 %v11934, %v11935
    %v11937 = vsel %vm3261, %v11605, 0.0
    %v11938 = vadd.f32 %v11936, %v11937
    %v11939 = vsel %vm3261, %v11606, 0.0
    %v11940 = vadd.f32 %v11938, %v11939
    %v11941 = vsel %vm3261, %v11607, 0.0
    %v11942 = vadd.f32 %v11940, %v11941
    %v11943 = vsel %vm3261, %v11608, 0.0
    %v11944 = vadd.f32 %v11942, %v11943
    %v11945 = vsel %vm3261, %v11609, 0.0
    %v11946 = vadd.f32 %v11944, %v11945
    %v11947 = vsel %vm3261, %v11610, 0.0
    %v11948 = vadd.f32 %v11946, %v11947
    %v11949 = vsel %vm3261, %v11611, 0.0
    %v11950 = vadd.f32 %v11948, %v11949
    %v11951 = vsel %vm3261, %v11612, 0.0
    %v11952 = vadd.f32 %v11950, %v11951
    %v11953 = vsel %vm3261, %v11613, 0.0
    %v11954 = vadd.f32 %v11952, %v11953
    %v11955 = vsel %vm3261, %v11614, 0.0
    %v11956 = vadd.f32 %v11954, %v11955
    %v11957 = vsel %vm3261, %v11615, 0.0
    %v11958 = vadd.f32 %v11956, %v11957
    %v11959 = vsel %vm3261, %v11616, 0.0
    %v11960 = vadd.f32 %v11958, %v11959
    %v11961 = vsel %vm3261, %v11617, 0.0
    %v11962 = vadd.f32 %v11960, %v11961
    %v11963 = vsel %vm3261, %v11618, 0.0
    %v11964 = vadd.f32 %v11962, %v11963
    %v11965 = vsel %vm3261, %v11619, 0.0
    %v11966 = vadd.f32 %v11964, %v11965
    %v11967 = vsel %vm3261, %v11620, 0.0
    %v11968 = vadd.f32 %v11966, %v11967
    %v11969 = vsel %vm3261, %v11621, 0.0
    %v11970 = vadd.f32 %v11968, %v11969
    %v11971 = vsel %vm3261, %v11622, 0.0
    %v11972 = vadd.f32 %v11970, %v11971
    %v11973 = vsel %vm3261, %v11623, 0.0
    %v11974 = vadd.f32 %v11972, %v11973
    %v11975 = vsel %vm3261, %v11624, 0.0
    %v11976 = vadd.f32 %v11974, %v11975
    %v11977 = vsel %vm3261, %v11625, 0.0
    %v11978 = vadd.f32 %v11976, %v11977
    %v11979 = vsel %vm3261, %v11626, 0.0
    %v11980 = vadd.f32 %v11978, %v11979
    %v11981 = vsel %vm3261, %v11627, 0.0
    %v11982 = vadd.f32 %v11980, %v11981
    %v11983 = vsel %vm3261, %v11628, 0.0
    %v11984 = vadd.f32 %v11982, %v11983
    %v11985 = vsel %vm3261, %v11629, 0.0
    %v11986 = vadd.f32 %v11984, %v11985
    %v11987 = vsel %vm3261, %v11630, 0.0
    %v11988 = vadd.f32 %v11986, %v11987
    %v11989 = vsel %vm3261, %v11631, 0.0
    %v11990 = vadd.f32 %v11988, %v11989
    %v11991 = vsel %vm3261, %v11632, 0.0
    %v11992 = vadd.f32 %v11990, %v11991
    %v11993 = vsel %vm3261, %v11633, 0.0
    %v11994 = vadd.f32 %v11992, %v11993
    %v11995 = vsel %vm3261, %v11634, 0.0
    %v11996 = vadd.f32 %v11994, %v11995
    %v11997 = vsel %vm3261, %v11635, 0.0
    %v11998 = vadd.f32 %v11996, %v11997
    %v11999 = vsel %vm3261, %v11636, 0.0
    %v12000 = vadd.f32 %v11998, %v11999
    %v12001 = vsel %vm3261, %v11637, 0.0
    %v12002 = vadd.f32 %v12000, %v12001
    %v12003 = vsel %vm3261, %v11638, 0.0
    %v12004 = vadd.f32 %v12002, %v12003
    %v12005 = vsel %vm3261, %v11639, 0.0
    %v12006 = vadd.f32 %v12004, %v12005
    %v12007 = vsel %vm3261, %v11640, 0.0
    %v12008 = vadd.f32 %v12006, %v12007
    %v12009 = vsel %vm3261, %v11641, 0.0
    %v12010 = vadd.f32 %v12008, %v12009
    %v12011 = vsel %vm3261, %v11642, 0.0
    %v12012 = vadd.f32 %v12010, %v12011
    %v12013 = vsel %vm3261, %v11643, 0.0
    %v12014 = vadd.f32 %v12012, %v12013
    %v12015 = vsel %vm3261, %v11644, 0.0
    %v12016 = vadd.f32 %v12014, %v12015
    %v12017 = vsel %vm3261, %v11645, 0.0
    %v12018 = vadd.f32 %v12016, %v12017
    %v12019 = vsel %vm3261, %v11646, 0.0
    %v12020 = vadd.f32 %v12018, %v12019
    %v12021 = vsel %vm3261, %v11647, 0.0
    %v12022 = vadd.f32 %v12020, %v12021
    %v12023 = vsel %vm3261, %v11648, 0.0
    %v12024 = vadd.f32 %v12022, %v12023
    %v12025 = vsel %vm3261, %v11649, 0.0
    %v12026 = vadd.f32 %v12024, %v12025
    %v12027 = vsel %vm3261, %v11650, 0.0
    %v12028 = vadd.f32 %v12026, %v12027
    %v12029 = vsel %vm3261, %v11651, 0.0
    %v12030 = vadd.f32 %v12028, %v12029
    %v12031 = vsel %vm3261, %v11652, 0.0
    %v12032 = vadd.f32 %v12030, %v12031
    %v12033 = vsel %vm3261, %v11653, 0.0
    %v12034 = vadd.f32 %v12032, %v12033
    %v12035 = vsel %vm3261, %v11654, 0.0
    %v12036 = vadd.f32 %v12034, %v12035
    %v12037 = vsel %vm3261, %v11655, 0.0
    %v12038 = vadd.f32 %v12036, %v12037
    %v12039 = vsel %vm3261, %v11656, 0.0
    %v12040 = vadd.f32 %v12038, %v12039
    %v12041 = vsel %vm3261, %v11657, 0.0
    %v12042 = vadd.f32 %v12040, %v12041
    %v12043 = vsel %vm3261, %v11658, 0.0
    %v12044 = vadd.f32 %v12042, %v12043
    %v12045 = vsel %vm3261, %v11659, 0.0
    %v12046 = vadd.f32 %v12044, %v12045
    %v12047 = vsel %vm3261, %v11660, 0.0
    %v12048 = vadd.f32 %v12046, %v12047
    %v12049 = vsel %vm3261, %v11661, 0.0
    %v12050 = vadd.f32 %v12048, %v12049
    %v12051 = vsel %vm3261, %v11662, 0.0
    %v12052 = vadd.f32 %v12050, %v12051
    %v12053 = vsel %vm3261, %v11663, 0.0
    %v12054 = vadd.f32 %v12052, %v12053
    %v12055 = vsel %vm3261, %v11664, 0.0
    %v12056 = vadd.f32 %v12054, %v12055
    %v12057 = vsel %vm3261, %v11665, 0.0
    %v12058 = vadd.f32 %v12056, %v12057
    %v12059 = vsel %vm3261, %v11666, 0.0
    %v12060 = vadd.f32 %v12058, %v12059
    %v12061 = vsel %vm3261, %v11667, 0.0
    %v12062 = vadd.f32 %v12060, %v12061
    %v12063 = vsel %vm3261, %v11668, 0.0
    %v12064 = vadd.f32 %v12062, %v12063
    %v12065 = vsel %vm3261, %v11669, 0.0
    %v12066 = vadd.f32 %v12064, %v12065
    %v12067 = vsel %vm3261, %v11670, 0.0
    %v12068 = vadd.f32 %v12066, %v12067
    %v12069 = vsel %vm3261, %v11671, 0.0
    %v12070 = vadd.f32 %v12068, %v12069
    %v12071 = vsel %vm3261, %v11672, 0.0
    %v12072 = vadd.f32 %v12070, %v12071
    %v12073 = vsel %vm3261, %v11673, 0.0
    %v12074 = vadd.f32 %v12072, %v12073
    %v12075 = vsel %vm3261, %v11674, 0.0
    %v12076 = vadd.f32 %v12074, %v12075
    %v12077 = vsel %vm3261, %v11675, 0.0
    %v12078 = vadd.f32 %v12076, %v12077
    %v12079 = vsel %vm3261, %v11676, 0.0
    %v12080 = vadd.f32 %v12078, %v12079
    %v12081 = vsel %vm3261, %v11677, 0.0
    %v12082 = vadd.f32 %v12080, %v12081
    %v12083 = vsel %vm3261, %v11678, 0.0
    %v12084 = vadd.f32 %v12082, %v12083
    %v12085 = vsel %vm3261, %v11679, 0.0
    %v12086 = vadd.f32 %v12084, %v12085
    %v12087 = vsel %vm3261, %v11680, 0.0
    %v12088 = vadd.f32 %v12086, %v12087
    %v12089 = vsel %vm3261, %v11681, 0.0
    %v12090 = vadd.f32 %v12088, %v12089
    %v12091 = vsel %vm3261, %v11682, 0.0
    %v12092 = vadd.f32 %v12090, %v12091
    %v12093 = vsel %vm3261, %v11683, 0.0
    %v12094 = vadd.f32 %v12092, %v12093
    %v12095 = vsel %vm3261, %v11684, 0.0
    %v12096 = vadd.f32 %v12094, %v12095
    %v12097 = vsel %vm3261, %v11685, 0.0
    %v12098 = vadd.f32 %v12096, %v12097
    %v12099 = vsel %vm3261, %v11686, 0.0
    %v12100 = vadd.f32 %v12098, %v12099
    %v12101 = vsel %vm3261, %v11687, 0.0
    %v12102 = vadd.f32 %v12100, %v12101
    %v12103 = vsel %vm3261, %v11688, 0.0
    %v12104 = vadd.f32 %v12102, %v12103
    %v12105 = vsel %vm3261, %v11689, 0.0
    %v12106 = vadd.f32 %v12104, %v12105
    %v12107 = vsel %vm3261, %v11690, 0.0
    %v12108 = vadd.f32 %v12106, %v12107
    %v12109 = vsel %vm3261, %v11691, 0.0
    %v12110 = vadd.f32 %v12108, %v12109
    %v12111 = vsel %vm3261, %v11692, 0.0
    %v12112 = vadd.f32 %v12110, %v12111
    %v12113 = vsel %vm3261, %v11693, 0.0
    %v12114 = vadd.f32 %v12112, %v12113
    %v12115 = vsel %vm3261, %v11694, 0.0
    %v12116 = vadd.f32 %v12114, %v12115
    %v12117 = vsel %vm3261, %v11695, 0.0
    %v12118 = vadd.f32 %v12116, %v12117
    %v12119 = vsel %vm3261, %v11696, 0.0
    %v12120 = vadd.f32 %v12118, %v12119
    %v12121 = vsel %vm3261, %v11697, 0.0
    %v12122 = vadd.f32 %v12120, %v12121
    %v12123 = vsel %vm3261, %v11698, 0.0
    %v12124 = vadd.f32 %v12122, %v12123
    %v12125 = vsel %vm3261, %v11699, 0.0
    %v12126 = vadd.f32 %v12124, %v12125
    %v12127 = vsel %vm3261, %v11700, 0.0
    %v12128 = vadd.f32 %v12126, %v12127
    %v12129 = vsel %vm3261, %v11701, 0.0
    %v12130 = vadd.f32 %v12128, %v12129
    %v12131 = vsel %vm3261, %v11702, 0.0
    %v12132 = vadd.f32 %v12130, %v12131
    %v12133 = vsel %vm3261, %v11703, 0.0
    %v12134 = vadd.f32 %v12132, %v12133
    %v12135 = vsel %vm3261, %v11704, 0.0
    %v12136 = vadd.f32 %v12134, %v12135
    %v12137 = vsel %vm3261, %v11705, 0.0
    %v12138 = vadd.f32 %v12136, %v12137
    %v12139 = vsel %vm3261, %v11706, 0.0
    %v12140 = vadd.f32 %v12138, %v12139
    %v12141 = vsel %vm3261, %v11707, 0.0
    %v12142 = vadd.f32 %v12140, %v12141
    %v12143 = vsel %vm3261, %v11708, 0.0
    %v12144 = vadd.f32 %v12142, %v12143
    %v12145 = vsel %vm3261, %v11709, 0.0
    %v12146 = vadd.f32 %v12144, %v12145
    %v12147 = vsel %vm3261, %v11710, 0.0
    %v12148 = vadd.f32 %v12146, %v12147
    %v12149 = vsel %vm3261, %v11711, 0.0
    %v12150 = vadd.f32 %v12148, %v12149
    %v12151 = vsel %vm3261, %v11712, 0.0
    %v12152 = vadd.f32 %v12150, %v12151
    %v12153 = vsel %vm3261, %v11713, 0.0
    %v12154 = vadd.f32 %v12152, %v12153
    %v12155 = vsel %vm3261, %v11714, 0.0
    %v12156 = vadd.f32 %v12154, %v12155
    %v12157 = vsel %vm3261, %v11715, 0.0
    %v12158 = vadd.f32 %v12156, %v12157
    %v12159 = vsel %vm3261, %v11716, 0.0
    %v12160 = vadd.f32 %v12158, %v12159
    %v12161 = vsel %vm3261, %v11717, 0.0
    %v12162 = vadd.f32 %v12160, %v12161
    %v12163 = vsel %vm3261, %v11718, 0.0
    %v12164 = vadd.f32 %v12162, %v12163
    %v12165 = vsel %vm3261, %v11719, 0.0
    %v12166 = vadd.f32 %v12164, %v12165
    %v12167 = vsel %vm3261, %v11720, 0.0
    %v12168 = vadd.f32 %v12166, %v12167
    %v12169 = vsel %vm3261, %v11721, 0.0
    %v12170 = vadd.f32 %v12168, %v12169
    %v12171 = vsel %vm3261, %v11722, 0.0
    %v12172 = vadd.f32 %v12170, %v12171
    %v12173 = vsel %vm3261, %v11723, 0.0
    %v12174 = vadd.f32 %v12172, %v12173
    %v12175 = vsel %vm3261, %v11724, 0.0
    %v12176 = vadd.f32 %v12174, %v12175
    %v12177 = vsel %vm3261, %v11725, 0.0
    %v12178 = vadd.f32 %v12176, %v12177
    %v12179 = vsel %vm3261, %v11726, 0.0
    %v12180 = vadd.f32 %v12178, %v12179
    %v12181 = vsel %vm3261, %v11727, 0.0
    %v12182 = vadd.f32 %v12180, %v12181
    %v12183 = vsel %vm3261, %v11728, 0.0
    %v12184 = vadd.f32 %v12182, %v12183
    %v12185 = vsel %vm3261, %v11729, 0.0
    %v12186 = vadd.f32 %v12184, %v12185
    %v12187 = vsel %vm3261, %v11730, 0.0
    %v12188 = vadd.f32 %v12186, %v12187
    %v12189 = vsel %vm3261, %v11731, 0.0
    %v12190 = vadd.f32 %v12188, %v12189
    %v12191 = vsel %vm3261, %v11732, 0.0
    %v12192 = vadd.f32 %v12190, %v12191
    %v12193 = vsel %vm3261, %v11733, 0.0
    %v12194 = vadd.f32 %v12192, %v12193
    %v12195 = vsel %vm3261, %v11734, 0.0
    %v12196 = vadd.f32 %v12194, %v12195
    %v12197 = vsel %vm3261, %v11735, 0.0
    %v12198 = vadd.f32 %v12196, %v12197
    %v12199 = vsel %vm3261, %v11736, 0.0
    %v12200 = vadd.f32 %v12198, %v12199
    %v12201 = vsel %vm3261, %v11737, 0.0
    %v12202 = vadd.f32 %v12200, %v12201
    %v12203 = vsel %vm3261, %v11738, 0.0
    %v12204 = vadd.f32 %v12202, %v12203
    %v12205 = vsel %vm3261, %v11739, 0.0
    %v12206 = vadd.f32 %v12204, %v12205
    %v12207 = vsel %vm3261, %v11740, 0.0
    %v12208 = vadd.f32 %v12206, %v12207
    %v12209 = vsel %vm3261, %v11741, 0.0
    %v12210 = vadd.f32 %v12208, %v12209
    %v12211 = vsel %vm3261, %v11742, 0.0
    %v12212 = vadd.f32 %v12210, %v12211
    %v12213 = vsel %vm3261, %v11743, 0.0
    %v12214 = vadd.f32 %v12212, %v12213
    %v12215 = vsel %vm3261, %v11744, 0.0
    %v12216 = vadd.f32 %v12214, %v12215
    %v12217 = vsel %vm3261, %v11745, 0.0
    %v12218 = vadd.f32 %v12216, %v12217
    %v12219 = vsel %vm3261, %v11746, 0.0
    %v12220 = vadd.f32 %v12218, %v12219
    %v12221 = vsel %vm3261, %v11747, 0.0
    %v12222 = vadd.f32 %v12220, %v12221
    %v12223 = vsel %vm3261, %v11748, 0.0
    %v12224 = vadd.f32 %v12222, %v12223
    %v12225 = vsel %vm3261, %v11749, 0.0
    %v12226 = vadd.f32 %v12224, %v12225
    %v12227 = vsel %vm3261, %v11750, 0.0
    %v12228 = vadd.f32 %v12226, %v12227
    %v12229 = vsel %vm3261, %v11751, 0.0
    %v12230 = vadd.f32 %v12228, %v12229
    %v12231 = vsel %vm3261, %v11752, 0.0
    %v12232 = vadd.f32 %v12230, %v12231
    %v12233 = vsel %vm3261, %v11753, 0.0
    %v12234 = vadd.f32 %v12232, %v12233
    %v12235 = vsel %vm3261, %v11754, 0.0
    %v12236 = vadd.f32 %v12234, %v12235
    %v12237 = vsel %vm3261, %v11755, 0.0
    %v12238 = vadd.f32 %v12236, %v12237
    %v12239 = vsel %vm3261, %v11756, 0.0
    %v12240 = vadd.f32 %v12238, %v12239
    %v12241 = vsel %vm3261, %v11757, 0.0
    %v12242 = vadd.f32 %v12240, %v12241
    %v12243 = vsel %vm3261, %v11758, 0.0
    %v12244 = vadd.f32 %v12242, %v12243
    %v12245 = vsel %vm3261, %v11759, 0.0
    %v12246 = vadd.f32 %v12244, %v12245
    %v12247 = vsel %vm3261, %v11760, 0.0
    %v12248 = vadd.f32 %v12246, %v12247
    %v12249 = vsel %vm3261, %v11761, 0.0
    %v12250 = vadd.f32 %v12248, %v12249
    %v12251 = vsel %vm3261, %v11762, 0.0
    %v12252 = vadd.f32 %v12250, %v12251
    %v12253 = vsel %vm3261, %v11763, 0.0
    %v12254 = vadd.f32 %v12252, %v12253
    %v12255 = vsel %vm3261, %v11764, 0.0
    %v12256 = vadd.f32 %v12254, %v12255
    %v12257 = vsel %vm3261, %v11765, 0.0
    %v12258 = vadd.f32 %v12256, %v12257
    %v12259 = vsel %vm3261, %v11766, 0.0
    %v12260 = vadd.f32 %v12258, %v12259
    %v12261 = vsel %vm3261, %v11767, 0.0
    %v12262 = vadd.f32 %v12260, %v12261
    %v12263 = vsel %vm3261, %v11768, 0.0
    %v12264 = vadd.f32 %v12262, %v12263
    %v12265 = vsel %vm3261, %v11769, 0.0
    %v12266 = vadd.f32 %v12264, %v12265
    %v12267 = vsel %vm3261, %v11770, 0.0
    %v12268 = vadd.f32 %v12266, %v12267
    %v12269 = vsel %vm3261, %v11771, 0.0
    %v12270 = vadd.f32 %v12268, %v12269
    %v12271 = vsel %vm3261, %v11772, 0.0
    %v12272 = vadd.f32 %v12270, %v12271
    %v12273 = vsel %vm3261, %v11773, 0.0
    %v12274 = vadd.f32 %v12272, %v12273
    %v12275 = vsel %vm3261, %v11774, 0.0
    %v12276 = vadd.f32 %v12274, %v12275
    %v12277 = vsel %vm3261, %v11775, 0.0
    %v12278 = vadd.f32 %v12276, %v12277
    %v12279 = vsel %vm3261, %v11776, 0.0
    %v12280 = vadd.f32 %v12278, %v12279
    %v12281 = vsel %vm3261, %v11777, 0.0
    %v12282 = vadd.f32 %v12280, %v12281
    %v12283 = vsel %vm3261, %v11778, 0.0
    %v12284 = vadd.f32 %v12282, %v12283
    %v12285 = vsel %vm3261, %v11779, 0.0
    %v12286 = vadd.f32 %v12284, %v12285
    %v12287 = vsel %vm3261, %v11780, 0.0
    %v12288 = vadd.f32 %v12286, %v12287
    %v12289 = vsel %vm3261, %v11781, 0.0
    %v12290 = vadd.f32 %v12288, %v12289
    %v12291 = vsel %vm3261, %v11782, 0.0
    %v12292 = vadd.f32 %v12290, %v12291
    %v12293 = vsel %vm3261, %v11783, 0.0
    %v12294 = vadd.f32 %v12292, %v12293
    %12295 = vadd.xlane.f32.xlu0 %v12294
    %v12296 = vpop.xlane.xlu0 %12295
    %v12297 = vrot.slane %v12296, 4
    %v12298 = vadd.f32 %v12296, %v12297
    %v12299 = vrot.slane %v12298, 2
    %v12300 = vadd.f32 %v12298, %v12299
    %v12301 = vrot.slane %v12300, 1
    %v12302 = vadd.f32 %v12300, %v12301
    %s12303 = vtos %v12302
    %s12304 = smul.f32 %s564, %s12303
    %v12305 = vstv %s12304
    %vm12306 = vcmask 0
    %12307 = vst.msk [vmem:[#allocation6] sm:$0x1] %vm12306, %v12305
    // Predicated region
    $region42: #{tpu_custom_call.1} parent=1 // pred_check
      _
    $region43: #{tpu_custom_call.1} parent=1 // pred_check_branch
      %12309 = sbr.rel (0) target = $region45
    $region44: #{tpu_custom_call.1} parent=1 // pred_region
      _
    $region45: #{tpu_custom_call.1} parent=1 // pred_fallthru
      _
    // Predicated region
    $region46: #{tpu_custom_call.1} parent=1 // pred_check
      _
    $region47: #{tpu_custom_call.1} parent=1 // pred_check_branch
      %12311 = sbr.rel (0) target = $region49
    $region48: #{tpu_custom_call.1} parent=1 // pred_region
      %s12313 = ssub.s32 16, 16
      %12314 = vsyncadd [#allocation4], %s12313
      %s12316 = sshll.u32 [#allocation6], 4
      %s12317 = int_to_ptr.vmem [resolvable:$true] %s12316
      %12319 = dma.vmem_to_hbm [thread:$0]  %s12317, 16, %s10, [#allocation4]
    $region49: #{tpu_custom_call.1} parent=1 // pred_fallthru
      _
    // Predicated region
    $region50: #{tpu_custom_call.1} parent=1 // pred_check
      _
    $region51: #{tpu_custom_call.1} parent=1 // pred_check_branch
      %12321 = sbr.rel (0) target = $region53
    $region52: #{tpu_custom_call.1} parent=1 // pred_region
      _
    $region53: #{tpu_custom_call.1} parent=1 // pred_fallthru
      _
    // Predicated region
    $region54: #{tpu_custom_call.1} parent=1 // pred_check
      _
    $region55: #{tpu_custom_call.1} parent=1 // pred_check_branch
      %12323 = sbr.rel (0) target = $region57
    $region56: #{tpu_custom_call.1} parent=1 // pred_region
      %12324 = dma.done [#allocation4], 16
    $region57: #{tpu_custom_call.1} parent=1 // pred_fallthru
      _
    %12325 = vsyncpa [#allocation4], 1
    %12326 = vsyncpa [#allocation5], 1

</llo_original>
